<compile_context>
chip_gen: v7x
topology: tpu7x:2x2x1
jax: 0.10.0
libtpu: 0.0.40
codegen_flags: <defaults>
</compile_context>

<pallas_src>
import math

import jax
import jax.numpy as jnp
from jax.experimental import pallas as pl
from jax.experimental.pallas import tpu as pltpu

V = 3  # number of views (input channels of discriminatorNet)


# ----------------------------- helpers --------------------------------------

def _round16(x):
    return -(-x // 16) * 16


def _row_tile(n, max_tile=512):
    """Row-tile size (multiple of 16) for the pooled-row dimension."""
    if n <= max_tile:
        return _round16(n)
    ntiles = -(-n // max_tile)
    return _round16(-(-n // ntiles))


# ----------------------------- Pallas kernels ------------------------------

def conv_pool_kernel(p_ref, w_ref, b_ref, s_ref, t_ref, o_ref):
    """Fused conv(im2col matmul) + bias + ReLU + BN(inference) + 2x2 max-pool.

    p_ref:               (4, T, K) bf16  patches; dim 0 = 4 taps of each pool win
    w_ref:               (K, C)    bf16
    b_ref, s_ref, t_ref: (1, C)    f32   conv bias / BN scale / BN shift
    o_ref:               (T, C)    bf16  pooled output rows
    """
    t = o_ref.shape[0]
    # One long MXU stream over all 4 taps (same RHS), f32 accumulation.
    z = jnp.dot(p_ref[...].reshape(4 * t, -1), w_ref[...],
                preferred_element_type=jnp.float32).reshape(4, t, -1)
    z0, z1, z2, z3 = z[0], z[1], z[2], z[3]
    zmax = jnp.maximum(jnp.maximum(z0, z1), jnp.maximum(z2, z3))
    zmin = jnp.minimum(jnp.minimum(z0, z1), jnp.minimum(z2, z3))
    scale = s_ref[...]
    # maxpool(BN(relu(x + b))) == BN(relu(max_taps(x) + b)) when scale >= 0,
    # and uses the min of the taps when scale < 0 -> exact for any BN params.
    sel = jnp.where(scale >= 0.0, zmax, zmin)
    r = jnp.maximum(sel + b_ref[...], 0.0)
    o_ref[...] = (r * scale + t_ref[...]).astype(o_ref.dtype)


def conv3_head_kernel(p_ref, w_ref, b_ref, s_ref, t_ref, c_ref, sel_ref,
                      hb_ref, o_ref):
    """Last conv block fused with the collapsed fc1+fc_out head + sigmoid.

    Grid is (V,) marked "arbitrary"; per-view partials accumulate into o_ref.
    p_ref:   (4, N3, K) bf16   N3 = B*36 pooled rows of this view
    w_ref:   (K, 48)    bf16
    b/s/t:   (1, 48)    f32    conv bias / BN scale / BN shift
    c_ref:   (N3, 48)   f32    collapsed head weight (wf1_v @ wo_v), batch-tiled
    sel_ref: (B, N3)    f32    sel[b, i] = 1 iff pooled row i belongs to batch b
    hb_ref:  (1, 1)     f32    collapsed head bias (sum_v bf1_v . wo_v + bo)
    o_ref:   (B, 1)     f32
    """
    v = pl.program_id(0)

    @pl.when(v == 0)
    def _():
        o_ref[...] = jnp.zeros_like(o_ref)

    w = w_ref[...]
    maxd = mind = None
    for q in range(4):                                   # unrolled; N3 is tiny
        d = jnp.dot(p_ref[q], w, preferred_element_type=jnp.float32)
        maxd = d if maxd is None else jnp.maximum(maxd, d)
        mind = d if mind is None else jnp.minimum(mind, d)
    scale = s_ref[...]
    sel = jnp.where(scale >= 0.0, maxd, mind)
    feat = jnp.maximum(sel + b_ref[...], 0.0) * scale + t_ref[...]   # (N3, 48)

    # Collapsed head: per-batch contraction of feat with the per-view vector.
    prod = feat * c_ref[...]                                         # (N3, 48)
    per_b = jnp.dot(sel_ref[...], prod,
                    preferred_element_type=jnp.float32)              # (B, 48)
    o_ref[...] += jnp.sum(per_b, axis=1, keepdims=True)              # (B, 1)

    @pl.when(v == pl.num_programs(0) - 1)
    def _():
        o_ref[...] = jax.nn.sigmoid(o_ref[...] + hb_ref[...])


# ------------------------------- wrappers -----------------------------------

def conv_block(p, w, b, scale, shift):
    """p: (V, 4, N, K) bf16 patches -> pooled rows (V, N, C) bf16 (row-tiled)."""
    v, _, n, k = p.shape
    cout = w.shape[-1]
    tile = _row_tile(n)
    rows = pl.cdiv(n, tile)
    n_pad = rows * tile
    if n_pad != n:
        p = jnp.pad(p, ((0, 0), (0, 0), (0, n_pad - n), (0, 0)))

    flops = 2 * v * 4 * n_pad * k * cout
    bytes_accessed = int(p.size * p.dtype.itemsize + w.size * w.dtype.itemsize
                         + v * n_pad * cout * 2 + 3 * v * cout * 4)
    out = pl.pallas_call(
        conv_pool_kernel,
        out_shape=jax.ShapeDtypeStruct((v, n_pad, cout), jnp.bfloat16),
        grid=(v, rows),
        in_specs=[
            pl.BlockSpec((None, 4, tile, k), lambda i, r: (i, 0, r, 0)),
            pl.BlockSpec((None, k, cout), lambda i, r: (i, 0, 0)),
            pl.BlockSpec((None, 1, cout), lambda i, r: (i, 0, 0)),
            pl.BlockSpec((None, 1, cout), lambda i, r: (i, 0, 0)),
            pl.BlockSpec((None, 1, cout), lambda i, r: (i, 0, 0)),
        ],
        out_specs=pl.BlockSpec((None, tile, cout), lambda i, r: (i, r, 0)),
        compiler_params=pltpu.CompilerParams(
            dimension_semantics=("parallel", "parallel")),
        cost_estimate=pl.CostEstimate(flops=flops, transcendentals=0,
                                      bytes_accessed=bytes_accessed),
    )(p, w, b, scale, shift)
    return out[:, :n] if n_pad != n else out


def conv3_head(p, w, b, scale, shift, ctile, sel, hb, batch):
    """conv block 3 + collapsed fc1/fc_out head + sigmoid.  Returns (B, 1)."""
    v, _, n3, k = p.shape
    cout = w.shape[-1]
    flops = 2 * v * 4 * n3 * k * cout + 2 * v * batch * n3 * cout
    bytes_accessed = int(p.size * p.dtype.itemsize + w.size * w.dtype.itemsize
                         + ctile.size * 4 + sel.size * 4 + batch * 4)
    return pl.pallas_call(
        conv3_head_kernel,
        out_shape=jax.ShapeDtypeStruct((batch, 1), jnp.float32),
        grid=(v,),
        in_specs=[
            pl.BlockSpec((None, 4, n3, k), lambda i: (i, 0, 0, 0)),
            pl.BlockSpec((None, k, cout), lambda i: (i, 0, 0)),
            pl.BlockSpec((None, 1, cout), lambda i: (i, 0, 0)),
            pl.BlockSpec((None, 1, cout), lambda i: (i, 0, 0)),
            pl.BlockSpec((None, 1, cout), lambda i: (i, 0, 0)),
            pl.BlockSpec((None, n3, cout), lambda i: (i, 0, 0)),
            pl.BlockSpec((batch, n3), lambda i: (0, 0)),
            pl.BlockSpec((1, 1), lambda i: (0, 0)),
        ],
        out_specs=pl.BlockSpec((batch, 1), lambda i: (0, 0)),
        compiler_params=pltpu.CompilerParams(
            dimension_semantics=("arbitrary",)),
        cost_estimate=pl.CostEstimate(flops=flops, transcendentals=batch,
                                      bytes_accessed=bytes_accessed),
    )(p, w, b, scale, shift, ctile, sel, hb)


# ------------------------------- glue ---------------------------------------

def pool_ordered_patches(x, k):
    """x: (V, B, H, W, C) NHWC.  kxk conv (stride 1, valid) followed by a 2x2
    max-pool.  Returns (V, 4, B*Ho*Wo, k*k*C) patches where dim 1 enumerates
    the 4 conv-output positions of each pool window (py, px)."""
    v, b, h, w, c = x.shape
    hc, wc = h - k + 1, w - k + 1
    ho, wo = hc // 2, wc // 2
    taps = []
    for py in range(2):
        for px in range(2):
            cols = []
            for dy in range(k):
                for dx in range(k):
                    sl = x[:, :,
                           py + dy: py + dy + 2 * ho: 2,
                           px + dx: px + dx + 2 * wo: 2, :]   # (V,B,ho,wo,C)
                    cols.append(sl)
            tap = jnp.stack(cols, axis=-2)                    # (V,B,ho,wo,k*k,C)
            taps.append(tap.reshape(v, b * ho * wo, k * k * c))
    return jnp.stack(taps, axis=1)


def discriminator_forward(x, params):
    # x: (B, 3, 60, 60) float32 (NCHW, like PyTorch)
    batch = x.shape[0]
    f = jnp.transpose(x, (1, 0, 2, 3))[..., None].astype(jnp.bfloat16)

    def bf16(name):
        return params[name].astype(jnp.bfloat16)

    # conv block 1: pad=2, 5x5, 1 -> 24, relu, bn, 2x2 pool  -> 30x30
    fpad = jnp.pad(f, ((0, 0), (0, 0), (2, 2), (2, 2), (0, 0)))
    p = pool_ordered_patches(fpad, 5)                    # (V, 4, B*900, 25)
    y = conv_block(p, bf16("w1"), params["b1"], params["s1"], params["t1"])
    f = y.reshape(V, batch, 30, 30, 24)

    # conv block 2: 3x3, 24 -> 32 -> 14x14
    p = pool_ordered_patches(f, 3)                       # (V, 4, B*196, 216)
    y = conv_block(p, bf16("w2"), params["b2"], params["s2"], params["t2"])
    f = y.reshape(V, batch, 14, 14, 32)

    # conv block 3 + collapsed fc1/fc_out head + sigmoid (no activation between
    # fc1 and fc_out in the reference, so the collapse is exact).
    p = pool_ordered_patches(f, 3)                       # (V, 4, B*36, 288)
    wo_v = params["wo"].reshape(V, 16)                   # (V, 16)
    cvec = jnp.einsum("vkj,vj->vk", params["wf1"], wo_v)            # (V, 1728)
    ctile = jnp.tile(cvec.reshape(V, 1, 36, 48),
                     (1, batch, 1, 1)).reshape(V, batch * 36, 48)
    sel = jnp.repeat(jnp.eye(batch, dtype=jnp.float32), 36, axis=1)  # (B, B*36)
    hb = (jnp.sum(params["bf1"].reshape(V, 16) * wo_v)
          + params["bo"].reshape(())).reshape(1, 1)
    out = conv3_head(p, bf16("w3"), params["b3"], params["s3"], params["t3"],
                     ctile, sel, hb, batch)
    return out.reshape(-1)                               # == torch .view(-1)


def init_params(key):
    eps = 1e-5
    ks = iter(jax.random.split(key, 22))

    def conv_params(cin, cout, k):
        # PyTorch layout (V, Cout, Cin, k, k) -> matmul layout (V, k*k*Cin, Cout)
        w = jax.random.normal(next(ks), (V, cout, cin, k, k),
                              jnp.float32) / math.sqrt(cin * k * k)
        b = 0.05 * jax.random.normal(next(ks), (V, cout), jnp.float32)
        w_mat = jnp.transpose(w, (0, 3, 4, 2, 1)).reshape(V, k * k * cin, cout)
        return w_mat, b.reshape(V, 1, cout)

    def bn_params(c):
        gamma = 1.0 + 0.1 * jax.random.normal(next(ks), (V, c), jnp.float32)
        beta = 0.1 * jax.random.normal(next(ks), (V, c), jnp.float32)
        mean = 0.1 * jax.random.normal(next(ks), (V, c), jnp.float32)
        var = jax.random.uniform(next(ks), (V, c), jnp.float32, minval=0.5, maxval=1.5)
        scale = gamma / jnp.sqrt(var + eps)
        shift = beta - mean * scale
        return scale.reshape(V, 1, c), shift.reshape(V, 1, c)

    p = {}
    p["w1"], p["b1"] = conv_params(1, 24, 5)
    p["s1"], p["t1"] = bn_params(24)
    p["w2"], p["b2"] = conv_params(24, 32, 3)
    p["s2"], p["t2"] = bn_params(32)
    p["w3"], p["b3"] = conv_params(32, 48, 3)
    p["s3"], p["t3"] = bn_params(48)

    # fc1: PyTorch (V, 16, 48*6*6) flattened as (c, h, w) -> permute rows to (h, w, c)
    wf = jax.random.normal(next(ks), (V, 16, 48 * 6 * 6),
                           jnp.float32) / math.sqrt(48 * 6 * 6)
    p["wf1"] = jnp.transpose(wf.reshape(V, 16, 48, 6, 6),
                             (0, 3, 4, 2, 1)).reshape(V, 6 * 6 * 48, 16)
    p["bf1"] = (0.05 * jax.random.normal(next(ks), (V, 16), jnp.float32)).reshape(V, 1, 16)

    # fc_out: PyTorch (1, 48), column index = view*16 + j
    p["wo"] = jax.random.normal(next(ks), (1, 48), jnp.float32) / math.sqrt(48)
    p["bo"] = 0.05 * jax.random.normal(next(ks), (1, 1), jnp.float32)
    return p


if __name__ == "__main__":
    key = jax.random.PRNGKey(0)
    kx, kp = jax.random.split(key)
    B = 2
    # spatial 60x60 is required by the architecture (fc1 expects 48*6*6)
    x = jax.random.normal(kx, (B, 3, 60, 60), dtype=jnp.float32)
    params = init_params(kp)

    fwd = jax.jit(discriminator_forward)
    out = jax.block_until_ready(fwd(x, params))

    assert out.shape == (B,), out.shape
    assert bool(jnp.all(jnp.isfinite(out)))
    assert bool(jnp.all((out >= 0.0) & (out <= 1.0)))
    print("KERNEL_OK")
</pallas_src>

<mosaic_0001>
module attributes {stable_mosaic.version = 11 : i64} {
  func.func @conv_pool_kernel(%arg0: i32, %arg1: i32, %arg2: memref<1x4x464x25xbf16, #tpu.memory_space<vmem>>, %arg3: memref<1x25x24xbf16, #tpu.memory_space<vmem>>, %arg4: memref<1x1x24xf32, #tpu.memory_space<vmem>>, %arg5: memref<1x1x24xf32, #tpu.memory_space<vmem>>, %arg6: memref<1x1x24xf32, #tpu.memory_space<vmem>>, %arg7: memref<1x464x24xbf16, #tpu.memory_space<vmem>>) attributes {dimension_semantics = [#tpu.dimension_semantics<parallel>, #tpu.dimension_semantics<parallel>], iteration_bounds = array<i64: 3, 4>, scalar_prefetch = 0 : i64, scratch_operands = 0 : i64, tpu.core_type = #tpu.core_type<tc>, window_params = [{transform_indices = @transform_0, window_bounds = array<i64: 1, 4, 464, 25>}, {transform_indices = @transform_1, window_bounds = array<i64: 1, 25, 24>}, {transform_indices = @transform_2, window_bounds = array<i64: 1, 1, 24>}, {transform_indices = @transform_3, window_bounds = array<i64: 1, 1, 24>}, {transform_indices = @transform_4, window_bounds = array<i64: 1, 1, 24>}, {transform_indices = @transform_5, window_bounds = array<i64: 1, 464, 24>}]} {
    %c0 = arith.constant 0 : index
    %c0_0 = arith.constant 0 : index
    %c0_1 = arith.constant 0 : index
    %c0_2 = arith.constant 0 : index
    %0 = vector.load %arg2[%c0, %c0_0, %c0_1, %c0_2] : memref<1x4x464x25xbf16, #tpu.memory_space<vmem>>, vector<1x4x464x25xbf16>
    %1 = vector.shape_cast %0 : vector<1x4x464x25xbf16> to vector<4x464x25xbf16>
    %2 = vector.shape_cast %1 : vector<4x464x25xbf16> to vector<1856x25xbf16>
    %c0_3 = arith.constant 0 : index
    %c0_4 = arith.constant 0 : index
    %c0_5 = arith.constant 0 : index
    %3 = vector.load %arg3[%c0_3, %c0_4, %c0_5] : memref<1x25x24xbf16, #tpu.memory_space<vmem>>, vector<1x25x24xbf16>
    %4 = vector.shape_cast %3 : vector<1x25x24xbf16> to vector<25x24xbf16>
    %cst = arith.constant dense<0.000000e+00> : vector<1856x24xf32>
    %5 = tpu.matmul %2, %4, %cst {dimension_numbers = #tpu.dot_dimension_numbers<[1], [0], [0], [1], [0, 0, 1, 1], [], []>} : vector<1856x25xbf16>, vector<25x24xbf16>, vector<1856x24xf32> -> vector<1856x24xf32>
    %6 = vector.shape_cast %5 : vector<1856x24xf32> to vector<4x464x24xf32>
    %7 = vector.extract_strided_slice %6 {offsets = [0, 0, 0], sizes = [1, 464, 24], strides = [1, 1, 1]} : vector<4x464x24xf32> to vector<1x464x24xf32>
    %8 = vector.shape_cast %7 : vector<1x464x24xf32> to vector<464x24xf32>
    %9 = vector.extract_strided_slice %6 {offsets = [1, 0, 0], sizes = [1, 464, 24], strides = [1, 1, 1]} : vector<4x464x24xf32> to vector<1x464x24xf32>
    %10 = vector.shape_cast %9 : vector<1x464x24xf32> to vector<464x24xf32>
    %11 = vector.extract_strided_slice %6 {offsets = [2, 0, 0], sizes = [1, 464, 24], strides = [1, 1, 1]} : vector<4x464x24xf32> to vector<1x464x24xf32>
    %12 = vector.shape_cast %11 : vector<1x464x24xf32> to vector<464x24xf32>
    %13 = vector.extract_strided_slice %6 {offsets = [3, 0, 0], sizes = [1, 464, 24], strides = [1, 1, 1]} : vector<4x464x24xf32> to vector<1x464x24xf32>
    %14 = vector.shape_cast %13 : vector<1x464x24xf32> to vector<464x24xf32>
    %15 = arith.maximumf %8, %10 : vector<464x24xf32>
    %16 = arith.maximumf %12, %14 : vector<464x24xf32>
    %17 = arith.maximumf %15, %16 : vector<464x24xf32>
    %18 = arith.minimumf %8, %10 : vector<464x24xf32>
    %19 = arith.minimumf %12, %14 : vector<464x24xf32>
    %20 = arith.minimumf %18, %19 : vector<464x24xf32>
    %c0_6 = arith.constant 0 : index
    %c0_7 = arith.constant 0 : index
    %c0_8 = arith.constant 0 : index
    %21 = vector.load %arg5[%c0_6, %c0_7, %c0_8] : memref<1x1x24xf32, #tpu.memory_space<vmem>>, vector<1x1x24xf32>
    %22 = vector.shape_cast %21 : vector<1x1x24xf32> to vector<1x24xf32>
    %cst_9 = arith.constant 0.000000e+00 : f32
    %23 = vector.broadcast %cst_9 : f32 to vector<1x24xf32>
    %24 = arith.cmpf oge, %22, %23 : vector<1x24xf32>
    %25 = vector.shape_cast %24 : vector<1x24xi1> to vector<1x24xi1>
    %26 = vector.broadcast %25 : vector<1x24xi1> to vector<464x24xi1>
    %27 = arith.select %26, %17, %20 : vector<464x24xi1>, vector<464x24xf32>
    %c0_10 = arith.constant 0 : index
    %c0_11 = arith.constant 0 : index
    %c0_12 = arith.constant 0 : index
    %28 = vector.load %arg4[%c0_10, %c0_11, %c0_12] : memref<1x1x24xf32, #tpu.memory_space<vmem>>, vector<1x1x24xf32>
    %29 = vector.shape_cast %28 : vector<1x1x24xf32> to vector<1x24xf32>
    %30 = vector.broadcast %29 : vector<1x24xf32> to vector<464x24xf32>
    %31 = arith.addf %27, %30 : vector<464x24xf32>
    %cst_13 = arith.constant 0.000000e+00 : f32
    %32 = vector.broadcast %cst_13 : f32 to vector<464x24xf32>
    %33 = arith.maximumf %31, %32 : vector<464x24xf32>
    %34 = vector.broadcast %22 : vector<1x24xf32> to vector<464x24xf32>
    %35 = arith.mulf %33, %34 : vector<464x24xf32>
    %c0_14 = arith.constant 0 : index
    %c0_15 = arith.constant 0 : index
    %c0_16 = arith.constant 0 : index
    %36 = vector.load %arg6[%c0_14, %c0_15, %c0_16] : memref<1x1x24xf32, #tpu.memory_space<vmem>>, vector<1x1x24xf32>
    %37 = vector.shape_cast %36 : vector<1x1x24xf32> to vector<1x24xf32>
    %38 = vector.broadcast %37 : vector<1x24xf32> to vector<464x24xf32>
    %39 = arith.addf %35, %38 : vector<464x24xf32>
    %40 = arith.truncf %39 : vector<464x24xf32> to vector<464x24xbf16>
    %c0_17 = arith.constant 0 : index
    %c0_18 = arith.constant 0 : index
    %c0_19 = arith.constant 0 : index
    %41 = vector.load %arg7[%c0_17, %c0_18, %c0_19] : memref<1x464x24xbf16, #tpu.memory_space<vmem>>, vector<1x464x24xbf16>
    %42 = vector.shape_cast %41 : vector<1x464x24xbf16> to vector<464x24xbf16>
    %43 = vector.shape_cast %40 : vector<464x24xbf16> to vector<1x464x24xbf16>
    tpu.vector_store %arg7[%c0_17, %c0_18, %c0_19], %43 {strides = array<i32>} : memref<1x464x24xbf16, #tpu.memory_space<vmem>>, vector<1x464x24xbf16>,
    return
  }
  func.func @transform_0(%arg0: i32, %arg1: i32) -> (i32, i32, i32, i32) {
    %c0_i32 = arith.constant 0 : i32
    %c0_i32_0 = arith.constant 0 : i32
    %c0_i32_1 = arith.constant 0 : i32
    return %arg0, %c0_i32, %arg1, %c0_i32_0 : i32, i32, i32, i32
  }
  func.func @transform_1(%arg0: i32, %arg1: i32) -> (i32, i32, i32) {
    %c0_i32 = arith.constant 0 : i32
    %c0_i32_0 = arith.constant 0 : i32
    %c0_i32_1 = arith.constant 0 : i32
    return %arg0, %c0_i32, %c0_i32_0 : i32, i32, i32
  }
  func.func @transform_2(%arg0: i32, %arg1: i32) -> (i32, i32, i32) {
    %c0_i32 = arith.constant 0 : i32
    %c0_i32_0 = arith.constant 0 : i32
    %c0_i32_1 = arith.constant 0 : i32
    return %arg0, %c0_i32, %c0_i32_0 : i32, i32, i32
  }
  func.func @transform_3(%arg0: i32, %arg1: i32) -> (i32, i32, i32) {
    %c0_i32 = arith.constant 0 : i32
    %c0_i32_0 = arith.constant 0 : i32
    %c0_i32_1 = arith.constant 0 : i32
    return %arg0, %c0_i32, %c0_i32_0 : i32, i32, i32
  }
  func.func @transform_4(%arg0: i32, %arg1: i32) -> (i32, i32, i32) {
    %c0_i32 = arith.constant 0 : i32
    %c0_i32_0 = arith.constant 0 : i32
    %c0_i32_1 = arith.constant 0 : i32
    return %arg0, %c0_i32, %c0_i32_0 : i32, i32, i32
  }
  func.func @transform_5(%arg0: i32, %arg1: i32) -> (i32, i32, i32) {
    %c0_i32 = arith.constant 0 : i32
    %c0_i32_0 = arith.constant 0 : i32
    return %arg0, %arg1, %c0_i32 : i32, i32, i32
  }
}

module attributes {stable_mosaic.version = 11 : i64} {
  func.func @conv_pool_kernel(%arg0: i32, %arg1: i32, %arg2: memref<1x4x400x216xbf16, #tpu.memory_space<vmem>>, %arg3: memref<1x216x32xbf16, #tpu.memory_space<vmem>>, %arg4: memref<1x1x32xf32, #tpu.memory_space<vmem>>, %arg5: memref<1x1x32xf32, #tpu.memory_space<vmem>>, %arg6: memref<1x1x32xf32, #tpu.memory_space<vmem>>, %arg7: memref<1x400x32xbf16, #tpu.memory_space<vmem>>) attributes {dimension_semantics = [#tpu.dimension_semantics<parallel>, #tpu.dimension_semantics<parallel>], iteration_bounds = array<i64: 3, 1>, scalar_prefetch = 0 : i64, scratch_operands = 0 : i64, tpu.core_type = #tpu.core_type<tc>, window_params = [{transform_indices = @transform_0, window_bounds = array<i64: 1, 4, 400, 216>}, {transform_indices = @transform_1, window_bounds = array<i64: 1, 216, 32>}, {transform_indices = @transform_2, window_bounds = array<i64: 1, 1, 32>}, {transform_indices = @transform_3, window_bounds = array<i64: 1, 1, 32>}, {transform_indices = @transform_4, window_bounds = array<i64: 1, 1, 32>}, {transform_indices = @transform_5, window_bounds = array<i64: 1, 400, 32>}]} {
    %c0 = arith.constant 0 : index
    %c0_0 = arith.constant 0 : index
    %c0_1 = arith.constant 0 : index
    %c0_2 = arith.constant 0 : index
    %0 = vector.load %arg2[%c0, %c0_0, %c0_1, %c0_2] : memref<1x4x400x216xbf16, #tpu.memory_space<vmem>>, vector<1x4x400x216xbf16>
    %1 = vector.shape_cast %0 : vector<1x4x400x216xbf16> to vector<4x400x216xbf16>
    %2 = vector.shape_cast %1 : vector<4x400x216xbf16> to vector<1600x216xbf16>
    %c0_3 = arith.constant 0 : index
    %c0_4 = arith.constant 0 : index
    %c0_5 = arith.constant 0 : index
    %3 = vector.load %arg3[%c0_3, %c0_4, %c0_5] : memref<1x216x32xbf16, #tpu.memory_space<vmem>>, vector<1x216x32xbf16>
    %4 = vector.shape_cast %3 : vector<1x216x32xbf16> to vector<216x32xbf16>
    %cst = arith.constant dense<0.000000e+00> : vector<1600x32xf32>
    %5 = tpu.matmul %2, %4, %cst {dimension_numbers = #tpu.dot_dimension_numbers<[1], [0], [0], [1], [0, 0, 1, 1], [], []>} : vector<1600x216xbf16>, vector<216x32xbf16>, vector<1600x32xf32> -> vector<1600x32xf32>
    %6 = vector.shape_cast %5 : vector<1600x32xf32> to vector<4x400x32xf32>
    %7 = vector.extract_strided_slice %6 {offsets = [0, 0, 0], sizes = [1, 400, 32], strides = [1, 1, 1]} : vector<4x400x32xf32> to vector<1x400x32xf32>
    %8 = vector.shape_cast %7 : vector<1x400x32xf32> to vector<400x32xf32>
    %9 = vector.extract_strided_slice %6 {offsets = [1, 0, 0], sizes = [1, 400, 32], strides = [1, 1, 1]} : vector<4x400x32xf32> to vector<1x400x32xf32>
    %10 = vector.shape_cast %9 : vector<1x400x32xf32> to vector<400x32xf32>
    %11 = vector.extract_strided_slice %6 {offsets = [2, 0, 0], sizes = [1, 400, 32], strides = [1, 1, 1]} : vector<4x400x32xf32> to vector<1x400x32xf32>
    %12 = vector.shape_cast %11 : vector<1x400x32xf32> to vector<400x32xf32>
    %13 = vector.extract_strided_slice %6 {offsets = [3, 0, 0], sizes = [1, 400, 32], strides = [1, 1, 1]} : vector<4x400x32xf32> to vector<1x400x32xf32>
    %14 = vector.shape_cast %13 : vector<1x400x32xf32> to vector<400x32xf32>
    %15 = arith.maximumf %8, %10 : vector<400x32xf32>
    %16 = arith.maximumf %12, %14 : vector<400x32xf32>
    %17 = arith.maximumf %15, %16 : vector<400x32xf32>
    %18 = arith.minimumf %8, %10 : vector<400x32xf32>
    %19 = arith.minimumf %12, %14 : vector<400x32xf32>
    %20 = arith.minimumf %18, %19 : vector<400x32xf32>
    %c0_6 = arith.constant 0 : index
    %c0_7 = arith.constant 0 : index
    %c0_8 = arith.constant 0 : index
    %21 = vector.load %arg5[%c0_6, %c0_7, %c0_8] : memref<1x1x32xf32, #tpu.memory_space<vmem>>, vector<1x1x32xf32>
    %22 = vector.shape_cast %21 : vector<1x1x32xf32> to vector<1x32xf32>
    %cst_9 = arith.constant 0.000000e+00 : f32
    %23 = vector.broadcast %cst_9 : f32 to vector<1x32xf32>
    %24 = arith.cmpf oge, %22, %23 : vector<1x32xf32>
    %25 = vector.shape_cast %24 : vector<1x32xi1> to vector<1x32xi1>
    %26 = vector.broadcast %25 : vector<1x32xi1> to vector<400x32xi1>
    %27 = arith.select %26, %17, %20 : vector<400x32xi1>, vector<400x32xf32>
    %c0_10 = arith.constant 0 : index
    %c0_11 = arith.constant 0 : index
    %c0_12 = arith.constant 0 : index
    %28 = vector.load %arg4[%c0_10, %c0_11, %c0_12] : memref<1x1x32xf32, #tpu.memory_space<vmem>>, vector<1x1x32xf32>
    %29 = vector.shape_cast %28 : vector<1x1x32xf32> to vector<1x32xf32>
    %30 = vector.broadcast %29 : vector<1x32xf32> to vector<400x32xf32>
    %31 = arith.addf %27, %30 : vector<400x32xf32>
    %cst_13 = arith.constant 0.000000e+00 : f32
    %32 = vector.broadcast %cst_13 : f32 to vector<400x32xf32>
    %33 = arith.maximumf %31, %32 : vector<400x32xf32>
    %34 = vector.broadcast %22 : vector<1x32xf32> to vector<400x32xf32>
    %35 = arith.mulf %33, %34 : vector<400x32xf32>
    %c0_14 = arith.constant 0 : index
    %c0_15 = arith.constant 0 : index
    %c0_16 = arith.constant 0 : index
    %36 = vector.load %arg6[%c0_14, %c0_15, %c0_16] : memref<1x1x32xf32, #tpu.memory_space<vmem>>, vector<1x1x32xf32>
    %37 = vector.shape_cast %36 : vector<1x1x32xf32> to vector<1x32xf32>
    %38 = vector.broadcast %37 : vector<1x32xf32> to vector<400x32xf32>
    %39 = arith.addf %35, %38 : vector<400x32xf32>
    %40 = arith.truncf %39 : vector<400x32xf32> to vector<400x32xbf16>
    %c0_17 = arith.constant 0 : index
    %c0_18 = arith.constant 0 : index
    %c0_19 = arith.constant 0 : index
    %41 = vector.load %arg7[%c0_17, %c0_18, %c0_19] : memref<1x400x32xbf16, #tpu.memory_space<vmem>>, vector<1x400x32xbf16>
    %42 = vector.shape_cast %41 : vector<1x400x32xbf16> to vector<400x32xbf16>
    %43 = vector.shape_cast %40 : vector<400x32xbf16> to vector<1x400x32xbf16>
    tpu.vector_store %arg7[%c0_17, %c0_18, %c0_19], %43 {strides = array<i32>} : memref<1x400x32xbf16, #tpu.memory_space<vmem>>, vector<1x400x32xbf16>,
    return
  }
  func.func @transform_0(%arg0: i32, %arg1: i32) -> (i32, i32, i32, i32) {
    %c0_i32 = arith.constant 0 : i32
    %c0_i32_0 = arith.constant 0 : i32
    %c0_i32_1 = arith.constant 0 : i32
    return %arg0, %c0_i32, %arg1, %c0_i32_0 : i32, i32, i32, i32
  }
  func.func @transform_1(%arg0: i32, %arg1: i32) -> (i32, i32, i32) {
    %c0_i32 = arith.constant 0 : i32
    %c0_i32_0 = arith.constant 0 : i32
    %c0_i32_1 = arith.constant 0 : i32
    return %arg0, %c0_i32, %c0_i32_0 : i32, i32, i32
  }
  func.func @transform_2(%arg0: i32, %arg1: i32) -> (i32, i32, i32) {
    %c0_i32 = arith.constant 0 : i32
    %c0_i32_0 = arith.constant 0 : i32
    %c0_i32_1 = arith.constant 0 : i32
    return %arg0, %c0_i32, %c0_i32_0 : i32, i32, i32
  }
  func.func @transform_3(%arg0: i32, %arg1: i32) -> (i32, i32, i32) {
    %c0_i32 = arith.constant 0 : i32
    %c0_i32_0 = arith.constant 0 : i32
    %c0_i32_1 = arith.constant 0 : i32
    return %arg0, %c0_i32, %c0_i32_0 : i32, i32, i32
  }
  func.func @transform_4(%arg0: i32, %arg1: i32) -> (i32, i32, i32) {
    %c0_i32 = arith.constant 0 : i32
    %c0_i32_0 = arith.constant 0 : i32
    %c0_i32_1 = arith.constant 0 : i32
    return %arg0, %c0_i32, %c0_i32_0 : i32, i32, i32
  }
  func.func @transform_5(%arg0: i32, %arg1: i32) -> (i32, i32, i32) {
    %c0_i32 = arith.constant 0 : i32
    %c0_i32_0 = arith.constant 0 : i32
    return %arg0, %arg1, %c0_i32 : i32, i32, i32
  }
}

module attributes {stable_mosaic.version = 11 : i64} {
  func.func @conv3_head_kernel(%arg0: i32, %arg1: memref<1x4x72x288xbf16, #tpu.memory_space<vmem>>, %arg2: memref<1x288x48xbf16, #tpu.memory_space<vmem>>, %arg3: memref<1x1x48xf32, #tpu.memory_space<vmem>>, %arg4: memref<1x1x48xf32, #tpu.memory_space<vmem>>, %arg5: memref<1x1x48xf32, #tpu.memory_space<vmem>>, %arg6: memref<1x72x48xf32, #tpu.memory_space<vmem>>, %arg7: memref<2x72xf32, #tpu.memory_space<vmem>>, %arg8: memref<1x1xf32, #tpu.memory_space<vmem>>, %arg9: memref<2x1xf32, #tpu.memory_space<vmem>>) attributes {dimension_semantics = [#tpu.dimension_semantics<arbitrary>], iteration_bounds = array<i64: 3>, scalar_prefetch = 0 : i64, scratch_operands = 0 : i64, tpu.core_type = #tpu.core_type<tc>, window_params = [{transform_indices = @transform_0, window_bounds = array<i64: 1, 4, 72, 288>}, {transform_indices = @transform_1, window_bounds = array<i64: 1, 288, 48>}, {transform_indices = @transform_2, window_bounds = array<i64: 1, 1, 48>}, {transform_indices = @transform_3, window_bounds = array<i64: 1, 1, 48>}, {transform_indices = @transform_4, window_bounds = array<i64: 1, 1, 48>}, {transform_indices = @transform_5, window_bounds = array<i64: 1, 72, 48>}, {pipeline_mode = #tpu.pipeline_mode<synchronous>, transform_indices = @transform_6, window_bounds = array<i64: 2, 72>}, {pipeline_mode = #tpu.pipeline_mode<synchronous>, transform_indices = @transform_7, window_bounds = array<i64: 1, 1>}, {pipeline_mode = #tpu.pipeline_mode<synchronous>, transform_indices = @transform_8, window_bounds = array<i64: 2, 1>}]} {
    %c0_i32 = arith.constant 0 : i32
    %0 = arith.cmpi eq, %arg0, %c0_i32 : i32
    %1 = arith.extui %0 : i1 to i32
    %c0_i32_0 = arith.constant 0 : i32
    %2 = arith.cmpi ne, %1, %c0_i32_0 : i32
    scf.if %2 {
      %cst_42 = arith.constant 0.000000e+00 : f32
      %55 = vector.broadcast %cst_42 : f32 to vector<2x1xf32>
      %c0_43 = arith.constant 0 : index
      %c0_44 = arith.constant 0 : index
      %56 = vector.load %arg9[%c0_43, %c0_44] : memref<2x1xf32, #tpu.memory_space<vmem>>, vector<2x1xf32>
      tpu.vector_store %arg9[%c0_43, %c0_44], %55 {strides = array<i32>} : memref<2x1xf32, #tpu.memory_space<vmem>>, vector<2x1xf32>,
    } else {
    }
    %c0 = arith.constant 0 : index
    %c0_1 = arith.constant 0 : index
    %c0_2 = arith.constant 0 : index
    %3 = vector.load %arg2[%c0, %c0_1, %c0_2] : memref<1x288x48xbf16, #tpu.memory_space<vmem>>, vector<1x288x48xbf16>
    %4 = vector.shape_cast %3 : vector<1x288x48xbf16> to vector<288x48xbf16>
    %c0_3 = arith.constant 0 : index
    %c0_4 = arith.constant 0 : index
    %c0_5 = arith.constant 0 : index
    %c0_6 = arith.constant 0 : index
    %5 = vector.load %arg1[%c0_3, %c0_4, %c0_5, %c0_6] : memref<1x4x72x288xbf16, #tpu.memory_space<vmem>>, vector<1x1x72x288xbf16>
    %6 = vector.shape_cast %5 : vector<1x1x72x288xbf16> to vector<72x288xbf16>
    %cst = arith.constant dense<0.000000e+00> : vector<72x48xf32>
    %7 = tpu.matmul %6, %4, %cst {dimension_numbers = #tpu.dot_dimension_numbers<[1], [0], [0], [1], [0, 0, 1, 1], [], []>} : vector<72x288xbf16>, vector<288x48xbf16>, vector<72x48xf32> -> vector<72x48xf32>
    %c0_7 = arith.constant 0 : index
    %c1 = arith.constant 1 : index
    %c0_8 = arith.constant 0 : index
    %c0_9 = arith.constant 0 : index
    %8 = vector.load %arg1[%c0_7, %c1, %c0_8, %c0_9] : memref<1x4x72x288xbf16, #tpu.memory_space<vmem>>, vector<1x1x72x288xbf16>
    %9 = vector.shape_cast %8 : vector<1x1x72x288xbf16> to vector<72x288xbf16>
    %cst_10 = arith.constant dense<0.000000e+00> : vector<72x48xf32>
    %10 = tpu.matmul %9, %4, %cst_10 {dimension_numbers = #tpu.dot_dimension_numbers<[1], [0], [0], [1], [0, 0, 1, 1], [], []>} : vector<72x288xbf16>, vector<288x48xbf16>, vector<72x48xf32> -> vector<72x48xf32>
    %11 = arith.maximumf %7, %10 : vector<72x48xf32>
    %12 = arith.minimumf %7, %10 : vector<72x48xf32>
    %c0_11 = arith.constant 0 : index
    %c2 = arith.constant 2 : index
    %c0_12 = arith.constant 0 : index
    %c0_13 = arith.constant 0 : index
    %13 = vector.load %arg1[%c0_11, %c2, %c0_12, %c0_13] : memref<1x4x72x288xbf16, #tpu.memory_space<vmem>>, vector<1x1x72x288xbf16>
    %14 = vector.shape_cast %13 : vector<1x1x72x288xbf16> to vector<72x288xbf16>
    %cst_14 = arith.constant dense<0.000000e+00> : vector<72x48xf32>
    %15 = tpu.matmul %14, %4, %cst_14 {dimension_numbers = #tpu.dot_dimension_numbers<[1], [0], [0], [1], [0, 0, 1, 1], [], []>} : vector<72x288xbf16>, vector<288x48xbf16>, vector<72x48xf32> -> vector<72x48xf32>
    %16 = arith.maximumf %11, %15 : vector<72x48xf32>
    %17 = arith.minimumf %12, %15 : vector<72x48xf32>
    %c0_15 = arith.constant 0 : index
    %c3 = arith.constant 3 : index
    %c0_16 = arith.constant 0 : index
    %c0_17 = arith.constant 0 : index
    %18 = vector.load %arg1[%c0_15, %c3, %c0_16, %c0_17] : memref<1x4x72x288xbf16, #tpu.memory_space<vmem>>, vector<1x1x72x288xbf16>
    %19 = vector.shape_cast %18 : vector<1x1x72x288xbf16> to vector<72x288xbf16>
    %cst_18 = arith.constant dense<0.000000e+00> : vector<72x48xf32>
    %20 = tpu.matmul %19, %4, %cst_18 {dimension_numbers = #tpu.dot_dimension_numbers<[1], [0], [0], [1], [0, 0, 1, 1], [], []>} : vector<72x288xbf16>, vector<288x48xbf16>, vector<72x48xf32> -> vector<72x48xf32>
    %21 = arith.maximumf %16, %20 : vector<72x48xf32>
    %22 = arith.minimumf %17, %20 : vector<72x48xf32>
    %c0_19 = arith.constant 0 : index
    %c0_20 = arith.constant 0 : index
    %c0_21 = arith.constant 0 : index
    %23 = vector.load %arg4[%c0_19, %c0_20, %c0_21] : memref<1x1x48xf32, #tpu.memory_space<vmem>>, vector<1x1x48xf32>
    %24 = vector.shape_cast %23 : vector<1x1x48xf32> to vector<1x48xf32>
    %cst_22 = arith.constant 0.000000e+00 : f32
    %25 = vector.broadcast %cst_22 : f32 to vector<1x48xf32>
    %26 = arith.cmpf oge, %24, %25 : vector<1x48xf32>
    %27 = vector.shape_cast %26 : vector<1x48xi1> to vector<1x48xi1>
    %28 = vector.broadcast %27 : vector<1x48xi1> to vector<72x48xi1>
    %29 = arith.select %28, %21, %22 : vector<72x48xi1>, vector<72x48xf32>
    %c0_23 = arith.constant 0 : index
    %c0_24 = arith.constant 0 : index
    %c0_25 = arith.constant 0 : index
    %30 = vector.load %arg3[%c0_23, %c0_24, %c0_25] : memref<1x1x48xf32, #tpu.memory_space<vmem>>, vector<1x1x48xf32>
    %31 = vector.shape_cast %30 : vector<1x1x48xf32> to vector<1x48xf32>
    %32 = vector.broadcast %31 : vector<1x48xf32> to vector<72x48xf32>
    %33 = arith.addf %29, %32 : vector<72x48xf32>
    %cst_26 = arith.constant 0.000000e+00 : f32
    %34 = vector.broadcast %cst_26 : f32 to vector<72x48xf32>
    %35 = arith.maximumf %33, %34 : vector<72x48xf32>
    %36 = vector.broadcast %24 : vector<1x48xf32> to vector<72x48xf32>
    %37 = arith.mulf %35, %36 : vector<72x48xf32>
    %c0_27 = arith.constant 0 : index
    %c0_28 = arith.constant 0 : index
    %c0_29 = arith.constant 0 : index
    %38 = vector.load %arg5[%c0_27, %c0_28, %c0_29] : memref<1x1x48xf32, #tpu.memory_space<vmem>>, vector<1x1x48xf32>
    %39 = vector.shape_cast %38 : vector<1x1x48xf32> to vector<1x48xf32>
    %40 = vector.broadcast %39 : vector<1x48xf32> to vector<72x48xf32>
    %41 = arith.addf %37, %40 : vector<72x48xf32>
    %c0_30 = arith.constant 0 : index
    %c0_31 = arith.constant 0 : index
    %c0_32 = arith.constant 0 : index
    %42 = vector.load %arg6[%c0_30, %c0_31, %c0_32] : memref<1x72x48xf32, #tpu.memory_space<vmem>>, vector<1x72x48xf32>
    %43 = vector.shape_cast %42 : vector<1x72x48xf32> to vector<72x48xf32>
    %44 = arith.mulf %41, %43 : vector<72x48xf32>
    %c0_33 = arith.constant 0 : index
    %c0_34 = arith.constant 0 : index
    %45 = vector.load %arg7[%c0_33, %c0_34] : memref<2x72xf32, #tpu.memory_space<vmem>>, vector<2x72xf32>
    %cst_35 = arith.constant dense<0.000000e+00> : vector<2x48xf32>
    %46 = tpu.matmul %45, %44, %cst_35 {dimension_numbers = #tpu.dot_dimension_numbers<[1], [0], [0], [1], [0, 0, 1, 1], [], []>} : vector<2x72xf32>, vector<72x48xf32>, vector<2x48xf32> -> vector<2x48xf32>
    %c0_36 = arith.constant 0 : index
    %c0_37 = arith.constant 0 : index
    %47 = vector.load %arg9[%c0_36, %c0_37] : memref<2x1xf32, #tpu.memory_space<vmem>>, vector<2x1xf32>
    %cst_38 = arith.constant dense<0.000000e+00> : vector<2xf32>
    %48 = vector.multi_reduction <add>, %46, %cst_38 [1] : vector<2x48xf32> to vector<2xf32>
    %49 = vector.shape_cast %48 : vector<2xf32> to vector<2x1xf32>
    %50 = arith.addf %47, %49 : vector<2x1xf32>
    %c0_39 = arith.constant 0 : index
    %c0_40 = arith.constant 0 : index
    %51 = vector.load %arg9[%c0_39, %c0_40] : memref<2x1xf32, #tpu.memory_space<vmem>>, vector<2x1xf32>
    tpu.vector_store %arg9[%c0_39, %c0_40], %50 {strides = array<i32>} : memref<2x1xf32, #tpu.memory_space<vmem>>, vector<2x1xf32>,
    %c2_i32 = arith.constant 2 : i32
    %52 = arith.cmpi eq, %arg0, %c2_i32 : i32
    %53 = arith.extui %52 : i1 to i32
    %c0_i32_41 = arith.constant 0 : i32
    %54 = arith.cmpi ne, %53, %c0_i32_41 : i32
    scf.if %54 {
      %c0_42 = arith.constant 0 : index
      %c0_43 = arith.constant 0 : index
      %55 = vector.load %arg9[%c0_42, %c0_43] : memref<2x1xf32, #tpu.memory_space<vmem>>, vector<2x1xf32>
      %c0_44 = arith.constant 0 : index
      %c0_45 = arith.constant 0 : index
      %56 = vector.load %arg8[%c0_44, %c0_45] : memref<1x1xf32, #tpu.memory_space<vmem>>, vector<1x1xf32>
      %57 = vector.broadcast %56 : vector<1x1xf32> to vector<2x1xf32>
      %58 = arith.addf %55, %57 : vector<2x1xf32>
      %59 = arith.negf %58 : vector<2x1xf32>
      %60 = math.exp %59 : vector<2x1xf32>
      %cst_46 = arith.constant 1.000000e+00 : f32
      %61 = vector.broadcast %cst_46 : f32 to vector<2x1xf32>
      %62 = arith.addf %61, %60 : vector<2x1xf32>
      %63 = arith.divf %61, %62 : vector<2x1xf32>
      %c0_47 = arith.constant 0 : index
      %c0_48 = arith.constant 0 : index
      %64 = vector.load %arg9[%c0_47, %c0_48] : memref<2x1xf32, #tpu.memory_space<vmem>>, vector<2x1xf32>
      tpu.vector_store %arg9[%c0_47, %c0_48], %63 {strides = array<i32>} : memref<2x1xf32, #tpu.memory_space<vmem>>, vector<2x1xf32>,
    } else {
    }
    return
  }
  func.func @transform_0(%arg0: i32) -> (i32, i32, i32, i32) {
    %c0_i32 = arith.constant 0 : i32
    %c0_i32_0 = arith.constant 0 : i32
    %c0_i32_1 = arith.constant 0 : i32
    %c0_i32_2 = arith.constant 0 : i32
    return %arg0, %c0_i32, %c0_i32_0, %c0_i32_1 : i32, i32, i32, i32
  }
  func.func @transform_1(%arg0: i32) -> (i32, i32, i32) {
    %c0_i32 = arith.constant 0 : i32
    %c0_i32_0 = arith.constant 0 : i32
    %c0_i32_1 = arith.constant 0 : i32
    return %arg0, %c0_i32, %c0_i32_0 : i32, i32, i32
  }
  func.func @transform_2(%arg0: i32) -> (i32, i32, i32) {
    %c0_i32 = arith.constant 0 : i32
    %c0_i32_0 = arith.constant 0 : i32
    %c0_i32_1 = arith.constant 0 : i32
    return %arg0, %c0_i32, %c0_i32_0 : i32, i32, i32
  }
  func.func @transform_3(%arg0: i32) -> (i32, i32, i32) {
    %c0_i32 = arith.constant 0 : i32
    %c0_i32_0 = arith.constant 0 : i32
    %c0_i32_1 = arith.constant 0 : i32
    return %arg0, %c0_i32, %c0_i32_0 : i32, i32, i32
  }
  func.func @transform_4(%arg0: i32) -> (i32, i32, i32) {
    %c0_i32 = arith.constant 0 : i32
    %c0_i32_0 = arith.constant 0 : i32
    %c0_i32_1 = arith.constant 0 : i32
    return %arg0, %c0_i32, %c0_i32_0 : i32, i32, i32
  }
  func.func @transform_5(%arg0: i32) -> (i32, i32, i32) {
    %c0_i32 = arith.constant 0 : i32
    %c0_i32_0 = arith.constant 0 : i32
    %c0_i32_1 = arith.constant 0 : i32
    return %arg0, %c0_i32, %c0_i32_0 : i32, i32, i32
  }
  func.func @transform_6(%arg0: i32) -> (i32, i32) {
    %c0_i32 = arith.constant 0 : i32
    %c0_i32_0 = arith.constant 0 : i32
    %c0_i32_1 = arith.constant 0 : i32
    return %c0_i32, %c0_i32_0 : i32, i32
  }
  func.func @transform_7(%arg0: i32) -> (i32, i32) {
    %c0_i32 = arith.constant 0 : i32
    %c0_i32_0 = arith.constant 0 : i32
    %c0_i32_1 = arith.constant 0 : i32
    return %c0_i32, %c0_i32_0 : i32, i32
  }
  func.func @transform_8(%arg0: i32) -> (i32, i32) {
    %c0_i32 = arith.constant 0 : i32
    %c0_i32_0 = arith.constant 0 : i32
    %c0_i32_1 = arith.constant 0 : i32
    return %c0_i32, %c0_i32_0 : i32, i32
  }
}

</mosaic_0001>

<llo_original>
// kernel: discriminator_forward.3
$region0: #{discriminator_forward.3}
  #allocation0 [shape = 'u32[]', space=smem, size = 0x4, offset = 0x4, fixed_abs, tag = 'smem constant byte address 0x4 - core index']
  #allocation1 [shape = 'u32[144,128]{1,0:T(1,128)}', space=vmem, size = 0x12000, scoped, tag = 'internal scratch']
  %s0 = inlined_call_operand.vmem [shape: bf16[3,4,1856,25], index: 0, kind: input, shape index: {}]
  %s1 = inlined_call_operand.vmem [shape: bf16[3,25,24], index: 1, kind: input, shape index: {}]
  %s2 = inlined_call_operand.vmem [shape: f32[3,1,24], index: 2, kind: input, shape index: {}]
  %s3 = inlined_call_operand.vmem [shape: f32[3,1,24], index: 3, kind: input, shape index: {}]
  %s4 = inlined_call_operand.vmem [shape: f32[3,1,24], index: 4, kind: input, shape index: {}]
  %s5 = inlined_call_operand.vmem [shape: bf16[3,1856,24], index: 5, kind: output, shape index: {}]
  %s6 = sld [smem:[#allocation0]]
  $region94: #{discriminator_forward.3} parent=0
    _
  %s8 = ssub.s32 1, %s6
  %s9 = scalar_select 0, %s8, %s6
  $region1: #{discriminator_forward.3} parent=0
    #allocation2 [shape = 'u8[950272]{0}', space=vmem, size = 0xe8000, scoped, tag = 'input window, operand 0']
    loop: start=0, step=1, limit=14
    $region2: #{discriminator_forward.3} parent=1 // loop_pre_header
      _
    $region3: #{discriminator_forward.3} parent=1 // loop_header
      %s11 = sphi 0, %s15
      %p12 = scmp.ge.s32.totalorder %s11, 14
      %s18 = sphi 0, %s30
      %s19 = sphi 0, %s26
      %s20 = sphi 0, %s18
      %s21 = sphi 0, %s19
      %s22 = sphi 0, %s20
      %s23 = sphi 0, %s21
      %s35 = sphi 0, %s37
      %s38 = sphi 0, %s35
      %s39 = sphi 0, %s38
      %s55 = sphi 0, %s39
      %s61 = sphi 0, %s63
      %s64 = sphi 0, %s61
      %s65 = sphi 0, %s64
      %s81 = sphi 0, %s65
      %s87 = sphi 0, %s89
      %s90 = sphi 0, %s87
      %s91 = sphi 0, %s90
      %s107 = sphi 0, %s91
      %s113 = sphi 0, %s115
      %s116 = sphi 0, %s113
      %s117 = sphi 0, %s116
      %s133 = sphi 0, %s117
      %s139 = sphi 0, %s141
      %s142 = sphi 0, %s139
      %s143 = sphi 0, %s142
      %s159 = sphi 0, %s143
      %s167 = sphi 0, %s169
      %s170 = sphi 0, %s167
      %s171 = sphi 0, %s170
      %s187 = sphi 0, %s171
    $region4: #{discriminator_forward.3} parent=1 // loop_header_branch
      %14 = sbr.rel (%p12) target = $region8
    $region5: #{discriminator_forward.3} parent=1 // loop_body
      %s16 = ssub.s32 %s11, 1
      %s17 = ssub.s32 %s11, 2
      %s24 = sadd.s32 1, %s19
      %p25 = scmp.ge.s32.totalorder %s24, 4
      %s26 = scalar_select %p25, 0, %s24
      %s27 = sadd.s32 1, %s18
      %s28 = scalar_select %p25, %s27, %s18
      %p29 = scmp.ge.s32.totalorder %s28, 3
      %s30 = scalar_select %p29, 0, %s28
      %s31 = ssub.s32 %s18, %s30
      %s32 = ssub.s32 %s19, %s26
      %s33 = sor.u32 %s31, %s32
      %p34 = scmp.eq.s32.totalorder %s33, 0
      %s36 = sadd.s32 %s35, 1
      %s37 = scalar_select %p34, %s35, %s36
      %p40 = pneg %p34
      %p41 = scmp.eq.s32.totalorder %s11, 11
      %p42 = por %p40, %p41
      %p43 = scmp.ne.s32.totalorder %s35, %s38
      %p44 = scmp.eq.s32.totalorder %s11, 0
      %p45 = por %p43, %p44
      %p46 = scmp.ne.s32.totalorder %s35, %s38
      %p47 = scmp.eq.s32.totalorder %s16, 11
      %p48 = por %p46, %p47
      %p49 = scmp.ne.s32.totalorder %s38, %s39
      %p50 = scmp.eq.s32.totalorder %s16, 0
      %p51 = por %p49, %p50
      %p52 = scmp.ne.s32.totalorder %s38, %s39
      %p53 = scmp.eq.s32.totalorder %s17, 11
      %p54 = por %p52, %p53
      %p56 = scmp.ne.s32.totalorder %s39, %s55
      %p57 = scmp.eq.s32.totalorder %s17, 0
      %p58 = por %p56, %p57
      %s59 = ssub.s32 %s18, %s30
      %p60 = scmp.eq.s32.totalorder %s59, 0
      %s62 = sadd.s32 %s61, 1
      %s63 = scalar_select %p60, %s61, %s62
      %p66 = pneg %p60
      %p67 = scmp.eq.s32.totalorder %s11, 11
      %p68 = por %p66, %p67
      %p69 = scmp.ne.s32.totalorder %s61, %s64
      %p70 = scmp.eq.s32.totalorder %s11, 0
      %p71 = por %p69, %p70
      %p72 = scmp.ne.s32.totalorder %s61, %s64
      %p73 = scmp.eq.s32.totalorder %s16, 11
      %p74 = por %p72, %p73
      %p75 = scmp.ne.s32.totalorder %s64, %s65
      %p76 = scmp.eq.s32.totalorder %s16, 0
      %p77 = por %p75, %p76
      %p78 = scmp.ne.s32.totalorder %s64, %s65
      %p79 = scmp.eq.s32.totalorder %s17, 11
      %p80 = por %p78, %p79
      %p82 = scmp.ne.s32.totalorder %s65, %s81
      %p83 = scmp.eq.s32.totalorder %s17, 0
      %p84 = por %p82, %p83
      %s85 = ssub.s32 %s18, %s30
      %p86 = scmp.eq.s32.totalorder %s85, 0
      %s88 = sadd.s32 %s87, 1
      %s89 = scalar_select %p86, %s87, %s88
      %p92 = pneg %p86
      %p93 = scmp.eq.s32.totalorder %s11, 11
      %p94 = por %p92, %p93
      %p95 = scmp.ne.s32.totalorder %s87, %s90
      %p96 = scmp.eq.s32.totalorder %s11, 0
      %p97 = por %p95, %p96
      %p98 = scmp.ne.s32.totalorder %s87, %s90
      %p99 = scmp.eq.s32.totalorder %s16, 11
      %p100 = por %p98, %p99
      %p101 = scmp.ne.s32.totalorder %s90, %s91
      %p102 = scmp.eq.s32.totalorder %s16, 0
      %p103 = por %p101, %p102
      %p104 = scmp.ne.s32.totalorder %s90, %s91
      %p105 = scmp.eq.s32.totalorder %s17, 11
      %p106 = por %p104, %p105
      %p108 = scmp.ne.s32.totalorder %s91, %s107
      %p109 = scmp.eq.s32.totalorder %s17, 0
      %p110 = por %p108, %p109
      %s111 = ssub.s32 %s18, %s30
      %p112 = scmp.eq.s32.totalorder %s111, 0
      %s114 = sadd.s32 %s113, 1
      %s115 = scalar_select %p112, %s113, %s114
      %p118 = pneg %p112
      %p119 = scmp.eq.s32.totalorder %s11, 11
      %p120 = por %p118, %p119
      %p121 = scmp.ne.s32.totalorder %s113, %s116
      %p122 = scmp.eq.s32.totalorder %s11, 0
      %p123 = por %p121, %p122
      %p124 = scmp.ne.s32.totalorder %s113, %s116
      %p125 = scmp.eq.s32.totalorder %s16, 11
      %p126 = por %p124, %p125
      %p127 = scmp.ne.s32.totalorder %s116, %s117
      %p128 = scmp.eq.s32.totalorder %s16, 0
      %p129 = por %p127, %p128
      %p130 = scmp.ne.s32.totalorder %s116, %s117
      %p131 = scmp.eq.s32.totalorder %s17, 11
      %p132 = por %p130, %p131
      %p134 = scmp.ne.s32.totalorder %s117, %s133
      %p135 = scmp.eq.s32.totalorder %s17, 0
      %p136 = por %p134, %p135
      %s137 = ssub.s32 %s18, %s30
      %p138 = scmp.eq.s32.totalorder %s137, 0
      %s140 = sadd.s32 %s139, 1
      %s141 = scalar_select %p138, %s139, %s140
      %p144 = pneg %p138
      %p145 = scmp.eq.s32.totalorder %s11, 11
      %p146 = por %p144, %p145
      %p147 = scmp.ne.s32.totalorder %s139, %s142
      %p148 = scmp.eq.s32.totalorder %s11, 0
      %p149 = por %p147, %p148
      %p150 = scmp.ne.s32.totalorder %s139, %s142
      %p151 = scmp.eq.s32.totalorder %s16, 11
      %p152 = por %p150, %p151
      %p153 = scmp.ne.s32.totalorder %s142, %s143
      %p154 = scmp.eq.s32.totalorder %s16, 0
      %p155 = por %p153, %p154
      %p156 = scmp.ne.s32.totalorder %s142, %s143
      %p157 = scmp.eq.s32.totalorder %s17, 11
      %p158 = por %p156, %p157
      %p160 = scmp.ne.s32.totalorder %s143, %s159
      %p161 = scmp.eq.s32.totalorder %s17, 0
      %p162 = por %p160, %p161
      %s163 = ssub.s32 %s18, %s30
      %s164 = ssub.s32 %s19, %s26
      %s165 = sor.u32 %s163, %s164
      %p166 = scmp.eq.s32.totalorder %s165, 0
      %s168 = sadd.s32 %s167, 1
      %s169 = scalar_select %p166, %s167, %s168
      %p172 = pneg %p166
      %p173 = scmp.eq.s32.totalorder %s11, 11
      %p174 = por %p172, %p173
      %p175 = scmp.ne.s32.totalorder %s167, %s170
      %p176 = scmp.eq.s32.totalorder %s11, 0
      %p177 = por %p175, %p176
      %p178 = scmp.ne.s32.totalorder %s167, %s170
      %p179 = scmp.eq.s32.totalorder %s16, 11
      %p180 = por %p178, %p179
      %p181 = scmp.ne.s32.totalorder %s170, %s171
      %p182 = scmp.eq.s32.totalorder %s16, 0
      %p183 = por %p181, %p182
      %p184 = scmp.ne.s32.totalorder %s170, %s171
      %p185 = scmp.eq.s32.totalorder %s17, 11
      %p186 = por %p184, %p185
      %p188 = scmp.ne.s32.totalorder %s171, %s187
      %p189 = scmp.eq.s32.totalorder %s17, 0
      %p190 = por %p188, %p189
      %p191 = scmp.le.s32.totalorder 1, %s11
      %p192 = scmp.lt.s32.totalorder %s11, 13
      %p193 = pnand %p191, %p192
      %p194 = pneg %p193
      // Predicated region
      $region9: #{discriminator_forward.3} parent=5 // pred_check
        _
      $region10: #{discriminator_forward.3} parent=5 // pred_check_branch
        %196 = sbr.rel (%p193) target = $region12
      $region11: #{discriminator_forward.3} parent=5 // pred_region
        %s197 = ssub.s32 %s11, 1
      $region12: #{discriminator_forward.3} parent=5 // pred_fallthru
        _
      %p198 = scmp.lt.s32.totalorder %s11, 12
      // Predicated region
      $region13: #{discriminator_forward.3} parent=5 // pred_check
        %p199 = pneg %p198
      $region14: #{discriminator_forward.3} parent=5 // pred_check_branch
        %201 = sbr.rel (%p199) target = $region16
      $region15: #{discriminator_forward.3} parent=5 // pred_region
        // Predicated region
        $region17: #{discriminator_forward.3} parent=15 // pred_check
          %p202 = pneg %p45
        $region18: #{discriminator_forward.3} parent=15 // pred_check_branch
          %204 = sbr.rel (%p202) target = $region20
        $region19: #{discriminator_forward.3} parent=15 // pred_region
          %s205 = sand.u32 %s35, 1
          %s206 = sand.u32 %s35, 1
          %s207 = smul.addr %s206, 928
          %s208 = scalar_lea.vmem [#allocation2], %s207
          %s209 = smul.u32 58, %s19
          %s210 = smul.addr %s18, 928
          %s211 = sadd.s32 %s209, %s210
          %s212 = smul.addr %s211, 4
          %s213 = scalar_lea.vmem %s0, %s212
          // Predicated region
          $region21: #{discriminator_forward.3} parent=19 // pred_check
            _
          $region22: #{discriminator_forward.3} parent=19 // pred_check_branch
            %215 = sbr.rel (0) target = $region24
          $region23: #{discriminator_forward.3} parent=19 // pred_region
            // Predicated region
            $region25: #{discriminator_forward.3} parent=23 // pred_check
              _
            $region26: #{discriminator_forward.3} parent=23 // pred_check_branch
              %217 = sbr.rel target = $region28
            $region27: #{discriminator_forward.3} parent=23 // pred_region
              // Predicated region
              $region40: #{discriminator_forward.3} parent=27 // pred_check
                _
              $region41: #{discriminator_forward.3} parent=27 // pred_check_branch
                %694 = sbr.rel (0) target = $region43
              $region42: #{discriminator_forward.3} parent=27 // pred_region
                loop: start=0, step=1, limit=1
                $region44: #{discriminator_forward.3} parent=42 // loop_pre_header
                  _
                $region45: #{discriminator_forward.3} parent=42 // loop_header
                  %s696 = sphi 0, %s700
                  %p697 = scmp.ge.s32.totalorder %s696, 1
                  %s701 = sphi %s213, %s213
                  %s702 = sphi %s208, %s208
                $region46: #{discriminator_forward.3} parent=42 // loop_header_branch
                  %699 = sbr.rel (%p697) target = $region50
                $region47: #{discriminator_forward.3} parent=42 // loop_body
                  _
                $region48: #{discriminator_forward.3} parent=42 // loop_footer
                  %s700 = sadd.s32 1, %s696
                $region49: #{discriminator_forward.3} parent=42 // loop_footer_branch
                  %695 = sbr.rel target = $region45
                $region50: #{discriminator_forward.3} parent=42 // loop_exit
                  _
                loop: start=0, step=1, limit=1
                $region51: #{discriminator_forward.3} parent=42 // loop_pre_header
                  _
                $region52: #{discriminator_forward.3} parent=42 // loop_header
                  %s705 = sphi 0, %s709
                  %p706 = scmp.ge.s32.totalorder %s705, 1
                  %s710 = sphi %s213, %s213
                  %s711 = sphi %s208, %s208
                $region53: #{discriminator_forward.3} parent=42 // loop_header_branch
                  %708 = sbr.rel (%p706) target = $region57
                $region54: #{discriminator_forward.3} parent=42 // loop_body
                  %v712 = vld [vmem:[%s710] sm:$0xf]
                  %713 = vst [vmem:[%s711] sm:$0xf] %v712
                  %v714 = vld [vmem:[%s710 + $0x4] sm:$0xf]
                  %715 = vst [vmem:[%s711 + $0x4] sm:$0xf] %v714
                  %v716 = vld [vmem:[%s710 + $0x8] sm:$0xf]
                  %717 = vst [vmem:[%s711 + $0x8] sm:$0xf] %v716
                  %v718 = vld [vmem:[%s710 + $0xc] sm:$0xf]
                  %719 = vst [vmem:[%s711 + $0xc] sm:$0xf] %v718
                  %v720 = vld [vmem:[%s710 + $0x10] sm:$0xf]
                  %721 = vst [vmem:[%s711 + $0x10] sm:$0xf] %v720
                  %v722 = vld [vmem:[%s710 + $0x14] sm:$0xf]
                  %723 = vst [vmem:[%s711 + $0x14] sm:$0xf] %v722
                  %v724 = vld [vmem:[%s710 + $0x18] sm:$0xf]
                  %725 = vst [vmem:[%s711 + $0x18] sm:$0xf] %v724
                  %v726 = vld [vmem:[%s710 + $0x1c] sm:$0xf]
                  %727 = vst [vmem:[%s711 + $0x1c] sm:$0xf] %v726
                  %v728 = vld [vmem:[%s710 + $0x20] sm:$0xf]
                  %729 = vst [vmem:[%s711 + $0x20] sm:$0xf] %v728
                  %v730 = vld [vmem:[%s710 + $0x24] sm:$0xf]
                  %731 = vst [vmem:[%s711 + $0x24] sm:$0xf] %v730
                  %v732 = vld [vmem:[%s710 + $0x28] sm:$0xf]
                  %733 = vst [vmem:[%s711 + $0x28] sm:$0xf] %v732
                  %v734 = vld [vmem:[%s710 + $0x2c] sm:$0xf]
                  %735 = vst [vmem:[%s711 + $0x2c] sm:$0xf] %v734
                  %v736 = vld [vmem:[%s710 + $0x30] sm:$0xf]
                  %737 = vst [vmem:[%s711 + $0x30] sm:$0xf] %v736
                  %v738 = vld [vmem:[%s710 + $0x34] sm:$0xf]
                  %739 = vst [vmem:[%s711 + $0x34] sm:$0xf] %v738
                  %v740 = vld [vmem:[%s710 + $0x38] sm:$0xf]
                  %741 = vst [vmem:[%s711 + $0x38] sm:$0xf] %v740
                  %v742 = vld [vmem:[%s710 + $0x3c] sm:$0xf]
                  %743 = vst [vmem:[%s711 + $0x3c] sm:$0xf] %v742
                  %v744 = vld [vmem:[%s710 + $0x40] sm:$0xf]
                  %745 = vst [vmem:[%s711 + $0x40] sm:$0xf] %v744
                  %v746 = vld [vmem:[%s710 + $0x44] sm:$0xf]
                  %747 = vst [vmem:[%s711 + $0x44] sm:$0xf] %v746
                  %v748 = vld [vmem:[%s710 + $0x48] sm:$0xf]
                  %749 = vst [vmem:[%s711 + $0x48] sm:$0xf] %v748
                  %v750 = vld [vmem:[%s710 + $0x4c] sm:$0xf]
                  %751 = vst [vmem:[%s711 + $0x4c] sm:$0xf] %v750
                  %v752 = vld [vmem:[%s710 + $0x50] sm:$0xf]
                  %753 = vst [vmem:[%s711 + $0x50] sm:$0xf] %v752
                  %v754 = vld [vmem:[%s710 + $0x54] sm:$0xf]
                  %755 = vst [vmem:[%s711 + $0x54] sm:$0xf] %v754
                  %v756 = vld [vmem:[%s710 + $0x58] sm:$0xf]
                  %757 = vst [vmem:[%s711 + $0x58] sm:$0xf] %v756
                  %v758 = vld [vmem:[%s710 + $0x5c] sm:$0xf]
                  %759 = vst [vmem:[%s711 + $0x5c] sm:$0xf] %v758
                  %v760 = vld [vmem:[%s710 + $0x60] sm:$0xf]
                  %761 = vst [vmem:[%s711 + $0x60] sm:$0xf] %v760
                  %v762 = vld [vmem:[%s710 + $0x64] sm:$0xf]
                  %763 = vst [vmem:[%s711 + $0x64] sm:$0xf] %v762
                  %v764 = vld [vmem:[%s710 + $0x68] sm:$0xf]
                  %765 = vst [vmem:[%s711 + $0x68] sm:$0xf] %v764
                  %v766 = vld [vmem:[%s710 + $0x6c] sm:$0xf]
                  %767 = vst [vmem:[%s711 + $0x6c] sm:$0xf] %v766
                  %v768 = vld [vmem:[%s710 + $0x70] sm:$0xf]
                  %769 = vst [vmem:[%s711 + $0x70] sm:$0xf] %v768
                  %v770 = vld [vmem:[%s710 + $0x74] sm:$0xf]
                  %771 = vst [vmem:[%s711 + $0x74] sm:$0xf] %v770
                  %v772 = vld [vmem:[%s710 + $0x78] sm:$0xf]
                  %773 = vst [vmem:[%s711 + $0x78] sm:$0xf] %v772
                  %v774 = vld [vmem:[%s710 + $0x7c] sm:$0xf]
                  %775 = vst [vmem:[%s711 + $0x7c] sm:$0xf] %v774
                  %v776 = vld [vmem:[%s710 + $0x80] sm:$0xf]
                  %777 = vst [vmem:[%s711 + $0x80] sm:$0xf] %v776
                  %v778 = vld [vmem:[%s710 + $0x84] sm:$0xf]
                  %779 = vst [vmem:[%s711 + $0x84] sm:$0xf] %v778
                  %v780 = vld [vmem:[%s710 + $0x88] sm:$0xf]
                  %781 = vst [vmem:[%s711 + $0x88] sm:$0xf] %v780
                  %v782 = vld [vmem:[%s710 + $0x8c] sm:$0xf]
                  %783 = vst [vmem:[%s711 + $0x8c] sm:$0xf] %v782
                  %v784 = vld [vmem:[%s710 + $0x90] sm:$0xf]
                  %785 = vst [vmem:[%s711 + $0x90] sm:$0xf] %v784
                  %v786 = vld [vmem:[%s710 + $0x94] sm:$0xf]
                  %787 = vst [vmem:[%s711 + $0x94] sm:$0xf] %v786
                  %v788 = vld [vmem:[%s710 + $0x98] sm:$0xf]
                  %789 = vst [vmem:[%s711 + $0x98] sm:$0xf] %v788
                  %v790 = vld [vmem:[%s710 + $0x9c] sm:$0xf]
                  %791 = vst [vmem:[%s711 + $0x9c] sm:$0xf] %v790
                  %v792 = vld [vmem:[%s710 + $0xa0] sm:$0xf]
                  %793 = vst [vmem:[%s711 + $0xa0] sm:$0xf] %v792
                  %v794 = vld [vmem:[%s710 + $0xa4] sm:$0xf]
                  %795 = vst [vmem:[%s711 + $0xa4] sm:$0xf] %v794
                  %v796 = vld [vmem:[%s710 + $0xa8] sm:$0xf]
                  %797 = vst [vmem:[%s711 + $0xa8] sm:$0xf] %v796
                  %v798 = vld [vmem:[%s710 + $0xac] sm:$0xf]
                  %799 = vst [vmem:[%s711 + $0xac] sm:$0xf] %v798
                  %v800 = vld [vmem:[%s710 + $0xb0] sm:$0xf]
                  %801 = vst [vmem:[%s711 + $0xb0] sm:$0xf] %v800
                  %v802 = vld [vmem:[%s710 + $0xb4] sm:$0xf]
                  %803 = vst [vmem:[%s711 + $0xb4] sm:$0xf] %v802
                  %v804 = vld [vmem:[%s710 + $0xb8] sm:$0xf]
                  %805 = vst [vmem:[%s711 + $0xb8] sm:$0xf] %v804
                  %v806 = vld [vmem:[%s710 + $0xbc] sm:$0xf]
                  %807 = vst [vmem:[%s711 + $0xbc] sm:$0xf] %v806
                  %v808 = vld [vmem:[%s710 + $0xc0] sm:$0xf]
                  %809 = vst [vmem:[%s711 + $0xc0] sm:$0xf] %v808
                  %v810 = vld [vmem:[%s710 + $0xc4] sm:$0xf]
                  %811 = vst [vmem:[%s711 + $0xc4] sm:$0xf] %v810
                  %v812 = vld [vmem:[%s710 + $0xc8] sm:$0xf]
                  %813 = vst [vmem:[%s711 + $0xc8] sm:$0xf] %v812
                  %v814 = vld [vmem:[%s710 + $0xcc] sm:$0xf]
                  %815 = vst [vmem:[%s711 + $0xcc] sm:$0xf] %v814
                  %v816 = vld [vmem:[%s710 + $0xd0] sm:$0xf]
                  %817 = vst [vmem:[%s711 + $0xd0] sm:$0xf] %v816
                  %v818 = vld [vmem:[%s710 + $0xd4] sm:$0xf]
                  %819 = vst [vmem:[%s711 + $0xd4] sm:$0xf] %v818
                  %v820 = vld [vmem:[%s710 + $0xd8] sm:$0xf]
                  %821 = vst [vmem:[%s711 + $0xd8] sm:$0xf] %v820
                  %v822 = vld [vmem:[%s710 + $0xdc] sm:$0xf]
                  %823 = vst [vmem:[%s711 + $0xdc] sm:$0xf] %v822
                  %v824 = vld [vmem:[%s710 + $0xe0] sm:$0xf]
                  %825 = vst [vmem:[%s711 + $0xe0] sm:$0xf] %v824
                  %v826 = vld [vmem:[%s710 + $0xe4] sm:$0xf]
                  %827 = vst [vmem:[%s711 + $0xe4] sm:$0xf] %v826
                  %v828 = vld [vmem:[%s710 + $0x3a0] sm:$0xf]
                  %829 = vst [vmem:[%s711 + $0xe8] sm:$0xf] %v828
                  %v830 = vld [vmem:[%s710 + $0x3a4] sm:$0xf]
                  %831 = vst [vmem:[%s711 + $0xec] sm:$0xf] %v830
                  %v832 = vld [vmem:[%s710 + $0x3a8] sm:$0xf]
                  %833 = vst [vmem:[%s711 + $0xf0] sm:$0xf] %v832
                  %v834 = vld [vmem:[%s710 + $0x3ac] sm:$0xf]
                  %835 = vst [vmem:[%s711 + $0xf4] sm:$0xf] %v834
                  %v836 = vld [vmem:[%s710 + $0x3b0] sm:$0xf]
                  %837 = vst [vmem:[%s711 + $0xf8] sm:$0xf] %v836
                  %v838 = vld [vmem:[%s710 + $0x3b4] sm:$0xf]
                  %839 = vst [vmem:[%s711 + $0xfc] sm:$0xf] %v838
                  %v840 = vld [vmem:[%s710 + $0x3b8] sm:$0xf]
                  %841 = vst [vmem:[%s711 + $0x100] sm:$0xf] %v840
                  %v842 = vld [vmem:[%s710 + $0x3bc] sm:$0xf]
                  %843 = vst [vmem:[%s711 + $0x104] sm:$0xf] %v842
                  %v844 = vld [vmem:[%s710 + $0x3c0] sm:$0xf]
                  %845 = vst [vmem:[%s711 + $0x108] sm:$0xf] %v844
                  %v846 = vld [vmem:[%s710 + $0x3c4] sm:$0xf]
                  %847 = vst [vmem:[%s711 + $0x10c] sm:$0xf] %v846
                  %v848 = vld [vmem:[%s710 + $0x3c8] sm:$0xf]
                  %849 = vst [vmem:[%s711 + $0x110] sm:$0xf] %v848
                  %v850 = vld [vmem:[%s710 + $0x3cc] sm:$0xf]
                  %851 = vst [vmem:[%s711 + $0x114] sm:$0xf] %v850
                  %v852 = vld [vmem:[%s710 + $0x3d0] sm:$0xf]
                  %853 = vst [vmem:[%s711 + $0x118] sm:$0xf] %v852
                  %v854 = vld [vmem:[%s710 + $0x3d4] sm:$0xf]
                  %855 = vst [vmem:[%s711 + $0x11c] sm:$0xf] %v854
                  %v856 = vld [vmem:[%s710 + $0x3d8] sm:$0xf]
                  %857 = vst [vmem:[%s711 + $0x120] sm:$0xf] %v856
                  %v858 = vld [vmem:[%s710 + $0x3dc] sm:$0xf]
                  %859 = vst [vmem:[%s711 + $0x124] sm:$0xf] %v858
                  %v860 = vld [vmem:[%s710 + $0x3e0] sm:$0xf]
                  %861 = vst [vmem:[%s711 + $0x128] sm:$0xf] %v860
                  %v862 = vld [vmem:[%s710 + $0x3e4] sm:$0xf]
                  %863 = vst [vmem:[%s711 + $0x12c] sm:$0xf] %v862
                  %v864 = vld [vmem:[%s710 + $0x3e8] sm:$0xf]
                  %865 = vst [vmem:[%s711 + $0x130] sm:$0xf] %v864
                  %v866 = vld [vmem:[%s710 + $0x3ec] sm:$0xf]
                  %867 = vst [vmem:[%s711 + $0x134] sm:$0xf] %v866
                  %v868 = vld [vmem:[%s710 + $0x3f0] sm:$0xf]
                  %869 = vst [vmem:[%s711 + $0x138] sm:$0xf] %v868
                  %v870 = vld [vmem:[%s710 + $0x3f4] sm:$0xf]
                  %871 = vst [vmem:[%s711 + $0x13c] sm:$0xf] %v870
                  %v872 = vld [vmem:[%s710 + $0x3f8] sm:$0xf]
                  %873 = vst [vmem:[%s711 + $0x140] sm:$0xf] %v872
                  %v874 = vld [vmem:[%s710 + $0x3fc] sm:$0xf]
                  %875 = vst [vmem:[%s711 + $0x144] sm:$0xf] %v874
                  %v876 = vld [vmem:[%s710 + $0x400] sm:$0xf]
                  %877 = vst [vmem:[%s711 + $0x148] sm:$0xf] %v876
                  %v878 = vld [vmem:[%s710 + $0x404] sm:$0xf]
                  %879 = vst [vmem:[%s711 + $0x14c] sm:$0xf] %v878
                  %v880 = vld [vmem:[%s710 + $0x408] sm:$0xf]
                  %881 = vst [vmem:[%s711 + $0x150] sm:$0xf] %v880
                  %v882 = vld [vmem:[%s710 + $0x40c] sm:$0xf]
                  %883 = vst [vmem:[%s711 + $0x154] sm:$0xf] %v882
                  %v884 = vld [vmem:[%s710 + $0x410] sm:$0xf]
                  %885 = vst [vmem:[%s711 + $0x158] sm:$0xf] %v884
                  %v886 = vld [vmem:[%s710 + $0x414] sm:$0xf]
                  %887 = vst [vmem:[%s711 + $0x15c] sm:$0xf] %v886
                  %v888 = vld [vmem:[%s710 + $0x418] sm:$0xf]
                  %889 = vst [vmem:[%s711 + $0x160] sm:$0xf] %v888
                  %v890 = vld [vmem:[%s710 + $0x41c] sm:$0xf]
                  %891 = vst [vmem:[%s711 + $0x164] sm:$0xf] %v890
                  %v892 = vld [vmem:[%s710 + $0x420] sm:$0xf]
                  %893 = vst [vmem:[%s711 + $0x168] sm:$0xf] %v892
                  %v894 = vld [vmem:[%s710 + $0x424] sm:$0xf]
                  %895 = vst [vmem:[%s711 + $0x16c] sm:$0xf] %v894
                  %v896 = vld [vmem:[%s710 + $0x428] sm:$0xf]
                  %897 = vst [vmem:[%s711 + $0x170] sm:$0xf] %v896
                  %v898 = vld [vmem:[%s710 + $0x42c] sm:$0xf]
                  %899 = vst [vmem:[%s711 + $0x174] sm:$0xf] %v898
                  %v900 = vld [vmem:[%s710 + $0x430] sm:$0xf]
                  %901 = vst [vmem:[%s711 + $0x178] sm:$0xf] %v900
                  %v902 = vld [vmem:[%s710 + $0x434] sm:$0xf]
                  %903 = vst [vmem:[%s711 + $0x17c] sm:$0xf] %v902
                  %v904 = vld [vmem:[%s710 + $0x438] sm:$0xf]
                  %905 = vst [vmem:[%s711 + $0x180] sm:$0xf] %v904
                  %v906 = vld [vmem:[%s710 + $0x43c] sm:$0xf]
                  %907 = vst [vmem:[%s711 + $0x184] sm:$0xf] %v906
                  %v908 = vld [vmem:[%s710 + $0x440] sm:$0xf]
                  %909 = vst [vmem:[%s711 + $0x188] sm:$0xf] %v908
                  %v910 = vld [vmem:[%s710 + $0x444] sm:$0xf]
                  %911 = vst [vmem:[%s711 + $0x18c] sm:$0xf] %v910
                  %v912 = vld [vmem:[%s710 + $0x448] sm:$0xf]
                  %913 = vst [vmem:[%s711 + $0x190] sm:$0xf] %v912
                  %v914 = vld [vmem:[%s710 + $0x44c] sm:$0xf]
                  %915 = vst [vmem:[%s711 + $0x194] sm:$0xf] %v914
                  %v916 = vld [vmem:[%s710 + $0x450] sm:$0xf]
                  %917 = vst [vmem:[%s711 + $0x198] sm:$0xf] %v916
                  %v918 = vld [vmem:[%s710 + $0x454] sm:$0xf]
                  %919 = vst [vmem:[%s711 + $0x19c] sm:$0xf] %v918
                  %v920 = vld [vmem:[%s710 + $0x458] sm:$0xf]
                  %921 = vst [vmem:[%s711 + $0x1a0] sm:$0xf] %v920
                  %v922 = vld [vmem:[%s710 + $0x45c] sm:$0xf]
                  %923 = vst [vmem:[%s711 + $0x1a4] sm:$0xf] %v922
                  %v924 = vld [vmem:[%s710 + $0x460] sm:$0xf]
                  %925 = vst [vmem:[%s711 + $0x1a8] sm:$0xf] %v924
                  %v926 = vld [vmem:[%s710 + $0x464] sm:$0xf]
                  %927 = vst [vmem:[%s711 + $0x1ac] sm:$0xf] %v926
                  %v928 = vld [vmem:[%s710 + $0x468] sm:$0xf]
                  %929 = vst [vmem:[%s711 + $0x1b0] sm:$0xf] %v928
                  %v930 = vld [vmem:[%s710 + $0x46c] sm:$0xf]
                  %931 = vst [vmem:[%s711 + $0x1b4] sm:$0xf] %v930
                  %v932 = vld [vmem:[%s710 + $0x470] sm:$0xf]
                  %933 = vst [vmem:[%s711 + $0x1b8] sm:$0xf] %v932
                  %v934 = vld [vmem:[%s710 + $0x474] sm:$0xf]
                  %935 = vst [vmem:[%s711 + $0x1bc] sm:$0xf] %v934
                  %v936 = vld [vmem:[%s710 + $0x478] sm:$0xf]
                  %937 = vst [vmem:[%s711 + $0x1c0] sm:$0xf] %v936
                  %v938 = vld [vmem:[%s710 + $0x47c] sm:$0xf]
                  %939 = vst [vmem:[%s711 + $0x1c4] sm:$0xf] %v938
                  %v940 = vld [vmem:[%s710 + $0x480] sm:$0xf]
                  %941 = vst [vmem:[%s711 + $0x1c8] sm:$0xf] %v940
                  %v942 = vld [vmem:[%s710 + $0x484] sm:$0xf]
                  %943 = vst [vmem:[%s711 + $0x1cc] sm:$0xf] %v942
                  %v944 = vld [vmem:[%s710 + $0x740] sm:$0xf]
                  %945 = vst [vmem:[%s711 + $0x1d0] sm:$0xf] %v944
                  %v946 = vld [vmem:[%s710 + $0x744] sm:$0xf]
                  %947 = vst [vmem:[%s711 + $0x1d4] sm:$0xf] %v946
                  %v948 = vld [vmem:[%s710 + $0x748] sm:$0xf]
                  %949 = vst [vmem:[%s711 + $0x1d8] sm:$0xf] %v948
                  %v950 = vld [vmem:[%s710 + $0x74c] sm:$0xf]
                  %951 = vst [vmem:[%s711 + $0x1dc] sm:$0xf] %v950
                  %v952 = vld [vmem:[%s710 + $0x750] sm:$0xf]
                  %953 = vst [vmem:[%s711 + $0x1e0] sm:$0xf] %v952
                  %v954 = vld [vmem:[%s710 + $0x754] sm:$0xf]
                  %955 = vst [vmem:[%s711 + $0x1e4] sm:$0xf] %v954
                  %v956 = vld [vmem:[%s710 + $0x758] sm:$0xf]
                  %957 = vst [vmem:[%s711 + $0x1e8] sm:$0xf] %v956
                  %v958 = vld [vmem:[%s710 + $0x75c] sm:$0xf]
                  %959 = vst [vmem:[%s711 + $0x1ec] sm:$0xf] %v958
                  %v960 = vld [vmem:[%s710 + $0x760] sm:$0xf]
                  %961 = vst [vmem:[%s711 + $0x1f0] sm:$0xf] %v960
                  %v962 = vld [vmem:[%s710 + $0x764] sm:$0xf]
                  %963 = vst [vmem:[%s711 + $0x1f4] sm:$0xf] %v962
                  %v964 = vld [vmem:[%s710 + $0x768] sm:$0xf]
                  %965 = vst [vmem:[%s711 + $0x1f8] sm:$0xf] %v964
                  %v966 = vld [vmem:[%s710 + $0x76c] sm:$0xf]
                  %967 = vst [vmem:[%s711 + $0x1fc] sm:$0xf] %v966
                  %v968 = vld [vmem:[%s710 + $0x770] sm:$0xf]
                  %969 = vst [vmem:[%s711 + $0x200] sm:$0xf] %v968
                  %v970 = vld [vmem:[%s710 + $0x774] sm:$0xf]
                  %971 = vst [vmem:[%s711 + $0x204] sm:$0xf] %v970
                  %v972 = vld [vmem:[%s710 + $0x778] sm:$0xf]
                  %973 = vst [vmem:[%s711 + $0x208] sm:$0xf] %v972
                  %v974 = vld [vmem:[%s710 + $0x77c] sm:$0xf]
                  %975 = vst [vmem:[%s711 + $0x20c] sm:$0xf] %v974
                  %v976 = vld [vmem:[%s710 + $0x780] sm:$0xf]
                  %977 = vst [vmem:[%s711 + $0x210] sm:$0xf] %v976
                  %v978 = vld [vmem:[%s710 + $0x784] sm:$0xf]
                  %979 = vst [vmem:[%s711 + $0x214] sm:$0xf] %v978
                  %v980 = vld [vmem:[%s710 + $0x788] sm:$0xf]
                  %981 = vst [vmem:[%s711 + $0x218] sm:$0xf] %v980
                  %v982 = vld [vmem:[%s710 + $0x78c] sm:$0xf]
                  %983 = vst [vmem:[%s711 + $0x21c] sm:$0xf] %v982
                  %v984 = vld [vmem:[%s710 + $0x790] sm:$0xf]
                  %985 = vst [vmem:[%s711 + $0x220] sm:$0xf] %v984
                  %v986 = vld [vmem:[%s710 + $0x794] sm:$0xf]
                  %987 = vst [vmem:[%s711 + $0x224] sm:$0xf] %v986
                  %v988 = vld [vmem:[%s710 + $0x798] sm:$0xf]
                  %989 = vst [vmem:[%s711 + $0x228] sm:$0xf] %v988
                  %v990 = vld [vmem:[%s710 + $0x79c] sm:$0xf]
                  %991 = vst [vmem:[%s711 + $0x22c] sm:$0xf] %v990
                  %v992 = vld [vmem:[%s710 + $0x7a0] sm:$0xf]
                  %993 = vst [vmem:[%s711 + $0x230] sm:$0xf] %v992
                  %v994 = vld [vmem:[%s710 + $0x7a4] sm:$0xf]
                  %995 = vst [vmem:[%s711 + $0x234] sm:$0xf] %v994
                  %v996 = vld [vmem:[%s710 + $0x7a8] sm:$0xf]
                  %997 = vst [vmem:[%s711 + $0x238] sm:$0xf] %v996
                  %v998 = vld [vmem:[%s710 + $0x7ac] sm:$0xf]
                  %999 = vst [vmem:[%s711 + $0x23c] sm:$0xf] %v998
                  %v1000 = vld [vmem:[%s710 + $0x7b0] sm:$0xf]
                  %1001 = vst [vmem:[%s711 + $0x240] sm:$0xf] %v1000
                  %v1002 = vld [vmem:[%s710 + $0x7b4] sm:$0xf]
                  %1003 = vst [vmem:[%s711 + $0x244] sm:$0xf] %v1002
                  %v1004 = vld [vmem:[%s710 + $0x7b8] sm:$0xf]
                  %1005 = vst [vmem:[%s711 + $0x248] sm:$0xf] %v1004
                  %v1006 = vld [vmem:[%s710 + $0x7bc] sm:$0xf]
                  %1007 = vst [vmem:[%s711 + $0x24c] sm:$0xf] %v1006
                  %v1008 = vld [vmem:[%s710 + $0x7c0] sm:$0xf]
                  %1009 = vst [vmem:[%s711 + $0x250] sm:$0xf] %v1008
                  %v1010 = vld [vmem:[%s710 + $0x7c4] sm:$0xf]
                  %1011 = vst [vmem:[%s711 + $0x254] sm:$0xf] %v1010
                  %v1012 = vld [vmem:[%s710 + $0x7c8] sm:$0xf]
                  %1013 = vst [vmem:[%s711 + $0x258] sm:$0xf] %v1012
                  %v1014 = vld [vmem:[%s710 + $0x7cc] sm:$0xf]
                  %1015 = vst [vmem:[%s711 + $0x25c] sm:$0xf] %v1014
                  %v1016 = vld [vmem:[%s710 + $0x7d0] sm:$0xf]
                  %1017 = vst [vmem:[%s711 + $0x260] sm:$0xf] %v1016
                  %v1018 = vld [vmem:[%s710 + $0x7d4] sm:$0xf]
                  %1019 = vst [vmem:[%s711 + $0x264] sm:$0xf] %v1018
                  %v1020 = vld [vmem:[%s710 + $0x7d8] sm:$0xf]
                  %1021 = vst [vmem:[%s711 + $0x268] sm:$0xf] %v1020
                  %v1022 = vld [vmem:[%s710 + $0x7dc] sm:$0xf]
                  %1023 = vst [vmem:[%s711 + $0x26c] sm:$0xf] %v1022
                  %v1024 = vld [vmem:[%s710 + $0x7e0] sm:$0xf]
                  %1025 = vst [vmem:[%s711 + $0x270] sm:$0xf] %v1024
                  %v1026 = vld [vmem:[%s710 + $0x7e4] sm:$0xf]
                  %1027 = vst [vmem:[%s711 + $0x274] sm:$0xf] %v1026
                  %v1028 = vld [vmem:[%s710 + $0x7e8] sm:$0xf]
                  %1029 = vst [vmem:[%s711 + $0x278] sm:$0xf] %v1028
                  %v1030 = vld [vmem:[%s710 + $0x7ec] sm:$0xf]
                  %1031 = vst [vmem:[%s711 + $0x27c] sm:$0xf] %v1030
                  %v1032 = vld [vmem:[%s710 + $0x7f0] sm:$0xf]
                  %1033 = vst [vmem:[%s711 + $0x280] sm:$0xf] %v1032
                  %v1034 = vld [vmem:[%s710 + $0x7f4] sm:$0xf]
                  %1035 = vst [vmem:[%s711 + $0x284] sm:$0xf] %v1034
                  %v1036 = vld [vmem:[%s710 + $0x7f8] sm:$0xf]
                  %1037 = vst [vmem:[%s711 + $0x288] sm:$0xf] %v1036
                  %v1038 = vld [vmem:[%s710 + $0x7fc] sm:$0xf]
                  %1039 = vst [vmem:[%s711 + $0x28c] sm:$0xf] %v1038
                  %v1040 = vld [vmem:[%s710 + $0x800] sm:$0xf]
                  %1041 = vst [vmem:[%s711 + $0x290] sm:$0xf] %v1040
                  %v1042 = vld [vmem:[%s710 + $0x804] sm:$0xf]
                  %1043 = vst [vmem:[%s711 + $0x294] sm:$0xf] %v1042
                  %v1044 = vld [vmem:[%s710 + $0x808] sm:$0xf]
                  %1045 = vst [vmem:[%s711 + $0x298] sm:$0xf] %v1044
                  %v1046 = vld [vmem:[%s710 + $0x80c] sm:$0xf]
                  %1047 = vst [vmem:[%s711 + $0x29c] sm:$0xf] %v1046
                  %v1048 = vld [vmem:[%s710 + $0x810] sm:$0xf]
                  %1049 = vst [vmem:[%s711 + $0x2a0] sm:$0xf] %v1048
                  %v1050 = vld [vmem:[%s710 + $0x814] sm:$0xf]
                  %1051 = vst [vmem:[%s711 + $0x2a4] sm:$0xf] %v1050
                  %v1052 = vld [vmem:[%s710 + $0x818] sm:$0xf]
                  %1053 = vst [vmem:[%s711 + $0x2a8] sm:$0xf] %v1052
                  %v1054 = vld [vmem:[%s710 + $0x81c] sm:$0xf]
                  %1055 = vst [vmem:[%s711 + $0x2ac] sm:$0xf] %v1054
                  %v1056 = vld [vmem:[%s710 + $0x820] sm:$0xf]
                  %1057 = vst [vmem:[%s711 + $0x2b0] sm:$0xf] %v1056
                  %v1058 = vld [vmem:[%s710 + $0x824] sm:$0xf]
                  %1059 = vst [vmem:[%s711 + $0x2b4] sm:$0xf] %v1058
                  %v1060 = vld [vmem:[%s710 + $0xae0] sm:$0xf]
                  %1061 = vst [vmem:[%s711 + $0x2b8] sm:$0xf] %v1060
                  %v1062 = vld [vmem:[%s710 + $0xae4] sm:$0xf]
                  %1063 = vst [vmem:[%s711 + $0x2bc] sm:$0xf] %v1062
                  %v1064 = vld [vmem:[%s710 + $0xae8] sm:$0xf]
                  %1065 = vst [vmem:[%s711 + $0x2c0] sm:$0xf] %v1064
                  %v1066 = vld [vmem:[%s710 + $0xaec] sm:$0xf]
                  %1067 = vst [vmem:[%s711 + $0x2c4] sm:$0xf] %v1066
                  %v1068 = vld [vmem:[%s710 + $0xaf0] sm:$0xf]
                  %1069 = vst [vmem:[%s711 + $0x2c8] sm:$0xf] %v1068
                  %v1070 = vld [vmem:[%s710 + $0xaf4] sm:$0xf]
                  %1071 = vst [vmem:[%s711 + $0x2cc] sm:$0xf] %v1070
                  %v1072 = vld [vmem:[%s710 + $0xaf8] sm:$0xf]
                  %1073 = vst [vmem:[%s711 + $0x2d0] sm:$0xf] %v1072
                  %v1074 = vld [vmem:[%s710 + $0xafc] sm:$0xf]
                  %1075 = vst [vmem:[%s711 + $0x2d4] sm:$0xf] %v1074
                  %v1076 = vld [vmem:[%s710 + $0xb00] sm:$0xf]
                  %1077 = vst [vmem:[%s711 + $0x2d8] sm:$0xf] %v1076
                  %v1078 = vld [vmem:[%s710 + $0xb04] sm:$0xf]
                  %1079 = vst [vmem:[%s711 + $0x2dc] sm:$0xf] %v1078
                  %v1080 = vld [vmem:[%s710 + $0xb08] sm:$0xf]
                  %1081 = vst [vmem:[%s711 + $0x2e0] sm:$0xf] %v1080
                  %v1082 = vld [vmem:[%s710 + $0xb0c] sm:$0xf]
                  %1083 = vst [vmem:[%s711 + $0x2e4] sm:$0xf] %v1082
                  %v1084 = vld [vmem:[%s710 + $0xb10] sm:$0xf]
                  %1085 = vst [vmem:[%s711 + $0x2e8] sm:$0xf] %v1084
                  %v1086 = vld [vmem:[%s710 + $0xb14] sm:$0xf]
                  %1087 = vst [vmem:[%s711 + $0x2ec] sm:$0xf] %v1086
                  %v1088 = vld [vmem:[%s710 + $0xb18] sm:$0xf]
                  %1089 = vst [vmem:[%s711 + $0x2f0] sm:$0xf] %v1088
                  %v1090 = vld [vmem:[%s710 + $0xb1c] sm:$0xf]
                  %1091 = vst [vmem:[%s711 + $0x2f4] sm:$0xf] %v1090
                  %v1092 = vld [vmem:[%s710 + $0xb20] sm:$0xf]
                  %1093 = vst [vmem:[%s711 + $0x2f8] sm:$0xf] %v1092
                  %v1094 = vld [vmem:[%s710 + $0xb24] sm:$0xf]
                  %1095 = vst [vmem:[%s711 + $0x2fc] sm:$0xf] %v1094
                  %v1096 = vld [vmem:[%s710 + $0xb28] sm:$0xf]
                  %1097 = vst [vmem:[%s711 + $0x300] sm:$0xf] %v1096
                  %v1098 = vld [vmem:[%s710 + $0xb2c] sm:$0xf]
                  %1099 = vst [vmem:[%s711 + $0x304] sm:$0xf] %v1098
                  %v1100 = vld [vmem:[%s710 + $0xb30] sm:$0xf]
                  %1101 = vst [vmem:[%s711 + $0x308] sm:$0xf] %v1100
                  %v1102 = vld [vmem:[%s710 + $0xb34] sm:$0xf]
                  %1103 = vst [vmem:[%s711 + $0x30c] sm:$0xf] %v1102
                  %v1104 = vld [vmem:[%s710 + $0xb38] sm:$0xf]
                  %1105 = vst [vmem:[%s711 + $0x310] sm:$0xf] %v1104
                  %v1106 = vld [vmem:[%s710 + $0xb3c] sm:$0xf]
                  %1107 = vst [vmem:[%s711 + $0x314] sm:$0xf] %v1106
                  %v1108 = vld [vmem:[%s710 + $0xb40] sm:$0xf]
                  %1109 = vst [vmem:[%s711 + $0x318] sm:$0xf] %v1108
                  %v1110 = vld [vmem:[%s710 + $0xb44] sm:$0xf]
                  %1111 = vst [vmem:[%s711 + $0x31c] sm:$0xf] %v1110
                  %v1112 = vld [vmem:[%s710 + $0xb48] sm:$0xf]
                  %1113 = vst [vmem:[%s711 + $0x320] sm:$0xf] %v1112
                  %v1114 = vld [vmem:[%s710 + $0xb4c] sm:$0xf]
                  %1115 = vst [vmem:[%s711 + $0x324] sm:$0xf] %v1114
                  %v1116 = vld [vmem:[%s710 + $0xb50] sm:$0xf]
                  %1117 = vst [vmem:[%s711 + $0x328] sm:$0xf] %v1116
                  %v1118 = vld [vmem:[%s710 + $0xb54] sm:$0xf]
                  %1119 = vst [vmem:[%s711 + $0x32c] sm:$0xf] %v1118
                  %v1120 = vld [vmem:[%s710 + $0xb58] sm:$0xf]
                  %1121 = vst [vmem:[%s711 + $0x330] sm:$0xf] %v1120
                  %v1122 = vld [vmem:[%s710 + $0xb5c] sm:$0xf]
                  %1123 = vst [vmem:[%s711 + $0x334] sm:$0xf] %v1122
                  %v1124 = vld [vmem:[%s710 + $0xb60] sm:$0xf]
                  %1125 = vst [vmem:[%s711 + $0x338] sm:$0xf] %v1124
                  %v1126 = vld [vmem:[%s710 + $0xb64] sm:$0xf]
                  %1127 = vst [vmem:[%s711 + $0x33c] sm:$0xf] %v1126
                  %v1128 = vld [vmem:[%s710 + $0xb68] sm:$0xf]
                  %1129 = vst [vmem:[%s711 + $0x340] sm:$0xf] %v1128
                  %v1130 = vld [vmem:[%s710 + $0xb6c] sm:$0xf]
                  %1131 = vst [vmem:[%s711 + $0x344] sm:$0xf] %v1130
                  %v1132 = vld [vmem:[%s710 + $0xb70] sm:$0xf]
                  %1133 = vst [vmem:[%s711 + $0x348] sm:$0xf] %v1132
                  %v1134 = vld [vmem:[%s710 + $0xb74] sm:$0xf]
                  %1135 = vst [vmem:[%s711 + $0x34c] sm:$0xf] %v1134
                  %v1136 = vld [vmem:[%s710 + $0xb78] sm:$0xf]
                  %1137 = vst [vmem:[%s711 + $0x350] sm:$0xf] %v1136
                  %v1138 = vld [vmem:[%s710 + $0xb7c] sm:$0xf]
                  %1139 = vst [vmem:[%s711 + $0x354] sm:$0xf] %v1138
                  %v1140 = vld [vmem:[%s710 + $0xb80] sm:$0xf]
                  %1141 = vst [vmem:[%s711 + $0x358] sm:$0xf] %v1140
                  %v1142 = vld [vmem:[%s710 + $0xb84] sm:$0xf]
                  %1143 = vst [vmem:[%s711 + $0x35c] sm:$0xf] %v1142
                  %v1144 = vld [vmem:[%s710 + $0xb88] sm:$0xf]
                  %1145 = vst [vmem:[%s711 + $0x360] sm:$0xf] %v1144
                  %v1146 = vld [vmem:[%s710 + $0xb8c] sm:$0xf]
                  %1147 = vst [vmem:[%s711 + $0x364] sm:$0xf] %v1146
                  %v1148 = vld [vmem:[%s710 + $0xb90] sm:$0xf]
                  %1149 = vst [vmem:[%s711 + $0x368] sm:$0xf] %v1148
                  %v1150 = vld [vmem:[%s710 + $0xb94] sm:$0xf]
                  %1151 = vst [vmem:[%s711 + $0x36c] sm:$0xf] %v1150
                  %v1152 = vld [vmem:[%s710 + $0xb98] sm:$0xf]
                  %1153 = vst [vmem:[%s711 + $0x370] sm:$0xf] %v1152
                  %v1154 = vld [vmem:[%s710 + $0xb9c] sm:$0xf]
                  %1155 = vst [vmem:[%s711 + $0x374] sm:$0xf] %v1154
                  %v1156 = vld [vmem:[%s710 + $0xba0] sm:$0xf]
                  %1157 = vst [vmem:[%s711 + $0x378] sm:$0xf] %v1156
                  %v1158 = vld [vmem:[%s710 + $0xba4] sm:$0xf]
                  %1159 = vst [vmem:[%s711 + $0x37c] sm:$0xf] %v1158
                  %v1160 = vld [vmem:[%s710 + $0xba8] sm:$0xf]
                  %1161 = vst [vmem:[%s711 + $0x380] sm:$0xf] %v1160
                  %v1162 = vld [vmem:[%s710 + $0xbac] sm:$0xf]
                  %1163 = vst [vmem:[%s711 + $0x384] sm:$0xf] %v1162
                  %v1164 = vld [vmem:[%s710 + $0xbb0] sm:$0xf]
                  %1165 = vst [vmem:[%s711 + $0x388] sm:$0xf] %v1164
                  %v1166 = vld [vmem:[%s710 + $0xbb4] sm:$0xf]
                  %1167 = vst [vmem:[%s711 + $0x38c] sm:$0xf] %v1166
                  %v1168 = vld [vmem:[%s710 + $0xbb8] sm:$0xf]
                  %1169 = vst [vmem:[%s711 + $0x390] sm:$0xf] %v1168
                  %v1170 = vld [vmem:[%s710 + $0xbbc] sm:$0xf]
                  %1171 = vst [vmem:[%s711 + $0x394] sm:$0xf] %v1170
                  %v1172 = vld [vmem:[%s710 + $0xbc0] sm:$0xf]
                  %1173 = vst [vmem:[%s711 + $0x398] sm:$0xf] %v1172
                  %v1174 = vld [vmem:[%s710 + $0xbc4] sm:$0xf]
                  %1175 = vst [vmem:[%s711 + $0x39c] sm:$0xf] %v1174
                $region55: #{discriminator_forward.3} parent=42 // loop_footer
                  %s709 = sadd.s32 1, %s705
                $region56: #{discriminator_forward.3} parent=42 // loop_footer_branch
                  %704 = sbr.rel target = $region52
                $region57: #{discriminator_forward.3} parent=42 // loop_exit
                  _
              $region43: #{discriminator_forward.3} parent=27 // pred_fallthru
                _
            $region28: #{discriminator_forward.3} parent=23 // pred_fallthru
              _
            // Predicated region
            $region29: #{discriminator_forward.3} parent=23 // pred_check
              _
            $region30: #{discriminator_forward.3} parent=23 // pred_check_branch
              %219 = sbr.rel (0) target = $region32
            $region31: #{discriminator_forward.3} parent=23 // pred_region
              loop: start=0, step=1, limit=1
              $region33: #{discriminator_forward.3} parent=31 // loop_pre_header
                _
              $region34: #{discriminator_forward.3} parent=31 // loop_header
                %s222 = sphi 0, %s226
                %p223 = scmp.ge.s32.totalorder %s222, 1
                %s227 = sphi %s213, %s213
                %s228 = sphi %s208, %s208
              $region35: #{discriminator_forward.3} parent=31 // loop_header_branch
                %225 = sbr.rel (%p223) target = $region39
              $region36: #{discriminator_forward.3} parent=31 // loop_body
                %v229 = vld [vmem:[%s227] sm:$0xf]
                %230 = vst [vmem:[%s228] sm:$0xf] %v229
                %v231 = vld [vmem:[%s227 + $0x4] sm:$0xf]
                %232 = vst [vmem:[%s228 + $0x4] sm:$0xf] %v231
                %v233 = vld [vmem:[%s227 + $0x8] sm:$0xf]
                %234 = vst [vmem:[%s228 + $0x8] sm:$0xf] %v233
                %v235 = vld [vmem:[%s227 + $0xc] sm:$0xf]
                %236 = vst [vmem:[%s228 + $0xc] sm:$0xf] %v235
                %v237 = vld [vmem:[%s227 + $0x10] sm:$0xf]
                %238 = vst [vmem:[%s228 + $0x10] sm:$0xf] %v237
                %v239 = vld [vmem:[%s227 + $0x14] sm:$0xf]
                %240 = vst [vmem:[%s228 + $0x14] sm:$0xf] %v239
                %v241 = vld [vmem:[%s227 + $0x18] sm:$0xf]
                %242 = vst [vmem:[%s228 + $0x18] sm:$0xf] %v241
                %v243 = vld [vmem:[%s227 + $0x1c] sm:$0xf]
                %244 = vst [vmem:[%s228 + $0x1c] sm:$0xf] %v243
                %v245 = vld [vmem:[%s227 + $0x20] sm:$0xf]
                %246 = vst [vmem:[%s228 + $0x20] sm:$0xf] %v245
                %v247 = vld [vmem:[%s227 + $0x24] sm:$0xf]
                %248 = vst [vmem:[%s228 + $0x24] sm:$0xf] %v247
                %v249 = vld [vmem:[%s227 + $0x28] sm:$0xf]
                %250 = vst [vmem:[%s228 + $0x28] sm:$0xf] %v249
                %v251 = vld [vmem:[%s227 + $0x2c] sm:$0xf]
                %252 = vst [vmem:[%s228 + $0x2c] sm:$0xf] %v251
                %v253 = vld [vmem:[%s227 + $0x30] sm:$0xf]
                %254 = vst [vmem:[%s228 + $0x30] sm:$0xf] %v253
                %v255 = vld [vmem:[%s227 + $0x34] sm:$0xf]
                %256 = vst [vmem:[%s228 + $0x34] sm:$0xf] %v255
                %v257 = vld [vmem:[%s227 + $0x38] sm:$0xf]
                %258 = vst [vmem:[%s228 + $0x38] sm:$0xf] %v257
                %v259 = vld [vmem:[%s227 + $0x3c] sm:$0xf]
                %260 = vst [vmem:[%s228 + $0x3c] sm:$0xf] %v259
                %v261 = vld [vmem:[%s227 + $0x40] sm:$0xf]
                %262 = vst [vmem:[%s228 + $0x40] sm:$0xf] %v261
                %v263 = vld [vmem:[%s227 + $0x44] sm:$0xf]
                %264 = vst [vmem:[%s228 + $0x44] sm:$0xf] %v263
                %v265 = vld [vmem:[%s227 + $0x48] sm:$0xf]
                %266 = vst [vmem:[%s228 + $0x48] sm:$0xf] %v265
                %v267 = vld [vmem:[%s227 + $0x4c] sm:$0xf]
                %268 = vst [vmem:[%s228 + $0x4c] sm:$0xf] %v267
                %v269 = vld [vmem:[%s227 + $0x50] sm:$0xf]
                %270 = vst [vmem:[%s228 + $0x50] sm:$0xf] %v269
                %v271 = vld [vmem:[%s227 + $0x54] sm:$0xf]
                %272 = vst [vmem:[%s228 + $0x54] sm:$0xf] %v271
                %v273 = vld [vmem:[%s227 + $0x58] sm:$0xf]
                %274 = vst [vmem:[%s228 + $0x58] sm:$0xf] %v273
                %v275 = vld [vmem:[%s227 + $0x5c] sm:$0xf]
                %276 = vst [vmem:[%s228 + $0x5c] sm:$0xf] %v275
                %v277 = vld [vmem:[%s227 + $0x60] sm:$0xf]
                %278 = vst [vmem:[%s228 + $0x60] sm:$0xf] %v277
                %v279 = vld [vmem:[%s227 + $0x64] sm:$0xf]
                %280 = vst [vmem:[%s228 + $0x64] sm:$0xf] %v279
                %v281 = vld [vmem:[%s227 + $0x68] sm:$0xf]
                %282 = vst [vmem:[%s228 + $0x68] sm:$0xf] %v281
                %v283 = vld [vmem:[%s227 + $0x6c] sm:$0xf]
                %284 = vst [vmem:[%s228 + $0x6c] sm:$0xf] %v283
                %v285 = vld [vmem:[%s227 + $0x70] sm:$0xf]
                %286 = vst [vmem:[%s228 + $0x70] sm:$0xf] %v285
                %v287 = vld [vmem:[%s227 + $0x74] sm:$0xf]
                %288 = vst [vmem:[%s228 + $0x74] sm:$0xf] %v287
                %v289 = vld [vmem:[%s227 + $0x78] sm:$0xf]
                %290 = vst [vmem:[%s228 + $0x78] sm:$0xf] %v289
                %v291 = vld [vmem:[%s227 + $0x7c] sm:$0xf]
                %292 = vst [vmem:[%s228 + $0x7c] sm:$0xf] %v291
                %v293 = vld [vmem:[%s227 + $0x80] sm:$0xf]
                %294 = vst [vmem:[%s228 + $0x80] sm:$0xf] %v293
                %v295 = vld [vmem:[%s227 + $0x84] sm:$0xf]
                %296 = vst [vmem:[%s228 + $0x84] sm:$0xf] %v295
                %v297 = vld [vmem:[%s227 + $0x88] sm:$0xf]
                %298 = vst [vmem:[%s228 + $0x88] sm:$0xf] %v297
                %v299 = vld [vmem:[%s227 + $0x8c] sm:$0xf]
                %300 = vst [vmem:[%s228 + $0x8c] sm:$0xf] %v299
                %v301 = vld [vmem:[%s227 + $0x90] sm:$0xf]
                %302 = vst [vmem:[%s228 + $0x90] sm:$0xf] %v301
                %v303 = vld [vmem:[%s227 + $0x94] sm:$0xf]
                %304 = vst [vmem:[%s228 + $0x94] sm:$0xf] %v303
                %v305 = vld [vmem:[%s227 + $0x98] sm:$0xf]
                %306 = vst [vmem:[%s228 + $0x98] sm:$0xf] %v305
                %v307 = vld [vmem:[%s227 + $0x9c] sm:$0xf]
                %308 = vst [vmem:[%s228 + $0x9c] sm:$0xf] %v307
                %v309 = vld [vmem:[%s227 + $0xa0] sm:$0xf]
                %310 = vst [vmem:[%s228 + $0xa0] sm:$0xf] %v309
                %v311 = vld [vmem:[%s227 + $0xa4] sm:$0xf]
                %312 = vst [vmem:[%s228 + $0xa4] sm:$0xf] %v311
                %v313 = vld [vmem:[%s227 + $0xa8] sm:$0xf]
                %314 = vst [vmem:[%s228 + $0xa8] sm:$0xf] %v313
                %v315 = vld [vmem:[%s227 + $0xac] sm:$0xf]
                %316 = vst [vmem:[%s228 + $0xac] sm:$0xf] %v315
                %v317 = vld [vmem:[%s227 + $0xb0] sm:$0xf]
                %318 = vst [vmem:[%s228 + $0xb0] sm:$0xf] %v317
                %v319 = vld [vmem:[%s227 + $0xb4] sm:$0xf]
                %320 = vst [vmem:[%s228 + $0xb4] sm:$0xf] %v319
                %v321 = vld [vmem:[%s227 + $0xb8] sm:$0xf]
                %322 = vst [vmem:[%s228 + $0xb8] sm:$0xf] %v321
                %v323 = vld [vmem:[%s227 + $0xbc] sm:$0xf]
                %324 = vst [vmem:[%s228 + $0xbc] sm:$0xf] %v323
                %v325 = vld [vmem:[%s227 + $0xc0] sm:$0xf]
                %326 = vst [vmem:[%s228 + $0xc0] sm:$0xf] %v325
                %v327 = vld [vmem:[%s227 + $0xc4] sm:$0xf]
                %328 = vst [vmem:[%s228 + $0xc4] sm:$0xf] %v327
                %v329 = vld [vmem:[%s227 + $0xc8] sm:$0xf]
                %330 = vst [vmem:[%s228 + $0xc8] sm:$0xf] %v329
                %v331 = vld [vmem:[%s227 + $0xcc] sm:$0xf]
                %332 = vst [vmem:[%s228 + $0xcc] sm:$0xf] %v331
                %v333 = vld [vmem:[%s227 + $0xd0] sm:$0xf]
                %334 = vst [vmem:[%s228 + $0xd0] sm:$0xf] %v333
                %v335 = vld [vmem:[%s227 + $0xd4] sm:$0xf]
                %336 = vst [vmem:[%s228 + $0xd4] sm:$0xf] %v335
                %v337 = vld [vmem:[%s227 + $0xd8] sm:$0xf]
                %338 = vst [vmem:[%s228 + $0xd8] sm:$0xf] %v337
                %v339 = vld [vmem:[%s227 + $0xdc] sm:$0xf]
                %340 = vst [vmem:[%s228 + $0xdc] sm:$0xf] %v339
                %v341 = vld [vmem:[%s227 + $0xe0] sm:$0xf]
                %342 = vst [vmem:[%s228 + $0xe0] sm:$0xf] %v341
                %v343 = vld [vmem:[%s227 + $0xe4] sm:$0xf]
                %344 = vst [vmem:[%s228 + $0xe4] sm:$0xf] %v343
                %v345 = vld [vmem:[%s227 + $0x3a0] sm:$0xf]
                %346 = vst [vmem:[%s228 + $0xe8] sm:$0xf] %v345
                %v347 = vld [vmem:[%s227 + $0x3a4] sm:$0xf]
                %348 = vst [vmem:[%s228 + $0xec] sm:$0xf] %v347
                %v349 = vld [vmem:[%s227 + $0x3a8] sm:$0xf]
                %350 = vst [vmem:[%s228 + $0xf0] sm:$0xf] %v349
                %v351 = vld [vmem:[%s227 + $0x3ac] sm:$0xf]
                %352 = vst [vmem:[%s228 + $0xf4] sm:$0xf] %v351
                %v353 = vld [vmem:[%s227 + $0x3b0] sm:$0xf]
                %354 = vst [vmem:[%s228 + $0xf8] sm:$0xf] %v353
                %v355 = vld [vmem:[%s227 + $0x3b4] sm:$0xf]
                %356 = vst [vmem:[%s228 + $0xfc] sm:$0xf] %v355
                %v357 = vld [vmem:[%s227 + $0x3b8] sm:$0xf]
                %358 = vst [vmem:[%s228 + $0x100] sm:$0xf] %v357
                %v359 = vld [vmem:[%s227 + $0x3bc] sm:$0xf]
                %360 = vst [vmem:[%s228 + $0x104] sm:$0xf] %v359
                %v361 = vld [vmem:[%s227 + $0x3c0] sm:$0xf]
                %362 = vst [vmem:[%s228 + $0x108] sm:$0xf] %v361
                %v363 = vld [vmem:[%s227 + $0x3c4] sm:$0xf]
                %364 = vst [vmem:[%s228 + $0x10c] sm:$0xf] %v363
                %v365 = vld [vmem:[%s227 + $0x3c8] sm:$0xf]
                %366 = vst [vmem:[%s228 + $0x110] sm:$0xf] %v365
                %v367 = vld [vmem:[%s227 + $0x3cc] sm:$0xf]
                %368 = vst [vmem:[%s228 + $0x114] sm:$0xf] %v367
                %v369 = vld [vmem:[%s227 + $0x3d0] sm:$0xf]
                %370 = vst [vmem:[%s228 + $0x118] sm:$0xf] %v369
                %v371 = vld [vmem:[%s227 + $0x3d4] sm:$0xf]
                %372 = vst [vmem:[%s228 + $0x11c] sm:$0xf] %v371
                %v373 = vld [vmem:[%s227 + $0x3d8] sm:$0xf]
                %374 = vst [vmem:[%s228 + $0x120] sm:$0xf] %v373
                %v375 = vld [vmem:[%s227 + $0x3dc] sm:$0xf]
                %376 = vst [vmem:[%s228 + $0x124] sm:$0xf] %v375
                %v377 = vld [vmem:[%s227 + $0x3e0] sm:$0xf]
                %378 = vst [vmem:[%s228 + $0x128] sm:$0xf] %v377
                %v379 = vld [vmem:[%s227 + $0x3e4] sm:$0xf]
                %380 = vst [vmem:[%s228 + $0x12c] sm:$0xf] %v379
                %v381 = vld [vmem:[%s227 + $0x3e8] sm:$0xf]
                %382 = vst [vmem:[%s228 + $0x130] sm:$0xf] %v381
                %v383 = vld [vmem:[%s227 + $0x3ec] sm:$0xf]
                %384 = vst [vmem:[%s228 + $0x134] sm:$0xf] %v383
                %v385 = vld [vmem:[%s227 + $0x3f0] sm:$0xf]
                %386 = vst [vmem:[%s228 + $0x138] sm:$0xf] %v385
                %v387 = vld [vmem:[%s227 + $0x3f4] sm:$0xf]
                %388 = vst [vmem:[%s228 + $0x13c] sm:$0xf] %v387
                %v389 = vld [vmem:[%s227 + $0x3f8] sm:$0xf]
                %390 = vst [vmem:[%s228 + $0x140] sm:$0xf] %v389
                %v391 = vld [vmem:[%s227 + $0x3fc] sm:$0xf]
                %392 = vst [vmem:[%s228 + $0x144] sm:$0xf] %v391
                %v393 = vld [vmem:[%s227 + $0x400] sm:$0xf]
                %394 = vst [vmem:[%s228 + $0x148] sm:$0xf] %v393
                %v395 = vld [vmem:[%s227 + $0x404] sm:$0xf]
                %396 = vst [vmem:[%s228 + $0x14c] sm:$0xf] %v395
                %v397 = vld [vmem:[%s227 + $0x408] sm:$0xf]
                %398 = vst [vmem:[%s228 + $0x150] sm:$0xf] %v397
                %v399 = vld [vmem:[%s227 + $0x40c] sm:$0xf]
                %400 = vst [vmem:[%s228 + $0x154] sm:$0xf] %v399
                %v401 = vld [vmem:[%s227 + $0x410] sm:$0xf]
                %402 = vst [vmem:[%s228 + $0x158] sm:$0xf] %v401
                %v403 = vld [vmem:[%s227 + $0x414] sm:$0xf]
                %404 = vst [vmem:[%s228 + $0x15c] sm:$0xf] %v403
                %v405 = vld [vmem:[%s227 + $0x418] sm:$0xf]
                %406 = vst [vmem:[%s228 + $0x160] sm:$0xf] %v405
                %v407 = vld [vmem:[%s227 + $0x41c] sm:$0xf]
                %408 = vst [vmem:[%s228 + $0x164] sm:$0xf] %v407
                %v409 = vld [vmem:[%s227 + $0x420] sm:$0xf]
                %410 = vst [vmem:[%s228 + $0x168] sm:$0xf] %v409
                %v411 = vld [vmem:[%s227 + $0x424] sm:$0xf]
                %412 = vst [vmem:[%s228 + $0x16c] sm:$0xf] %v411
                %v413 = vld [vmem:[%s227 + $0x428] sm:$0xf]
                %414 = vst [vmem:[%s228 + $0x170] sm:$0xf] %v413
                %v415 = vld [vmem:[%s227 + $0x42c] sm:$0xf]
                %416 = vst [vmem:[%s228 + $0x174] sm:$0xf] %v415
                %v417 = vld [vmem:[%s227 + $0x430] sm:$0xf]
                %418 = vst [vmem:[%s228 + $0x178] sm:$0xf] %v417
                %v419 = vld [vmem:[%s227 + $0x434] sm:$0xf]
                %420 = vst [vmem:[%s228 + $0x17c] sm:$0xf] %v419
                %v421 = vld [vmem:[%s227 + $0x438] sm:$0xf]
                %422 = vst [vmem:[%s228 + $0x180] sm:$0xf] %v421
                %v423 = vld [vmem:[%s227 + $0x43c] sm:$0xf]
                %424 = vst [vmem:[%s228 + $0x184] sm:$0xf] %v423
                %v425 = vld [vmem:[%s227 + $0x440] sm:$0xf]
                %426 = vst [vmem:[%s228 + $0x188] sm:$0xf] %v425
                %v427 = vld [vmem:[%s227 + $0x444] sm:$0xf]
                %428 = vst [vmem:[%s228 + $0x18c] sm:$0xf] %v427
                %v429 = vld [vmem:[%s227 + $0x448] sm:$0xf]
                %430 = vst [vmem:[%s228 + $0x190] sm:$0xf] %v429
                %v431 = vld [vmem:[%s227 + $0x44c] sm:$0xf]
                %432 = vst [vmem:[%s228 + $0x194] sm:$0xf] %v431
                %v433 = vld [vmem:[%s227 + $0x450] sm:$0xf]
                %434 = vst [vmem:[%s228 + $0x198] sm:$0xf] %v433
                %v435 = vld [vmem:[%s227 + $0x454] sm:$0xf]
                %436 = vst [vmem:[%s228 + $0x19c] sm:$0xf] %v435
                %v437 = vld [vmem:[%s227 + $0x458] sm:$0xf]
                %438 = vst [vmem:[%s228 + $0x1a0] sm:$0xf] %v437
                %v439 = vld [vmem:[%s227 + $0x45c] sm:$0xf]
                %440 = vst [vmem:[%s228 + $0x1a4] sm:$0xf] %v439
                %v441 = vld [vmem:[%s227 + $0x460] sm:$0xf]
                %442 = vst [vmem:[%s228 + $0x1a8] sm:$0xf] %v441
                %v443 = vld [vmem:[%s227 + $0x464] sm:$0xf]
                %444 = vst [vmem:[%s228 + $0x1ac] sm:$0xf] %v443
                %v445 = vld [vmem:[%s227 + $0x468] sm:$0xf]
                %446 = vst [vmem:[%s228 + $0x1b0] sm:$0xf] %v445
                %v447 = vld [vmem:[%s227 + $0x46c] sm:$0xf]
                %448 = vst [vmem:[%s228 + $0x1b4] sm:$0xf] %v447
                %v449 = vld [vmem:[%s227 + $0x470] sm:$0xf]
                %450 = vst [vmem:[%s228 + $0x1b8] sm:$0xf] %v449
                %v451 = vld [vmem:[%s227 + $0x474] sm:$0xf]
                %452 = vst [vmem:[%s228 + $0x1bc] sm:$0xf] %v451
                %v453 = vld [vmem:[%s227 + $0x478] sm:$0xf]
                %454 = vst [vmem:[%s228 + $0x1c0] sm:$0xf] %v453
                %v455 = vld [vmem:[%s227 + $0x47c] sm:$0xf]
                %456 = vst [vmem:[%s228 + $0x1c4] sm:$0xf] %v455
                %v457 = vld [vmem:[%s227 + $0x480] sm:$0xf]
                %458 = vst [vmem:[%s228 + $0x1c8] sm:$0xf] %v457
                %v459 = vld [vmem:[%s227 + $0x484] sm:$0xf]
                %460 = vst [vmem:[%s228 + $0x1cc] sm:$0xf] %v459
                %v461 = vld [vmem:[%s227 + $0x740] sm:$0xf]
                %462 = vst [vmem:[%s228 + $0x1d0] sm:$0xf] %v461
                %v463 = vld [vmem:[%s227 + $0x744] sm:$0xf]
                %464 = vst [vmem:[%s228 + $0x1d4] sm:$0xf] %v463
                %v465 = vld [vmem:[%s227 + $0x748] sm:$0xf]
                %466 = vst [vmem:[%s228 + $0x1d8] sm:$0xf] %v465
                %v467 = vld [vmem:[%s227 + $0x74c] sm:$0xf]
                %468 = vst [vmem:[%s228 + $0x1dc] sm:$0xf] %v467
                %v469 = vld [vmem:[%s227 + $0x750] sm:$0xf]
                %470 = vst [vmem:[%s228 + $0x1e0] sm:$0xf] %v469
                %v471 = vld [vmem:[%s227 + $0x754] sm:$0xf]
                %472 = vst [vmem:[%s228 + $0x1e4] sm:$0xf] %v471
                %v473 = vld [vmem:[%s227 + $0x758] sm:$0xf]
                %474 = vst [vmem:[%s228 + $0x1e8] sm:$0xf] %v473
                %v475 = vld [vmem:[%s227 + $0x75c] sm:$0xf]
                %476 = vst [vmem:[%s228 + $0x1ec] sm:$0xf] %v475
                %v477 = vld [vmem:[%s227 + $0x760] sm:$0xf]
                %478 = vst [vmem:[%s228 + $0x1f0] sm:$0xf] %v477
                %v479 = vld [vmem:[%s227 + $0x764] sm:$0xf]
                %480 = vst [vmem:[%s228 + $0x1f4] sm:$0xf] %v479
                %v481 = vld [vmem:[%s227 + $0x768] sm:$0xf]
                %482 = vst [vmem:[%s228 + $0x1f8] sm:$0xf] %v481
                %v483 = vld [vmem:[%s227 + $0x76c] sm:$0xf]
                %484 = vst [vmem:[%s228 + $0x1fc] sm:$0xf] %v483
                %v485 = vld [vmem:[%s227 + $0x770] sm:$0xf]
                %486 = vst [vmem:[%s228 + $0x200] sm:$0xf] %v485
                %v487 = vld [vmem:[%s227 + $0x774] sm:$0xf]
                %488 = vst [vmem:[%s228 + $0x204] sm:$0xf] %v487
                %v489 = vld [vmem:[%s227 + $0x778] sm:$0xf]
                %490 = vst [vmem:[%s228 + $0x208] sm:$0xf] %v489
                %v491 = vld [vmem:[%s227 + $0x77c] sm:$0xf]
                %492 = vst [vmem:[%s228 + $0x20c] sm:$0xf] %v491
                %v493 = vld [vmem:[%s227 + $0x780] sm:$0xf]
                %494 = vst [vmem:[%s228 + $0x210] sm:$0xf] %v493
                %v495 = vld [vmem:[%s227 + $0x784] sm:$0xf]
                %496 = vst [vmem:[%s228 + $0x214] sm:$0xf] %v495
                %v497 = vld [vmem:[%s227 + $0x788] sm:$0xf]
                %498 = vst [vmem:[%s228 + $0x218] sm:$0xf] %v497
                %v499 = vld [vmem:[%s227 + $0x78c] sm:$0xf]
                %500 = vst [vmem:[%s228 + $0x21c] sm:$0xf] %v499
                %v501 = vld [vmem:[%s227 + $0x790] sm:$0xf]
                %502 = vst [vmem:[%s228 + $0x220] sm:$0xf] %v501
                %v503 = vld [vmem:[%s227 + $0x794] sm:$0xf]
                %504 = vst [vmem:[%s228 + $0x224] sm:$0xf] %v503
                %v505 = vld [vmem:[%s227 + $0x798] sm:$0xf]
                %506 = vst [vmem:[%s228 + $0x228] sm:$0xf] %v505
                %v507 = vld [vmem:[%s227 + $0x79c] sm:$0xf]
                %508 = vst [vmem:[%s228 + $0x22c] sm:$0xf] %v507
                %v509 = vld [vmem:[%s227 + $0x7a0] sm:$0xf]
                %510 = vst [vmem:[%s228 + $0x230] sm:$0xf] %v509
                %v511 = vld [vmem:[%s227 + $0x7a4] sm:$0xf]
                %512 = vst [vmem:[%s228 + $0x234] sm:$0xf] %v511
                %v513 = vld [vmem:[%s227 + $0x7a8] sm:$0xf]
                %514 = vst [vmem:[%s228 + $0x238] sm:$0xf] %v513
                %v515 = vld [vmem:[%s227 + $0x7ac] sm:$0xf]
                %516 = vst [vmem:[%s228 + $0x23c] sm:$0xf] %v515
                %v517 = vld [vmem:[%s227 + $0x7b0] sm:$0xf]
                %518 = vst [vmem:[%s228 + $0x240] sm:$0xf] %v517
                %v519 = vld [vmem:[%s227 + $0x7b4] sm:$0xf]
                %520 = vst [vmem:[%s228 + $0x244] sm:$0xf] %v519
                %v521 = vld [vmem:[%s227 + $0x7b8] sm:$0xf]
                %522 = vst [vmem:[%s228 + $0x248] sm:$0xf] %v521
                %v523 = vld [vmem:[%s227 + $0x7bc] sm:$0xf]
                %524 = vst [vmem:[%s228 + $0x24c] sm:$0xf] %v523
                %v525 = vld [vmem:[%s227 + $0x7c0] sm:$0xf]
                %526 = vst [vmem:[%s228 + $0x250] sm:$0xf] %v525
                %v527 = vld [vmem:[%s227 + $0x7c4] sm:$0xf]
                %528 = vst [vmem:[%s228 + $0x254] sm:$0xf] %v527
                %v529 = vld [vmem:[%s227 + $0x7c8] sm:$0xf]
                %530 = vst [vmem:[%s228 + $0x258] sm:$0xf] %v529
                %v531 = vld [vmem:[%s227 + $0x7cc] sm:$0xf]
                %532 = vst [vmem:[%s228 + $0x25c] sm:$0xf] %v531
                %v533 = vld [vmem:[%s227 + $0x7d0] sm:$0xf]
                %534 = vst [vmem:[%s228 + $0x260] sm:$0xf] %v533
                %v535 = vld [vmem:[%s227 + $0x7d4] sm:$0xf]
                %536 = vst [vmem:[%s228 + $0x264] sm:$0xf] %v535
                %v537 = vld [vmem:[%s227 + $0x7d8] sm:$0xf]
                %538 = vst [vmem:[%s228 + $0x268] sm:$0xf] %v537
                %v539 = vld [vmem:[%s227 + $0x7dc] sm:$0xf]
                %540 = vst [vmem:[%s228 + $0x26c] sm:$0xf] %v539
                %v541 = vld [vmem:[%s227 + $0x7e0] sm:$0xf]
                %542 = vst [vmem:[%s228 + $0x270] sm:$0xf] %v541
                %v543 = vld [vmem:[%s227 + $0x7e4] sm:$0xf]
                %544 = vst [vmem:[%s228 + $0x274] sm:$0xf] %v543
                %v545 = vld [vmem:[%s227 + $0x7e8] sm:$0xf]
                %546 = vst [vmem:[%s228 + $0x278] sm:$0xf] %v545
                %v547 = vld [vmem:[%s227 + $0x7ec] sm:$0xf]
                %548 = vst [vmem:[%s228 + $0x27c] sm:$0xf] %v547
                %v549 = vld [vmem:[%s227 + $0x7f0] sm:$0xf]
                %550 = vst [vmem:[%s228 + $0x280] sm:$0xf] %v549
                %v551 = vld [vmem:[%s227 + $0x7f4] sm:$0xf]
                %552 = vst [vmem:[%s228 + $0x284] sm:$0xf] %v551
                %v553 = vld [vmem:[%s227 + $0x7f8] sm:$0xf]
                %554 = vst [vmem:[%s228 + $0x288] sm:$0xf] %v553
                %v555 = vld [vmem:[%s227 + $0x7fc] sm:$0xf]
                %556 = vst [vmem:[%s228 + $0x28c] sm:$0xf] %v555
                %v557 = vld [vmem:[%s227 + $0x800] sm:$0xf]
                %558 = vst [vmem:[%s228 + $0x290] sm:$0xf] %v557
                %v559 = vld [vmem:[%s227 + $0x804] sm:$0xf]
                %560 = vst [vmem:[%s228 + $0x294] sm:$0xf] %v559
                %v561 = vld [vmem:[%s227 + $0x808] sm:$0xf]
                %562 = vst [vmem:[%s228 + $0x298] sm:$0xf] %v561
                %v563 = vld [vmem:[%s227 + $0x80c] sm:$0xf]
                %564 = vst [vmem:[%s228 + $0x29c] sm:$0xf] %v563
                %v565 = vld [vmem:[%s227 + $0x810] sm:$0xf]
                %566 = vst [vmem:[%s228 + $0x2a0] sm:$0xf] %v565
                %v567 = vld [vmem:[%s227 + $0x814] sm:$0xf]
                %568 = vst [vmem:[%s228 + $0x2a4] sm:$0xf] %v567
                %v569 = vld [vmem:[%s227 + $0x818] sm:$0xf]
                %570 = vst [vmem:[%s228 + $0x2a8] sm:$0xf] %v569
                %v571 = vld [vmem:[%s227 + $0x81c] sm:$0xf]
                %572 = vst [vmem:[%s228 + $0x2ac] sm:$0xf] %v571
                %v573 = vld [vmem:[%s227 + $0x820] sm:$0xf]
                %574 = vst [vmem:[%s228 + $0x2b0] sm:$0xf] %v573
                %v575 = vld [vmem:[%s227 + $0x824] sm:$0xf]
                %576 = vst [vmem:[%s228 + $0x2b4] sm:$0xf] %v575
                %v577 = vld [vmem:[%s227 + $0xae0] sm:$0xf]
                %578 = vst [vmem:[%s228 + $0x2b8] sm:$0xf] %v577
                %v579 = vld [vmem:[%s227 + $0xae4] sm:$0xf]
                %580 = vst [vmem:[%s228 + $0x2bc] sm:$0xf] %v579
                %v581 = vld [vmem:[%s227 + $0xae8] sm:$0xf]
                %582 = vst [vmem:[%s228 + $0x2c0] sm:$0xf] %v581
                %v583 = vld [vmem:[%s227 + $0xaec] sm:$0xf]
                %584 = vst [vmem:[%s228 + $0x2c4] sm:$0xf] %v583
                %v585 = vld [vmem:[%s227 + $0xaf0] sm:$0xf]
                %586 = vst [vmem:[%s228 + $0x2c8] sm:$0xf] %v585
                %v587 = vld [vmem:[%s227 + $0xaf4] sm:$0xf]
                %588 = vst [vmem:[%s228 + $0x2cc] sm:$0xf] %v587
                %v589 = vld [vmem:[%s227 + $0xaf8] sm:$0xf]
                %590 = vst [vmem:[%s228 + $0x2d0] sm:$0xf] %v589
                %v591 = vld [vmem:[%s227 + $0xafc] sm:$0xf]
                %592 = vst [vmem:[%s228 + $0x2d4] sm:$0xf] %v591
                %v593 = vld [vmem:[%s227 + $0xb00] sm:$0xf]
                %594 = vst [vmem:[%s228 + $0x2d8] sm:$0xf] %v593
                %v595 = vld [vmem:[%s227 + $0xb04] sm:$0xf]
                %596 = vst [vmem:[%s228 + $0x2dc] sm:$0xf] %v595
                %v597 = vld [vmem:[%s227 + $0xb08] sm:$0xf]
                %598 = vst [vmem:[%s228 + $0x2e0] sm:$0xf] %v597
                %v599 = vld [vmem:[%s227 + $0xb0c] sm:$0xf]
                %600 = vst [vmem:[%s228 + $0x2e4] sm:$0xf] %v599
                %v601 = vld [vmem:[%s227 + $0xb10] sm:$0xf]
                %602 = vst [vmem:[%s228 + $0x2e8] sm:$0xf] %v601
                %v603 = vld [vmem:[%s227 + $0xb14] sm:$0xf]
                %604 = vst [vmem:[%s228 + $0x2ec] sm:$0xf] %v603
                %v605 = vld [vmem:[%s227 + $0xb18] sm:$0xf]
                %606 = vst [vmem:[%s228 + $0x2f0] sm:$0xf] %v605
                %v607 = vld [vmem:[%s227 + $0xb1c] sm:$0xf]
                %608 = vst [vmem:[%s228 + $0x2f4] sm:$0xf] %v607
                %v609 = vld [vmem:[%s227 + $0xb20] sm:$0xf]
                %610 = vst [vmem:[%s228 + $0x2f8] sm:$0xf] %v609
                %v611 = vld [vmem:[%s227 + $0xb24] sm:$0xf]
                %612 = vst [vmem:[%s228 + $0x2fc] sm:$0xf] %v611
                %v613 = vld [vmem:[%s227 + $0xb28] sm:$0xf]
                %614 = vst [vmem:[%s228 + $0x300] sm:$0xf] %v613
                %v615 = vld [vmem:[%s227 + $0xb2c] sm:$0xf]
                %616 = vst [vmem:[%s228 + $0x304] sm:$0xf] %v615
                %v617 = vld [vmem:[%s227 + $0xb30] sm:$0xf]
                %618 = vst [vmem:[%s228 + $0x308] sm:$0xf] %v617
                %v619 = vld [vmem:[%s227 + $0xb34] sm:$0xf]
                %620 = vst [vmem:[%s228 + $0x30c] sm:$0xf] %v619
                %v621 = vld [vmem:[%s227 + $0xb38] sm:$0xf]
                %622 = vst [vmem:[%s228 + $0x310] sm:$0xf] %v621
                %v623 = vld [vmem:[%s227 + $0xb3c] sm:$0xf]
                %624 = vst [vmem:[%s228 + $0x314] sm:$0xf] %v623
                %v625 = vld [vmem:[%s227 + $0xb40] sm:$0xf]
                %626 = vst [vmem:[%s228 + $0x318] sm:$0xf] %v625
                %v627 = vld [vmem:[%s227 + $0xb44] sm:$0xf]
                %628 = vst [vmem:[%s228 + $0x31c] sm:$0xf] %v627
                %v629 = vld [vmem:[%s227 + $0xb48] sm:$0xf]
                %630 = vst [vmem:[%s228 + $0x320] sm:$0xf] %v629
                %v631 = vld [vmem:[%s227 + $0xb4c] sm:$0xf]
                %632 = vst [vmem:[%s228 + $0x324] sm:$0xf] %v631
                %v633 = vld [vmem:[%s227 + $0xb50] sm:$0xf]
                %634 = vst [vmem:[%s228 + $0x328] sm:$0xf] %v633
                %v635 = vld [vmem:[%s227 + $0xb54] sm:$0xf]
                %636 = vst [vmem:[%s228 + $0x32c] sm:$0xf] %v635
                %v637 = vld [vmem:[%s227 + $0xb58] sm:$0xf]
                %638 = vst [vmem:[%s228 + $0x330] sm:$0xf] %v637
                %v639 = vld [vmem:[%s227 + $0xb5c] sm:$0xf]
                %640 = vst [vmem:[%s228 + $0x334] sm:$0xf] %v639
                %v641 = vld [vmem:[%s227 + $0xb60] sm:$0xf]
                %642 = vst [vmem:[%s228 + $0x338] sm:$0xf] %v641
                %v643 = vld [vmem:[%s227 + $0xb64] sm:$0xf]
                %644 = vst [vmem:[%s228 + $0x33c] sm:$0xf] %v643
                %v645 = vld [vmem:[%s227 + $0xb68] sm:$0xf]
                %646 = vst [vmem:[%s228 + $0x340] sm:$0xf] %v645
                %v647 = vld [vmem:[%s227 + $0xb6c] sm:$0xf]
                %648 = vst [vmem:[%s228 + $0x344] sm:$0xf] %v647
                %v649 = vld [vmem:[%s227 + $0xb70] sm:$0xf]
                %650 = vst [vmem:[%s228 + $0x348] sm:$0xf] %v649
                %v651 = vld [vmem:[%s227 + $0xb74] sm:$0xf]
                %652 = vst [vmem:[%s228 + $0x34c] sm:$0xf] %v651
                %v653 = vld [vmem:[%s227 + $0xb78] sm:$0xf]
                %654 = vst [vmem:[%s228 + $0x350] sm:$0xf] %v653
                %v655 = vld [vmem:[%s227 + $0xb7c] sm:$0xf]
                %656 = vst [vmem:[%s228 + $0x354] sm:$0xf] %v655
                %v657 = vld [vmem:[%s227 + $0xb80] sm:$0xf]
                %658 = vst [vmem:[%s228 + $0x358] sm:$0xf] %v657
                %v659 = vld [vmem:[%s227 + $0xb84] sm:$0xf]
                %660 = vst [vmem:[%s228 + $0x35c] sm:$0xf] %v659
                %v661 = vld [vmem:[%s227 + $0xb88] sm:$0xf]
                %662 = vst [vmem:[%s228 + $0x360] sm:$0xf] %v661
                %v663 = vld [vmem:[%s227 + $0xb8c] sm:$0xf]
                %664 = vst [vmem:[%s228 + $0x364] sm:$0xf] %v663
                %v665 = vld [vmem:[%s227 + $0xb90] sm:$0xf]
                %666 = vst [vmem:[%s228 + $0x368] sm:$0xf] %v665
                %v667 = vld [vmem:[%s227 + $0xb94] sm:$0xf]
                %668 = vst [vmem:[%s228 + $0x36c] sm:$0xf] %v667
                %v669 = vld [vmem:[%s227 + $0xb98] sm:$0xf]
                %670 = vst [vmem:[%s228 + $0x370] sm:$0xf] %v669
                %v671 = vld [vmem:[%s227 + $0xb9c] sm:$0xf]
                %672 = vst [vmem:[%s228 + $0x374] sm:$0xf] %v671
                %v673 = vld [vmem:[%s227 + $0xba0] sm:$0xf]
                %674 = vst [vmem:[%s228 + $0x378] sm:$0xf] %v673
                %v675 = vld [vmem:[%s227 + $0xba4] sm:$0xf]
                %676 = vst [vmem:[%s228 + $0x37c] sm:$0xf] %v675
                %v677 = vld [vmem:[%s227 + $0xba8] sm:$0xf]
                %678 = vst [vmem:[%s228 + $0x380] sm:$0xf] %v677
                %v679 = vld [vmem:[%s227 + $0xbac] sm:$0xf]
                %680 = vst [vmem:[%s228 + $0x384] sm:$0xf] %v679
                %v681 = vld [vmem:[%s227 + $0xbb0] sm:$0xf]
                %682 = vst [vmem:[%s228 + $0x388] sm:$0xf] %v681
                %v683 = vld [vmem:[%s227 + $0xbb4] sm:$0xf]
                %684 = vst [vmem:[%s228 + $0x38c] sm:$0xf] %v683
                %v685 = vld [vmem:[%s227 + $0xbb8] sm:$0xf]
                %686 = vst [vmem:[%s228 + $0x390] sm:$0xf] %v685
                %v687 = vld [vmem:[%s227 + $0xbbc] sm:$0xf]
                %688 = vst [vmem:[%s228 + $0x394] sm:$0xf] %v687
                %v689 = vld [vmem:[%s227 + $0xbc0] sm:$0xf]
                %690 = vst [vmem:[%s228 + $0x398] sm:$0xf] %v689
                %v691 = vld [vmem:[%s227 + $0xbc4] sm:$0xf]
                %692 = vst [vmem:[%s228 + $0x39c] sm:$0xf] %v691
              $region37: #{discriminator_forward.3} parent=31 // loop_footer
                %s226 = sadd.s32 1, %s222
              $region38: #{discriminator_forward.3} parent=31 // loop_footer_branch
                %221 = sbr.rel target = $region34
              $region39: #{discriminator_forward.3} parent=31 // loop_exit
                _
            $region32: #{discriminator_forward.3} parent=23 // pred_fallthru
              _
          $region24: #{discriminator_forward.3} parent=19 // pred_fallthru
            _
          %1176 = vnop
        $region20: #{discriminator_forward.3} parent=15 // pred_fallthru
          _
        // Predicated region
        $region58: #{discriminator_forward.3} parent=15 // pred_check
          %p1177 = pneg %p71
        $region59: #{discriminator_forward.3} parent=15 // pred_check_branch
          %1179 = sbr.rel (%p1177) target = $region61
        $region60: #{discriminator_forward.3} parent=15 // pred_region
          %p1180 = scmp.lt.s32.totalorder %s18, 2
          %s1181 = scalar_select %p1180, %s18, 2
          %s1182 = smul.addr %s1181, 4
          %s1183 = smul.addr %s1182, 4
          %s1184 = scalar_lea.vmem %s1, %s1183
        $region61: #{discriminator_forward.3} parent=15 // pred_fallthru
          _
        // Predicated region
        $region62: #{discriminator_forward.3} parent=15 // pred_check
          %p1185 = pneg %p97
        $region63: #{discriminator_forward.3} parent=15 // pred_check_branch
          %1187 = sbr.rel (%p1185) target = $region65
        $region64: #{discriminator_forward.3} parent=15 // pred_region
          %p1188 = scmp.lt.s32.totalorder %s18, 2
          %s1189 = scalar_select %p1188, %s18, 2
          %s1190 = scalar_lea.vmem %s2, %s1189
        $region65: #{discriminator_forward.3} parent=15 // pred_fallthru
          _
        // Predicated region
        $region66: #{discriminator_forward.3} parent=15 // pred_check
          %p1191 = pneg %p123
        $region67: #{discriminator_forward.3} parent=15 // pred_check_branch
          %1193 = sbr.rel (%p1191) target = $region69
        $region68: #{discriminator_forward.3} parent=15 // pred_region
          %p1194 = scmp.lt.s32.totalorder %s18, 2
          %s1195 = scalar_select %p1194, %s18, 2
          %s1196 = scalar_lea.vmem %s3, %s1195
        $region69: #{discriminator_forward.3} parent=15 // pred_fallthru
          _
        // Predicated region
        $region70: #{discriminator_forward.3} parent=15 // pred_check
          %p1197 = pneg %p149
        $region71: #{discriminator_forward.3} parent=15 // pred_check_branch
          %1199 = sbr.rel (%p1197) target = $region73
        $region72: #{discriminator_forward.3} parent=15 // pred_region
          %p1200 = scmp.lt.s32.totalorder %s18, 2
          %s1201 = scalar_select %p1200, %s18, 2
          %s1202 = scalar_lea.vmem %s4, %s1201
        $region73: #{discriminator_forward.3} parent=15 // pred_fallthru
          _
      $region16: #{discriminator_forward.3} parent=5 // pred_fallthru
        _
      %p1203 = scmp.le.s32.totalorder 1, %s11
      %p1204 = scmp.lt.s32.totalorder %s11, 13
      %p1205 = pnand %p1203, %p1204
      %p1206 = pneg %p1205
      // Predicated region
      $region74: #{discriminator_forward.3} parent=5 // pred_check
        _
      $region75: #{discriminator_forward.3} parent=5 // pred_check_branch
        %1208 = sbr.rel (%p1205) target = $region77
      $region76: #{discriminator_forward.3} parent=5 // pred_region
        %s1209 = ssub.s32 %s11, 1
        %s1210 = sand.u32 %s38, 1
        %s1211 = sand.u32 %s38, 1
        %s1212 = smul.addr %s1211, 928
        %s1213 = scalar_lea.vmem [#allocation2], %s1212
        // Predicated region
        $region78: #{discriminator_forward.3} parent=76 // pred_check
          %p1214 = pneg %p51
        $region79: #{discriminator_forward.3} parent=76 // pred_check_branch
          %1216 = sbr.rel (%p1214) target = $region81
        $region80: #{discriminator_forward.3} parent=76 // pred_region
          _
        $region81: #{discriminator_forward.3} parent=76 // pred_fallthru
          _
        %s1217 = sand.u32 %s38, 1
        %s1218 = sand.u32 %s38, 1
        %s1219 = smul.addr %s1218, 928
        %s1220 = scalar_lea.vmem [#allocation2], %s1219
        %p1221 = pneg %p51
        %p1222 = pneg %p48
        %p1223 = scmp.lt.s32.totalorder %s20, 2
        %s1224 = scalar_select %p1223, %s20, 2
        %s1225 = smul.addr %s1224, 4
        %s1226 = smul.addr %s1225, 4
        %s1227 = scalar_lea.vmem %s1, %s1226
        %p1228 = pneg %p77
        %p1229 = pneg %p74
        %p1230 = scmp.lt.s32.totalorder %s20, 2
        %s1231 = scalar_select %p1230, %s20, 2
        %s1232 = scalar_lea.vmem %s2, %s1231
        %p1233 = pneg %p103
        %p1234 = pneg %p100
        %p1235 = scmp.lt.s32.totalorder %s20, 2
        %s1236 = scalar_select %p1235, %s20, 2
        %s1237 = scalar_lea.vmem %s3, %s1236
        %p1238 = pneg %p129
        %p1239 = pneg %p126
        %p1240 = scmp.lt.s32.totalorder %s20, 2
        %s1241 = scalar_select %p1240, %s20, 2
        %s1242 = scalar_lea.vmem %s4, %s1241
        %p1243 = pneg %p155
        %p1244 = pneg %p152
        %p1245 = pneg %p183
        %p1246 = pneg %p180
        %s1247 = smul.u32 58, %s21
        %p1248 = scmp.lt.s32.totalorder %s20, 2
        %s1249 = scalar_select %p1248, %s20, 2
        %p1250 = scmp.lt.s32.totalorder %s1247, 231
        %s1251 = scalar_select %p1250, %s1247, 231
        %s1252 = smul.addr %s1249, 232
        %s1253 = sadd.s32 %s1251, %s1252
        %s1254 = smul.addr %s1253, 4
        %s1255 = scalar_lea.vmem %s5, %s1254
        %s1256 = smul.u32 58, %s21
        %p1257 = scmp.lt.s32.totalorder %s20, 2
        %s1258 = scalar_select %p1257, %s20, 2
        %s1259 = smul.addr %s1258, 4
        %s1260 = smul.addr %s1259, 4
        %s1261 = scalar_lea.vmem %s1, %s1260
        %p1262 = scmp.lt.s32.totalorder %s20, 2
        %s1263 = scalar_select %p1262, %s20, 2
        %s1264 = scalar_lea.vmem %s2, %s1263
        %p1265 = scmp.lt.s32.totalorder %s20, 2
        %s1266 = scalar_select %p1265, %s20, 2
        %s1267 = scalar_lea.vmem %s3, %s1266
        %p1268 = scmp.lt.s32.totalorder %s20, 2
        %s1269 = scalar_select %p1268, %s20, 2
        %s1270 = scalar_lea.vmem %s4, %s1269
        %s1271 = smul.u32 58, %s21
        %p1272 = scmp.lt.s32.totalorder %s20, 2
        %s1273 = scalar_select %p1272, %s20, 2
        %p1274 = scmp.lt.s32.totalorder %s1271, 231
        %s1275 = scalar_select %p1274, %s1271, 231
        %s1276 = smul.addr %s1273, 232
        %s1277 = sadd.s32 %s1275, %s1276
        %s1278 = smul.addr %s1277, 4
        %s1279 = scalar_lea.vmem %s5, %s1278
        %s1280 = smul.u32 58, %s21
        %v1282 = vld [vmem:[%s1213] sm:$0xf]
        %v1283 = vld [vmem:[%s1213 + $0x4] sm:$0xf]
        %v1284 = vld [vmem:[%s1213 + $0x8] sm:$0xf]
        %v1285 = vld [vmem:[%s1213 + $0xc] sm:$0xf]
        %v1286 = vld [vmem:[%s1213 + $0x10] sm:$0xf]
        %v1287 = vld [vmem:[%s1213 + $0x14] sm:$0xf]
        %v1288 = vld [vmem:[%s1213 + $0x18] sm:$0xf]
        %v1289 = vld [vmem:[%s1213 + $0x1c] sm:$0xf]
        %v1290 = vld [vmem:[%s1213 + $0x20] sm:$0xf]
        %v1291 = vld [vmem:[%s1213 + $0x24] sm:$0xf]
        %v1292 = vld [vmem:[%s1213 + $0x28] sm:$0xf]
        %v1293 = vld [vmem:[%s1213 + $0x2c] sm:$0xf]
        %v1294 = vld [vmem:[%s1213 + $0x30] sm:$0xf]
        %v1295 = vld [vmem:[%s1213 + $0x34] sm:$0xf]
        %v1296 = vld [vmem:[%s1213 + $0x38] sm:$0xf]
        %v1297 = vld [vmem:[%s1213 + $0x3c] sm:$0xf]
        %v1298 = vld [vmem:[%s1213 + $0x40] sm:$0xf]
        %v1299 = vld [vmem:[%s1213 + $0x44] sm:$0xf]
        %v1300 = vld [vmem:[%s1213 + $0x48] sm:$0xf]
        %v1301 = vld [vmem:[%s1213 + $0x4c] sm:$0xf]
        %v1302 = vld [vmem:[%s1213 + $0x50] sm:$0xf]
        %v1303 = vld [vmem:[%s1213 + $0x54] sm:$0xf]
        %v1304 = vld [vmem:[%s1213 + $0x58] sm:$0xf]
        %v1305 = vld [vmem:[%s1213 + $0x5c] sm:$0xf]
        %v1306 = vld [vmem:[%s1213 + $0x60] sm:$0xf]
        %v1307 = vld [vmem:[%s1213 + $0x64] sm:$0xf]
        %v1308 = vld [vmem:[%s1213 + $0x68] sm:$0xf]
        %v1309 = vld [vmem:[%s1213 + $0x6c] sm:$0xf]
        %v1310 = vld [vmem:[%s1213 + $0x70] sm:$0xf]
        %v1311 = vld [vmem:[%s1213 + $0x74] sm:$0xf]
        %v1312 = vld [vmem:[%s1213 + $0x78] sm:$0xf]
        %v1313 = vld [vmem:[%s1213 + $0x7c] sm:$0xf]
        %v1314 = vld [vmem:[%s1213 + $0x80] sm:$0xf]
        %v1315 = vld [vmem:[%s1213 + $0x84] sm:$0xf]
        %v1316 = vld [vmem:[%s1213 + $0x88] sm:$0xf]
        %v1317 = vld [vmem:[%s1213 + $0x8c] sm:$0xf]
        %v1318 = vld [vmem:[%s1213 + $0x90] sm:$0xf]
        %v1319 = vld [vmem:[%s1213 + $0x94] sm:$0xf]
        %v1320 = vld [vmem:[%s1213 + $0x98] sm:$0xf]
        %v1321 = vld [vmem:[%s1213 + $0x9c] sm:$0xf]
        %v1322 = vld [vmem:[%s1213 + $0xa0] sm:$0xf]
        %v1323 = vld [vmem:[%s1213 + $0xa4] sm:$0xf]
        %v1324 = vld [vmem:[%s1213 + $0xa8] sm:$0xf]
        %v1325 = vld [vmem:[%s1213 + $0xac] sm:$0xf]
        %v1326 = vld [vmem:[%s1213 + $0xb0] sm:$0xf]
        %v1327 = vld [vmem:[%s1213 + $0xb4] sm:$0xf]
        %v1328 = vld [vmem:[%s1213 + $0xb8] sm:$0xf]
        %v1329 = vld [vmem:[%s1213 + $0xbc] sm:$0xf]
        %v1330 = vld [vmem:[%s1213 + $0xc0] sm:$0xf]
        %v1331 = vld [vmem:[%s1213 + $0xc4] sm:$0xf]
        %v1332 = vld [vmem:[%s1213 + $0xc8] sm:$0xf]
        %v1333 = vld [vmem:[%s1213 + $0xcc] sm:$0xf]
        %v1334 = vld [vmem:[%s1213 + $0xd0] sm:$0xf]
        %v1335 = vld [vmem:[%s1213 + $0xd4] sm:$0xf]
        %v1336 = vld [vmem:[%s1213 + $0xd8] sm:$0xf]
        %v1337 = vld [vmem:[%s1213 + $0xdc] sm:$0xf]
        %v1338 = vld [vmem:[%s1213 + $0xe0] sm:$0xf]
        %v1339 = vld [vmem:[%s1213 + $0xe4] sm:$0xf]
        %v1340 = vld [vmem:[%s1213 + $0xe8] sm:$0xf]
        %v1341 = vld [vmem:[%s1213 + $0xec] sm:$0xf]
        %v1342 = vld [vmem:[%s1213 + $0xf0] sm:$0xf]
        %v1343 = vld [vmem:[%s1213 + $0xf4] sm:$0xf]
        %v1344 = vld [vmem:[%s1213 + $0xf8] sm:$0xf]
        %v1345 = vld [vmem:[%s1213 + $0xfc] sm:$0xf]
        %v1346 = vld [vmem:[%s1213 + $0x100] sm:$0xf]
        %v1347 = vld [vmem:[%s1213 + $0x104] sm:$0xf]
        %v1348 = vld [vmem:[%s1213 + $0x108] sm:$0xf]
        %v1349 = vld [vmem:[%s1213 + $0x10c] sm:$0xf]
        %v1350 = vld [vmem:[%s1213 + $0x110] sm:$0xf]
        %v1351 = vld [vmem:[%s1213 + $0x114] sm:$0xf]
        %v1352 = vld [vmem:[%s1213 + $0x118] sm:$0xf]
        %v1353 = vld [vmem:[%s1213 + $0x11c] sm:$0xf]
        %v1354 = vld [vmem:[%s1213 + $0x120] sm:$0xf]
        %v1355 = vld [vmem:[%s1213 + $0x124] sm:$0xf]
        %v1356 = vld [vmem:[%s1213 + $0x128] sm:$0xf]
        %v1357 = vld [vmem:[%s1213 + $0x12c] sm:$0xf]
        %v1358 = vld [vmem:[%s1213 + $0x130] sm:$0xf]
        %v1359 = vld [vmem:[%s1213 + $0x134] sm:$0xf]
        %v1360 = vld [vmem:[%s1213 + $0x138] sm:$0xf]
        %v1361 = vld [vmem:[%s1213 + $0x13c] sm:$0xf]
        %v1362 = vld [vmem:[%s1213 + $0x140] sm:$0xf]
        %v1363 = vld [vmem:[%s1213 + $0x144] sm:$0xf]
        %v1364 = vld [vmem:[%s1213 + $0x148] sm:$0xf]
        %v1365 = vld [vmem:[%s1213 + $0x14c] sm:$0xf]
        %v1366 = vld [vmem:[%s1213 + $0x150] sm:$0xf]
        %v1367 = vld [vmem:[%s1213 + $0x154] sm:$0xf]
        %v1368 = vld [vmem:[%s1213 + $0x158] sm:$0xf]
        %v1369 = vld [vmem:[%s1213 + $0x15c] sm:$0xf]
        %v1370 = vld [vmem:[%s1213 + $0x160] sm:$0xf]
        %v1371 = vld [vmem:[%s1213 + $0x164] sm:$0xf]
        %v1372 = vld [vmem:[%s1213 + $0x168] sm:$0xf]
        %v1373 = vld [vmem:[%s1213 + $0x16c] sm:$0xf]
        %v1374 = vld [vmem:[%s1213 + $0x170] sm:$0xf]
        %v1375 = vld [vmem:[%s1213 + $0x174] sm:$0xf]
        %v1376 = vld [vmem:[%s1213 + $0x178] sm:$0xf]
        %v1377 = vld [vmem:[%s1213 + $0x17c] sm:$0xf]
        %v1378 = vld [vmem:[%s1213 + $0x180] sm:$0xf]
        %v1379 = vld [vmem:[%s1213 + $0x184] sm:$0xf]
        %v1380 = vld [vmem:[%s1213 + $0x188] sm:$0xf]
        %v1381 = vld [vmem:[%s1213 + $0x18c] sm:$0xf]
        %v1382 = vld [vmem:[%s1213 + $0x190] sm:$0xf]
        %v1383 = vld [vmem:[%s1213 + $0x194] sm:$0xf]
        %v1384 = vld [vmem:[%s1213 + $0x198] sm:$0xf]
        %v1385 = vld [vmem:[%s1213 + $0x19c] sm:$0xf]
        %v1386 = vld [vmem:[%s1213 + $0x1a0] sm:$0xf]
        %v1387 = vld [vmem:[%s1213 + $0x1a4] sm:$0xf]
        %v1388 = vld [vmem:[%s1213 + $0x1a8] sm:$0xf]
        %v1389 = vld [vmem:[%s1213 + $0x1ac] sm:$0xf]
        %v1390 = vld [vmem:[%s1213 + $0x1b0] sm:$0xf]
        %v1391 = vld [vmem:[%s1213 + $0x1b4] sm:$0xf]
        %v1392 = vld [vmem:[%s1213 + $0x1b8] sm:$0xf]
        %v1393 = vld [vmem:[%s1213 + $0x1bc] sm:$0xf]
        %v1394 = vld [vmem:[%s1213 + $0x1c0] sm:$0xf]
        %v1395 = vld [vmem:[%s1213 + $0x1c4] sm:$0xf]
        %v1396 = vld [vmem:[%s1213 + $0x1c8] sm:$0xf]
        %v1397 = vld [vmem:[%s1213 + $0x1cc] sm:$0xf]
        %v1398 = vld [vmem:[%s1213 + $0x1d0] sm:$0xf]
        %v1399 = vld [vmem:[%s1213 + $0x1d4] sm:$0xf]
        %v1400 = vld [vmem:[%s1213 + $0x1d8] sm:$0xf]
        %v1401 = vld [vmem:[%s1213 + $0x1dc] sm:$0xf]
        %v1402 = vld [vmem:[%s1213 + $0x1e0] sm:$0xf]
        %v1403 = vld [vmem:[%s1213 + $0x1e4] sm:$0xf]
        %v1404 = vld [vmem:[%s1213 + $0x1e8] sm:$0xf]
        %v1405 = vld [vmem:[%s1213 + $0x1ec] sm:$0xf]
        %v1406 = vld [vmem:[%s1213 + $0x1f0] sm:$0xf]
        %v1407 = vld [vmem:[%s1213 + $0x1f4] sm:$0xf]
        %v1408 = vld [vmem:[%s1213 + $0x1f8] sm:$0xf]
        %v1409 = vld [vmem:[%s1213 + $0x1fc] sm:$0xf]
        %v1410 = vld [vmem:[%s1213 + $0x200] sm:$0xf]
        %v1411 = vld [vmem:[%s1213 + $0x204] sm:$0xf]
        %v1412 = vld [vmem:[%s1213 + $0x208] sm:$0xf]
        %v1413 = vld [vmem:[%s1213 + $0x20c] sm:$0xf]
        %v1414 = vld [vmem:[%s1213 + $0x210] sm:$0xf]
        %v1415 = vld [vmem:[%s1213 + $0x214] sm:$0xf]
        %v1416 = vld [vmem:[%s1213 + $0x218] sm:$0xf]
        %v1417 = vld [vmem:[%s1213 + $0x21c] sm:$0xf]
        %v1418 = vld [vmem:[%s1213 + $0x220] sm:$0xf]
        %v1419 = vld [vmem:[%s1213 + $0x224] sm:$0xf]
        %v1420 = vld [vmem:[%s1213 + $0x228] sm:$0xf]
        %v1421 = vld [vmem:[%s1213 + $0x22c] sm:$0xf]
        %v1422 = vld [vmem:[%s1213 + $0x230] sm:$0xf]
        %v1423 = vld [vmem:[%s1213 + $0x234] sm:$0xf]
        %v1424 = vld [vmem:[%s1213 + $0x238] sm:$0xf]
        %v1425 = vld [vmem:[%s1213 + $0x23c] sm:$0xf]
        %v1426 = vld [vmem:[%s1213 + $0x240] sm:$0xf]
        %v1427 = vld [vmem:[%s1213 + $0x244] sm:$0xf]
        %v1428 = vld [vmem:[%s1213 + $0x248] sm:$0xf]
        %v1429 = vld [vmem:[%s1213 + $0x24c] sm:$0xf]
        %v1430 = vld [vmem:[%s1213 + $0x250] sm:$0xf]
        %v1431 = vld [vmem:[%s1213 + $0x254] sm:$0xf]
        %v1432 = vld [vmem:[%s1213 + $0x258] sm:$0xf]
        %v1433 = vld [vmem:[%s1213 + $0x25c] sm:$0xf]
        %v1434 = vld [vmem:[%s1213 + $0x260] sm:$0xf]
        %v1435 = vld [vmem:[%s1213 + $0x264] sm:$0xf]
        %v1436 = vld [vmem:[%s1213 + $0x268] sm:$0xf]
        %v1437 = vld [vmem:[%s1213 + $0x26c] sm:$0xf]
        %v1438 = vld [vmem:[%s1213 + $0x270] sm:$0xf]
        %v1439 = vld [vmem:[%s1213 + $0x274] sm:$0xf]
        %v1440 = vld [vmem:[%s1213 + $0x278] sm:$0xf]
        %v1441 = vld [vmem:[%s1213 + $0x27c] sm:$0xf]
        %v1442 = vld [vmem:[%s1213 + $0x280] sm:$0xf]
        %v1443 = vld [vmem:[%s1213 + $0x284] sm:$0xf]
        %v1444 = vld [vmem:[%s1213 + $0x288] sm:$0xf]
        %v1445 = vld [vmem:[%s1213 + $0x28c] sm:$0xf]
        %v1446 = vld [vmem:[%s1213 + $0x290] sm:$0xf]
        %v1447 = vld [vmem:[%s1213 + $0x294] sm:$0xf]
        %v1448 = vld [vmem:[%s1213 + $0x298] sm:$0xf]
        %v1449 = vld [vmem:[%s1213 + $0x29c] sm:$0xf]
        %v1450 = vld [vmem:[%s1213 + $0x2a0] sm:$0xf]
        %v1451 = vld [vmem:[%s1213 + $0x2a4] sm:$0xf]
        %v1452 = vld [vmem:[%s1213 + $0x2a8] sm:$0xf]
        %v1453 = vld [vmem:[%s1213 + $0x2ac] sm:$0xf]
        %v1454 = vld [vmem:[%s1213 + $0x2b0] sm:$0xf]
        %v1455 = vld [vmem:[%s1213 + $0x2b4] sm:$0xf]
        %v1456 = vld [vmem:[%s1213 + $0x2b8] sm:$0xf]
        %v1457 = vld [vmem:[%s1213 + $0x2bc] sm:$0xf]
        %v1458 = vld [vmem:[%s1213 + $0x2c0] sm:$0xf]
        %v1459 = vld [vmem:[%s1213 + $0x2c4] sm:$0xf]
        %v1460 = vld [vmem:[%s1213 + $0x2c8] sm:$0xf]
        %v1461 = vld [vmem:[%s1213 + $0x2cc] sm:$0xf]
        %v1462 = vld [vmem:[%s1213 + $0x2d0] sm:$0xf]
        %v1463 = vld [vmem:[%s1213 + $0x2d4] sm:$0xf]
        %v1464 = vld [vmem:[%s1213 + $0x2d8] sm:$0xf]
        %v1465 = vld [vmem:[%s1213 + $0x2dc] sm:$0xf]
        %v1466 = vld [vmem:[%s1213 + $0x2e0] sm:$0xf]
        %v1467 = vld [vmem:[%s1213 + $0x2e4] sm:$0xf]
        %v1468 = vld [vmem:[%s1213 + $0x2e8] sm:$0xf]
        %v1469 = vld [vmem:[%s1213 + $0x2ec] sm:$0xf]
        %v1470 = vld [vmem:[%s1213 + $0x2f0] sm:$0xf]
        %v1471 = vld [vmem:[%s1213 + $0x2f4] sm:$0xf]
        %v1472 = vld [vmem:[%s1213 + $0x2f8] sm:$0xf]
        %v1473 = vld [vmem:[%s1213 + $0x2fc] sm:$0xf]
        %v1474 = vld [vmem:[%s1213 + $0x300] sm:$0xf]
        %v1475 = vld [vmem:[%s1213 + $0x304] sm:$0xf]
        %v1476 = vld [vmem:[%s1213 + $0x308] sm:$0xf]
        %v1477 = vld [vmem:[%s1213 + $0x30c] sm:$0xf]
        %v1478 = vld [vmem:[%s1213 + $0x310] sm:$0xf]
        %v1479 = vld [vmem:[%s1213 + $0x314] sm:$0xf]
        %v1480 = vld [vmem:[%s1213 + $0x318] sm:$0xf]
        %v1481 = vld [vmem:[%s1213 + $0x31c] sm:$0xf]
        %v1482 = vld [vmem:[%s1213 + $0x320] sm:$0xf]
        %v1483 = vld [vmem:[%s1213 + $0x324] sm:$0xf]
        %v1484 = vld [vmem:[%s1213 + $0x328] sm:$0xf]
        %v1485 = vld [vmem:[%s1213 + $0x32c] sm:$0xf]
        %v1486 = vld [vmem:[%s1213 + $0x330] sm:$0xf]
        %v1487 = vld [vmem:[%s1213 + $0x334] sm:$0xf]
        %v1488 = vld [vmem:[%s1213 + $0x338] sm:$0xf]
        %v1489 = vld [vmem:[%s1213 + $0x33c] sm:$0xf]
        %v1490 = vld [vmem:[%s1213 + $0x340] sm:$0xf]
        %v1491 = vld [vmem:[%s1213 + $0x344] sm:$0xf]
        %v1492 = vld [vmem:[%s1213 + $0x348] sm:$0xf]
        %v1493 = vld [vmem:[%s1213 + $0x34c] sm:$0xf]
        %v1494 = vld [vmem:[%s1213 + $0x350] sm:$0xf]
        %v1495 = vld [vmem:[%s1213 + $0x354] sm:$0xf]
        %v1496 = vld [vmem:[%s1213 + $0x358] sm:$0xf]
        %v1497 = vld [vmem:[%s1213 + $0x35c] sm:$0xf]
        %v1498 = vld [vmem:[%s1213 + $0x360] sm:$0xf]
        %v1499 = vld [vmem:[%s1213 + $0x364] sm:$0xf]
        %v1500 = vld [vmem:[%s1213 + $0x368] sm:$0xf]
        %v1501 = vld [vmem:[%s1213 + $0x36c] sm:$0xf]
        %v1502 = vld [vmem:[%s1213 + $0x370] sm:$0xf]
        %v1503 = vld [vmem:[%s1213 + $0x374] sm:$0xf]
        %v1504 = vld [vmem:[%s1213 + $0x378] sm:$0xf]
        %v1505 = vld [vmem:[%s1213 + $0x37c] sm:$0xf]
        %v1506 = vld [vmem:[%s1213 + $0x380] sm:$0xf]
        %v1507 = vld [vmem:[%s1213 + $0x384] sm:$0xf]
        %v1508 = vld [vmem:[%s1213 + $0x388] sm:$0xf]
        %v1509 = vld [vmem:[%s1213 + $0x38c] sm:$0xf]
        %v1510 = vld [vmem:[%s1213 + $0x390] sm:$0xf]
        %v1511 = vld [vmem:[%s1213 + $0x394] sm:$0xf]
        %v1512 = vld [vmem:[%s1213 + $0x398] sm:$0xf]
        %v1513 = vld [vmem:[%s1213 + $0x39c] sm:$0xf]
        %v1514 = vld [vmem:[%s1261] sm:$0xf]
        %v1515 = vld [vmem:[%s1261 + $0x4] sm:$0xf]
        %v1516 = vld [vmem:[%s1261 + $0x8] sm:$0xf]
        %v1517 = vld [vmem:[%s1261 + $0xc] sm:$0x1]
        %v1750 = vunpack.c.l.b16 %v1282
        %v1751 = vunpack.c.l.b16 %v1283
        %v1752 = vunpack.c.l.b16 %v1284
        %v1753 = vunpack.c.l.b16 %v1285
        %v1754 = vunpack.c.l.b16 %v1286
        %v1755 = vunpack.c.l.b16 %v1287
        %v1756 = vunpack.c.l.b16 %v1288
        %v1757 = vunpack.c.l.b16 %v1289
        %v1758 = vunpack.c.l.b16 %v1290
        %v1759 = vunpack.c.l.b16 %v1291
        %v1760 = vunpack.c.l.b16 %v1292
        %v1761 = vunpack.c.l.b16 %v1293
        %v1762 = vunpack.c.l.b16 %v1294
        %v1763 = vunpack.c.l.b16 %v1295
        %v1764 = vunpack.c.l.b16 %v1296
        %v1765 = vunpack.c.l.b16 %v1297
        %v1766 = vunpack.c.l.b16 %v1298
        %v1767 = vunpack.c.l.b16 %v1299
        %v1768 = vunpack.c.l.b16 %v1300
        %v1769 = vunpack.c.l.b16 %v1301
        %v1770 = vunpack.c.l.b16 %v1302
        %v1771 = vunpack.c.l.b16 %v1303
        %v1772 = vunpack.c.l.b16 %v1304
        %v1773 = vunpack.c.l.b16 %v1305
        %v1774 = vunpack.c.l.b16 %v1306
        %v1775 = vunpack.c.l.b16 %v1307
        %v1776 = vunpack.c.l.b16 %v1308
        %v1777 = vunpack.c.l.b16 %v1309
        %v1778 = vunpack.c.l.b16 %v1310
        %v1779 = vunpack.c.l.b16 %v1311
        %v1780 = vunpack.c.l.b16 %v1312
        %v1781 = vunpack.c.l.b16 %v1313
        %v1782 = vunpack.c.l.b16 %v1314
        %v1783 = vunpack.c.l.b16 %v1315
        %v1784 = vunpack.c.l.b16 %v1316
        %v1785 = vunpack.c.l.b16 %v1317
        %v1786 = vunpack.c.l.b16 %v1318
        %v1787 = vunpack.c.l.b16 %v1319
        %v1788 = vunpack.c.l.b16 %v1320
        %v1789 = vunpack.c.l.b16 %v1321
        %v1790 = vunpack.c.l.b16 %v1322
        %v1791 = vunpack.c.l.b16 %v1323
        %v1792 = vunpack.c.l.b16 %v1324
        %v1793 = vunpack.c.l.b16 %v1325
        %v1794 = vunpack.c.l.b16 %v1326
        %v1795 = vunpack.c.l.b16 %v1327
        %v1796 = vunpack.c.l.b16 %v1328
        %v1797 = vunpack.c.l.b16 %v1329
        %v1798 = vunpack.c.l.b16 %v1330
        %v1799 = vunpack.c.l.b16 %v1331
        %v1800 = vunpack.c.l.b16 %v1332
        %v1801 = vunpack.c.l.b16 %v1333
        %v1802 = vunpack.c.l.b16 %v1334
        %v1803 = vunpack.c.l.b16 %v1335
        %v1804 = vunpack.c.l.b16 %v1336
        %v1805 = vunpack.c.l.b16 %v1337
        %v1806 = vunpack.c.l.b16 %v1338
        %v1807 = vunpack.c.l.b16 %v1339
        %v1808 = vunpack.c.l.b16 %v1340
        %v1809 = vunpack.c.l.b16 %v1341
        %v1810 = vunpack.c.l.b16 %v1342
        %v1811 = vunpack.c.l.b16 %v1343
        %v1812 = vunpack.c.l.b16 %v1344
        %v1813 = vunpack.c.l.b16 %v1345
        %v1814 = vunpack.c.l.b16 %v1346
        %v1815 = vunpack.c.l.b16 %v1347
        %v1816 = vunpack.c.l.b16 %v1348
        %v1817 = vunpack.c.l.b16 %v1349
        %v1818 = vunpack.c.l.b16 %v1350
        %v1819 = vunpack.c.l.b16 %v1351
        %v1820 = vunpack.c.l.b16 %v1352
        %v1821 = vunpack.c.l.b16 %v1353
        %v1822 = vunpack.c.l.b16 %v1354
        %v1823 = vunpack.c.l.b16 %v1355
        %v1824 = vunpack.c.l.b16 %v1356
        %v1825 = vunpack.c.l.b16 %v1357
        %v1826 = vunpack.c.l.b16 %v1358
        %v1827 = vunpack.c.l.b16 %v1359
        %v1828 = vunpack.c.l.b16 %v1360
        %v1829 = vunpack.c.l.b16 %v1361
        %v1830 = vunpack.c.l.b16 %v1362
        %v1831 = vunpack.c.l.b16 %v1363
        %v1832 = vunpack.c.l.b16 %v1364
        %v1833 = vunpack.c.l.b16 %v1365
        %v1834 = vunpack.c.l.b16 %v1366
        %v1835 = vunpack.c.l.b16 %v1367
        %v1836 = vunpack.c.l.b16 %v1368
        %v1837 = vunpack.c.l.b16 %v1369
        %v1838 = vunpack.c.l.b16 %v1370
        %v1839 = vunpack.c.l.b16 %v1371
        %v1840 = vunpack.c.l.b16 %v1372
        %v1841 = vunpack.c.l.b16 %v1373
        %v1842 = vunpack.c.l.b16 %v1374
        %v1843 = vunpack.c.l.b16 %v1375
        %v1844 = vunpack.c.l.b16 %v1376
        %v1845 = vunpack.c.l.b16 %v1377
        %v1846 = vunpack.c.l.b16 %v1378
        %v1847 = vunpack.c.l.b16 %v1379
        %v1848 = vunpack.c.l.b16 %v1380
        %v1849 = vunpack.c.l.b16 %v1381
        %v1850 = vunpack.c.l.b16 %v1382
        %v1851 = vunpack.c.l.b16 %v1383
        %v1852 = vunpack.c.l.b16 %v1384
        %v1853 = vunpack.c.l.b16 %v1385
        %v1854 = vunpack.c.l.b16 %v1386
        %v1855 = vunpack.c.l.b16 %v1387
        %v1856 = vunpack.c.l.b16 %v1388
        %v1857 = vunpack.c.l.b16 %v1389
        %v1858 = vunpack.c.l.b16 %v1390
        %v1859 = vunpack.c.l.b16 %v1391
        %v1860 = vunpack.c.l.b16 %v1392
        %v1861 = vunpack.c.l.b16 %v1393
        %v1862 = vunpack.c.l.b16 %v1394
        %v1863 = vunpack.c.l.b16 %v1395
        %v1864 = vunpack.c.l.b16 %v1396
        %v1865 = vunpack.c.l.b16 %v1397
        %v1866 = vunpack.c.l.b16 %v1398
        %v1867 = vunpack.c.l.b16 %v1399
        %v1868 = vunpack.c.l.b16 %v1400
        %v1869 = vunpack.c.l.b16 %v1401
        %v1870 = vunpack.c.l.b16 %v1402
        %v1871 = vunpack.c.l.b16 %v1403
        %v1872 = vunpack.c.l.b16 %v1404
        %v1873 = vunpack.c.l.b16 %v1405
        %v1874 = vunpack.c.l.b16 %v1406
        %v1875 = vunpack.c.l.b16 %v1407
        %v1876 = vunpack.c.l.b16 %v1408
        %v1877 = vunpack.c.l.b16 %v1409
        %v1878 = vunpack.c.l.b16 %v1410
        %v1879 = vunpack.c.l.b16 %v1411
        %v1880 = vunpack.c.l.b16 %v1412
        %v1881 = vunpack.c.l.b16 %v1413
        %v1882 = vunpack.c.l.b16 %v1414
        %v1883 = vunpack.c.l.b16 %v1415
        %v1884 = vunpack.c.l.b16 %v1416
        %v1885 = vunpack.c.l.b16 %v1417
        %v1886 = vunpack.c.l.b16 %v1418
        %v1887 = vunpack.c.l.b16 %v1419
        %v1888 = vunpack.c.l.b16 %v1420
        %v1889 = vunpack.c.l.b16 %v1421
        %v1890 = vunpack.c.l.b16 %v1422
        %v1891 = vunpack.c.l.b16 %v1423
        %v1892 = vunpack.c.l.b16 %v1424
        %v1893 = vunpack.c.l.b16 %v1425
        %v1894 = vunpack.c.l.b16 %v1426
        %v1895 = vunpack.c.l.b16 %v1427
        %v1896 = vunpack.c.l.b16 %v1428
        %v1897 = vunpack.c.l.b16 %v1429
        %v1898 = vunpack.c.l.b16 %v1430
        %v1899 = vunpack.c.l.b16 %v1431
        %v1900 = vunpack.c.l.b16 %v1432
        %v1901 = vunpack.c.l.b16 %v1433
        %v1902 = vunpack.c.l.b16 %v1434
        %v1903 = vunpack.c.l.b16 %v1435
        %v1904 = vunpack.c.l.b16 %v1436
        %v1905 = vunpack.c.l.b16 %v1437
        %v1906 = vunpack.c.l.b16 %v1438
        %v1907 = vunpack.c.l.b16 %v1439
        %v1908 = vunpack.c.l.b16 %v1440
        %v1909 = vunpack.c.l.b16 %v1441
        %v1910 = vunpack.c.l.b16 %v1442
        %v1911 = vunpack.c.l.b16 %v1443
        %v1912 = vunpack.c.l.b16 %v1444
        %v1913 = vunpack.c.l.b16 %v1445
        %v1914 = vunpack.c.l.b16 %v1446
        %v1915 = vunpack.c.l.b16 %v1447
        %v1916 = vunpack.c.l.b16 %v1448
        %v1917 = vunpack.c.l.b16 %v1449
        %v1918 = vunpack.c.l.b16 %v1450
        %v1919 = vunpack.c.l.b16 %v1451
        %v1920 = vunpack.c.l.b16 %v1452
        %v1921 = vunpack.c.l.b16 %v1453
        %v1922 = vunpack.c.l.b16 %v1454
        %v1923 = vunpack.c.l.b16 %v1455
        %v1924 = vunpack.c.l.b16 %v1456
        %v1925 = vunpack.c.l.b16 %v1457
        %v1926 = vunpack.c.l.b16 %v1458
        %v1927 = vunpack.c.l.b16 %v1459
        %v1928 = vunpack.c.l.b16 %v1460
        %v1929 = vunpack.c.l.b16 %v1461
        %v1930 = vunpack.c.l.b16 %v1462
        %v1931 = vunpack.c.l.b16 %v1463
        %v1932 = vunpack.c.l.b16 %v1464
        %v1933 = vunpack.c.l.b16 %v1465
        %v1934 = vunpack.c.l.b16 %v1466
        %v1935 = vunpack.c.l.b16 %v1467
        %v1936 = vunpack.c.l.b16 %v1468
        %v1937 = vunpack.c.l.b16 %v1469
        %v1938 = vunpack.c.l.b16 %v1470
        %v1939 = vunpack.c.l.b16 %v1471
        %v1940 = vunpack.c.l.b16 %v1472
        %v1941 = vunpack.c.l.b16 %v1473
        %v1942 = vunpack.c.l.b16 %v1474
        %v1943 = vunpack.c.l.b16 %v1475
        %v1944 = vunpack.c.l.b16 %v1476
        %v1945 = vunpack.c.l.b16 %v1477
        %v1946 = vunpack.c.l.b16 %v1478
        %v1947 = vunpack.c.l.b16 %v1479
        %v1948 = vunpack.c.l.b16 %v1480
        %v1949 = vunpack.c.l.b16 %v1481
        %v1950 = vunpack.c.l.b16 %v1482
        %v1951 = vunpack.c.l.b16 %v1483
        %v1952 = vunpack.c.l.b16 %v1484
        %v1953 = vunpack.c.l.b16 %v1485
        %v1954 = vunpack.c.l.b16 %v1486
        %v1955 = vunpack.c.l.b16 %v1487
        %v1956 = vunpack.c.l.b16 %v1488
        %v1957 = vunpack.c.l.b16 %v1489
        %v1958 = vunpack.c.l.b16 %v1490
        %v1959 = vunpack.c.l.b16 %v1491
        %v1960 = vunpack.c.l.b16 %v1492
        %v1961 = vunpack.c.l.b16 %v1493
        %v1962 = vunpack.c.l.b16 %v1494
        %v1963 = vunpack.c.l.b16 %v1495
        %v1964 = vunpack.c.l.b16 %v1496
        %v1965 = vunpack.c.l.b16 %v1497
        %v1966 = vunpack.c.l.b16 %v1498
        %v1967 = vunpack.c.l.b16 %v1499
        %v1968 = vunpack.c.l.b16 %v1500
        %v1969 = vunpack.c.l.b16 %v1501
        %v1970 = vunpack.c.l.b16 %v1502
        %v1971 = vunpack.c.l.b16 %v1503
        %v1972 = vunpack.c.l.b16 %v1504
        %v1973 = vunpack.c.l.b16 %v1505
        %v1974 = vunpack.c.l.b16 %v1506
        %v1975 = vunpack.c.l.b16 %v1507
        %v1976 = vunpack.c.l.b16 %v1508
        %v1977 = vunpack.c.l.b16 %v1509
        %v1978 = vunpack.c.l.b16 %v1510
        %v1979 = vunpack.c.l.b16 %v1511
        %v1980 = vunpack.c.l.b16 %v1512
        %v1981 = vunpack.c.l.b16 %v1513
        %v1982 = vpack.c.b16 %v1751, %v1750
        %v1983 = vpack.c.b16 %v1753, %v1752
        %v1984 = vpack.c.b16 %v1755, %v1754
        %v1985 = vpack.c.b16 %v1757, %v1756
        %v1986 = vpack.c.b16 %v1759, %v1758
        %v1987 = vpack.c.b16 %v1761, %v1760
        %v1988 = vpack.c.b16 %v1763, %v1762
        %v1989 = vpack.c.b16 %v1765, %v1764
        %v1990 = vpack.c.b16 %v1767, %v1766
        %v1991 = vpack.c.b16 %v1769, %v1768
        %v1992 = vpack.c.b16 %v1771, %v1770
        %v1993 = vpack.c.b16 %v1773, %v1772
        %v1994 = vpack.c.b16 %v1775, %v1774
        %v1995 = vpack.c.b16 %v1777, %v1776
        %v1996 = vpack.c.b16 %v1779, %v1778
        %v1997 = vpack.c.b16 %v1781, %v1780
        %v1998 = vpack.c.b16 %v1783, %v1782
        %v1999 = vpack.c.b16 %v1785, %v1784
        %v2000 = vpack.c.b16 %v1787, %v1786
        %v2001 = vpack.c.b16 %v1789, %v1788
        %v2002 = vpack.c.b16 %v1791, %v1790
        %v2003 = vpack.c.b16 %v1793, %v1792
        %v2004 = vpack.c.b16 %v1795, %v1794
        %v2005 = vpack.c.b16 %v1797, %v1796
        %v2006 = vpack.c.b16 %v1799, %v1798
        %v2007 = vpack.c.b16 %v1801, %v1800
        %v2008 = vpack.c.b16 %v1803, %v1802
        %v2009 = vpack.c.b16 %v1805, %v1804
        %v2010 = vpack.c.b16 %v1807, %v1806
        %v2011 = vpack.c.b16 %v1809, %v1808
        %v2012 = vpack.c.b16 %v1811, %v1810
        %v2013 = vpack.c.b16 %v1813, %v1812
        %v2014 = vpack.c.b16 %v1815, %v1814
        %v2015 = vpack.c.b16 %v1817, %v1816
        %v2016 = vpack.c.b16 %v1819, %v1818
        %v2017 = vpack.c.b16 %v1821, %v1820
        %v2018 = vpack.c.b16 %v1823, %v1822
        %v2019 = vpack.c.b16 %v1825, %v1824
        %v2020 = vpack.c.b16 %v1827, %v1826
        %v2021 = vpack.c.b16 %v1829, %v1828
        %v2022 = vpack.c.b16 %v1831, %v1830
        %v2023 = vpack.c.b16 %v1833, %v1832
        %v2024 = vpack.c.b16 %v1835, %v1834
        %v2025 = vpack.c.b16 %v1837, %v1836
        %v2026 = vpack.c.b16 %v1839, %v1838
        %v2027 = vpack.c.b16 %v1841, %v1840
        %v2028 = vpack.c.b16 %v1843, %v1842
        %v2029 = vpack.c.b16 %v1845, %v1844
        %v2030 = vpack.c.b16 %v1847, %v1846
        %v2031 = vpack.c.b16 %v1849, %v1848
        %v2032 = vpack.c.b16 %v1851, %v1850
        %v2033 = vpack.c.b16 %v1853, %v1852
        %v2034 = vpack.c.b16 %v1855, %v1854
        %v2035 = vpack.c.b16 %v1857, %v1856
        %v2036 = vpack.c.b16 %v1859, %v1858
        %v2037 = vpack.c.b16 %v1861, %v1860
        %v2038 = vpack.c.b16 %v1863, %v1862
        %v2039 = vpack.c.b16 %v1865, %v1864
        %v2040 = vpack.c.b16 %v1867, %v1866
        %v2041 = vpack.c.b16 %v1869, %v1868
        %v2042 = vpack.c.b16 %v1871, %v1870
        %v2043 = vpack.c.b16 %v1873, %v1872
        %v2044 = vpack.c.b16 %v1875, %v1874
        %v2045 = vpack.c.b16 %v1877, %v1876
        %v2046 = vpack.c.b16 %v1879, %v1878
        %v2047 = vpack.c.b16 %v1881, %v1880
        %v2048 = vpack.c.b16 %v1883, %v1882
        %v2049 = vpack.c.b16 %v1885, %v1884
        %v2050 = vpack.c.b16 %v1887, %v1886
        %v2051 = vpack.c.b16 %v1889, %v1888
        %v2052 = vpack.c.b16 %v1891, %v1890
        %v2053 = vpack.c.b16 %v1893, %v1892
        %v2054 = vpack.c.b16 %v1895, %v1894
        %v2055 = vpack.c.b16 %v1897, %v1896
        %v2056 = vpack.c.b16 %v1899, %v1898
        %v2057 = vpack.c.b16 %v1901, %v1900
        %v2058 = vpack.c.b16 %v1903, %v1902
        %v2059 = vpack.c.b16 %v1905, %v1904
        %v2060 = vpack.c.b16 %v1907, %v1906
        %v2061 = vpack.c.b16 %v1909, %v1908
        %v2062 = vpack.c.b16 %v1911, %v1910
        %v2063 = vpack.c.b16 %v1913, %v1912
        %v2064 = vpack.c.b16 %v1915, %v1914
        %v2065 = vpack.c.b16 %v1917, %v1916
        %v2066 = vpack.c.b16 %v1919, %v1918
        %v2067 = vpack.c.b16 %v1921, %v1920
        %v2068 = vpack.c.b16 %v1923, %v1922
        %v2069 = vpack.c.b16 %v1925, %v1924
        %v2070 = vpack.c.b16 %v1927, %v1926
        %v2071 = vpack.c.b16 %v1929, %v1928
        %v2072 = vpack.c.b16 %v1931, %v1930
        %v2073 = vpack.c.b16 %v1933, %v1932
        %v2074 = vpack.c.b16 %v1935, %v1934
        %v2075 = vpack.c.b16 %v1937, %v1936
        %v2076 = vpack.c.b16 %v1939, %v1938
        %v2077 = vpack.c.b16 %v1941, %v1940
        %v2078 = vpack.c.b16 %v1943, %v1942
        %v2079 = vpack.c.b16 %v1945, %v1944
        %v2080 = vpack.c.b16 %v1947, %v1946
        %v2081 = vpack.c.b16 %v1949, %v1948
        %v2082 = vpack.c.b16 %v1951, %v1950
        %v2083 = vpack.c.b16 %v1953, %v1952
        %v2084 = vpack.c.b16 %v1955, %v1954
        %v2085 = vpack.c.b16 %v1957, %v1956
        %v2086 = vpack.c.b16 %v1959, %v1958
        %v2087 = vpack.c.b16 %v1961, %v1960
        %v2088 = vpack.c.b16 %v1963, %v1962
        %v2089 = vpack.c.b16 %v1965, %v1964
        %v2090 = vpack.c.b16 %v1967, %v1966
        %v2091 = vpack.c.b16 %v1969, %v1968
        %v2092 = vpack.c.b16 %v1971, %v1970
        %v2093 = vpack.c.b16 %v1973, %v1972
        %v2094 = vpack.c.b16 %v1975, %v1974
        %v2095 = vpack.c.b16 %v1977, %v1976
        %v2096 = vpack.c.b16 %v1979, %v1978
        %v2097 = vpack.c.b16 %v1981, %v1980
        %v2102 = vunpack.c.l.b16 %v1514
        %v2103 = vunpack.c.l.b16 %v1515
        %v2104 = vunpack.c.l.b16 %v1516
        %v2105 = vunpack.c.l.b16 %v1517
        %v2106 = vpack.c.b16 %v2103, %v2102
        %v2107 = vpack.c.b16 %v2105, %v2104
        %vm2109 = vcmask 203776
        %v2111 = vsel %vm2109, %v1982, 0
        %v2114 = vsel %vm2109, %v1983, 0
        %v2117 = vsel %vm2109, %v1984, 0
        %v2120 = vsel %vm2109, %v1985, 0
        %v2123 = vsel %vm2109, %v1986, 0
        %v2126 = vsel %vm2109, %v1987, 0
        %v2129 = vsel %vm2109, %v1988, 0
        %v2132 = vsel %vm2109, %v1989, 0
        %v2135 = vsel %vm2109, %v1990, 0
        %v2138 = vsel %vm2109, %v1991, 0
        %v2141 = vsel %vm2109, %v1992, 0
        %v2144 = vsel %vm2109, %v1993, 0
        %v2147 = vsel %vm2109, %v1994, 0
        %v2150 = vsel %vm2109, %v1995, 0
        %v2153 = vsel %vm2109, %v1996, 0
        %v2156 = vsel %vm2109, %v1997, 0
        %v2159 = vsel %vm2109, %v1998, 0
        %v2162 = vsel %vm2109, %v1999, 0
        %v2165 = vsel %vm2109, %v2000, 0
        %v2168 = vsel %vm2109, %v2001, 0
        %v2171 = vsel %vm2109, %v2002, 0
        %v2174 = vsel %vm2109, %v2003, 0
        %v2177 = vsel %vm2109, %v2004, 0
        %v2180 = vsel %vm2109, %v2005, 0
        %v2183 = vsel %vm2109, %v2006, 0
        %v2186 = vsel %vm2109, %v2007, 0
        %v2189 = vsel %vm2109, %v2008, 0
        %v2192 = vsel %vm2109, %v2009, 0
        %v2195 = vsel %vm2109, %v2010, 0
        %v2198 = vsel %vm2109, %v2011, 0
        %v2201 = vsel %vm2109, %v2012, 0
        %v2204 = vsel %vm2109, %v2013, 0
        %v2207 = vsel %vm2109, %v2014, 0
        %v2210 = vsel %vm2109, %v2015, 0
        %v2213 = vsel %vm2109, %v2016, 0
        %v2216 = vsel %vm2109, %v2017, 0
        %v2219 = vsel %vm2109, %v2018, 0
        %v2222 = vsel %vm2109, %v2019, 0
        %v2225 = vsel %vm2109, %v2020, 0
        %v2228 = vsel %vm2109, %v2021, 0
        %v2231 = vsel %vm2109, %v2022, 0
        %v2234 = vsel %vm2109, %v2023, 0
        %v2237 = vsel %vm2109, %v2024, 0
        %v2240 = vsel %vm2109, %v2025, 0
        %v2243 = vsel %vm2109, %v2026, 0
        %v2246 = vsel %vm2109, %v2027, 0
        %v2249 = vsel %vm2109, %v2028, 0
        %v2252 = vsel %vm2109, %v2029, 0
        %v2255 = vsel %vm2109, %v2030, 0
        %v2258 = vsel %vm2109, %v2031, 0
        %v2261 = vsel %vm2109, %v2032, 0
        %v2264 = vsel %vm2109, %v2033, 0
        %v2267 = vsel %vm2109, %v2034, 0
        %v2270 = vsel %vm2109, %v2035, 0
        %v2273 = vsel %vm2109, %v2036, 0
        %v2276 = vsel %vm2109, %v2037, 0
        %v2279 = vsel %vm2109, %v2038, 0
        %v2282 = vsel %vm2109, %v2039, 0
        %v2285 = vsel %vm2109, %v2040, 0
        %v2288 = vsel %vm2109, %v2041, 0
        %v2291 = vsel %vm2109, %v2042, 0
        %v2294 = vsel %vm2109, %v2043, 0
        %v2297 = vsel %vm2109, %v2044, 0
        %v2300 = vsel %vm2109, %v2045, 0
        %v2303 = vsel %vm2109, %v2046, 0
        %v2306 = vsel %vm2109, %v2047, 0
        %v2309 = vsel %vm2109, %v2048, 0
        %v2312 = vsel %vm2109, %v2049, 0
        %v2315 = vsel %vm2109, %v2050, 0
        %v2318 = vsel %vm2109, %v2051, 0
        %v2321 = vsel %vm2109, %v2052, 0
        %v2324 = vsel %vm2109, %v2053, 0
        %v2327 = vsel %vm2109, %v2054, 0
        %v2330 = vsel %vm2109, %v2055, 0
        %v2333 = vsel %vm2109, %v2056, 0
        %v2336 = vsel %vm2109, %v2057, 0
        %v2339 = vsel %vm2109, %v2058, 0
        %v2342 = vsel %vm2109, %v2059, 0
        %v2345 = vsel %vm2109, %v2060, 0
        %v2348 = vsel %vm2109, %v2061, 0
        %v2351 = vsel %vm2109, %v2062, 0
        %v2354 = vsel %vm2109, %v2063, 0
        %v2357 = vsel %vm2109, %v2064, 0
        %v2360 = vsel %vm2109, %v2065, 0
        %v2363 = vsel %vm2109, %v2066, 0
        %v2366 = vsel %vm2109, %v2067, 0
        %v2369 = vsel %vm2109, %v2068, 0
        %v2372 = vsel %vm2109, %v2069, 0
        %v2375 = vsel %vm2109, %v2070, 0
        %v2378 = vsel %vm2109, %v2071, 0
        %v2381 = vsel %vm2109, %v2072, 0
        %v2384 = vsel %vm2109, %v2073, 0
        %v2387 = vsel %vm2109, %v2074, 0
        %v2390 = vsel %vm2109, %v2075, 0
        %v2393 = vsel %vm2109, %v2076, 0
        %v2396 = vsel %vm2109, %v2077, 0
        %v2399 = vsel %vm2109, %v2078, 0
        %v2402 = vsel %vm2109, %v2079, 0
        %v2405 = vsel %vm2109, %v2080, 0
        %v2408 = vsel %vm2109, %v2081, 0
        %v2411 = vsel %vm2109, %v2082, 0
        %v2414 = vsel %vm2109, %v2083, 0
        %v2417 = vsel %vm2109, %v2084, 0
        %v2420 = vsel %vm2109, %v2085, 0
        %v2423 = vsel %vm2109, %v2086, 0
        %v2426 = vsel %vm2109, %v2087, 0
        %v2429 = vsel %vm2109, %v2088, 0
        %v2432 = vsel %vm2109, %v2089, 0
        %v2435 = vsel %vm2109, %v2090, 0
        %v2438 = vsel %vm2109, %v2091, 0
        %v2441 = vsel %vm2109, %v2092, 0
        %v2444 = vsel %vm2109, %v2093, 0
        %v2447 = vsel %vm2109, %v2094, 0
        %v2450 = vsel %vm2109, %v2095, 0
        %v2453 = vsel %vm2109, %v2096, 0
        %v2456 = vsel %vm2109, %v2097, 0
        %vm2458 = vcmask 1043456
        %vm2459 = vcmask 1044480
        %v2460 = vsel %vm2458, 4294967295, 65535
        %v2461 = vsel %vm2459, %v2460, 0
        %v2463 = vand.u32 %v2107, %v2461
        %2465 = vmatprep.subr.bf16.mxu0 0
        %2466 = vmatpush1.bf16.msra.mxu0 %v2106
        %2467 = vmatprep.subr.bf16.mxu0 0
        %2468 = vmatpush1.bf16.msra.mxu0 %v2463
        %2469 = vmatprep.subr.bf16.mxu0 0
        %2470 = vmatpush1.bf16.msra.mxu0 0
        %2471 = vmatprep.subr.bf16.mxu0 0
        %2472 = vmatpush1.bf16.msra.mxu0 0
        %2473 = vmatprep.subr.bf16.mxu0 0
        %2474 = vmatpush1.bf16.msra.mxu0 0
        %2475 = vmatprep.subr.bf16.mxu0 0
        %2476 = vmatpush1.bf16.msra.mxu0 0
        %2477 = vmatprep.subr.bf16.mxu0 0
        %2478 = vmatpush1.bf16.msra.mxu0 0
        %2479 = vmatprep.subr.bf16.mxu0 0
        %2480 = vmatpush1.bf16.msra.mxu0 0
        %2481 = vmatprep.subr.bf16.mxu0 0
        %2482 = vmatpush1.bf16.msra.mxu0 0
        %2483 = vmatprep.subr.bf16.mxu0 0
        %2484 = vmatpush1.bf16.msra.mxu0 0
        %2485 = vmatprep.subr.bf16.mxu0 0
        %2486 = vmatpush1.bf16.msra.mxu0 0
        %2487 = vmatprep.subr.bf16.mxu0 0
        %2488 = vmatpush1.bf16.msra.mxu0 0
        %2489 = vmatprep.subr.bf16.mxu0 0
        %2490 = vmatpush1.bf16.msra.mxu0 0
        %2491 = vmatprep.subr.bf16.mxu0 0
        %2492 = vmatpush1.bf16.msra.mxu0 0
        %2493 = vmatprep.subr.bf16.mxu0 0
        %2494 = vmatpush1.bf16.msra.mxu0 0
        %2495 = vmatprep.subr.bf16.mxu0 0
        %2496 = vmatpush1.bf16.msra.mxu0 0
        %2497 = vmatprep.mubr.bf16.mxu0 0
        %2498 = vmatmul.mubr.bf16.gmra.mrb[0].mxu0 %v2111
        %v2499 = vpop.f32.mrb[0].mxu0
        %v2500 = vadd.f32 0.0, %v2499
        %v2501 = vpop.f32.mrb[0].mxu0
        %v2502 = vpop.f32.mrb[0].mxu0
        %v2503 = vadd.f32 0.0, %v2502
        %v2504 = vpop.f32.mrb[0].mxu0
        %2505 = vmatprep.mubr.bf16.mxu0 0
        %2506 = vmatmul.mubr.bf16.gmra.mrb[0].mxu0 %v2114
        %v2507 = vpop.f32.mrb[0].mxu0
        %v2508 = vadd.f32 0.0, %v2507
        %v2509 = vpop.f32.mrb[0].mxu0
        %v2510 = vpop.f32.mrb[0].mxu0
        %v2511 = vadd.f32 0.0, %v2510
        %v2512 = vpop.f32.mrb[0].mxu0
        %2513 = vmatprep.mubr.bf16.mxu0 0
        %2514 = vmatmul.mubr.bf16.gmra.mrb[0].mxu0 %v2117
        %v2515 = vpop.f32.mrb[0].mxu0
        %v2516 = vadd.f32 0.0, %v2515
        %v2517 = vpop.f32.mrb[0].mxu0
        %v2518 = vpop.f32.mrb[0].mxu0
        %v2519 = vadd.f32 0.0, %v2518
        %v2520 = vpop.f32.mrb[0].mxu0
        %2521 = vmatprep.mubr.bf16.mxu0 0
        %2522 = vmatmul.mubr.bf16.gmra.mrb[0].mxu0 %v2120
        %v2523 = vpop.f32.mrb[0].mxu0
        %v2524 = vadd.f32 0.0, %v2523
        %v2525 = vpop.f32.mrb[0].mxu0
        %v2526 = vpop.f32.mrb[0].mxu0
        %v2527 = vadd.f32 0.0, %v2526
        %v2528 = vpop.f32.mrb[0].mxu0
        %2529 = vmatprep.mubr.bf16.mxu0 0
        %2530 = vmatmul.mubr.bf16.gmra.mrb[0].mxu0 %v2123
        %v2531 = vpop.f32.mrb[0].mxu0
        %v2532 = vadd.f32 0.0, %v2531
        %v2533 = vpop.f32.mrb[0].mxu0
        %v2534 = vpop.f32.mrb[0].mxu0
        %v2535 = vadd.f32 0.0, %v2534
        %v2536 = vpop.f32.mrb[0].mxu0
        %2537 = vmatprep.mubr.bf16.mxu0 0
        %2538 = vmatmul.mubr.bf16.gmra.mrb[0].mxu0 %v2126
        %v2539 = vpop.f32.mrb[0].mxu0
        %v2540 = vadd.f32 0.0, %v2539
        %v2541 = vpop.f32.mrb[0].mxu0
        %v2542 = vpop.f32.mrb[0].mxu0
        %v2543 = vadd.f32 0.0, %v2542
        %v2544 = vpop.f32.mrb[0].mxu0
        %2545 = vmatprep.mubr.bf16.mxu0 0
        %2546 = vmatmul.mubr.bf16.gmra.mrb[0].mxu0 %v2129
        %v2547 = vpop.f32.mrb[0].mxu0
        %v2548 = vadd.f32 0.0, %v2547
        %v2549 = vpop.f32.mrb[0].mxu0
        %v2550 = vpop.f32.mrb[0].mxu0
        %v2551 = vadd.f32 0.0, %v2550
        %v2552 = vpop.f32.mrb[0].mxu0
        %2553 = vmatprep.mubr.bf16.mxu0 0
        %2554 = vmatmul.mubr.bf16.gmra.mrb[0].mxu0 %v2132
        %v2555 = vpop.f32.mrb[0].mxu0
        %v2556 = vadd.f32 0.0, %v2555
        %v2557 = vpop.f32.mrb[0].mxu0
        %v2558 = vpop.f32.mrb[0].mxu0
        %v2559 = vadd.f32 0.0, %v2558
        %v2560 = vpop.f32.mrb[0].mxu0
        %2561 = vmatprep.mubr.bf16.mxu0 0
        %2562 = vmatmul.mubr.bf16.gmra.mrb[0].mxu0 %v2135
        %v2563 = vpop.f32.mrb[0].mxu0
        %v2564 = vadd.f32 0.0, %v2563
        %v2565 = vpop.f32.mrb[0].mxu0
        %v2566 = vpop.f32.mrb[0].mxu0
        %v2567 = vadd.f32 0.0, %v2566
        %v2568 = vpop.f32.mrb[0].mxu0
        %2569 = vmatprep.mubr.bf16.mxu0 0
        %2570 = vmatmul.mubr.bf16.gmra.mrb[0].mxu0 %v2138
        %v2571 = vpop.f32.mrb[0].mxu0
        %v2572 = vadd.f32 0.0, %v2571
        %v2573 = vpop.f32.mrb[0].mxu0
        %v2574 = vpop.f32.mrb[0].mxu0
        %v2575 = vadd.f32 0.0, %v2574
        %v2576 = vpop.f32.mrb[0].mxu0
        %2577 = vmatprep.mubr.bf16.mxu0 0
        %2578 = vmatmul.mubr.bf16.gmra.mrb[0].mxu0 %v2141
        %v2579 = vpop.f32.mrb[0].mxu0
        %v2580 = vadd.f32 0.0, %v2579
        %v2581 = vpop.f32.mrb[0].mxu0
        %v2582 = vpop.f32.mrb[0].mxu0
        %v2583 = vadd.f32 0.0, %v2582
        %v2584 = vpop.f32.mrb[0].mxu0
        %2585 = vmatprep.mubr.bf16.mxu0 0
        %2586 = vmatmul.mubr.bf16.gmra.mrb[0].mxu0 %v2144
        %v2587 = vpop.f32.mrb[0].mxu0
        %v2588 = vadd.f32 0.0, %v2587
        %v2589 = vpop.f32.mrb[0].mxu0
        %v2590 = vpop.f32.mrb[0].mxu0
        %v2591 = vadd.f32 0.0, %v2590
        %v2592 = vpop.f32.mrb[0].mxu0
        %2593 = vmatprep.mubr.bf16.mxu0 0
        %2594 = vmatmul.mubr.bf16.gmra.mrb[0].mxu0 %v2147
        %v2595 = vpop.f32.mrb[0].mxu0
        %v2596 = vadd.f32 0.0, %v2595
        %v2597 = vpop.f32.mrb[0].mxu0
        %v2598 = vpop.f32.mrb[0].mxu0
        %v2599 = vadd.f32 0.0, %v2598
        %v2600 = vpop.f32.mrb[0].mxu0
        %2601 = vmatprep.mubr.bf16.mxu0 0
        %2602 = vmatmul.mubr.bf16.gmra.mrb[0].mxu0 %v2150
        %v2603 = vpop.f32.mrb[0].mxu0
        %v2604 = vadd.f32 0.0, %v2603
        %v2605 = vpop.f32.mrb[0].mxu0
        %v2606 = vpop.f32.mrb[0].mxu0
        %v2607 = vadd.f32 0.0, %v2606
        %v2608 = vpop.f32.mrb[0].mxu0
        %2609 = vmatprep.mubr.bf16.mxu0 0
        %2610 = vmatmul.mubr.bf16.gmra.mrb[0].mxu0 %v2153
        %v2611 = vpop.f32.mrb[0].mxu0
        %v2612 = vadd.f32 0.0, %v2611
        %v2613 = vpop.f32.mrb[0].mxu0
        %v2614 = vpop.f32.mrb[0].mxu0
        %v2615 = vadd.f32 0.0, %v2614
        %v2616 = vpop.f32.mrb[0].mxu0
        %2617 = vmatprep.mubr.bf16.mxu0 0
        %2618 = vmatmul.mubr.bf16.gmra.mrb[0].mxu0 %v2156
        %v2619 = vpop.f32.mrb[0].mxu0
        %v2620 = vadd.f32 0.0, %v2619
        %v2621 = vpop.f32.mrb[0].mxu0
        %v2622 = vpop.f32.mrb[0].mxu0
        %v2623 = vadd.f32 0.0, %v2622
        %v2624 = vpop.f32.mrb[0].mxu0
        %2625 = vmatprep.mubr.bf16.mxu0 0
        %2626 = vmatmul.mubr.bf16.gmra.mrb[0].mxu0 %v2159
        %v2627 = vpop.f32.mrb[0].mxu0
        %v2628 = vadd.f32 0.0, %v2627
        %v2629 = vpop.f32.mrb[0].mxu0
        %v2630 = vpop.f32.mrb[0].mxu0
        %v2631 = vadd.f32 0.0, %v2630
        %v2632 = vpop.f32.mrb[0].mxu0
        %2633 = vmatprep.mubr.bf16.mxu0 0
        %2634 = vmatmul.mubr.bf16.gmra.mrb[0].mxu0 %v2162
        %v2635 = vpop.f32.mrb[0].mxu0
        %v2636 = vadd.f32 0.0, %v2635
        %v2637 = vpop.f32.mrb[0].mxu0
        %v2638 = vpop.f32.mrb[0].mxu0
        %v2639 = vadd.f32 0.0, %v2638
        %v2640 = vpop.f32.mrb[0].mxu0
        %2641 = vmatprep.mubr.bf16.mxu0 0
        %2642 = vmatmul.mubr.bf16.gmra.mrb[0].mxu0 %v2165
        %v2643 = vpop.f32.mrb[0].mxu0
        %v2644 = vadd.f32 0.0, %v2643
        %v2645 = vpop.f32.mrb[0].mxu0
        %v2646 = vpop.f32.mrb[0].mxu0
        %v2647 = vadd.f32 0.0, %v2646
        %v2648 = vpop.f32.mrb[0].mxu0
        %2649 = vmatprep.mubr.bf16.mxu0 0
        %2650 = vmatmul.mubr.bf16.gmra.mrb[0].mxu0 %v2168
        %v2651 = vpop.f32.mrb[0].mxu0
        %v2652 = vadd.f32 0.0, %v2651
        %v2653 = vpop.f32.mrb[0].mxu0
        %v2654 = vpop.f32.mrb[0].mxu0
        %v2655 = vadd.f32 0.0, %v2654
        %v2656 = vpop.f32.mrb[0].mxu0
        %2657 = vmatprep.mubr.bf16.mxu0 0
        %2658 = vmatmul.mubr.bf16.gmra.mrb[0].mxu0 %v2171
        %v2659 = vpop.f32.mrb[0].mxu0
        %v2660 = vadd.f32 0.0, %v2659
        %v2661 = vpop.f32.mrb[0].mxu0
        %v2662 = vpop.f32.mrb[0].mxu0
        %v2663 = vadd.f32 0.0, %v2662
        %v2664 = vpop.f32.mrb[0].mxu0
        %2665 = vmatprep.mubr.bf16.mxu0 0
        %2666 = vmatmul.mubr.bf16.gmra.mrb[0].mxu0 %v2174
        %v2667 = vpop.f32.mrb[0].mxu0
        %v2668 = vadd.f32 0.0, %v2667
        %v2669 = vpop.f32.mrb[0].mxu0
        %v2670 = vpop.f32.mrb[0].mxu0
        %v2671 = vadd.f32 0.0, %v2670
        %v2672 = vpop.f32.mrb[0].mxu0
        %2673 = vmatprep.mubr.bf16.mxu0 0
        %2674 = vmatmul.mubr.bf16.gmra.mrb[0].mxu0 %v2177
        %v2675 = vpop.f32.mrb[0].mxu0
        %v2676 = vadd.f32 0.0, %v2675
        %v2677 = vpop.f32.mrb[0].mxu0
        %v2678 = vpop.f32.mrb[0].mxu0
        %v2679 = vadd.f32 0.0, %v2678
        %v2680 = vpop.f32.mrb[0].mxu0
        %2681 = vmatprep.mubr.bf16.mxu0 0
        %2682 = vmatmul.mubr.bf16.gmra.mrb[0].mxu0 %v2180
        %v2683 = vpop.f32.mrb[0].mxu0
        %v2684 = vadd.f32 0.0, %v2683
        %v2685 = vpop.f32.mrb[0].mxu0
        %v2686 = vpop.f32.mrb[0].mxu0
        %v2687 = vadd.f32 0.0, %v2686
        %v2688 = vpop.f32.mrb[0].mxu0
        %2689 = vmatprep.mubr.bf16.mxu0 0
        %2690 = vmatmul.mubr.bf16.gmra.mrb[0].mxu0 %v2183
        %v2691 = vpop.f32.mrb[0].mxu0
        %v2692 = vadd.f32 0.0, %v2691
        %v2693 = vpop.f32.mrb[0].mxu0
        %v2694 = vpop.f32.mrb[0].mxu0
        %v2695 = vadd.f32 0.0, %v2694
        %v2696 = vpop.f32.mrb[0].mxu0
        %2697 = vmatprep.mubr.bf16.mxu0 0
        %2698 = vmatmul.mubr.bf16.gmra.mrb[0].mxu0 %v2186
        %v2699 = vpop.f32.mrb[0].mxu0
        %v2700 = vadd.f32 0.0, %v2699
        %v2701 = vpop.f32.mrb[0].mxu0
        %v2702 = vpop.f32.mrb[0].mxu0
        %v2703 = vadd.f32 0.0, %v2702
        %v2704 = vpop.f32.mrb[0].mxu0
        %2705 = vmatprep.mubr.bf16.mxu0 0
        %2706 = vmatmul.mubr.bf16.gmra.mrb[0].mxu0 %v2189
        %v2707 = vpop.f32.mrb[0].mxu0
        %v2708 = vadd.f32 0.0, %v2707
        %v2709 = vpop.f32.mrb[0].mxu0
        %v2710 = vpop.f32.mrb[0].mxu0
        %v2711 = vadd.f32 0.0, %v2710
        %v2712 = vpop.f32.mrb[0].mxu0
        %2713 = vmatprep.mubr.bf16.mxu0 0
        %2714 = vmatmul.mubr.bf16.gmra.mrb[0].mxu0 %v2192
        %v2715 = vpop.f32.mrb[0].mxu0
        %v2716 = vadd.f32 0.0, %v2715
        %v2717 = vpop.f32.mrb[0].mxu0
        %v2718 = vpop.f32.mrb[0].mxu0
        %v2719 = vadd.f32 0.0, %v2718
        %v2720 = vpop.f32.mrb[0].mxu0
        %2721 = vmatprep.mubr.bf16.mxu0 0
        %2722 = vmatmul.mubr.bf16.gmra.mrb[0].mxu0 %v2195
        %v2723 = vpop.f32.mrb[0].mxu0
        %v2724 = vadd.f32 0.0, %v2723
        %v2725 = vpop.f32.mrb[0].mxu0
        %v2726 = vpop.f32.mrb[0].mxu0
        %v2727 = vadd.f32 0.0, %v2726
        %v2728 = vpop.f32.mrb[0].mxu0
        %2729 = vmatprep.mubr.bf16.mxu0 0
        %2730 = vmatmul.mubr.bf16.gmra.mrb[0].mxu0 %v2198
        %v2731 = vpop.f32.mrb[0].mxu0
        %v2732 = vadd.f32 0.0, %v2731
        %v2733 = vpop.f32.mrb[0].mxu0
        %v2734 = vpop.f32.mrb[0].mxu0
        %v2735 = vadd.f32 0.0, %v2734
        %v2736 = vpop.f32.mrb[0].mxu0
        %2737 = vmatprep.mubr.bf16.mxu0 0
        %2738 = vmatmul.mubr.bf16.gmra.mrb[0].mxu0 %v2201
        %v2739 = vpop.f32.mrb[0].mxu0
        %v2740 = vadd.f32 0.0, %v2739
        %v2741 = vpop.f32.mrb[0].mxu0
        %v2742 = vpop.f32.mrb[0].mxu0
        %v2743 = vadd.f32 0.0, %v2742
        %v2744 = vpop.f32.mrb[0].mxu0
        %2745 = vmatprep.mubr.bf16.mxu0 0
        %2746 = vmatmul.mubr.bf16.gmra.mrb[0].mxu0 %v2204
        %v2747 = vpop.f32.mrb[0].mxu0
        %v2748 = vadd.f32 0.0, %v2747
        %v2749 = vpop.f32.mrb[0].mxu0
        %v2750 = vpop.f32.mrb[0].mxu0
        %v2751 = vadd.f32 0.0, %v2750
        %v2752 = vpop.f32.mrb[0].mxu0
        %2753 = vmatprep.mubr.bf16.mxu0 0
        %2754 = vmatmul.mubr.bf16.gmra.mrb[0].mxu0 %v2207
        %v2755 = vpop.f32.mrb[0].mxu0
        %v2756 = vadd.f32 0.0, %v2755
        %v2757 = vpop.f32.mrb[0].mxu0
        %v2758 = vpop.f32.mrb[0].mxu0
        %v2759 = vadd.f32 0.0, %v2758
        %v2760 = vpop.f32.mrb[0].mxu0
        %2761 = vmatprep.mubr.bf16.mxu0 0
        %2762 = vmatmul.mubr.bf16.gmra.mrb[0].mxu0 %v2210
        %v2763 = vpop.f32.mrb[0].mxu0
        %v2764 = vadd.f32 0.0, %v2763
        %v2765 = vpop.f32.mrb[0].mxu0
        %v2766 = vpop.f32.mrb[0].mxu0
        %v2767 = vadd.f32 0.0, %v2766
        %v2768 = vpop.f32.mrb[0].mxu0
        %2769 = vmatprep.mubr.bf16.mxu0 0
        %2770 = vmatmul.mubr.bf16.gmra.mrb[0].mxu0 %v2213
        %v2771 = vpop.f32.mrb[0].mxu0
        %v2772 = vadd.f32 0.0, %v2771
        %v2773 = vpop.f32.mrb[0].mxu0
        %v2774 = vpop.f32.mrb[0].mxu0
        %v2775 = vadd.f32 0.0, %v2774
        %v2776 = vpop.f32.mrb[0].mxu0
        %2777 = vmatprep.mubr.bf16.mxu0 0
        %2778 = vmatmul.mubr.bf16.gmra.mrb[0].mxu0 %v2216
        %v2779 = vpop.f32.mrb[0].mxu0
        %v2780 = vadd.f32 0.0, %v2779
        %v2781 = vpop.f32.mrb[0].mxu0
        %v2782 = vpop.f32.mrb[0].mxu0
        %v2783 = vadd.f32 0.0, %v2782
        %v2784 = vpop.f32.mrb[0].mxu0
        %2785 = vmatprep.mubr.bf16.mxu0 0
        %2786 = vmatmul.mubr.bf16.gmra.mrb[0].mxu0 %v2219
        %v2787 = vpop.f32.mrb[0].mxu0
        %v2788 = vadd.f32 0.0, %v2787
        %v2789 = vpop.f32.mrb[0].mxu0
        %v2790 = vpop.f32.mrb[0].mxu0
        %v2791 = vadd.f32 0.0, %v2790
        %v2792 = vpop.f32.mrb[0].mxu0
        %2793 = vmatprep.mubr.bf16.mxu0 0
        %2794 = vmatmul.mubr.bf16.gmra.mrb[0].mxu0 %v2222
        %v2795 = vpop.f32.mrb[0].mxu0
        %v2796 = vadd.f32 0.0, %v2795
        %v2797 = vpop.f32.mrb[0].mxu0
        %v2798 = vpop.f32.mrb[0].mxu0
        %v2799 = vadd.f32 0.0, %v2798
        %v2800 = vpop.f32.mrb[0].mxu0
        %2801 = vmatprep.mubr.bf16.mxu0 0
        %2802 = vmatmul.mubr.bf16.gmra.mrb[0].mxu0 %v2225
        %v2803 = vpop.f32.mrb[0].mxu0
        %v2804 = vadd.f32 0.0, %v2803
        %v2805 = vpop.f32.mrb[0].mxu0
        %v2806 = vpop.f32.mrb[0].mxu0
        %v2807 = vadd.f32 0.0, %v2806
        %v2808 = vpop.f32.mrb[0].mxu0
        %2809 = vmatprep.mubr.bf16.mxu0 0
        %2810 = vmatmul.mubr.bf16.gmra.mrb[0].mxu0 %v2228
        %v2811 = vpop.f32.mrb[0].mxu0
        %v2812 = vadd.f32 0.0, %v2811
        %v2813 = vpop.f32.mrb[0].mxu0
        %v2814 = vpop.f32.mrb[0].mxu0
        %v2815 = vadd.f32 0.0, %v2814
        %v2816 = vpop.f32.mrb[0].mxu0
        %2817 = vmatprep.mubr.bf16.mxu0 0
        %2818 = vmatmul.mubr.bf16.gmra.mrb[0].mxu0 %v2231
        %v2819 = vpop.f32.mrb[0].mxu0
        %v2820 = vadd.f32 0.0, %v2819
        %v2821 = vpop.f32.mrb[0].mxu0
        %v2822 = vpop.f32.mrb[0].mxu0
        %v2823 = vadd.f32 0.0, %v2822
        %v2824 = vpop.f32.mrb[0].mxu0
        %2825 = vmatprep.mubr.bf16.mxu0 0
        %2826 = vmatmul.mubr.bf16.gmra.mrb[0].mxu0 %v2234
        %v2827 = vpop.f32.mrb[0].mxu0
        %v2828 = vadd.f32 0.0, %v2827
        %v2829 = vpop.f32.mrb[0].mxu0
        %v2830 = vpop.f32.mrb[0].mxu0
        %v2831 = vadd.f32 0.0, %v2830
        %v2832 = vpop.f32.mrb[0].mxu0
        %2833 = vmatprep.mubr.bf16.mxu0 0
        %2834 = vmatmul.mubr.bf16.gmra.mrb[0].mxu0 %v2237
        %v2835 = vpop.f32.mrb[0].mxu0
        %v2836 = vadd.f32 0.0, %v2835
        %v2837 = vpop.f32.mrb[0].mxu0
        %v2838 = vpop.f32.mrb[0].mxu0
        %v2839 = vadd.f32 0.0, %v2838
        %v2840 = vpop.f32.mrb[0].mxu0
        %2841 = vmatprep.mubr.bf16.mxu0 0
        %2842 = vmatmul.mubr.bf16.gmra.mrb[0].mxu0 %v2240
        %v2843 = vpop.f32.mrb[0].mxu0
        %v2844 = vadd.f32 0.0, %v2843
        %v2845 = vpop.f32.mrb[0].mxu0
        %v2846 = vpop.f32.mrb[0].mxu0
        %v2847 = vadd.f32 0.0, %v2846
        %v2848 = vpop.f32.mrb[0].mxu0
        %2849 = vmatprep.mubr.bf16.mxu0 0
        %2850 = vmatmul.mubr.bf16.gmra.mrb[0].mxu0 %v2243
        %v2851 = vpop.f32.mrb[0].mxu0
        %v2852 = vadd.f32 0.0, %v2851
        %v2853 = vpop.f32.mrb[0].mxu0
        %v2854 = vpop.f32.mrb[0].mxu0
        %v2855 = vadd.f32 0.0, %v2854
        %v2856 = vpop.f32.mrb[0].mxu0
        %2857 = vmatprep.mubr.bf16.mxu0 0
        %2858 = vmatmul.mubr.bf16.gmra.mrb[0].mxu0 %v2246
        %v2859 = vpop.f32.mrb[0].mxu0
        %v2860 = vadd.f32 0.0, %v2859
        %v2861 = vpop.f32.mrb[0].mxu0
        %v2862 = vpop.f32.mrb[0].mxu0
        %v2863 = vadd.f32 0.0, %v2862
        %v2864 = vpop.f32.mrb[0].mxu0
        %2865 = vmatprep.mubr.bf16.mxu0 0
        %2866 = vmatmul.mubr.bf16.gmra.mrb[0].mxu0 %v2249
        %v2867 = vpop.f32.mrb[0].mxu0
        %v2868 = vadd.f32 0.0, %v2867
        %v2869 = vpop.f32.mrb[0].mxu0
        %v2870 = vpop.f32.mrb[0].mxu0
        %v2871 = vadd.f32 0.0, %v2870
        %v2872 = vpop.f32.mrb[0].mxu0
        %2873 = vmatprep.mubr.bf16.mxu0 0
        %2874 = vmatmul.mubr.bf16.gmra.mrb[0].mxu0 %v2252
        %v2875 = vpop.f32.mrb[0].mxu0
        %v2876 = vadd.f32 0.0, %v2875
        %v2877 = vpop.f32.mrb[0].mxu0
        %v2878 = vpop.f32.mrb[0].mxu0
        %v2879 = vadd.f32 0.0, %v2878
        %v2880 = vpop.f32.mrb[0].mxu0
        %2881 = vmatprep.mubr.bf16.mxu0 0
        %2882 = vmatmul.mubr.bf16.gmra.mrb[0].mxu0 %v2255
        %v2883 = vpop.f32.mrb[0].mxu0
        %v2884 = vadd.f32 0.0, %v2883
        %v2885 = vpop.f32.mrb[0].mxu0
        %v2886 = vpop.f32.mrb[0].mxu0
        %v2887 = vadd.f32 0.0, %v2886
        %v2888 = vpop.f32.mrb[0].mxu0
        %2889 = vmatprep.mubr.bf16.mxu0 0
        %2890 = vmatmul.mubr.bf16.gmra.mrb[0].mxu0 %v2258
        %v2891 = vpop.f32.mrb[0].mxu0
        %v2892 = vadd.f32 0.0, %v2891
        %v2893 = vpop.f32.mrb[0].mxu0
        %v2894 = vpop.f32.mrb[0].mxu0
        %v2895 = vadd.f32 0.0, %v2894
        %v2896 = vpop.f32.mrb[0].mxu0
        %2897 = vmatprep.mubr.bf16.mxu0 0
        %2898 = vmatmul.mubr.bf16.gmra.mrb[0].mxu0 %v2261
        %v2899 = vpop.f32.mrb[0].mxu0
        %v2900 = vadd.f32 0.0, %v2899
        %v2901 = vpop.f32.mrb[0].mxu0
        %v2902 = vpop.f32.mrb[0].mxu0
        %v2903 = vadd.f32 0.0, %v2902
        %v2904 = vpop.f32.mrb[0].mxu0
        %2905 = vmatprep.mubr.bf16.mxu0 0
        %2906 = vmatmul.mubr.bf16.gmra.mrb[0].mxu0 %v2264
        %v2907 = vpop.f32.mrb[0].mxu0
        %v2908 = vadd.f32 0.0, %v2907
        %v2909 = vpop.f32.mrb[0].mxu0
        %v2910 = vpop.f32.mrb[0].mxu0
        %v2911 = vadd.f32 0.0, %v2910
        %v2912 = vpop.f32.mrb[0].mxu0
        %2913 = vmatprep.mubr.bf16.mxu0 0
        %2914 = vmatmul.mubr.bf16.gmra.mrb[0].mxu0 %v2267
        %v2915 = vpop.f32.mrb[0].mxu0
        %v2916 = vadd.f32 0.0, %v2915
        %v2917 = vpop.f32.mrb[0].mxu0
        %v2918 = vpop.f32.mrb[0].mxu0
        %v2919 = vadd.f32 0.0, %v2918
        %v2920 = vpop.f32.mrb[0].mxu0
        %2921 = vmatprep.mubr.bf16.mxu0 0
        %2922 = vmatmul.mubr.bf16.gmra.mrb[0].mxu0 %v2270
        %v2923 = vpop.f32.mrb[0].mxu0
        %v2924 = vadd.f32 0.0, %v2923
        %v2925 = vpop.f32.mrb[0].mxu0
        %v2926 = vpop.f32.mrb[0].mxu0
        %v2927 = vadd.f32 0.0, %v2926
        %v2928 = vpop.f32.mrb[0].mxu0
        %2929 = vmatprep.mubr.bf16.mxu0 0
        %2930 = vmatmul.mubr.bf16.gmra.mrb[0].mxu0 %v2273
        %v2931 = vpop.f32.mrb[0].mxu0
        %v2932 = vadd.f32 0.0, %v2931
        %v2933 = vpop.f32.mrb[0].mxu0
        %v2934 = vpop.f32.mrb[0].mxu0
        %v2935 = vadd.f32 0.0, %v2934
        %v2936 = vpop.f32.mrb[0].mxu0
        %2937 = vmatprep.mubr.bf16.mxu0 0
        %2938 = vmatmul.mubr.bf16.gmra.mrb[0].mxu0 %v2276
        %v2939 = vpop.f32.mrb[0].mxu0
        %v2940 = vadd.f32 0.0, %v2939
        %v2941 = vpop.f32.mrb[0].mxu0
        %v2942 = vpop.f32.mrb[0].mxu0
        %v2943 = vadd.f32 0.0, %v2942
        %v2944 = vpop.f32.mrb[0].mxu0
        %2945 = vmatprep.mubr.bf16.mxu0 0
        %2946 = vmatmul.mubr.bf16.gmra.mrb[0].mxu0 %v2279
        %v2947 = vpop.f32.mrb[0].mxu0
        %v2948 = vadd.f32 0.0, %v2947
        %v2949 = vpop.f32.mrb[0].mxu0
        %v2950 = vpop.f32.mrb[0].mxu0
        %v2951 = vadd.f32 0.0, %v2950
        %v2952 = vpop.f32.mrb[0].mxu0
        %2953 = vmatprep.mubr.bf16.mxu0 0
        %2954 = vmatmul.mubr.bf16.gmra.mrb[0].mxu0 %v2282
        %v2955 = vpop.f32.mrb[0].mxu0
        %v2956 = vadd.f32 0.0, %v2955
        %v2957 = vpop.f32.mrb[0].mxu0
        %v2958 = vpop.f32.mrb[0].mxu0
        %v2959 = vadd.f32 0.0, %v2958
        %v2960 = vpop.f32.mrb[0].mxu0
        %2961 = vmatprep.mubr.bf16.mxu0 0
        %2962 = vmatmul.mubr.bf16.gmra.mrb[0].mxu0 %v2285
        %v2963 = vpop.f32.mrb[0].mxu0
        %v2964 = vadd.f32 0.0, %v2963
        %v2965 = vpop.f32.mrb[0].mxu0
        %v2966 = vpop.f32.mrb[0].mxu0
        %v2967 = vadd.f32 0.0, %v2966
        %v2968 = vpop.f32.mrb[0].mxu0
        %2969 = vmatprep.mubr.bf16.mxu0 0
        %2970 = vmatmul.mubr.bf16.gmra.mrb[0].mxu0 %v2288
        %v2971 = vpop.f32.mrb[0].mxu0
        %v2972 = vadd.f32 0.0, %v2971
        %v2973 = vpop.f32.mrb[0].mxu0
        %v2974 = vpop.f32.mrb[0].mxu0
        %v2975 = vadd.f32 0.0, %v2974
        %v2976 = vpop.f32.mrb[0].mxu0
        %2977 = vmatprep.mubr.bf16.mxu0 0
        %2978 = vmatmul.mubr.bf16.gmra.mrb[0].mxu0 %v2291
        %v2979 = vpop.f32.mrb[0].mxu0
        %v2980 = vadd.f32 0.0, %v2979
        %v2981 = vpop.f32.mrb[0].mxu0
        %v2982 = vpop.f32.mrb[0].mxu0
        %v2983 = vadd.f32 0.0, %v2982
        %v2984 = vpop.f32.mrb[0].mxu0
        %2985 = vmatprep.mubr.bf16.mxu0 0
        %2986 = vmatmul.mubr.bf16.gmra.mrb[0].mxu0 %v2294
        %v2987 = vpop.f32.mrb[0].mxu0
        %v2988 = vadd.f32 0.0, %v2987
        %v2989 = vpop.f32.mrb[0].mxu0
        %v2990 = vpop.f32.mrb[0].mxu0
        %v2991 = vadd.f32 0.0, %v2990
        %v2992 = vpop.f32.mrb[0].mxu0
        %2993 = vmatprep.mubr.bf16.mxu0 0
        %2994 = vmatmul.mubr.bf16.gmra.mrb[0].mxu0 %v2297
        %v2995 = vpop.f32.mrb[0].mxu0
        %v2996 = vadd.f32 0.0, %v2995
        %v2997 = vpop.f32.mrb[0].mxu0
        %v2998 = vpop.f32.mrb[0].mxu0
        %v2999 = vadd.f32 0.0, %v2998
        %v3000 = vpop.f32.mrb[0].mxu0
        %3001 = vmatprep.mubr.bf16.mxu0 0
        %3002 = vmatmul.mubr.bf16.gmra.mrb[0].mxu0 %v2300
        %v3003 = vpop.f32.mrb[0].mxu0
        %v3004 = vadd.f32 0.0, %v3003
        %v3005 = vpop.f32.mrb[0].mxu0
        %v3006 = vpop.f32.mrb[0].mxu0
        %v3007 = vadd.f32 0.0, %v3006
        %v3008 = vpop.f32.mrb[0].mxu0
        %3009 = vmatprep.mubr.bf16.mxu0 0
        %3010 = vmatmul.mubr.bf16.gmra.mrb[0].mxu0 %v2303
        %v3011 = vpop.f32.mrb[0].mxu0
        %v3012 = vadd.f32 0.0, %v3011
        %v3013 = vpop.f32.mrb[0].mxu0
        %v3014 = vpop.f32.mrb[0].mxu0
        %v3015 = vadd.f32 0.0, %v3014
        %v3016 = vpop.f32.mrb[0].mxu0
        %3017 = vmatprep.mubr.bf16.mxu0 0
        %3018 = vmatmul.mubr.bf16.gmra.mrb[0].mxu0 %v2306
        %v3019 = vpop.f32.mrb[0].mxu0
        %v3020 = vadd.f32 0.0, %v3019
        %v3021 = vpop.f32.mrb[0].mxu0
        %v3022 = vpop.f32.mrb[0].mxu0
        %v3023 = vadd.f32 0.0, %v3022
        %v3024 = vpop.f32.mrb[0].mxu0
        %3025 = vmatprep.mubr.bf16.mxu0 0
        %3026 = vmatmul.mubr.bf16.gmra.mrb[0].mxu0 %v2309
        %v3027 = vpop.f32.mrb[0].mxu0
        %v3028 = vadd.f32 0.0, %v3027
        %v3029 = vpop.f32.mrb[0].mxu0
        %v3030 = vpop.f32.mrb[0].mxu0
        %v3031 = vadd.f32 0.0, %v3030
        %v3032 = vpop.f32.mrb[0].mxu0
        %3033 = vmatprep.mubr.bf16.mxu0 0
        %3034 = vmatmul.mubr.bf16.gmra.mrb[0].mxu0 %v2312
        %v3035 = vpop.f32.mrb[0].mxu0
        %v3036 = vadd.f32 0.0, %v3035
        %v3037 = vpop.f32.mrb[0].mxu0
        %v3038 = vpop.f32.mrb[0].mxu0
        %v3039 = vadd.f32 0.0, %v3038
        %v3040 = vpop.f32.mrb[0].mxu0
        %3041 = vmatprep.mubr.bf16.mxu0 0
        %3042 = vmatmul.mubr.bf16.gmra.mrb[0].mxu0 %v2315
        %v3043 = vpop.f32.mrb[0].mxu0
        %v3044 = vadd.f32 0.0, %v3043
        %v3045 = vpop.f32.mrb[0].mxu0
        %v3046 = vpop.f32.mrb[0].mxu0
        %v3047 = vadd.f32 0.0, %v3046
        %v3048 = vpop.f32.mrb[0].mxu0
        %3049 = vmatprep.mubr.bf16.mxu0 0
        %3050 = vmatmul.mubr.bf16.gmra.mrb[0].mxu0 %v2318
        %v3051 = vpop.f32.mrb[0].mxu0
        %v3052 = vadd.f32 0.0, %v3051
        %v3053 = vpop.f32.mrb[0].mxu0
        %v3054 = vpop.f32.mrb[0].mxu0
        %v3055 = vadd.f32 0.0, %v3054
        %v3056 = vpop.f32.mrb[0].mxu0
        %3057 = vmatprep.mubr.bf16.mxu0 0
        %3058 = vmatmul.mubr.bf16.gmra.mrb[0].mxu0 %v2321
        %v3059 = vpop.f32.mrb[0].mxu0
        %v3060 = vadd.f32 0.0, %v3059
        %v3061 = vpop.f32.mrb[0].mxu0
        %v3062 = vpop.f32.mrb[0].mxu0
        %v3063 = vadd.f32 0.0, %v3062
        %v3064 = vpop.f32.mrb[0].mxu0
        %3065 = vmatprep.mubr.bf16.mxu0 0
        %3066 = vmatmul.mubr.bf16.gmra.mrb[0].mxu0 %v2324
        %v3067 = vpop.f32.mrb[0].mxu0
        %v3068 = vadd.f32 0.0, %v3067
        %v3069 = vpop.f32.mrb[0].mxu0
        %v3070 = vpop.f32.mrb[0].mxu0
        %v3071 = vadd.f32 0.0, %v3070
        %v3072 = vpop.f32.mrb[0].mxu0
        %3073 = vmatprep.mubr.bf16.mxu0 0
        %3074 = vmatmul.mubr.bf16.gmra.mrb[0].mxu0 %v2327
        %v3075 = vpop.f32.mrb[0].mxu0
        %v3076 = vadd.f32 0.0, %v3075
        %v3077 = vpop.f32.mrb[0].mxu0
        %v3078 = vpop.f32.mrb[0].mxu0
        %v3079 = vadd.f32 0.0, %v3078
        %v3080 = vpop.f32.mrb[0].mxu0
        %3081 = vmatprep.mubr.bf16.mxu0 0
        %3082 = vmatmul.mubr.bf16.gmra.mrb[0].mxu0 %v2330
        %v3083 = vpop.f32.mrb[0].mxu0
        %v3084 = vadd.f32 0.0, %v3083
        %v3085 = vpop.f32.mrb[0].mxu0
        %v3086 = vpop.f32.mrb[0].mxu0
        %v3087 = vadd.f32 0.0, %v3086
        %v3088 = vpop.f32.mrb[0].mxu0
        %3089 = vmatprep.mubr.bf16.mxu0 0
        %3090 = vmatmul.mubr.bf16.gmra.mrb[0].mxu0 %v2333
        %v3091 = vpop.f32.mrb[0].mxu0
        %v3092 = vadd.f32 0.0, %v3091
        %v3093 = vpop.f32.mrb[0].mxu0
        %v3094 = vpop.f32.mrb[0].mxu0
        %v3095 = vadd.f32 0.0, %v3094
        %v3096 = vpop.f32.mrb[0].mxu0
        %3097 = vmatprep.mubr.bf16.mxu0 0
        %3098 = vmatmul.mubr.bf16.gmra.mrb[0].mxu0 %v2336
        %v3099 = vpop.f32.mrb[0].mxu0
        %v3100 = vadd.f32 0.0, %v3099
        %v3101 = vpop.f32.mrb[0].mxu0
        %v3102 = vpop.f32.mrb[0].mxu0
        %v3103 = vadd.f32 0.0, %v3102
        %v3104 = vpop.f32.mrb[0].mxu0
        %3105 = vmatprep.mubr.bf16.mxu0 0
        %3106 = vmatmul.mubr.bf16.gmra.mrb[0].mxu0 %v2339
        %v3107 = vpop.f32.mrb[0].mxu0
        %v3108 = vadd.f32 0.0, %v3107
        %v3109 = vpop.f32.mrb[0].mxu0
        %v3110 = vpop.f32.mrb[0].mxu0
        %v3111 = vadd.f32 0.0, %v3110
        %v3112 = vpop.f32.mrb[0].mxu0
        %3113 = vmatprep.mubr.bf16.mxu0 0
        %3114 = vmatmul.mubr.bf16.gmra.mrb[0].mxu0 %v2342
        %v3115 = vpop.f32.mrb[0].mxu0
        %v3116 = vadd.f32 0.0, %v3115
        %v3117 = vpop.f32.mrb[0].mxu0
        %v3118 = vpop.f32.mrb[0].mxu0
        %v3119 = vadd.f32 0.0, %v3118
        %v3120 = vpop.f32.mrb[0].mxu0
        %3121 = vmatprep.mubr.bf16.mxu0 0
        %3122 = vmatmul.mubr.bf16.gmra.mrb[0].mxu0 %v2345
        %v3123 = vpop.f32.mrb[0].mxu0
        %v3124 = vadd.f32 0.0, %v3123
        %v3125 = vpop.f32.mrb[0].mxu0
        %v3126 = vpop.f32.mrb[0].mxu0
        %v3127 = vadd.f32 0.0, %v3126
        %v3128 = vpop.f32.mrb[0].mxu0
        %3129 = vmatprep.mubr.bf16.mxu0 0
        %3130 = vmatmul.mubr.bf16.gmra.mrb[0].mxu0 %v2348
        %v3131 = vpop.f32.mrb[0].mxu0
        %v3132 = vadd.f32 0.0, %v3131
        %v3133 = vpop.f32.mrb[0].mxu0
        %v3134 = vpop.f32.mrb[0].mxu0
        %v3135 = vadd.f32 0.0, %v3134
        %v3136 = vpop.f32.mrb[0].mxu0
        %3137 = vmatprep.mubr.bf16.mxu0 0
        %3138 = vmatmul.mubr.bf16.gmra.mrb[0].mxu0 %v2351
        %v3139 = vpop.f32.mrb[0].mxu0
        %v3140 = vadd.f32 0.0, %v3139
        %v3141 = vpop.f32.mrb[0].mxu0
        %v3142 = vpop.f32.mrb[0].mxu0
        %v3143 = vadd.f32 0.0, %v3142
        %v3144 = vpop.f32.mrb[0].mxu0
        %3145 = vmatprep.mubr.bf16.mxu0 0
        %3146 = vmatmul.mubr.bf16.gmra.mrb[0].mxu0 %v2354
        %v3147 = vpop.f32.mrb[0].mxu0
        %v3148 = vadd.f32 0.0, %v3147
        %v3149 = vpop.f32.mrb[0].mxu0
        %v3150 = vpop.f32.mrb[0].mxu0
        %v3151 = vadd.f32 0.0, %v3150
        %v3152 = vpop.f32.mrb[0].mxu0
        %3153 = vmatprep.mubr.bf16.mxu0 0
        %3154 = vmatmul.mubr.bf16.gmra.mrb[0].mxu0 %v2357
        %v3155 = vpop.f32.mrb[0].mxu0
        %v3156 = vadd.f32 0.0, %v3155
        %v3157 = vpop.f32.mrb[0].mxu0
        %v3158 = vpop.f32.mrb[0].mxu0
        %v3159 = vadd.f32 0.0, %v3158
        %v3160 = vpop.f32.mrb[0].mxu0
        %3161 = vmatprep.mubr.bf16.mxu0 0
        %3162 = vmatmul.mubr.bf16.gmra.mrb[0].mxu0 %v2360
        %v3163 = vpop.f32.mrb[0].mxu0
        %v3164 = vadd.f32 0.0, %v3163
        %v3165 = vpop.f32.mrb[0].mxu0
        %v3166 = vpop.f32.mrb[0].mxu0
        %v3167 = vadd.f32 0.0, %v3166
        %v3168 = vpop.f32.mrb[0].mxu0
        %3169 = vmatprep.mubr.bf16.mxu0 0
        %3170 = vmatmul.mubr.bf16.gmra.mrb[0].mxu0 %v2363
        %v3171 = vpop.f32.mrb[0].mxu0
        %v3172 = vadd.f32 0.0, %v3171
        %v3173 = vpop.f32.mrb[0].mxu0
        %v3174 = vpop.f32.mrb[0].mxu0
        %v3175 = vadd.f32 0.0, %v3174
        %v3176 = vpop.f32.mrb[0].mxu0
        %3177 = vmatprep.mubr.bf16.mxu0 0
        %3178 = vmatmul.mubr.bf16.gmra.mrb[0].mxu0 %v2366
        %v3179 = vpop.f32.mrb[0].mxu0
        %v3180 = vadd.f32 0.0, %v3179
        %v3181 = vpop.f32.mrb[0].mxu0
        %v3182 = vpop.f32.mrb[0].mxu0
        %v3183 = vadd.f32 0.0, %v3182
        %v3184 = vpop.f32.mrb[0].mxu0
        %3185 = vmatprep.mubr.bf16.mxu0 0
        %3186 = vmatmul.mubr.bf16.gmra.mrb[0].mxu0 %v2369
        %v3187 = vpop.f32.mrb[0].mxu0
        %v3188 = vadd.f32 0.0, %v3187
        %v3189 = vpop.f32.mrb[0].mxu0
        %v3190 = vpop.f32.mrb[0].mxu0
        %v3191 = vadd.f32 0.0, %v3190
        %v3192 = vpop.f32.mrb[0].mxu0
        %3193 = vmatprep.mubr.bf16.mxu0 0
        %3194 = vmatmul.mubr.bf16.gmra.mrb[0].mxu0 %v2372
        %v3195 = vpop.f32.mrb[0].mxu0
        %v3196 = vadd.f32 0.0, %v3195
        %v3197 = vpop.f32.mrb[0].mxu0
        %v3198 = vpop.f32.mrb[0].mxu0
        %v3199 = vadd.f32 0.0, %v3198
        %v3200 = vpop.f32.mrb[0].mxu0
        %3201 = vmatprep.mubr.bf16.mxu0 0
        %3202 = vmatmul.mubr.bf16.gmra.mrb[0].mxu0 %v2375
        %v3203 = vpop.f32.mrb[0].mxu0
        %v3204 = vadd.f32 0.0, %v3203
        %v3205 = vpop.f32.mrb[0].mxu0
        %v3206 = vpop.f32.mrb[0].mxu0
        %v3207 = vadd.f32 0.0, %v3206
        %v3208 = vpop.f32.mrb[0].mxu0
        %3209 = vmatprep.mubr.bf16.mxu0 0
        %3210 = vmatmul.mubr.bf16.gmra.mrb[0].mxu0 %v2378
        %v3211 = vpop.f32.mrb[0].mxu0
        %v3212 = vadd.f32 0.0, %v3211
        %v3213 = vpop.f32.mrb[0].mxu0
        %v3214 = vpop.f32.mrb[0].mxu0
        %v3215 = vadd.f32 0.0, %v3214
        %v3216 = vpop.f32.mrb[0].mxu0
        %3217 = vmatprep.mubr.bf16.mxu0 0
        %3218 = vmatmul.mubr.bf16.gmra.mrb[0].mxu0 %v2381
        %v3219 = vpop.f32.mrb[0].mxu0
        %v3220 = vadd.f32 0.0, %v3219
        %v3221 = vpop.f32.mrb[0].mxu0
        %v3222 = vpop.f32.mrb[0].mxu0
        %v3223 = vadd.f32 0.0, %v3222
        %v3224 = vpop.f32.mrb[0].mxu0
        %3225 = vmatprep.mubr.bf16.mxu0 0
        %3226 = vmatmul.mubr.bf16.gmra.mrb[0].mxu0 %v2384
        %v3227 = vpop.f32.mrb[0].mxu0
        %v3228 = vadd.f32 0.0, %v3227
        %v3229 = vpop.f32.mrb[0].mxu0
        %v3230 = vpop.f32.mrb[0].mxu0
        %v3231 = vadd.f32 0.0, %v3230
        %v3232 = vpop.f32.mrb[0].mxu0
        %3233 = vmatprep.mubr.bf16.mxu0 0
        %3234 = vmatmul.mubr.bf16.gmra.mrb[0].mxu0 %v2387
        %v3235 = vpop.f32.mrb[0].mxu0
        %v3236 = vadd.f32 0.0, %v3235
        %v3237 = vpop.f32.mrb[0].mxu0
        %v3238 = vpop.f32.mrb[0].mxu0
        %v3239 = vadd.f32 0.0, %v3238
        %v3240 = vpop.f32.mrb[0].mxu0
        %3241 = vmatprep.mubr.bf16.mxu0 0
        %3242 = vmatmul.mubr.bf16.gmra.mrb[0].mxu0 %v2390
        %v3243 = vpop.f32.mrb[0].mxu0
        %v3244 = vadd.f32 0.0, %v3243
        %v3245 = vpop.f32.mrb[0].mxu0
        %v3246 = vpop.f32.mrb[0].mxu0
        %v3247 = vadd.f32 0.0, %v3246
        %v3248 = vpop.f32.mrb[0].mxu0
        %3249 = vmatprep.mubr.bf16.mxu0 0
        %3250 = vmatmul.mubr.bf16.gmra.mrb[0].mxu0 %v2393
        %v3251 = vpop.f32.mrb[0].mxu0
        %v3252 = vadd.f32 0.0, %v3251
        %v3253 = vpop.f32.mrb[0].mxu0
        %v3254 = vpop.f32.mrb[0].mxu0
        %v3255 = vadd.f32 0.0, %v3254
        %v3256 = vpop.f32.mrb[0].mxu0
        %3257 = vmatprep.mubr.bf16.mxu0 0
        %3258 = vmatmul.mubr.bf16.gmra.mrb[0].mxu0 %v2396
        %v3259 = vpop.f32.mrb[0].mxu0
        %v3260 = vadd.f32 0.0, %v3259
        %v3261 = vpop.f32.mrb[0].mxu0
        %v3262 = vpop.f32.mrb[0].mxu0
        %v3263 = vadd.f32 0.0, %v3262
        %v3264 = vpop.f32.mrb[0].mxu0
        %3265 = vmatprep.mubr.bf16.mxu0 0
        %3266 = vmatmul.mubr.bf16.gmra.mrb[0].mxu0 %v2399
        %v3267 = vpop.f32.mrb[0].mxu0
        %v3268 = vadd.f32 0.0, %v3267
        %v3269 = vpop.f32.mrb[0].mxu0
        %v3270 = vpop.f32.mrb[0].mxu0
        %v3271 = vadd.f32 0.0, %v3270
        %v3272 = vpop.f32.mrb[0].mxu0
        %3273 = vmatprep.mubr.bf16.mxu0 0
        %3274 = vmatmul.mubr.bf16.gmra.mrb[0].mxu0 %v2402
        %v3275 = vpop.f32.mrb[0].mxu0
        %v3276 = vadd.f32 0.0, %v3275
        %v3277 = vpop.f32.mrb[0].mxu0
        %v3278 = vpop.f32.mrb[0].mxu0
        %v3279 = vadd.f32 0.0, %v3278
        %v3280 = vpop.f32.mrb[0].mxu0
        %3281 = vmatprep.mubr.bf16.mxu0 0
        %3282 = vmatmul.mubr.bf16.gmra.mrb[0].mxu0 %v2405
        %v3283 = vpop.f32.mrb[0].mxu0
        %v3284 = vadd.f32 0.0, %v3283
        %v3285 = vpop.f32.mrb[0].mxu0
        %v3286 = vpop.f32.mrb[0].mxu0
        %v3287 = vadd.f32 0.0, %v3286
        %v3288 = vpop.f32.mrb[0].mxu0
        %3289 = vmatprep.mubr.bf16.mxu0 0
        %3290 = vmatmul.mubr.bf16.gmra.mrb[0].mxu0 %v2408
        %v3291 = vpop.f32.mrb[0].mxu0
        %v3292 = vadd.f32 0.0, %v3291
        %v3293 = vpop.f32.mrb[0].mxu0
        %v3294 = vpop.f32.mrb[0].mxu0
        %v3295 = vadd.f32 0.0, %v3294
        %v3296 = vpop.f32.mrb[0].mxu0
        %3297 = vmatprep.mubr.bf16.mxu0 0
        %3298 = vmatmul.mubr.bf16.gmra.mrb[0].mxu0 %v2411
        %v3299 = vpop.f32.mrb[0].mxu0
        %v3300 = vadd.f32 0.0, %v3299
        %v3301 = vpop.f32.mrb[0].mxu0
        %v3302 = vpop.f32.mrb[0].mxu0
        %v3303 = vadd.f32 0.0, %v3302
        %v3304 = vpop.f32.mrb[0].mxu0
        %3305 = vmatprep.mubr.bf16.mxu0 0
        %3306 = vmatmul.mubr.bf16.gmra.mrb[0].mxu0 %v2414
        %v3307 = vpop.f32.mrb[0].mxu0
        %v3308 = vadd.f32 0.0, %v3307
        %v3309 = vpop.f32.mrb[0].mxu0
        %v3310 = vpop.f32.mrb[0].mxu0
        %v3311 = vadd.f32 0.0, %v3310
        %v3312 = vpop.f32.mrb[0].mxu0
        %3313 = vmatprep.mubr.bf16.mxu0 0
        %3314 = vmatmul.mubr.bf16.gmra.mrb[0].mxu0 %v2417
        %v3315 = vpop.f32.mrb[0].mxu0
        %v3316 = vadd.f32 0.0, %v3315
        %v3317 = vpop.f32.mrb[0].mxu0
        %v3318 = vpop.f32.mrb[0].mxu0
        %v3319 = vadd.f32 0.0, %v3318
        %v3320 = vpop.f32.mrb[0].mxu0
        %3321 = vmatprep.mubr.bf16.mxu0 0
        %3322 = vmatmul.mubr.bf16.gmra.mrb[0].mxu0 %v2420
        %v3323 = vpop.f32.mrb[0].mxu0
        %v3324 = vadd.f32 0.0, %v3323
        %v3325 = vpop.f32.mrb[0].mxu0
        %v3326 = vpop.f32.mrb[0].mxu0
        %v3327 = vadd.f32 0.0, %v3326
        %v3328 = vpop.f32.mrb[0].mxu0
        %3329 = vmatprep.mubr.bf16.mxu0 0
        %3330 = vmatmul.mubr.bf16.gmra.mrb[0].mxu0 %v2423
        %v3331 = vpop.f32.mrb[0].mxu0
        %v3332 = vadd.f32 0.0, %v3331
        %v3333 = vpop.f32.mrb[0].mxu0
        %v3334 = vpop.f32.mrb[0].mxu0
        %v3335 = vadd.f32 0.0, %v3334
        %v3336 = vpop.f32.mrb[0].mxu0
        %3337 = vmatprep.mubr.bf16.mxu0 0
        %3338 = vmatmul.mubr.bf16.gmra.mrb[0].mxu0 %v2426
        %v3339 = vpop.f32.mrb[0].mxu0
        %v3340 = vadd.f32 0.0, %v3339
        %v3341 = vpop.f32.mrb[0].mxu0
        %v3342 = vpop.f32.mrb[0].mxu0
        %v3343 = vadd.f32 0.0, %v3342
        %v3344 = vpop.f32.mrb[0].mxu0
        %3345 = vmatprep.mubr.bf16.mxu0 0
        %3346 = vmatmul.mubr.bf16.gmra.mrb[0].mxu0 %v2429
        %v3347 = vpop.f32.mrb[0].mxu0
        %v3348 = vadd.f32 0.0, %v3347
        %v3349 = vpop.f32.mrb[0].mxu0
        %v3350 = vpop.f32.mrb[0].mxu0
        %v3351 = vadd.f32 0.0, %v3350
        %v3352 = vpop.f32.mrb[0].mxu0
        %3353 = vmatprep.mubr.bf16.mxu0 0
        %3354 = vmatmul.mubr.bf16.gmra.mrb[0].mxu0 %v2432
        %v3355 = vpop.f32.mrb[0].mxu0
        %v3356 = vadd.f32 0.0, %v3355
        %v3357 = vpop.f32.mrb[0].mxu0
        %v3358 = vpop.f32.mrb[0].mxu0
        %v3359 = vadd.f32 0.0, %v3358
        %v3360 = vpop.f32.mrb[0].mxu0
        %3361 = vmatprep.mubr.bf16.mxu0 0
        %3362 = vmatmul.mubr.bf16.gmra.mrb[0].mxu0 %v2435
        %v3363 = vpop.f32.mrb[0].mxu0
        %v3364 = vadd.f32 0.0, %v3363
        %v3365 = vpop.f32.mrb[0].mxu0
        %v3366 = vpop.f32.mrb[0].mxu0
        %v3367 = vadd.f32 0.0, %v3366
        %v3368 = vpop.f32.mrb[0].mxu0
        %3369 = vmatprep.mubr.bf16.mxu0 0
        %3370 = vmatmul.mubr.bf16.gmra.mrb[0].mxu0 %v2438
        %v3371 = vpop.f32.mrb[0].mxu0
        %v3372 = vadd.f32 0.0, %v3371
        %v3373 = vpop.f32.mrb[0].mxu0
        %v3374 = vpop.f32.mrb[0].mxu0
        %v3375 = vadd.f32 0.0, %v3374
        %v3376 = vpop.f32.mrb[0].mxu0
        %3377 = vmatprep.mubr.bf16.mxu0 0
        %3378 = vmatmul.mubr.bf16.gmra.mrb[0].mxu0 %v2441
        %v3379 = vpop.f32.mrb[0].mxu0
        %v3380 = vadd.f32 0.0, %v3379
        %v3381 = vpop.f32.mrb[0].mxu0
        %v3382 = vpop.f32.mrb[0].mxu0
        %v3383 = vadd.f32 0.0, %v3382
        %v3384 = vpop.f32.mrb[0].mxu0
        %3385 = vmatprep.mubr.bf16.mxu0 0
        %3386 = vmatmul.mubr.bf16.gmra.mrb[0].mxu0 %v2444
        %v3387 = vpop.f32.mrb[0].mxu0
        %v3388 = vadd.f32 0.0, %v3387
        %v3389 = vpop.f32.mrb[0].mxu0
        %v3390 = vpop.f32.mrb[0].mxu0
        %v3391 = vadd.f32 0.0, %v3390
        %v3392 = vpop.f32.mrb[0].mxu0
        %3393 = vmatprep.mubr.bf16.mxu0 0
        %3394 = vmatmul.mubr.bf16.gmra.mrb[0].mxu0 %v2447
        %v3395 = vpop.f32.mrb[0].mxu0
        %v3396 = vadd.f32 0.0, %v3395
        %v3397 = vpop.f32.mrb[0].mxu0
        %v3398 = vpop.f32.mrb[0].mxu0
        %v3399 = vadd.f32 0.0, %v3398
        %v3400 = vpop.f32.mrb[0].mxu0
        %3401 = vmatprep.mubr.bf16.mxu0 0
        %3402 = vmatmul.mubr.bf16.gmra.mrb[0].mxu0 %v2450
        %v3403 = vpop.f32.mrb[0].mxu0
        %v3404 = vadd.f32 0.0, %v3403
        %v3405 = vpop.f32.mrb[0].mxu0
        %v3406 = vpop.f32.mrb[0].mxu0
        %v3407 = vadd.f32 0.0, %v3406
        %v3408 = vpop.f32.mrb[0].mxu0
        %3409 = vmatprep.mubr.bf16.mxu0 0
        %3410 = vmatmul.mubr.bf16.gmra.mrb[0].mxu0 %v2453
        %v3411 = vpop.f32.mrb[0].mxu0
        %v3412 = vadd.f32 0.0, %v3411
        %v3413 = vpop.f32.mrb[0].mxu0
        %v3414 = vpop.f32.mrb[0].mxu0
        %v3415 = vadd.f32 0.0, %v3414
        %v3416 = vpop.f32.mrb[0].mxu0
        %3417 = vmatprep.mubr.bf16.mxu0 0
        %3418 = vmatmul.mubr.bf16.gmra.mrb[0].mxu0 %v2456
        %v3419 = vpop.f32.mrb[0].mxu0
        %v3420 = vadd.f32 0.0, %v3419
        %v3421 = vpop.f32.mrb[0].mxu0
        %v3422 = vpop.f32.mrb[0].mxu0
        %v3423 = vadd.f32 0.0, %v3422
        %v3424 = vpop.f32.mrb[0].mxu0
        %3425 = vdwg.mxu0
        %v3426 = vmax.f32 %v2500, %v2732
        %v3427 = vmax.f32 %v2503, %v2735
        %v3428 = vmax.f32 %v2508, %v2740
        %v3429 = vmax.f32 %v2511, %v2743
        %v3430 = vmax.f32 %v2516, %v2748
        %v3431 = vmax.f32 %v2519, %v2751
        %v3432 = vmax.f32 %v2524, %v2756
        %v3433 = vmax.f32 %v2527, %v2759
        %v3434 = vmax.f32 %v2532, %v2764
        %v3435 = vmax.f32 %v2535, %v2767
        %v3436 = vmax.f32 %v2540, %v2772
        %v3437 = vmax.f32 %v2543, %v2775
        %v3438 = vmax.f32 %v2548, %v2780
        %v3439 = vmax.f32 %v2551, %v2783
        %v3440 = vmax.f32 %v2556, %v2788
        %v3441 = vmax.f32 %v2559, %v2791
        %v3442 = vmax.f32 %v2564, %v2796
        %v3443 = vmax.f32 %v2567, %v2799
        %v3444 = vmax.f32 %v2572, %v2804
        %v3445 = vmax.f32 %v2575, %v2807
        %v3446 = vmax.f32 %v2580, %v2812
        %v3447 = vmax.f32 %v2583, %v2815
        %v3448 = vmax.f32 %v2588, %v2820
        %v3449 = vmax.f32 %v2591, %v2823
        %v3450 = vmax.f32 %v2596, %v2828
        %v3451 = vmax.f32 %v2599, %v2831
        %v3452 = vmax.f32 %v2604, %v2836
        %v3453 = vmax.f32 %v2607, %v2839
        %v3454 = vmax.f32 %v2612, %v2844
        %v3455 = vmax.f32 %v2615, %v2847
        %v3456 = vmax.f32 %v2620, %v2852
        %v3457 = vmax.f32 %v2623, %v2855
        %v3458 = vmax.f32 %v2628, %v2860
        %v3459 = vmax.f32 %v2631, %v2863
        %v3460 = vmax.f32 %v2636, %v2868
        %v3461 = vmax.f32 %v2639, %v2871
        %v3462 = vmax.f32 %v2644, %v2876
        %v3463 = vmax.f32 %v2647, %v2879
        %v3464 = vmax.f32 %v2652, %v2884
        %v3465 = vmax.f32 %v2655, %v2887
        %v3466 = vmax.f32 %v2660, %v2892
        %v3467 = vmax.f32 %v2663, %v2895
        %v3468 = vmax.f32 %v2668, %v2900
        %v3469 = vmax.f32 %v2671, %v2903
        %v3470 = vmax.f32 %v2676, %v2908
        %v3471 = vmax.f32 %v2679, %v2911
        %v3472 = vmax.f32 %v2684, %v2916
        %v3473 = vmax.f32 %v2687, %v2919
        %v3474 = vmax.f32 %v2692, %v2924
        %v3475 = vmax.f32 %v2695, %v2927
        %v3476 = vmax.f32 %v2700, %v2932
        %v3477 = vmax.f32 %v2703, %v2935
        %v3478 = vmax.f32 %v2708, %v2940
        %v3479 = vmax.f32 %v2711, %v2943
        %v3480 = vmax.f32 %v2716, %v2948
        %v3481 = vmax.f32 %v2719, %v2951
        %v3482 = vmax.f32 %v2724, %v2956
        %v3483 = vmax.f32 %v2727, %v2959
        %v3484 = vmax.f32 %v2964, %v3196
        %v3485 = vmax.f32 %v2967, %v3199
        %v3486 = vmax.f32 %v2972, %v3204
        %v3487 = vmax.f32 %v2975, %v3207
        %v3488 = vmax.f32 %v2980, %v3212
        %v3489 = vmax.f32 %v2983, %v3215
        %v3490 = vmax.f32 %v2988, %v3220
        %v3491 = vmax.f32 %v2991, %v3223
        %v3492 = vmax.f32 %v2996, %v3228
        %v3493 = vmax.f32 %v2999, %v3231
        %v3494 = vmax.f32 %v3004, %v3236
        %v3495 = vmax.f32 %v3007, %v3239
        %v3496 = vmax.f32 %v3012, %v3244
        %v3497 = vmax.f32 %v3015, %v3247
        %v3498 = vmax.f32 %v3020, %v3252
        %v3499 = vmax.f32 %v3023, %v3255
        %v3500 = vmax.f32 %v3028, %v3260
        %v3501 = vmax.f32 %v3031, %v3263
        %v3502 = vmax.f32 %v3036, %v3268
        %v3503 = vmax.f32 %v3039, %v3271
        %v3504 = vmax.f32 %v3044, %v3276
        %v3505 = vmax.f32 %v3047, %v3279
        %v3506 = vmax.f32 %v3052, %v3284
        %v3507 = vmax.f32 %v3055, %v3287
        %v3508 = vmax.f32 %v3060, %v3292
        %v3509 = vmax.f32 %v3063, %v3295
        %v3510 = vmax.f32 %v3068, %v3300
        %v3511 = vmax.f32 %v3071, %v3303
        %v3512 = vmax.f32 %v3076, %v3308
        %v3513 = vmax.f32 %v3079, %v3311
        %v3514 = vmax.f32 %v3084, %v3316
        %v3515 = vmax.f32 %v3087, %v3319
        %v3516 = vmax.f32 %v3092, %v3324
        %v3517 = vmax.f32 %v3095, %v3327
        %v3518 = vmax.f32 %v3100, %v3332
        %v3519 = vmax.f32 %v3103, %v3335
        %v3520 = vmax.f32 %v3108, %v3340
        %v3521 = vmax.f32 %v3111, %v3343
        %v3522 = vmax.f32 %v3116, %v3348
        %v3523 = vmax.f32 %v3119, %v3351
        %v3524 = vmax.f32 %v3124, %v3356
        %v3525 = vmax.f32 %v3127, %v3359
        %v3526 = vmax.f32 %v3132, %v3364
        %v3527 = vmax.f32 %v3135, %v3367
        %v3528 = vmax.f32 %v3140, %v3372
        %v3529 = vmax.f32 %v3143, %v3375
        %v3530 = vmax.f32 %v3148, %v3380
        %v3531 = vmax.f32 %v3151, %v3383
        %v3532 = vmax.f32 %v3156, %v3388
        %v3533 = vmax.f32 %v3159, %v3391
        %v3534 = vmax.f32 %v3164, %v3396
        %v3535 = vmax.f32 %v3167, %v3399
        %v3536 = vmax.f32 %v3172, %v3404
        %v3537 = vmax.f32 %v3175, %v3407
        %v3538 = vmax.f32 %v3180, %v3412
        %v3539 = vmax.f32 %v3183, %v3415
        %v3540 = vmax.f32 %v3188, %v3420
        %v3541 = vmax.f32 %v3191, %v3423
        %v3542 = vmax.f32 %v3426, %v3484
        %v3543 = vmax.f32 %v3427, %v3485
        %v3544 = vmax.f32 %v3428, %v3486
        %v3545 = vmax.f32 %v3429, %v3487
        %v3546 = vmax.f32 %v3430, %v3488
        %v3547 = vmax.f32 %v3431, %v3489
        %v3548 = vmax.f32 %v3432, %v3490
        %v3549 = vmax.f32 %v3433, %v3491
        %v3550 = vmax.f32 %v3434, %v3492
        %v3551 = vmax.f32 %v3435, %v3493
        %v3552 = vmax.f32 %v3436, %v3494
        %v3553 = vmax.f32 %v3437, %v3495
        %v3554 = vmax.f32 %v3438, %v3496
        %v3555 = vmax.f32 %v3439, %v3497
        %v3556 = vmax.f32 %v3440, %v3498
        %v3557 = vmax.f32 %v3441, %v3499
        %v3558 = vmax.f32 %v3442, %v3500
        %v3559 = vmax.f32 %v3443, %v3501
        %v3560 = vmax.f32 %v3444, %v3502
        %v3561 = vmax.f32 %v3445, %v3503
        %v3562 = vmax.f32 %v3446, %v3504
        %v3563 = vmax.f32 %v3447, %v3505
        %v3564 = vmax.f32 %v3448, %v3506
        %v3565 = vmax.f32 %v3449, %v3507
        %v3566 = vmax.f32 %v3450, %v3508
        %v3567 = vmax.f32 %v3451, %v3509
        %v3568 = vmax.f32 %v3452, %v3510
        %v3569 = vmax.f32 %v3453, %v3511
        %v3570 = vmax.f32 %v3454, %v3512
        %v3571 = vmax.f32 %v3455, %v3513
        %v3572 = vmax.f32 %v3456, %v3514
        %v3573 = vmax.f32 %v3457, %v3515
        %v3574 = vmax.f32 %v3458, %v3516
        %v3575 = vmax.f32 %v3459, %v3517
        %v3576 = vmax.f32 %v3460, %v3518
        %v3577 = vmax.f32 %v3461, %v3519
        %v3578 = vmax.f32 %v3462, %v3520
        %v3579 = vmax.f32 %v3463, %v3521
        %v3580 = vmax.f32 %v3464, %v3522
        %v3581 = vmax.f32 %v3465, %v3523
        %v3582 = vmax.f32 %v3466, %v3524
        %v3583 = vmax.f32 %v3467, %v3525
        %v3584 = vmax.f32 %v3468, %v3526
        %v3585 = vmax.f32 %v3469, %v3527
        %v3586 = vmax.f32 %v3470, %v3528
        %v3587 = vmax.f32 %v3471, %v3529
        %v3588 = vmax.f32 %v3472, %v3530
        %v3589 = vmax.f32 %v3473, %v3531
        %v3590 = vmax.f32 %v3474, %v3532
        %v3591 = vmax.f32 %v3475, %v3533
        %v3592 = vmax.f32 %v3476, %v3534
        %v3593 = vmax.f32 %v3477, %v3535
        %v3594 = vmax.f32 %v3478, %v3536
        %v3595 = vmax.f32 %v3479, %v3537
        %v3596 = vmax.f32 %v3480, %v3538
        %v3597 = vmax.f32 %v3481, %v3539
        %v3598 = vmax.f32 %v3482, %v3540
        %v3599 = vmax.f32 %v3483, %v3541
        %v3600 = vmin.f32 %v2500, %v2732
        %v3601 = vmin.f32 %v2503, %v2735
        %v3602 = vmin.f32 %v2508, %v2740
        %v3603 = vmin.f32 %v2511, %v2743
        %v3604 = vmin.f32 %v2516, %v2748
        %v3605 = vmin.f32 %v2519, %v2751
        %v3606 = vmin.f32 %v2524, %v2756
        %v3607 = vmin.f32 %v2527, %v2759
        %v3608 = vmin.f32 %v2532, %v2764
        %v3609 = vmin.f32 %v2535, %v2767
        %v3610 = vmin.f32 %v2540, %v2772
        %v3611 = vmin.f32 %v2543, %v2775
        %v3612 = vmin.f32 %v2548, %v2780
        %v3613 = vmin.f32 %v2551, %v2783
        %v3614 = vmin.f32 %v2556, %v2788
        %v3615 = vmin.f32 %v2559, %v2791
        %v3616 = vmin.f32 %v2564, %v2796
        %v3617 = vmin.f32 %v2567, %v2799
        %v3618 = vmin.f32 %v2572, %v2804
        %v3619 = vmin.f32 %v2575, %v2807
        %v3620 = vmin.f32 %v2580, %v2812
        %v3621 = vmin.f32 %v2583, %v2815
        %v3622 = vmin.f32 %v2588, %v2820
        %v3623 = vmin.f32 %v2591, %v2823
        %v3624 = vmin.f32 %v2596, %v2828
        %v3625 = vmin.f32 %v2599, %v2831
        %v3626 = vmin.f32 %v2604, %v2836
        %v3627 = vmin.f32 %v2607, %v2839
        %v3628 = vmin.f32 %v2612, %v2844
        %v3629 = vmin.f32 %v2615, %v2847
        %v3630 = vmin.f32 %v2620, %v2852
        %v3631 = vmin.f32 %v2623, %v2855
        %v3632 = vmin.f32 %v2628, %v2860
        %v3633 = vmin.f32 %v2631, %v2863
        %v3634 = vmin.f32 %v2636, %v2868
        %v3635 = vmin.f32 %v2639, %v2871
        %v3636 = vmin.f32 %v2644, %v2876
        %v3637 = vmin.f32 %v2647, %v2879
        %v3638 = vmin.f32 %v2652, %v2884
        %v3639 = vmin.f32 %v2655, %v2887
        %v3640 = vmin.f32 %v2660, %v2892
        %v3641 = vmin.f32 %v2663, %v2895
        %v3642 = vmin.f32 %v2668, %v2900
        %v3643 = vmin.f32 %v2671, %v2903
        %v3644 = vmin.f32 %v2676, %v2908
        %v3645 = vmin.f32 %v2679, %v2911
        %v3646 = vmin.f32 %v2684, %v2916
        %v3647 = vmin.f32 %v2687, %v2919
        %v3648 = vmin.f32 %v2692, %v2924
        %v3649 = vmin.f32 %v2695, %v2927
        %v3650 = vmin.f32 %v2700, %v2932
        %v3651 = vmin.f32 %v2703, %v2935
        %v3652 = vmin.f32 %v2708, %v2940
        %v3653 = vmin.f32 %v2711, %v2943
        %v3654 = vmin.f32 %v2716, %v2948
        %v3655 = vmin.f32 %v2719, %v2951
        %v3656 = vmin.f32 %v2724, %v2956
        %v3657 = vmin.f32 %v2727, %v2959
        %v3658 = vmin.f32 %v2964, %v3196
        %v3659 = vmin.f32 %v2967, %v3199
        %v3660 = vmin.f32 %v2972, %v3204
        %v3661 = vmin.f32 %v2975, %v3207
        %v3662 = vmin.f32 %v2980, %v3212
        %v3663 = vmin.f32 %v2983, %v3215
        %v3664 = vmin.f32 %v2988, %v3220
        %v3665 = vmin.f32 %v2991, %v3223
        %v3666 = vmin.f32 %v2996, %v3228
        %v3667 = vmin.f32 %v2999, %v3231
        %v3668 = vmin.f32 %v3004, %v3236
        %v3669 = vmin.f32 %v3007, %v3239
        %v3670 = vmin.f32 %v3012, %v3244
        %v3671 = vmin.f32 %v3015, %v3247
        %v3672 = vmin.f32 %v3020, %v3252
        %v3673 = vmin.f32 %v3023, %v3255
        %v3674 = vmin.f32 %v3028, %v3260
        %v3675 = vmin.f32 %v3031, %v3263
        %v3676 = vmin.f32 %v3036, %v3268
        %v3677 = vmin.f32 %v3039, %v3271
        %v3678 = vmin.f32 %v3044, %v3276
        %v3679 = vmin.f32 %v3047, %v3279
        %v3680 = vmin.f32 %v3052, %v3284
        %v3681 = vmin.f32 %v3055, %v3287
        %v3682 = vmin.f32 %v3060, %v3292
        %v3683 = vmin.f32 %v3063, %v3295
        %v3684 = vmin.f32 %v3068, %v3300
        %v3685 = vmin.f32 %v3071, %v3303
        %v3686 = vmin.f32 %v3076, %v3308
        %v3687 = vmin.f32 %v3079, %v3311
        %v3688 = vmin.f32 %v3084, %v3316
        %v3689 = vmin.f32 %v3087, %v3319
        %v3690 = vmin.f32 %v3092, %v3324
        %v3691 = vmin.f32 %v3095, %v3327
        %v3692 = vmin.f32 %v3100, %v3332
        %v3693 = vmin.f32 %v3103, %v3335
        %v3694 = vmin.f32 %v3108, %v3340
        %v3695 = vmin.f32 %v3111, %v3343
        %v3696 = vmin.f32 %v3116, %v3348
        %v3697 = vmin.f32 %v3119, %v3351
        %v3698 = vmin.f32 %v3124, %v3356
        %v3699 = vmin.f32 %v3127, %v3359
        %v3700 = vmin.f32 %v3132, %v3364
        %v3701 = vmin.f32 %v3135, %v3367
        %v3702 = vmin.f32 %v3140, %v3372
        %v3703 = vmin.f32 %v3143, %v3375
        %v3704 = vmin.f32 %v3148, %v3380
        %v3705 = vmin.f32 %v3151, %v3383
        %v3706 = vmin.f32 %v3156, %v3388
        %v3707 = vmin.f32 %v3159, %v3391
        %v3708 = vmin.f32 %v3164, %v3396
        %v3709 = vmin.f32 %v3167, %v3399
        %v3710 = vmin.f32 %v3172, %v3404
        %v3711 = vmin.f32 %v3175, %v3407
        %v3712 = vmin.f32 %v3180, %v3412
        %v3713 = vmin.f32 %v3183, %v3415
        %v3714 = vmin.f32 %v3188, %v3420
        %v3715 = vmin.f32 %v3191, %v3423
        %v3716 = vmin.f32 %v3600, %v3658
        %v3717 = vmin.f32 %v3601, %v3659
        %v3718 = vmin.f32 %v3602, %v3660
        %v3719 = vmin.f32 %v3603, %v3661
        %v3720 = vmin.f32 %v3604, %v3662
        %v3721 = vmin.f32 %v3605, %v3663
        %v3722 = vmin.f32 %v3606, %v3664
        %v3723 = vmin.f32 %v3607, %v3665
        %v3724 = vmin.f32 %v3608, %v3666
        %v3725 = vmin.f32 %v3609, %v3667
        %v3726 = vmin.f32 %v3610, %v3668
        %v3727 = vmin.f32 %v3611, %v3669
        %v3728 = vmin.f32 %v3612, %v3670
        %v3729 = vmin.f32 %v3613, %v3671
        %v3730 = vmin.f32 %v3614, %v3672
        %v3731 = vmin.f32 %v3615, %v3673
        %v3732 = vmin.f32 %v3616, %v3674
        %v3733 = vmin.f32 %v3617, %v3675
        %v3734 = vmin.f32 %v3618, %v3676
        %v3735 = vmin.f32 %v3619, %v3677
        %v3736 = vmin.f32 %v3620, %v3678
        %v3737 = vmin.f32 %v3621, %v3679
        %v3738 = vmin.f32 %v3622, %v3680
        %v3739 = vmin.f32 %v3623, %v3681
        %v3740 = vmin.f32 %v3624, %v3682
        %v3741 = vmin.f32 %v3625, %v3683
        %v3742 = vmin.f32 %v3626, %v3684
        %v3743 = vmin.f32 %v3627, %v3685
        %v3744 = vmin.f32 %v3628, %v3686
        %v3745 = vmin.f32 %v3629, %v3687
        %v3746 = vmin.f32 %v3630, %v3688
        %v3747 = vmin.f32 %v3631, %v3689
        %v3748 = vmin.f32 %v3632, %v3690
        %v3749 = vmin.f32 %v3633, %v3691
        %v3750 = vmin.f32 %v3634, %v3692
        %v3751 = vmin.f32 %v3635, %v3693
        %v3752 = vmin.f32 %v3636, %v3694
        %v3753 = vmin.f32 %v3637, %v3695
        %v3754 = vmin.f32 %v3638, %v3696
        %v3755 = vmin.f32 %v3639, %v3697
        %v3756 = vmin.f32 %v3640, %v3698
        %v3757 = vmin.f32 %v3641, %v3699
        %v3758 = vmin.f32 %v3642, %v3700
        %v3759 = vmin.f32 %v3643, %v3701
        %v3760 = vmin.f32 %v3644, %v3702
        %v3761 = vmin.f32 %v3645, %v3703
        %v3762 = vmin.f32 %v3646, %v3704
        %v3763 = vmin.f32 %v3647, %v3705
        %v3764 = vmin.f32 %v3648, %v3706
        %v3765 = vmin.f32 %v3649, %v3707
        %v3766 = vmin.f32 %v3650, %v3708
        %v3767 = vmin.f32 %v3651, %v3709
        %v3768 = vmin.f32 %v3652, %v3710
        %v3769 = vmin.f32 %v3653, %v3711
        %v3770 = vmin.f32 %v3654, %v3712
        %v3771 = vmin.f32 %v3655, %v3713
        %v3772 = vmin.f32 %v3656, %v3714
        %v3773 = vmin.f32 %v3657, %v3715
        %v3774 = vld [vmem:[%s1267] sm:$0x1]
        %vm3775 = vcmp.ge.f32.partialorder %v3774, 0.0
        %v3776 = vsel %vm3775, 1, 0
        %v3777 = vlaneseq
        %v3778 = vshrl.u32 %v3777, 7
        %v3779 = vsub.s32 0, %v3778
        %v3780 = vrot.slane %v3776, %v3779
        %vm3781 = vcmp.eq.s32.totalorder %v3780, 1
        %v3782 = vsel %vm3781, %v3542, %v3716
        %v3783 = vsel %vm3781, %v3543, %v3717
        %v3784 = vsel %vm3781, %v3544, %v3718
        %v3785 = vsel %vm3781, %v3545, %v3719
        %v3786 = vsel %vm3781, %v3546, %v3720
        %v3787 = vsel %vm3781, %v3547, %v3721
        %v3788 = vsel %vm3781, %v3548, %v3722
        %v3789 = vsel %vm3781, %v3549, %v3723
        %v3790 = vsel %vm3781, %v3550, %v3724
        %v3791 = vsel %vm3781, %v3551, %v3725
        %v3792 = vsel %vm3781, %v3552, %v3726
        %v3793 = vsel %vm3781, %v3553, %v3727
        %v3794 = vsel %vm3781, %v3554, %v3728
        %v3795 = vsel %vm3781, %v3555, %v3729
        %v3796 = vsel %vm3781, %v3556, %v3730
        %v3797 = vsel %vm3781, %v3557, %v3731
        %v3798 = vsel %vm3781, %v3558, %v3732
        %v3799 = vsel %vm3781, %v3559, %v3733
        %v3800 = vsel %vm3781, %v3560, %v3734
        %v3801 = vsel %vm3781, %v3561, %v3735
        %v3802 = vsel %vm3781, %v3562, %v3736
        %v3803 = vsel %vm3781, %v3563, %v3737
        %v3804 = vsel %vm3781, %v3564, %v3738
        %v3805 = vsel %vm3781, %v3565, %v3739
        %v3806 = vsel %vm3781, %v3566, %v3740
        %v3807 = vsel %vm3781, %v3567, %v3741
        %v3808 = vsel %vm3781, %v3568, %v3742
        %v3809 = vsel %vm3781, %v3569, %v3743
        %v3810 = vsel %vm3781, %v3570, %v3744
        %v3811 = vsel %vm3781, %v3571, %v3745
        %v3812 = vsel %vm3781, %v3572, %v3746
        %v3813 = vsel %vm3781, %v3573, %v3747
        %v3814 = vsel %vm3781, %v3574, %v3748
        %v3815 = vsel %vm3781, %v3575, %v3749
        %v3816 = vsel %vm3781, %v3576, %v3750
        %v3817 = vsel %vm3781, %v3577, %v3751
        %v3818 = vsel %vm3781, %v3578, %v3752
        %v3819 = vsel %vm3781, %v3579, %v3753
        %v3820 = vsel %vm3781, %v3580, %v3754
        %v3821 = vsel %vm3781, %v3581, %v3755
        %v3822 = vsel %vm3781, %v3582, %v3756
        %v3823 = vsel %vm3781, %v3583, %v3757
        %v3824 = vsel %vm3781, %v3584, %v3758
        %v3825 = vsel %vm3781, %v3585, %v3759
        %v3826 = vsel %vm3781, %v3586, %v3760
        %v3827 = vsel %vm3781, %v3587, %v3761
        %v3828 = vsel %vm3781, %v3588, %v3762
        %v3829 = vsel %vm3781, %v3589, %v3763
        %v3830 = vsel %vm3781, %v3590, %v3764
        %v3831 = vsel %vm3781, %v3591, %v3765
        %v3832 = vsel %vm3781, %v3592, %v3766
        %v3833 = vsel %vm3781, %v3593, %v3767
        %v3834 = vsel %vm3781, %v3594, %v3768
        %v3835 = vsel %vm3781, %v3595, %v3769
        %v3836 = vsel %vm3781, %v3596, %v3770
        %v3837 = vsel %vm3781, %v3597, %v3771
        %v3838 = vsel %vm3781, %v3598, %v3772
        %v3839 = vsel %vm3781, %v3599, %v3773
        %v3840 = vld [vmem:[%s1264] sm:$0x1]
        %v3842 = vlaneseq
        %v3843 = vshrl.u32 %v3842, 7
        %v3844 = vsub.s32 0, %v3843
        %v3845 = vrot.slane %v3840, %v3844
        %v3847 = vadd.f32 %v3782, %v3845
        %v3848 = vadd.f32 %v3783, %v3845
        %v3849 = vadd.f32 %v3784, %v3845
        %v3850 = vadd.f32 %v3785, %v3845
        %v3851 = vadd.f32 %v3786, %v3845
        %v3852 = vadd.f32 %v3787, %v3845
        %v3853 = vadd.f32 %v3788, %v3845
        %v3854 = vadd.f32 %v3789, %v3845
        %v3855 = vadd.f32 %v3790, %v3845
        %v3856 = vadd.f32 %v3791, %v3845
        %v3857 = vadd.f32 %v3792, %v3845
        %v3858 = vadd.f32 %v3793, %v3845
        %v3859 = vadd.f32 %v3794, %v3845
        %v3860 = vadd.f32 %v3795, %v3845
        %v3861 = vadd.f32 %v3796, %v3845
        %v3862 = vadd.f32 %v3797, %v3845
        %v3863 = vadd.f32 %v3798, %v3845
        %v3864 = vadd.f32 %v3799, %v3845
        %v3865 = vadd.f32 %v3800, %v3845
        %v3866 = vadd.f32 %v3801, %v3845
        %v3867 = vadd.f32 %v3802, %v3845
        %v3868 = vadd.f32 %v3803, %v3845
        %v3869 = vadd.f32 %v3804, %v3845
        %v3870 = vadd.f32 %v3805, %v3845
        %v3871 = vadd.f32 %v3806, %v3845
        %v3872 = vadd.f32 %v3807, %v3845
        %v3873 = vadd.f32 %v3808, %v3845
        %v3874 = vadd.f32 %v3809, %v3845
        %v3875 = vadd.f32 %v3810, %v3845
        %v3876 = vadd.f32 %v3811, %v3845
        %v3877 = vadd.f32 %v3812, %v3845
        %v3878 = vadd.f32 %v3813, %v3845
        %v3879 = vadd.f32 %v3814, %v3845
        %v3880 = vadd.f32 %v3815, %v3845
        %v3881 = vadd.f32 %v3816, %v3845
        %v3882 = vadd.f32 %v3817, %v3845
        %v3883 = vadd.f32 %v3818, %v3845
        %v3884 = vadd.f32 %v3819, %v3845
        %v3885 = vadd.f32 %v3820, %v3845
        %v3886 = vadd.f32 %v3821, %v3845
        %v3887 = vadd.f32 %v3822, %v3845
        %v3888 = vadd.f32 %v3823, %v3845
        %v3889 = vadd.f32 %v3824, %v3845
        %v3890 = vadd.f32 %v3825, %v3845
        %v3891 = vadd.f32 %v3826, %v3845
        %v3892 = vadd.f32 %v3827, %v3845
        %v3893 = vadd.f32 %v3828, %v3845
        %v3894 = vadd.f32 %v3829, %v3845
        %v3895 = vadd.f32 %v3830, %v3845
        %v3896 = vadd.f32 %v3831, %v3845
        %v3897 = vadd.f32 %v3832, %v3845
        %v3898 = vadd.f32 %v3833, %v3845
        %v3899 = vadd.f32 %v3834, %v3845
        %v3900 = vadd.f32 %v3835, %v3845
        %v3901 = vadd.f32 %v3836, %v3845
        %v3902 = vadd.f32 %v3837, %v3845
        %v3903 = vadd.f32 %v3838, %v3845
        %v3904 = vadd.f32 %v3839, %v3845
        %v3905 = vmax.f32 %v3847, 0.0
        %v3906 = vmax.f32 %v3848, 0.0
        %v3907 = vmax.f32 %v3849, 0.0
        %v3908 = vmax.f32 %v3850, 0.0
        %v3909 = vmax.f32 %v3851, 0.0
        %v3910 = vmax.f32 %v3852, 0.0
        %v3911 = vmax.f32 %v3853, 0.0
        %v3912 = vmax.f32 %v3854, 0.0
        %v3913 = vmax.f32 %v3855, 0.0
        %v3914 = vmax.f32 %v3856, 0.0
        %v3915 = vmax.f32 %v3857, 0.0
        %v3916 = vmax.f32 %v3858, 0.0
        %v3917 = vmax.f32 %v3859, 0.0
        %v3918 = vmax.f32 %v3860, 0.0
        %v3919 = vmax.f32 %v3861, 0.0
        %v3920 = vmax.f32 %v3862, 0.0
        %v3921 = vmax.f32 %v3863, 0.0
        %v3922 = vmax.f32 %v3864, 0.0
        %v3923 = vmax.f32 %v3865, 0.0
        %v3924 = vmax.f32 %v3866, 0.0
        %v3925 = vmax.f32 %v3867, 0.0
        %v3926 = vmax.f32 %v3868, 0.0
        %v3927 = vmax.f32 %v3869, 0.0
        %v3928 = vmax.f32 %v3870, 0.0
        %v3929 = vmax.f32 %v3871, 0.0
        %v3930 = vmax.f32 %v3872, 0.0
        %v3931 = vmax.f32 %v3873, 0.0
        %v3932 = vmax.f32 %v3874, 0.0
        %v3933 = vmax.f32 %v3875, 0.0
        %v3934 = vmax.f32 %v3876, 0.0
        %v3935 = vmax.f32 %v3877, 0.0
        %v3936 = vmax.f32 %v3878, 0.0
        %v3937 = vmax.f32 %v3879, 0.0
        %v3938 = vmax.f32 %v3880, 0.0
        %v3939 = vmax.f32 %v3881, 0.0
        %v3940 = vmax.f32 %v3882, 0.0
        %v3941 = vmax.f32 %v3883, 0.0
        %v3942 = vmax.f32 %v3884, 0.0
        %v3943 = vmax.f32 %v3885, 0.0
        %v3944 = vmax.f32 %v3886, 0.0
        %v3945 = vmax.f32 %v3887, 0.0
        %v3946 = vmax.f32 %v3888, 0.0
        %v3947 = vmax.f32 %v3889, 0.0
        %v3948 = vmax.f32 %v3890, 0.0
        %v3949 = vmax.f32 %v3891, 0.0
        %v3950 = vmax.f32 %v3892, 0.0
        %v3951 = vmax.f32 %v3893, 0.0
        %v3952 = vmax.f32 %v3894, 0.0
        %v3953 = vmax.f32 %v3895, 0.0
        %v3954 = vmax.f32 %v3896, 0.0
        %v3955 = vmax.f32 %v3897, 0.0
        %v3956 = vmax.f32 %v3898, 0.0
        %v3957 = vmax.f32 %v3899, 0.0
        %v3958 = vmax.f32 %v3900, 0.0
        %v3959 = vmax.f32 %v3901, 0.0
        %v3960 = vmax.f32 %v3902, 0.0
        %v3961 = vmax.f32 %v3903, 0.0
        %v3962 = vmax.f32 %v3904, 0.0
        %v3964 = vlaneseq
        %v3965 = vshrl.u32 %v3964, 7
        %v3966 = vsub.s32 0, %v3965
        %v3967 = vrot.slane %v3774, %v3966
        %v3969 = vmul.f32 %v3905, %v3967
        %v3970 = vmul.f32 %v3906, %v3967
        %v3971 = vmul.f32 %v3907, %v3967
        %v3972 = vmul.f32 %v3908, %v3967
        %v3973 = vmul.f32 %v3909, %v3967
        %v3974 = vmul.f32 %v3910, %v3967
        %v3975 = vmul.f32 %v3911, %v3967
        %v3976 = vmul.f32 %v3912, %v3967
        %v3977 = vmul.f32 %v3913, %v3967
        %v3978 = vmul.f32 %v3914, %v3967
        %v3979 = vmul.f32 %v3915, %v3967
        %v3980 = vmul.f32 %v3916, %v3967
        %v3981 = vmul.f32 %v3917, %v3967
        %v3982 = vmul.f32 %v3918, %v3967
        %v3983 = vmul.f32 %v3919, %v3967
        %v3984 = vmul.f32 %v3920, %v3967
        %v3985 = vmul.f32 %v3921, %v3967
        %v3986 = vmul.f32 %v3922, %v3967
        %v3987 = vmul.f32 %v3923, %v3967
        %v3988 = vmul.f32 %v3924, %v3967
        %v3989 = vmul.f32 %v3925, %v3967
        %v3990 = vmul.f32 %v3926, %v3967
        %v3991 = vmul.f32 %v3927, %v3967
        %v3992 = vmul.f32 %v3928, %v3967
        %v3993 = vmul.f32 %v3929, %v3967
        %v3994 = vmul.f32 %v3930, %v3967
        %v3995 = vmul.f32 %v3931, %v3967
        %v3996 = vmul.f32 %v3932, %v3967
        %v3997 = vmul.f32 %v3933, %v3967
        %v3998 = vmul.f32 %v3934, %v3967
        %v3999 = vmul.f32 %v3935, %v3967
        %v4000 = vmul.f32 %v3936, %v3967
        %v4001 = vmul.f32 %v3937, %v3967
        %v4002 = vmul.f32 %v3938, %v3967
        %v4003 = vmul.f32 %v3939, %v3967
        %v4004 = vmul.f32 %v3940, %v3967
        %v4005 = vmul.f32 %v3941, %v3967
        %v4006 = vmul.f32 %v3942, %v3967
        %v4007 = vmul.f32 %v3943, %v3967
        %v4008 = vmul.f32 %v3944, %v3967
        %v4009 = vmul.f32 %v3945, %v3967
        %v4010 = vmul.f32 %v3946, %v3967
        %v4011 = vmul.f32 %v3947, %v3967
        %v4012 = vmul.f32 %v3948, %v3967
        %v4013 = vmul.f32 %v3949, %v3967
        %v4014 = vmul.f32 %v3950, %v3967
        %v4015 = vmul.f32 %v3951, %v3967
        %v4016 = vmul.f32 %v3952, %v3967
        %v4017 = vmul.f32 %v3953, %v3967
        %v4018 = vmul.f32 %v3954, %v3967
        %v4019 = vmul.f32 %v3955, %v3967
        %v4020 = vmul.f32 %v3956, %v3967
        %v4021 = vmul.f32 %v3957, %v3967
        %v4022 = vmul.f32 %v3958, %v3967
        %v4023 = vmul.f32 %v3959, %v3967
        %v4024 = vmul.f32 %v3960, %v3967
        %v4025 = vmul.f32 %v3961, %v3967
        %v4026 = vmul.f32 %v3962, %v3967
        %v4027 = vld [vmem:[%s1270] sm:$0x1]
        %v4029 = vlaneseq
        %v4030 = vshrl.u32 %v4029, 7
        %v4031 = vsub.s32 0, %v4030
        %v4032 = vrot.slane %v4027, %v4031
        %v4034 = vadd.f32 %v3969, %v4032
        %v4035 = vadd.f32 %v3970, %v4032
        %v4036 = vadd.f32 %v3971, %v4032
        %v4037 = vadd.f32 %v3972, %v4032
        %v4038 = vadd.f32 %v3973, %v4032
        %v4039 = vadd.f32 %v3974, %v4032
        %v4040 = vadd.f32 %v3975, %v4032
        %v4041 = vadd.f32 %v3976, %v4032
        %v4042 = vadd.f32 %v3977, %v4032
        %v4043 = vadd.f32 %v3978, %v4032
        %v4044 = vadd.f32 %v3979, %v4032
        %v4045 = vadd.f32 %v3980, %v4032
        %v4046 = vadd.f32 %v3981, %v4032
        %v4047 = vadd.f32 %v3982, %v4032
        %v4048 = vadd.f32 %v3983, %v4032
        %v4049 = vadd.f32 %v3984, %v4032
        %v4050 = vadd.f32 %v3985, %v4032
        %v4051 = vadd.f32 %v3986, %v4032
        %v4052 = vadd.f32 %v3987, %v4032
        %v4053 = vadd.f32 %v3988, %v4032
        %v4054 = vadd.f32 %v3989, %v4032
        %v4055 = vadd.f32 %v3990, %v4032
        %v4056 = vadd.f32 %v3991, %v4032
        %v4057 = vadd.f32 %v3992, %v4032
        %v4058 = vadd.f32 %v3993, %v4032
        %v4059 = vadd.f32 %v3994, %v4032
        %v4060 = vadd.f32 %v3995, %v4032
        %v4061 = vadd.f32 %v3996, %v4032
        %v4062 = vadd.f32 %v3997, %v4032
        %v4063 = vadd.f32 %v3998, %v4032
        %v4064 = vadd.f32 %v3999, %v4032
        %v4065 = vadd.f32 %v4000, %v4032
        %v4066 = vadd.f32 %v4001, %v4032
        %v4067 = vadd.f32 %v4002, %v4032
        %v4068 = vadd.f32 %v4003, %v4032
        %v4069 = vadd.f32 %v4004, %v4032
        %v4070 = vadd.f32 %v4005, %v4032
        %v4071 = vadd.f32 %v4006, %v4032
        %v4072 = vadd.f32 %v4007, %v4032
        %v4073 = vadd.f32 %v4008, %v4032
        %v4074 = vadd.f32 %v4009, %v4032
        %v4075 = vadd.f32 %v4010, %v4032
        %v4076 = vadd.f32 %v4011, %v4032
        %v4077 = vadd.f32 %v4012, %v4032
        %v4078 = vadd.f32 %v4013, %v4032
        %v4079 = vadd.f32 %v4014, %v4032
        %v4080 = vadd.f32 %v4015, %v4032
        %v4081 = vadd.f32 %v4016, %v4032
        %v4082 = vadd.f32 %v4017, %v4032
        %v4083 = vadd.f32 %v4018, %v4032
        %v4084 = vadd.f32 %v4019, %v4032
        %v4085 = vadd.f32 %v4020, %v4032
        %v4086 = vadd.f32 %v4021, %v4032
        %v4087 = vadd.f32 %v4022, %v4032
        %v4088 = vadd.f32 %v4023, %v4032
        %v4089 = vadd.f32 %v4024, %v4032
        %v4090 = vadd.f32 %v4025, %v4032
        %v4091 = vadd.f32 %v4026, %v4032
        %v4092 = vpack.c.bf16 %v4035, %v4034
        %v4093 = vpack.c.bf16 %v4037, %v4036
        %v4094 = vpack.c.bf16 %v4039, %v4038
        %v4095 = vpack.c.bf16 %v4041, %v4040
        %v4096 = vpack.c.bf16 %v4043, %v4042
        %v4097 = vpack.c.bf16 %v4045, %v4044
        %v4098 = vpack.c.bf16 %v4047, %v4046
        %v4099 = vpack.c.bf16 %v4049, %v4048
        %v4100 = vpack.c.bf16 %v4051, %v4050
        %v4101 = vpack.c.bf16 %v4053, %v4052
        %v4102 = vpack.c.bf16 %v4055, %v4054
        %v4103 = vpack.c.bf16 %v4057, %v4056
        %v4104 = vpack.c.bf16 %v4059, %v4058
        %v4105 = vpack.c.bf16 %v4061, %v4060
        %v4106 = vpack.c.bf16 %v4063, %v4062
        %v4107 = vpack.c.bf16 %v4065, %v4064
        %v4108 = vpack.c.bf16 %v4067, %v4066
        %v4109 = vpack.c.bf16 %v4069, %v4068
        %v4110 = vpack.c.bf16 %v4071, %v4070
        %v4111 = vpack.c.bf16 %v4073, %v4072
        %v4112 = vpack.c.bf16 %v4075, %v4074
        %v4113 = vpack.c.bf16 %v4077, %v4076
        %v4114 = vpack.c.bf16 %v4079, %v4078
        %v4115 = vpack.c.bf16 %v4081, %v4080
        %v4116 = vpack.c.bf16 %v4083, %v4082
        %v4117 = vpack.c.bf16 %v4085, %v4084
        %v4118 = vpack.c.bf16 %v4087, %v4086
        %v4119 = vpack.c.bf16 %v4089, %v4088
        %v4120 = vpack.c.bf16 %v4091, %v4090
        %v4150 = vunpack.c.l.b16 %v4092
        %v4151 = vunpack.c.h.b16 %v4092
        %v4152 = vunpack.c.l.b16 %v4093
        %v4153 = vunpack.c.h.b16 %v4093
        %v4154 = vunpack.c.l.b16 %v4094
        %v4155 = vunpack.c.h.b16 %v4094
        %v4156 = vunpack.c.l.b16 %v4095
        %v4157 = vunpack.c.h.b16 %v4095
        %v4158 = vunpack.c.l.b16 %v4096
        %v4159 = vunpack.c.h.b16 %v4096
        %v4160 = vunpack.c.l.b16 %v4097
        %v4161 = vunpack.c.h.b16 %v4097
        %v4162 = vunpack.c.l.b16 %v4098
        %v4163 = vunpack.c.h.b16 %v4098
        %v4164 = vunpack.c.l.b16 %v4099
        %v4165 = vunpack.c.h.b16 %v4099
        %v4166 = vunpack.c.l.b16 %v4100
        %v4167 = vunpack.c.h.b16 %v4100
        %v4168 = vunpack.c.l.b16 %v4101
        %v4169 = vunpack.c.h.b16 %v4101
        %v4170 = vunpack.c.l.b16 %v4102
        %v4171 = vunpack.c.h.b16 %v4102
        %v4172 = vunpack.c.l.b16 %v4103
        %v4173 = vunpack.c.h.b16 %v4103
        %v4174 = vunpack.c.l.b16 %v4104
        %v4175 = vunpack.c.h.b16 %v4104
        %v4176 = vunpack.c.l.b16 %v4105
        %v4177 = vunpack.c.h.b16 %v4105
        %v4178 = vunpack.c.l.b16 %v4106
        %v4179 = vunpack.c.h.b16 %v4106
        %v4180 = vunpack.c.l.b16 %v4107
        %v4181 = vunpack.c.h.b16 %v4107
        %v4182 = vunpack.c.l.b16 %v4108
        %v4183 = vunpack.c.h.b16 %v4108
        %v4184 = vunpack.c.l.b16 %v4109
        %v4185 = vunpack.c.h.b16 %v4109
        %v4186 = vunpack.c.l.b16 %v4110
        %v4187 = vunpack.c.h.b16 %v4110
        %v4188 = vunpack.c.l.b16 %v4111
        %v4189 = vunpack.c.h.b16 %v4111
        %v4190 = vunpack.c.l.b16 %v4112
        %v4191 = vunpack.c.h.b16 %v4112
        %v4192 = vunpack.c.l.b16 %v4113
        %v4193 = vunpack.c.h.b16 %v4113
        %v4194 = vunpack.c.l.b16 %v4114
        %v4195 = vunpack.c.h.b16 %v4114
        %v4196 = vunpack.c.l.b16 %v4115
        %v4197 = vunpack.c.h.b16 %v4115
        %v4198 = vunpack.c.l.b16 %v4116
        %v4199 = vunpack.c.h.b16 %v4116
        %v4200 = vunpack.c.l.b16 %v4117
        %v4201 = vunpack.c.h.b16 %v4117
        %v4202 = vunpack.c.l.b16 %v4118
        %v4203 = vunpack.c.h.b16 %v4118
        %v4204 = vunpack.c.l.b16 %v4119
        %v4205 = vunpack.c.h.b16 %v4119
        %v4206 = vunpack.c.l.b16 %v4120
        %v4207 = vunpack.c.h.b16 %v4120
        %v4208 = vpack.c.b16 %v4150, %v4150
        %v4209 = vpack.c.b16 %v4151, %v4151
        %v4210 = vpack.c.b16 %v4152, %v4152
        %v4211 = vpack.c.b16 %v4153, %v4153
        %v4212 = vpack.c.b16 %v4154, %v4154
        %v4213 = vpack.c.b16 %v4155, %v4155
        %v4214 = vpack.c.b16 %v4156, %v4156
        %v4215 = vpack.c.b16 %v4157, %v4157
        %v4216 = vpack.c.b16 %v4158, %v4158
        %v4217 = vpack.c.b16 %v4159, %v4159
        %v4218 = vpack.c.b16 %v4160, %v4160
        %v4219 = vpack.c.b16 %v4161, %v4161
        %v4220 = vpack.c.b16 %v4162, %v4162
        %v4221 = vpack.c.b16 %v4163, %v4163
        %v4222 = vpack.c.b16 %v4164, %v4164
        %v4223 = vpack.c.b16 %v4165, %v4165
        %v4224 = vpack.c.b16 %v4166, %v4166
        %v4225 = vpack.c.b16 %v4167, %v4167
        %v4226 = vpack.c.b16 %v4168, %v4168
        %v4227 = vpack.c.b16 %v4169, %v4169
        %v4228 = vpack.c.b16 %v4170, %v4170
        %v4229 = vpack.c.b16 %v4171, %v4171
        %v4230 = vpack.c.b16 %v4172, %v4172
        %v4231 = vpack.c.b16 %v4173, %v4173
        %v4232 = vpack.c.b16 %v4174, %v4174
        %v4233 = vpack.c.b16 %v4175, %v4175
        %v4234 = vpack.c.b16 %v4176, %v4176
        %v4235 = vpack.c.b16 %v4177, %v4177
        %v4236 = vpack.c.b16 %v4178, %v4178
        %v4237 = vpack.c.b16 %v4179, %v4179
        %v4238 = vpack.c.b16 %v4180, %v4180
        %v4239 = vpack.c.b16 %v4181, %v4181
        %v4240 = vpack.c.b16 %v4182, %v4182
        %v4241 = vpack.c.b16 %v4183, %v4183
        %v4242 = vpack.c.b16 %v4184, %v4184
        %v4243 = vpack.c.b16 %v4185, %v4185
        %v4244 = vpack.c.b16 %v4186, %v4186
        %v4245 = vpack.c.b16 %v4187, %v4187
        %v4246 = vpack.c.b16 %v4188, %v4188
        %v4247 = vpack.c.b16 %v4189, %v4189
        %v4248 = vpack.c.b16 %v4190, %v4190
        %v4249 = vpack.c.b16 %v4191, %v4191
        %v4250 = vpack.c.b16 %v4192, %v4192
        %v4251 = vpack.c.b16 %v4193, %v4193
        %v4252 = vpack.c.b16 %v4194, %v4194
        %v4253 = vpack.c.b16 %v4195, %v4195
        %v4254 = vpack.c.b16 %v4196, %v4196
        %v4255 = vpack.c.b16 %v4197, %v4197
        %v4256 = vpack.c.b16 %v4198, %v4198
        %v4257 = vpack.c.b16 %v4199, %v4199
        %v4258 = vpack.c.b16 %v4200, %v4200
        %v4259 = vpack.c.b16 %v4201, %v4201
        %v4260 = vpack.c.b16 %v4202, %v4202
        %v4261 = vpack.c.b16 %v4203, %v4203
        %v4262 = vpack.c.b16 %v4204, %v4204
        %v4263 = vpack.c.b16 %v4205, %v4205
        %v4264 = vpack.c.b16 %v4206, %v4206
        %v4265 = vpack.c.b16 %v4207, %v4207
        %vm4324 = vcmask 191488
        %4325 = vst.msk [vmem:[%s1279] sm:$0xf] %vm4324, %v4208
        %4326 = vst.msk [vmem:[%s1279 + $0x4] sm:$0xf] %vm4324, %v4209
        %4327 = vst.msk [vmem:[%s1279 + $0x8] sm:$0xf] %vm4324, %v4210
        %4328 = vst.msk [vmem:[%s1279 + $0xc] sm:$0xf] %vm4324, %v4211
        %4329 = vst.msk [vmem:[%s1279 + $0x10] sm:$0xf] %vm4324, %v4212
        %4330 = vst.msk [vmem:[%s1279 + $0x14] sm:$0xf] %vm4324, %v4213
        %4331 = vst.msk [vmem:[%s1279 + $0x18] sm:$0xf] %vm4324, %v4214
        %4332 = vst.msk [vmem:[%s1279 + $0x1c] sm:$0xf] %vm4324, %v4215
        %4333 = vst.msk [vmem:[%s1279 + $0x20] sm:$0xf] %vm4324, %v4216
        %4334 = vst.msk [vmem:[%s1279 + $0x24] sm:$0xf] %vm4324, %v4217
        %4335 = vst.msk [vmem:[%s1279 + $0x28] sm:$0xf] %vm4324, %v4218
        %4336 = vst.msk [vmem:[%s1279 + $0x2c] sm:$0xf] %vm4324, %v4219
        %4337 = vst.msk [vmem:[%s1279 + $0x30] sm:$0xf] %vm4324, %v4220
        %4338 = vst.msk [vmem:[%s1279 + $0x34] sm:$0xf] %vm4324, %v4221
        %4339 = vst.msk [vmem:[%s1279 + $0x38] sm:$0xf] %vm4324, %v4222
        %4340 = vst.msk [vmem:[%s1279 + $0x3c] sm:$0xf] %vm4324, %v4223
        %4341 = vst.msk [vmem:[%s1279 + $0x40] sm:$0xf] %vm4324, %v4224
        %4342 = vst.msk [vmem:[%s1279 + $0x44] sm:$0xf] %vm4324, %v4225
        %4343 = vst.msk [vmem:[%s1279 + $0x48] sm:$0xf] %vm4324, %v4226
        %4344 = vst.msk [vmem:[%s1279 + $0x4c] sm:$0xf] %vm4324, %v4227
        %4345 = vst.msk [vmem:[%s1279 + $0x50] sm:$0xf] %vm4324, %v4228
        %4346 = vst.msk [vmem:[%s1279 + $0x54] sm:$0xf] %vm4324, %v4229
        %4347 = vst.msk [vmem:[%s1279 + $0x58] sm:$0xf] %vm4324, %v4230
        %4348 = vst.msk [vmem:[%s1279 + $0x5c] sm:$0xf] %vm4324, %v4231
        %4349 = vst.msk [vmem:[%s1279 + $0x60] sm:$0xf] %vm4324, %v4232
        %4350 = vst.msk [vmem:[%s1279 + $0x64] sm:$0xf] %vm4324, %v4233
        %4351 = vst.msk [vmem:[%s1279 + $0x68] sm:$0xf] %vm4324, %v4234
        %4352 = vst.msk [vmem:[%s1279 + $0x6c] sm:$0xf] %vm4324, %v4235
        %4353 = vst.msk [vmem:[%s1279 + $0x70] sm:$0xf] %vm4324, %v4236
        %4354 = vst.msk [vmem:[%s1279 + $0x74] sm:$0xf] %vm4324, %v4237
        %4355 = vst.msk [vmem:[%s1279 + $0x78] sm:$0xf] %vm4324, %v4238
        %4356 = vst.msk [vmem:[%s1279 + $0x7c] sm:$0xf] %vm4324, %v4239
        %4357 = vst.msk [vmem:[%s1279 + $0x80] sm:$0xf] %vm4324, %v4240
        %4358 = vst.msk [vmem:[%s1279 + $0x84] sm:$0xf] %vm4324, %v4241
        %4359 = vst.msk [vmem:[%s1279 + $0x88] sm:$0xf] %vm4324, %v4242
        %4360 = vst.msk [vmem:[%s1279 + $0x8c] sm:$0xf] %vm4324, %v4243
        %4361 = vst.msk [vmem:[%s1279 + $0x90] sm:$0xf] %vm4324, %v4244
        %4362 = vst.msk [vmem:[%s1279 + $0x94] sm:$0xf] %vm4324, %v4245
        %4363 = vst.msk [vmem:[%s1279 + $0x98] sm:$0xf] %vm4324, %v4246
        %4364 = vst.msk [vmem:[%s1279 + $0x9c] sm:$0xf] %vm4324, %v4247
        %4365 = vst.msk [vmem:[%s1279 + $0xa0] sm:$0xf] %vm4324, %v4248
        %4366 = vst.msk [vmem:[%s1279 + $0xa4] sm:$0xf] %vm4324, %v4249
        %4367 = vst.msk [vmem:[%s1279 + $0xa8] sm:$0xf] %vm4324, %v4250
        %4368 = vst.msk [vmem:[%s1279 + $0xac] sm:$0xf] %vm4324, %v4251
        %4369 = vst.msk [vmem:[%s1279 + $0xb0] sm:$0xf] %vm4324, %v4252
        %4370 = vst.msk [vmem:[%s1279 + $0xb4] sm:$0xf] %vm4324, %v4253
        %4371 = vst.msk [vmem:[%s1279 + $0xb8] sm:$0xf] %vm4324, %v4254
        %4372 = vst.msk [vmem:[%s1279 + $0xbc] sm:$0xf] %vm4324, %v4255
        %4373 = vst.msk [vmem:[%s1279 + $0xc0] sm:$0xf] %vm4324, %v4256
        %4374 = vst.msk [vmem:[%s1279 + $0xc4] sm:$0xf] %vm4324, %v4257
        %4375 = vst.msk [vmem:[%s1279 + $0xc8] sm:$0xf] %vm4324, %v4258
        %4376 = vst.msk [vmem:[%s1279 + $0xcc] sm:$0xf] %vm4324, %v4259
        %4377 = vst.msk [vmem:[%s1279 + $0xd0] sm:$0xf] %vm4324, %v4260
        %4378 = vst.msk [vmem:[%s1279 + $0xd4] sm:$0xf] %vm4324, %v4261
        %4379 = vst.msk [vmem:[%s1279 + $0xd8] sm:$0xf] %vm4324, %v4262
        %4380 = vst.msk [vmem:[%s1279 + $0xdc] sm:$0xf] %vm4324, %v4263
        %4381 = vst.msk [vmem:[%s1279 + $0xe0] sm:$0xf] %vm4324, %v4264
        %4382 = vst.msk [vmem:[%s1279 + $0xe4] sm:$0xf] %vm4324, %v4265
        %s4383 = smul.u32 58, %s21
        %p4384 = scmp.lt.s32.totalorder %s20, 2
        %s4385 = scalar_select %p4384, %s20, 2
        %p4386 = scmp.lt.s32.totalorder %s4383, 231
        %s4387 = scalar_select %p4386, %s4383, 231
        %s4388 = smul.addr %s4385, 232
        %s4389 = sadd.s32 %s4387, %s4388
        %s4390 = smul.addr %s4389, 4
        %s4391 = scalar_lea.vmem %s5, %s4390
        // Predicated region
        $region82: #{discriminator_forward.3} parent=76 // pred_check
          %p4392 = pneg %p180
        $region83: #{discriminator_forward.3} parent=76 // pred_check_branch
          %4394 = sbr.rel (%p4392) target = $region85
        $region84: #{discriminator_forward.3} parent=76 // pred_region
          %s4395 = smul.u32 58, %s21
        $region85: #{discriminator_forward.3} parent=76 // pred_fallthru
          _
      $region77: #{discriminator_forward.3} parent=5 // pred_fallthru
        _
      %p4396 = scmp.le.s32.totalorder 2, %s11
      // Predicated region
      $region86: #{discriminator_forward.3} parent=5 // pred_check
        %p4397 = pneg %p4396
      $region87: #{discriminator_forward.3} parent=5 // pred_check_branch
        %4399 = sbr.rel (%p4397) target = $region89
      $region88: #{discriminator_forward.3} parent=5 // pred_region
        %s4400 = ssub.s32 %s11, 2
        // Predicated region
        $region90: #{discriminator_forward.3} parent=88 // pred_check
          %p4401 = pneg %p186
        $region91: #{discriminator_forward.3} parent=88 // pred_check_branch
          %4403 = sbr.rel (%p4401) target = $region93
        $region92: #{discriminator_forward.3} parent=88 // pred_region
          %s4404 = smul.u32 58, %s23
          %p4405 = scmp.lt.s32.totalorder %s22, 2
          %s4406 = scalar_select %p4405, %s22, 2
          %p4407 = scmp.lt.s32.totalorder %s4404, 231
          %s4408 = scalar_select %p4407, %s4404, 231
          %s4409 = smul.addr %s4406, 232
          %s4410 = sadd.s32 %s4408, %s4409
          %s4411 = smul.addr %s4410, 4
          %s4412 = scalar_lea.vmem %s5, %s4411
        $region93: #{discriminator_forward.3} parent=88 // pred_fallthru
          _
      $region89: #{discriminator_forward.3} parent=5 // pred_fallthru
        _
    $region6: #{discriminator_forward.3} parent=1 // loop_footer
      %s15 = sadd.s32 1, %s11
    $region7: #{discriminator_forward.3} parent=1 // loop_footer_branch
      %10 = sbr.rel target = $region3
    $region8: #{discriminator_forward.3} parent=1 // loop_exit
      _

// kernel: discriminator_forward.4
$region0: #{discriminator_forward.4}
  #allocation0 [shape = 'u32[]', space=smem, size = 0x4, offset = 0x4, fixed_abs, tag = 'smem constant byte address 0x4 - core index']
  #allocation1 [shape = 'u32[144,128]{1,0:T(1,128)}', space=vmem, size = 0x12000, scoped, tag = 'internal scratch']
  %s0 = inlined_call_operand.vmem [shape: bf16[3,4,400,216], index: 0, kind: input, shape index: {}]
  %s1 = inlined_call_operand.vmem [shape: bf16[3,216,32], index: 1, kind: input, shape index: {}]
  %s2 = inlined_call_operand.vmem [shape: f32[3,1,32], index: 2, kind: input, shape index: {}]
  %s3 = inlined_call_operand.vmem [shape: f32[3,1,32], index: 3, kind: input, shape index: {}]
  %s4 = inlined_call_operand.vmem [shape: f32[3,1,32], index: 4, kind: input, shape index: {}]
  %s5 = inlined_call_operand.vmem [shape: bf16[3,400,32], index: 5, kind: output, shape index: {}]
  %s6 = sld [smem:[#allocation0]]
  $region53: #{discriminator_forward.4} parent=0
    _
  %s8 = ssub.s32 1, %s6
  %s9 = scalar_select 0, %s8, %s6
  loop: start=0, step=1, limit=5
  $region2: #{discriminator_forward.4} parent=0 // loop_pre_header
    _
  $region3: #{discriminator_forward.4} parent=0 // loop_header
    %s11 = sphi 0, %s15
    %p12 = scmp.ge.s32.totalorder %s11, 5
    %s18 = sphi 0, %s30
    %s19 = sphi 0, %s26
    %s20 = sphi 0, %s18
    %s21 = sphi 0, %s19
    %s22 = sphi 0, %s20
    %s23 = sphi 0, %s21
    %s35 = sphi 0, %s37
    %s38 = sphi 0, %s35
    %s39 = sphi 0, %s38
    %s55 = sphi 0, %s39
    %s61 = sphi 0, %s63
    %s64 = sphi 0, %s61
    %s65 = sphi 0, %s64
    %s81 = sphi 0, %s65
    %s87 = sphi 0, %s89
    %s90 = sphi 0, %s87
    %s91 = sphi 0, %s90
    %s107 = sphi 0, %s91
    %s113 = sphi 0, %s115
    %s116 = sphi 0, %s113
    %s117 = sphi 0, %s116
    %s133 = sphi 0, %s117
    %s139 = sphi 0, %s141
    %s142 = sphi 0, %s139
    %s143 = sphi 0, %s142
    %s159 = sphi 0, %s143
    %s167 = sphi 0, %s169
    %s170 = sphi 0, %s167
    %s171 = sphi 0, %s170
    %s187 = sphi 0, %s171
  $region4: #{discriminator_forward.4} parent=0 // loop_header_branch
    %14 = sbr.rel (%p12) target = $region8
  $region5: #{discriminator_forward.4} parent=0 // loop_body
    %s16 = ssub.s32 %s11, 1
    %s17 = ssub.s32 %s11, 2
    %s24 = sadd.s32 1, %s19
    %p25 = scmp.ge.s32.totalorder %s24, 1
    %s26 = scalar_select %p25, 0, %s24
    %s27 = sadd.s32 1, %s18
    %s28 = scalar_select %p25, %s27, %s18
    %p29 = scmp.ge.s32.totalorder %s28, 3
    %s30 = scalar_select %p29, 0, %s28
    %s31 = ssub.s32 %s18, %s30
    %s32 = ssub.s32 %s19, %s26
    %s33 = sor.u32 %s31, %s32
    %p34 = scmp.eq.s32.totalorder %s33, 0
    %s36 = sadd.s32 %s35, 1
    %s37 = scalar_select %p34, %s35, %s36
    %p40 = pneg %p34
    %p41 = scmp.eq.s32.totalorder %s11, 2
    %p42 = por %p40, %p41
    %p43 = scmp.ne.s32.totalorder %s35, %s38
    %p44 = scmp.eq.s32.totalorder %s11, 0
    %p45 = por %p43, %p44
    %p46 = scmp.ne.s32.totalorder %s35, %s38
    %p47 = scmp.eq.s32.totalorder %s16, 2
    %p48 = por %p46, %p47
    %p49 = scmp.ne.s32.totalorder %s38, %s39
    %p50 = scmp.eq.s32.totalorder %s16, 0
    %p51 = por %p49, %p50
    %p52 = scmp.ne.s32.totalorder %s38, %s39
    %p53 = scmp.eq.s32.totalorder %s17, 2
    %p54 = por %p52, %p53
    %p56 = scmp.ne.s32.totalorder %s39, %s55
    %p57 = scmp.eq.s32.totalorder %s17, 0
    %p58 = por %p56, %p57
    %s59 = ssub.s32 %s18, %s30
    %p60 = scmp.eq.s32.totalorder %s59, 0
    %s62 = sadd.s32 %s61, 1
    %s63 = scalar_select %p60, %s61, %s62
    %p66 = pneg %p60
    %p67 = scmp.eq.s32.totalorder %s11, 2
    %p68 = por %p66, %p67
    %p69 = scmp.ne.s32.totalorder %s61, %s64
    %p70 = scmp.eq.s32.totalorder %s11, 0
    %p71 = por %p69, %p70
    %p72 = scmp.ne.s32.totalorder %s61, %s64
    %p73 = scmp.eq.s32.totalorder %s16, 2
    %p74 = por %p72, %p73
    %p75 = scmp.ne.s32.totalorder %s64, %s65
    %p76 = scmp.eq.s32.totalorder %s16, 0
    %p77 = por %p75, %p76
    %p78 = scmp.ne.s32.totalorder %s64, %s65
    %p79 = scmp.eq.s32.totalorder %s17, 2
    %p80 = por %p78, %p79
    %p82 = scmp.ne.s32.totalorder %s65, %s81
    %p83 = scmp.eq.s32.totalorder %s17, 0
    %p84 = por %p82, %p83
    %s85 = ssub.s32 %s18, %s30
    %p86 = scmp.eq.s32.totalorder %s85, 0
    %s88 = sadd.s32 %s87, 1
    %s89 = scalar_select %p86, %s87, %s88
    %p92 = pneg %p86
    %p93 = scmp.eq.s32.totalorder %s11, 2
    %p94 = por %p92, %p93
    %p95 = scmp.ne.s32.totalorder %s87, %s90
    %p96 = scmp.eq.s32.totalorder %s11, 0
    %p97 = por %p95, %p96
    %p98 = scmp.ne.s32.totalorder %s87, %s90
    %p99 = scmp.eq.s32.totalorder %s16, 2
    %p100 = por %p98, %p99
    %p101 = scmp.ne.s32.totalorder %s90, %s91
    %p102 = scmp.eq.s32.totalorder %s16, 0
    %p103 = por %p101, %p102
    %p104 = scmp.ne.s32.totalorder %s90, %s91
    %p105 = scmp.eq.s32.totalorder %s17, 2
    %p106 = por %p104, %p105
    %p108 = scmp.ne.s32.totalorder %s91, %s107
    %p109 = scmp.eq.s32.totalorder %s17, 0
    %p110 = por %p108, %p109
    %s111 = ssub.s32 %s18, %s30
    %p112 = scmp.eq.s32.totalorder %s111, 0
    %s114 = sadd.s32 %s113, 1
    %s115 = scalar_select %p112, %s113, %s114
    %p118 = pneg %p112
    %p119 = scmp.eq.s32.totalorder %s11, 2
    %p120 = por %p118, %p119
    %p121 = scmp.ne.s32.totalorder %s113, %s116
    %p122 = scmp.eq.s32.totalorder %s11, 0
    %p123 = por %p121, %p122
    %p124 = scmp.ne.s32.totalorder %s113, %s116
    %p125 = scmp.eq.s32.totalorder %s16, 2
    %p126 = por %p124, %p125
    %p127 = scmp.ne.s32.totalorder %s116, %s117
    %p128 = scmp.eq.s32.totalorder %s16, 0
    %p129 = por %p127, %p128
    %p130 = scmp.ne.s32.totalorder %s116, %s117
    %p131 = scmp.eq.s32.totalorder %s17, 2
    %p132 = por %p130, %p131
    %p134 = scmp.ne.s32.totalorder %s117, %s133
    %p135 = scmp.eq.s32.totalorder %s17, 0
    %p136 = por %p134, %p135
    %s137 = ssub.s32 %s18, %s30
    %p138 = scmp.eq.s32.totalorder %s137, 0
    %s140 = sadd.s32 %s139, 1
    %s141 = scalar_select %p138, %s139, %s140
    %p144 = pneg %p138
    %p145 = scmp.eq.s32.totalorder %s11, 2
    %p146 = por %p144, %p145
    %p147 = scmp.ne.s32.totalorder %s139, %s142
    %p148 = scmp.eq.s32.totalorder %s11, 0
    %p149 = por %p147, %p148
    %p150 = scmp.ne.s32.totalorder %s139, %s142
    %p151 = scmp.eq.s32.totalorder %s16, 2
    %p152 = por %p150, %p151
    %p153 = scmp.ne.s32.totalorder %s142, %s143
    %p154 = scmp.eq.s32.totalorder %s16, 0
    %p155 = por %p153, %p154
    %p156 = scmp.ne.s32.totalorder %s142, %s143
    %p157 = scmp.eq.s32.totalorder %s17, 2
    %p158 = por %p156, %p157
    %p160 = scmp.ne.s32.totalorder %s143, %s159
    %p161 = scmp.eq.s32.totalorder %s17, 0
    %p162 = por %p160, %p161
    %s163 = ssub.s32 %s18, %s30
    %s164 = ssub.s32 %s19, %s26
    %s165 = sor.u32 %s163, %s164
    %p166 = scmp.eq.s32.totalorder %s165, 0
    %s168 = sadd.s32 %s167, 1
    %s169 = scalar_select %p166, %s167, %s168
    %p172 = pneg %p166
    %p173 = scmp.eq.s32.totalorder %s11, 2
    %p174 = por %p172, %p173
    %p175 = scmp.ne.s32.totalorder %s167, %s170
    %p176 = scmp.eq.s32.totalorder %s11, 0
    %p177 = por %p175, %p176
    %p178 = scmp.ne.s32.totalorder %s167, %s170
    %p179 = scmp.eq.s32.totalorder %s16, 2
    %p180 = por %p178, %p179
    %p181 = scmp.ne.s32.totalorder %s170, %s171
    %p182 = scmp.eq.s32.totalorder %s16, 0
    %p183 = por %p181, %p182
    %p184 = scmp.ne.s32.totalorder %s170, %s171
    %p185 = scmp.eq.s32.totalorder %s17, 2
    %p186 = por %p184, %p185
    %p188 = scmp.ne.s32.totalorder %s171, %s187
    %p189 = scmp.eq.s32.totalorder %s17, 0
    %p190 = por %p188, %p189
    %p191 = scmp.le.s32.totalorder 1, %s11
    %p192 = scmp.lt.s32.totalorder %s11, 4
    %p193 = pnand %p191, %p192
    %p194 = pneg %p193
    // Predicated region
    $region9: #{discriminator_forward.4} parent=5 // pred_check
      _
    $region10: #{discriminator_forward.4} parent=5 // pred_check_branch
      %196 = sbr.rel (%p193) target = $region12
    $region11: #{discriminator_forward.4} parent=5 // pred_region
      %s197 = ssub.s32 %s11, 1
    $region12: #{discriminator_forward.4} parent=5 // pred_fallthru
      _
    %p198 = scmp.lt.s32.totalorder %s11, 3
    // Predicated region
    $region13: #{discriminator_forward.4} parent=5 // pred_check
      %p199 = pneg %p198
    $region14: #{discriminator_forward.4} parent=5 // pred_check_branch
      %201 = sbr.rel (%p199) target = $region16
    $region15: #{discriminator_forward.4} parent=5 // pred_region
      // Predicated region
      $region17: #{discriminator_forward.4} parent=15 // pred_check
        %p202 = pneg %p45
      $region18: #{discriminator_forward.4} parent=15 // pred_check_branch
        %204 = sbr.rel (%p202) target = $region20
      $region19: #{discriminator_forward.4} parent=15 // pred_region
        %s205 = smul.u32 50, %s19
        %p206 = scmp.lt.s32.totalorder %s18, 2
        %s207 = scalar_select %p206, %s18, 2
        %p208 = scmp.lt.s32.totalorder %s205, 49
        %s209 = scalar_select %p208, %s205, 49
        %s210 = smul.addr %s209, 2
        %s211 = smul.addr %s207, 400
        %s212 = sadd.s32 %s210, %s211
        %s213 = smul.addr %s212, 4
        %s214 = scalar_lea.vmem %s0, %s213
        %s215 = smul.u32 50, %s19
      $region20: #{discriminator_forward.4} parent=15 // pred_fallthru
        _
      // Predicated region
      $region21: #{discriminator_forward.4} parent=15 // pred_check
        %p216 = pneg %p71
      $region22: #{discriminator_forward.4} parent=15 // pred_check_branch
        %218 = sbr.rel (%p216) target = $region24
      $region23: #{discriminator_forward.4} parent=15 // pred_region
        %p219 = scmp.lt.s32.totalorder %s18, 2
        %s220 = scalar_select %p219, %s18, 2
        %s221 = smul.addr %s220, 27
        %s222 = smul.addr %s221, 4
        %s223 = scalar_lea.vmem %s1, %s222
      $region24: #{discriminator_forward.4} parent=15 // pred_fallthru
        _
      // Predicated region
      $region25: #{discriminator_forward.4} parent=15 // pred_check
        %p224 = pneg %p97
      $region26: #{discriminator_forward.4} parent=15 // pred_check_branch
        %226 = sbr.rel (%p224) target = $region28
      $region27: #{discriminator_forward.4} parent=15 // pred_region
        %p227 = scmp.lt.s32.totalorder %s18, 2
        %s228 = scalar_select %p227, %s18, 2
        %s229 = scalar_lea.vmem %s2, %s228
      $region28: #{discriminator_forward.4} parent=15 // pred_fallthru
        _
      // Predicated region
      $region29: #{discriminator_forward.4} parent=15 // pred_check
        %p230 = pneg %p123
      $region30: #{discriminator_forward.4} parent=15 // pred_check_branch
        %232 = sbr.rel (%p230) target = $region32
      $region31: #{discriminator_forward.4} parent=15 // pred_region
        %p233 = scmp.lt.s32.totalorder %s18, 2
        %s234 = scalar_select %p233, %s18, 2
        %s235 = scalar_lea.vmem %s3, %s234
      $region32: #{discriminator_forward.4} parent=15 // pred_fallthru
        _
      // Predicated region
      $region33: #{discriminator_forward.4} parent=15 // pred_check
        %p236 = pneg %p149
      $region34: #{discriminator_forward.4} parent=15 // pred_check_branch
        %238 = sbr.rel (%p236) target = $region36
      $region35: #{discriminator_forward.4} parent=15 // pred_region
        %p239 = scmp.lt.s32.totalorder %s18, 2
        %s240 = scalar_select %p239, %s18, 2
        %s241 = scalar_lea.vmem %s4, %s240
      $region36: #{discriminator_forward.4} parent=15 // pred_fallthru
        _
    $region16: #{discriminator_forward.4} parent=5 // pred_fallthru
      _
    %p242 = scmp.le.s32.totalorder 1, %s11
    %p243 = scmp.lt.s32.totalorder %s11, 4
    %p244 = pnand %p242, %p243
    %p245 = pneg %p244
    // Predicated region
    $region37: #{discriminator_forward.4} parent=5 // pred_check
      _
    $region38: #{discriminator_forward.4} parent=5 // pred_check_branch
      %247 = sbr.rel (%p244) target = $region40
    $region39: #{discriminator_forward.4} parent=5 // pred_region
      %s248 = ssub.s32 %s11, 1
      %s249 = smul.u32 50, %s21
      %p250 = scmp.lt.s32.totalorder %s20, 2
      %s251 = scalar_select %p250, %s20, 2
      %p252 = scmp.lt.s32.totalorder %s249, 49
      %s253 = scalar_select %p252, %s249, 49
      %s254 = smul.addr %s253, 2
      %s255 = smul.addr %s251, 400
      %s256 = sadd.s32 %s254, %s255
      %s257 = smul.addr %s256, 4
      %s258 = scalar_lea.vmem %s0, %s257
      %p259 = pneg %p51
      %p260 = pneg %p48
      %p261 = scmp.lt.s32.totalorder %s20, 2
      %s262 = scalar_select %p261, %s20, 2
      %s263 = smul.addr %s262, 27
      %s264 = smul.addr %s263, 4
      %s265 = scalar_lea.vmem %s1, %s264
      %p266 = pneg %p77
      %p267 = pneg %p74
      %p268 = scmp.lt.s32.totalorder %s20, 2
      %s269 = scalar_select %p268, %s20, 2
      %s270 = scalar_lea.vmem %s2, %s269
      %p271 = pneg %p103
      %p272 = pneg %p100
      %p273 = scmp.lt.s32.totalorder %s20, 2
      %s274 = scalar_select %p273, %s20, 2
      %s275 = scalar_lea.vmem %s3, %s274
      %p276 = pneg %p129
      %p277 = pneg %p126
      %p278 = scmp.lt.s32.totalorder %s20, 2
      %s279 = scalar_select %p278, %s20, 2
      %s280 = scalar_lea.vmem %s4, %s279
      %p281 = pneg %p155
      %p282 = pneg %p152
      %p283 = pneg %p183
      %p284 = pneg %p180
      %s285 = smul.u32 50, %s21
      %p286 = scmp.lt.s32.totalorder %s20, 2
      %s287 = scalar_select %p286, %s20, 2
      %p288 = scmp.lt.s32.totalorder %s285, 49
      %s289 = scalar_select %p288, %s285, 49
      %s290 = smul.addr %s287, 50
      %s291 = sadd.s32 %s289, %s290
      %s292 = smul.addr %s291, 4
      %s293 = scalar_lea.vmem %s5, %s292
      %s294 = smul.u32 50, %s21
      %p295 = scmp.lt.s32.totalorder %s20, 2
      %s296 = scalar_select %p295, %s20, 2
      %p297 = scmp.lt.s32.totalorder %s294, 49
      %s298 = scalar_select %p297, %s294, 49
      %s299 = smul.addr %s298, 2
      %s300 = smul.addr %s296, 400
      %s301 = sadd.s32 %s299, %s300
      %s302 = smul.addr %s301, 4
      %s303 = scalar_lea.vmem %s0, %s302
      %s304 = smul.u32 50, %s21
      %p305 = scmp.lt.s32.totalorder %s20, 2
      %s306 = scalar_select %p305, %s20, 2
      %s307 = smul.addr %s306, 27
      %s308 = smul.addr %s307, 4
      %s309 = scalar_lea.vmem %s1, %s308
      %p310 = scmp.lt.s32.totalorder %s20, 2
      %s311 = scalar_select %p310, %s20, 2
      %s312 = scalar_lea.vmem %s2, %s311
      %p313 = scmp.lt.s32.totalorder %s20, 2
      %s314 = scalar_select %p313, %s20, 2
      %s315 = scalar_lea.vmem %s3, %s314
      %p316 = scmp.lt.s32.totalorder %s20, 2
      %s317 = scalar_select %p316, %s20, 2
      %s318 = scalar_lea.vmem %s4, %s317
      %s319 = smul.u32 50, %s21
      %p320 = scmp.lt.s32.totalorder %s20, 2
      %s321 = scalar_select %p320, %s20, 2
      %p322 = scmp.lt.s32.totalorder %s319, 49
      %s323 = scalar_select %p322, %s319, 49
      %s324 = smul.addr %s321, 50
      %s325 = sadd.s32 %s323, %s324
      %s326 = smul.addr %s325, 4
      %s327 = scalar_lea.vmem %s5, %s326
      %s328 = smul.u32 50, %s21
      %v330 = vld [vmem:[%s303] sm:$0xff]
      %v331 = vld [vmem:[%s303 + $0x8] sm:$0xff]
      %v332 = vld [vmem:[%s303 + $0x10] sm:$0xff]
      %v333 = vld [vmem:[%s303 + $0x18] sm:$0xff]
      %v334 = vld [vmem:[%s303 + $0x20] sm:$0xff]
      %v335 = vld [vmem:[%s303 + $0x28] sm:$0xff]
      %v336 = vld [vmem:[%s303 + $0x30] sm:$0xff]
      %v337 = vld [vmem:[%s303 + $0x38] sm:$0xff]
      %v338 = vld [vmem:[%s303 + $0x40] sm:$0xff]
      %v339 = vld [vmem:[%s303 + $0x48] sm:$0xff]
      %v340 = vld [vmem:[%s303 + $0x50] sm:$0xff]
      %v341 = vld [vmem:[%s303 + $0x58] sm:$0xff]
      %v342 = vld [vmem:[%s303 + $0x60] sm:$0xff]
      %v343 = vld [vmem:[%s303 + $0x68] sm:$0xff]
      %v344 = vld [vmem:[%s303 + $0x70] sm:$0xff]
      %v345 = vld [vmem:[%s303 + $0x78] sm:$0xff]
      %v346 = vld [vmem:[%s303 + $0x80] sm:$0xff]
      %v347 = vld [vmem:[%s303 + $0x88] sm:$0xff]
      %v348 = vld [vmem:[%s303 + $0x90] sm:$0xff]
      %v349 = vld [vmem:[%s303 + $0x98] sm:$0xff]
      %v350 = vld [vmem:[%s303 + $0xa0] sm:$0xff]
      %v351 = vld [vmem:[%s303 + $0xa8] sm:$0xff]
      %v352 = vld [vmem:[%s303 + $0xb0] sm:$0xff]
      %v353 = vld [vmem:[%s303 + $0xb8] sm:$0xff]
      %v354 = vld [vmem:[%s303 + $0xc0] sm:$0xff]
      %v355 = vld [vmem:[%s303 + $0xc8] sm:$0xff]
      %v356 = vld [vmem:[%s303 + $0xd0] sm:$0xff]
      %v357 = vld [vmem:[%s303 + $0xd8] sm:$0xff]
      %v358 = vld [vmem:[%s303 + $0xe0] sm:$0xff]
      %v359 = vld [vmem:[%s303 + $0xe8] sm:$0xff]
      %v360 = vld [vmem:[%s303 + $0xf0] sm:$0xff]
      %v361 = vld [vmem:[%s303 + $0xf8] sm:$0xff]
      %v362 = vld [vmem:[%s303 + $0x100] sm:$0xff]
      %v363 = vld [vmem:[%s303 + $0x108] sm:$0xff]
      %v364 = vld [vmem:[%s303 + $0x110] sm:$0xff]
      %v365 = vld [vmem:[%s303 + $0x118] sm:$0xff]
      %v366 = vld [vmem:[%s303 + $0x120] sm:$0xff]
      %v367 = vld [vmem:[%s303 + $0x128] sm:$0xff]
      %v368 = vld [vmem:[%s303 + $0x130] sm:$0xff]
      %v369 = vld [vmem:[%s303 + $0x138] sm:$0xff]
      %v370 = vld [vmem:[%s303 + $0x140] sm:$0xff]
      %v371 = vld [vmem:[%s303 + $0x148] sm:$0xff]
      %v372 = vld [vmem:[%s303 + $0x150] sm:$0xff]
      %v373 = vld [vmem:[%s303 + $0x158] sm:$0xff]
      %v374 = vld [vmem:[%s303 + $0x160] sm:$0xff]
      %v375 = vld [vmem:[%s303 + $0x168] sm:$0xff]
      %v376 = vld [vmem:[%s303 + $0x170] sm:$0xff]
      %v377 = vld [vmem:[%s303 + $0x178] sm:$0xff]
      %v378 = vld [vmem:[%s303 + $0x180] sm:$0xff]
      %v379 = vld [vmem:[%s303 + $0x188] sm:$0xff]
      %v380 = vld [vmem:[%s303 + $0x190] sm:$0xff]
      %v381 = vld [vmem:[%s303 + $0x198] sm:$0xff]
      %v382 = vld [vmem:[%s303 + $0x1a0] sm:$0xff]
      %v383 = vld [vmem:[%s303 + $0x1a8] sm:$0xff]
      %v384 = vld [vmem:[%s303 + $0x1b0] sm:$0xff]
      %v385 = vld [vmem:[%s303 + $0x1b8] sm:$0xff]
      %v386 = vld [vmem:[%s303 + $0x1c0] sm:$0xff]
      %v387 = vld [vmem:[%s303 + $0x1c8] sm:$0xff]
      %v388 = vld [vmem:[%s303 + $0x1d0] sm:$0xff]
      %v389 = vld [vmem:[%s303 + $0x1d8] sm:$0xff]
      %v390 = vld [vmem:[%s303 + $0x1e0] sm:$0xff]
      %v391 = vld [vmem:[%s303 + $0x1e8] sm:$0xff]
      %v392 = vld [vmem:[%s303 + $0x1f0] sm:$0xff]
      %v393 = vld [vmem:[%s303 + $0x1f8] sm:$0xff]
      %v394 = vld [vmem:[%s303 + $0x200] sm:$0xff]
      %v395 = vld [vmem:[%s303 + $0x208] sm:$0xff]
      %v396 = vld [vmem:[%s303 + $0x210] sm:$0xff]
      %v397 = vld [vmem:[%s303 + $0x218] sm:$0xff]
      %v398 = vld [vmem:[%s303 + $0x220] sm:$0xff]
      %v399 = vld [vmem:[%s303 + $0x228] sm:$0xff]
      %v400 = vld [vmem:[%s303 + $0x230] sm:$0xff]
      %v401 = vld [vmem:[%s303 + $0x238] sm:$0xff]
      %v402 = vld [vmem:[%s303 + $0x240] sm:$0xff]
      %v403 = vld [vmem:[%s303 + $0x248] sm:$0xff]
      %v404 = vld [vmem:[%s303 + $0x250] sm:$0xff]
      %v405 = vld [vmem:[%s303 + $0x258] sm:$0xff]
      %v406 = vld [vmem:[%s303 + $0x260] sm:$0xff]
      %v407 = vld [vmem:[%s303 + $0x268] sm:$0xff]
      %v408 = vld [vmem:[%s303 + $0x270] sm:$0xff]
      %v409 = vld [vmem:[%s303 + $0x278] sm:$0xff]
      %v410 = vld [vmem:[%s303 + $0x280] sm:$0xff]
      %v411 = vld [vmem:[%s303 + $0x288] sm:$0xff]
      %v412 = vld [vmem:[%s303 + $0x290] sm:$0xff]
      %v413 = vld [vmem:[%s303 + $0x298] sm:$0xff]
      %v414 = vld [vmem:[%s303 + $0x2a0] sm:$0xff]
      %v415 = vld [vmem:[%s303 + $0x2a8] sm:$0xff]
      %v416 = vld [vmem:[%s303 + $0x2b0] sm:$0xff]
      %v417 = vld [vmem:[%s303 + $0x2b8] sm:$0xff]
      %v418 = vld [vmem:[%s303 + $0x2c0] sm:$0xff]
      %v419 = vld [vmem:[%s303 + $0x2c8] sm:$0xff]
      %v420 = vld [vmem:[%s303 + $0x2d0] sm:$0xff]
      %v421 = vld [vmem:[%s303 + $0x2d8] sm:$0xff]
      %v422 = vld [vmem:[%s303 + $0x2e0] sm:$0xff]
      %v423 = vld [vmem:[%s303 + $0x2e8] sm:$0xff]
      %v424 = vld [vmem:[%s303 + $0x2f0] sm:$0xff]
      %v425 = vld [vmem:[%s303 + $0x2f8] sm:$0xff]
      %v426 = vld [vmem:[%s303 + $0x300] sm:$0xff]
      %v427 = vld [vmem:[%s303 + $0x308] sm:$0xff]
      %v428 = vld [vmem:[%s303 + $0x310] sm:$0xff]
      %v429 = vld [vmem:[%s303 + $0x318] sm:$0xff]
      %v430 = vld [vmem:[%s303 + $0x320] sm:$0xff]
      %v431 = vld [vmem:[%s303 + $0x328] sm:$0xff]
      %v432 = vld [vmem:[%s303 + $0x330] sm:$0xff]
      %v433 = vld [vmem:[%s303 + $0x338] sm:$0xff]
      %v434 = vld [vmem:[%s303 + $0x340] sm:$0xff]
      %v435 = vld [vmem:[%s303 + $0x348] sm:$0xff]
      %v436 = vld [vmem:[%s303 + $0x350] sm:$0xff]
      %v437 = vld [vmem:[%s303 + $0x358] sm:$0xff]
      %v438 = vld [vmem:[%s303 + $0x360] sm:$0xff]
      %v439 = vld [vmem:[%s303 + $0x368] sm:$0xff]
      %v440 = vld [vmem:[%s303 + $0x370] sm:$0xff]
      %v441 = vld [vmem:[%s303 + $0x378] sm:$0xff]
      %v442 = vld [vmem:[%s303 + $0x380] sm:$0xff]
      %v443 = vld [vmem:[%s303 + $0x388] sm:$0xff]
      %v444 = vld [vmem:[%s303 + $0x390] sm:$0xff]
      %v445 = vld [vmem:[%s303 + $0x398] sm:$0xff]
      %v446 = vld [vmem:[%s303 + $0x3a0] sm:$0xff]
      %v447 = vld [vmem:[%s303 + $0x3a8] sm:$0xff]
      %v448 = vld [vmem:[%s303 + $0x3b0] sm:$0xff]
      %v449 = vld [vmem:[%s303 + $0x3b8] sm:$0xff]
      %v450 = vld [vmem:[%s303 + $0x3c0] sm:$0xff]
      %v451 = vld [vmem:[%s303 + $0x3c8] sm:$0xff]
      %v452 = vld [vmem:[%s303 + $0x3d0] sm:$0xff]
      %v453 = vld [vmem:[%s303 + $0x3d8] sm:$0xff]
      %v454 = vld [vmem:[%s303 + $0x3e0] sm:$0xff]
      %v455 = vld [vmem:[%s303 + $0x3e8] sm:$0xff]
      %v456 = vld [vmem:[%s303 + $0x3f0] sm:$0xff]
      %v457 = vld [vmem:[%s303 + $0x3f8] sm:$0xff]
      %v458 = vld [vmem:[%s303 + $0x400] sm:$0xff]
      %v459 = vld [vmem:[%s303 + $0x408] sm:$0xff]
      %v460 = vld [vmem:[%s303 + $0x410] sm:$0xff]
      %v461 = vld [vmem:[%s303 + $0x418] sm:$0xff]
      %v462 = vld [vmem:[%s303 + $0x420] sm:$0xff]
      %v463 = vld [vmem:[%s303 + $0x428] sm:$0xff]
      %v464 = vld [vmem:[%s303 + $0x430] sm:$0xff]
      %v465 = vld [vmem:[%s303 + $0x438] sm:$0xff]
      %v466 = vld [vmem:[%s303 + $0x440] sm:$0xff]
      %v467 = vld [vmem:[%s303 + $0x448] sm:$0xff]
      %v468 = vld [vmem:[%s303 + $0x450] sm:$0xff]
      %v469 = vld [vmem:[%s303 + $0x458] sm:$0xff]
      %v470 = vld [vmem:[%s303 + $0x460] sm:$0xff]
      %v471 = vld [vmem:[%s303 + $0x468] sm:$0xff]
      %v472 = vld [vmem:[%s303 + $0x470] sm:$0xff]
      %v473 = vld [vmem:[%s303 + $0x478] sm:$0xff]
      %v474 = vld [vmem:[%s303 + $0x480] sm:$0xff]
      %v475 = vld [vmem:[%s303 + $0x488] sm:$0xff]
      %v476 = vld [vmem:[%s303 + $0x490] sm:$0xff]
      %v477 = vld [vmem:[%s303 + $0x498] sm:$0xff]
      %v478 = vld [vmem:[%s303 + $0x4a0] sm:$0xff]
      %v479 = vld [vmem:[%s303 + $0x4a8] sm:$0xff]
      %v480 = vld [vmem:[%s303 + $0x4b0] sm:$0xff]
      %v481 = vld [vmem:[%s303 + $0x4b8] sm:$0xff]
      %v482 = vld [vmem:[%s303 + $0x4c0] sm:$0xff]
      %v483 = vld [vmem:[%s303 + $0x4c8] sm:$0xff]
      %v484 = vld [vmem:[%s303 + $0x4d0] sm:$0xff]
      %v485 = vld [vmem:[%s303 + $0x4d8] sm:$0xff]
      %v486 = vld [vmem:[%s303 + $0x4e0] sm:$0xff]
      %v487 = vld [vmem:[%s303 + $0x4e8] sm:$0xff]
      %v488 = vld [vmem:[%s303 + $0x4f0] sm:$0xff]
      %v489 = vld [vmem:[%s303 + $0x4f8] sm:$0xff]
      %v490 = vld [vmem:[%s303 + $0x500] sm:$0xff]
      %v491 = vld [vmem:[%s303 + $0x508] sm:$0xff]
      %v492 = vld [vmem:[%s303 + $0x510] sm:$0xff]
      %v493 = vld [vmem:[%s303 + $0x518] sm:$0xff]
      %v494 = vld [vmem:[%s303 + $0x520] sm:$0xff]
      %v495 = vld [vmem:[%s303 + $0x528] sm:$0xff]
      %v496 = vld [vmem:[%s303 + $0x530] sm:$0xff]
      %v497 = vld [vmem:[%s303 + $0x538] sm:$0xff]
      %v498 = vld [vmem:[%s303 + $0x540] sm:$0xff]
      %v499 = vld [vmem:[%s303 + $0x548] sm:$0xff]
      %v500 = vld [vmem:[%s303 + $0x550] sm:$0xff]
      %v501 = vld [vmem:[%s303 + $0x558] sm:$0xff]
      %v502 = vld [vmem:[%s303 + $0x560] sm:$0xff]
      %v503 = vld [vmem:[%s303 + $0x568] sm:$0xff]
      %v504 = vld [vmem:[%s303 + $0x570] sm:$0xff]
      %v505 = vld [vmem:[%s303 + $0x578] sm:$0xff]
      %v506 = vld [vmem:[%s303 + $0x580] sm:$0xff]
      %v507 = vld [vmem:[%s303 + $0x588] sm:$0xff]
      %v508 = vld [vmem:[%s303 + $0x590] sm:$0xff]
      %v509 = vld [vmem:[%s303 + $0x598] sm:$0xff]
      %v510 = vld [vmem:[%s303 + $0x5a0] sm:$0xff]
      %v511 = vld [vmem:[%s303 + $0x5a8] sm:$0xff]
      %v512 = vld [vmem:[%s303 + $0x5b0] sm:$0xff]
      %v513 = vld [vmem:[%s303 + $0x5b8] sm:$0xff]
      %v514 = vld [vmem:[%s303 + $0x5c0] sm:$0xff]
      %v515 = vld [vmem:[%s303 + $0x5c8] sm:$0xff]
      %v516 = vld [vmem:[%s303 + $0x5d0] sm:$0xff]
      %v517 = vld [vmem:[%s303 + $0x5d8] sm:$0xff]
      %v518 = vld [vmem:[%s303 + $0x5e0] sm:$0xff]
      %v519 = vld [vmem:[%s303 + $0x5e8] sm:$0xff]
      %v520 = vld [vmem:[%s303 + $0x5f0] sm:$0xff]
      %v521 = vld [vmem:[%s303 + $0x5f8] sm:$0xff]
      %v522 = vld [vmem:[%s303 + $0x600] sm:$0xff]
      %v523 = vld [vmem:[%s303 + $0x608] sm:$0xff]
      %v524 = vld [vmem:[%s303 + $0x610] sm:$0xff]
      %v525 = vld [vmem:[%s303 + $0x618] sm:$0xff]
      %v526 = vld [vmem:[%s303 + $0x620] sm:$0xff]
      %v527 = vld [vmem:[%s303 + $0x628] sm:$0xff]
      %v528 = vld [vmem:[%s303 + $0x630] sm:$0xff]
      %v529 = vld [vmem:[%s303 + $0x638] sm:$0xff]
      %v530 = vld [vmem:[%s309] sm:$0xf]
      %v531 = vld [vmem:[%s309 + $0x4] sm:$0xf]
      %v532 = vld [vmem:[%s309 + $0x8] sm:$0xf]
      %v533 = vld [vmem:[%s309 + $0xc] sm:$0xf]
      %v534 = vld [vmem:[%s309 + $0x10] sm:$0xf]
      %v535 = vld [vmem:[%s309 + $0x14] sm:$0xf]
      %v536 = vld [vmem:[%s309 + $0x18] sm:$0xf]
      %v537 = vld [vmem:[%s309 + $0x1c] sm:$0xf]
      %v538 = vld [vmem:[%s309 + $0x20] sm:$0xf]
      %v539 = vld [vmem:[%s309 + $0x24] sm:$0xf]
      %v540 = vld [vmem:[%s309 + $0x28] sm:$0xf]
      %v541 = vld [vmem:[%s309 + $0x2c] sm:$0xf]
      %v542 = vld [vmem:[%s309 + $0x30] sm:$0xf]
      %v543 = vld [vmem:[%s309 + $0x34] sm:$0xf]
      %v544 = vld [vmem:[%s309 + $0x38] sm:$0xf]
      %v545 = vld [vmem:[%s309 + $0x3c] sm:$0xf]
      %v546 = vld [vmem:[%s309 + $0x40] sm:$0xf]
      %v547 = vld [vmem:[%s309 + $0x44] sm:$0xf]
      %v548 = vld [vmem:[%s309 + $0x48] sm:$0xf]
      %v549 = vld [vmem:[%s309 + $0x4c] sm:$0xf]
      %v550 = vld [vmem:[%s309 + $0x50] sm:$0xf]
      %v551 = vld [vmem:[%s309 + $0x54] sm:$0xf]
      %v552 = vld [vmem:[%s309 + $0x58] sm:$0xf]
      %v553 = vld [vmem:[%s309 + $0x5c] sm:$0xf]
      %v554 = vld [vmem:[%s309 + $0x60] sm:$0xf]
      %v555 = vld [vmem:[%s309 + $0x64] sm:$0xf]
      %v556 = vld [vmem:[%s309 + $0x68] sm:$0xf]
      %v757 = vunpack.c.l.b16 %v330
      %v758 = vunpack.c.h.b16 %v330
      %v759 = vunpack.c.l.b16 %v331
      %v760 = vunpack.c.h.b16 %v331
      %v761 = vunpack.c.l.b16 %v332
      %v762 = vunpack.c.h.b16 %v332
      %v763 = vunpack.c.l.b16 %v333
      %v764 = vunpack.c.h.b16 %v333
      %v765 = vunpack.c.l.b16 %v334
      %v766 = vunpack.c.h.b16 %v334
      %v767 = vunpack.c.l.b16 %v335
      %v768 = vunpack.c.h.b16 %v335
      %v769 = vunpack.c.l.b16 %v336
      %v770 = vunpack.c.h.b16 %v336
      %v771 = vunpack.c.l.b16 %v337
      %v772 = vunpack.c.h.b16 %v337
      %v773 = vunpack.c.l.b16 %v338
      %v774 = vunpack.c.h.b16 %v338
      %v775 = vunpack.c.l.b16 %v339
      %v776 = vunpack.c.h.b16 %v339
      %v777 = vunpack.c.l.b16 %v340
      %v778 = vunpack.c.h.b16 %v340
      %v779 = vunpack.c.l.b16 %v341
      %v780 = vunpack.c.h.b16 %v341
      %v781 = vunpack.c.l.b16 %v342
      %v782 = vunpack.c.h.b16 %v342
      %v783 = vunpack.c.l.b16 %v343
      %v784 = vunpack.c.h.b16 %v343
      %v785 = vunpack.c.l.b16 %v344
      %v786 = vunpack.c.h.b16 %v344
      %v787 = vunpack.c.l.b16 %v345
      %v788 = vunpack.c.h.b16 %v345
      %v789 = vunpack.c.l.b16 %v346
      %v790 = vunpack.c.h.b16 %v346
      %v791 = vunpack.c.l.b16 %v347
      %v792 = vunpack.c.h.b16 %v347
      %v793 = vunpack.c.l.b16 %v348
      %v794 = vunpack.c.h.b16 %v348
      %v795 = vunpack.c.l.b16 %v349
      %v796 = vunpack.c.h.b16 %v349
      %v797 = vunpack.c.l.b16 %v350
      %v798 = vunpack.c.h.b16 %v350
      %v799 = vunpack.c.l.b16 %v351
      %v800 = vunpack.c.h.b16 %v351
      %v801 = vunpack.c.l.b16 %v352
      %v802 = vunpack.c.h.b16 %v352
      %v803 = vunpack.c.l.b16 %v353
      %v804 = vunpack.c.h.b16 %v353
      %v805 = vunpack.c.l.b16 %v354
      %v806 = vunpack.c.h.b16 %v354
      %v807 = vunpack.c.l.b16 %v355
      %v808 = vunpack.c.h.b16 %v355
      %v809 = vunpack.c.l.b16 %v356
      %v810 = vunpack.c.h.b16 %v356
      %v811 = vunpack.c.l.b16 %v357
      %v812 = vunpack.c.h.b16 %v357
      %v813 = vunpack.c.l.b16 %v358
      %v814 = vunpack.c.h.b16 %v358
      %v815 = vunpack.c.l.b16 %v359
      %v816 = vunpack.c.h.b16 %v359
      %v817 = vunpack.c.l.b16 %v360
      %v818 = vunpack.c.h.b16 %v360
      %v819 = vunpack.c.l.b16 %v361
      %v820 = vunpack.c.h.b16 %v361
      %v821 = vunpack.c.l.b16 %v362
      %v822 = vunpack.c.h.b16 %v362
      %v823 = vunpack.c.l.b16 %v363
      %v824 = vunpack.c.h.b16 %v363
      %v825 = vunpack.c.l.b16 %v364
      %v826 = vunpack.c.h.b16 %v364
      %v827 = vunpack.c.l.b16 %v365
      %v828 = vunpack.c.h.b16 %v365
      %v829 = vunpack.c.l.b16 %v366
      %v830 = vunpack.c.h.b16 %v366
      %v831 = vunpack.c.l.b16 %v367
      %v832 = vunpack.c.h.b16 %v367
      %v833 = vunpack.c.l.b16 %v368
      %v834 = vunpack.c.h.b16 %v368
      %v835 = vunpack.c.l.b16 %v369
      %v836 = vunpack.c.h.b16 %v369
      %v837 = vunpack.c.l.b16 %v370
      %v838 = vunpack.c.h.b16 %v370
      %v839 = vunpack.c.l.b16 %v371
      %v840 = vunpack.c.h.b16 %v371
      %v841 = vunpack.c.l.b16 %v372
      %v842 = vunpack.c.h.b16 %v372
      %v843 = vunpack.c.l.b16 %v373
      %v844 = vunpack.c.h.b16 %v373
      %v845 = vunpack.c.l.b16 %v374
      %v846 = vunpack.c.h.b16 %v374
      %v847 = vunpack.c.l.b16 %v375
      %v848 = vunpack.c.h.b16 %v375
      %v849 = vunpack.c.l.b16 %v376
      %v850 = vunpack.c.h.b16 %v376
      %v851 = vunpack.c.l.b16 %v377
      %v852 = vunpack.c.h.b16 %v377
      %v853 = vunpack.c.l.b16 %v378
      %v854 = vunpack.c.h.b16 %v378
      %v855 = vunpack.c.l.b16 %v379
      %v856 = vunpack.c.h.b16 %v379
      %v857 = vunpack.c.l.b16 %v380
      %v858 = vunpack.c.h.b16 %v380
      %v859 = vunpack.c.l.b16 %v381
      %v860 = vunpack.c.h.b16 %v381
      %v861 = vunpack.c.l.b16 %v382
      %v862 = vunpack.c.h.b16 %v382
      %v863 = vunpack.c.l.b16 %v383
      %v864 = vunpack.c.h.b16 %v383
      %v865 = vunpack.c.l.b16 %v384
      %v866 = vunpack.c.h.b16 %v384
      %v867 = vunpack.c.l.b16 %v385
      %v868 = vunpack.c.h.b16 %v385
      %v869 = vunpack.c.l.b16 %v386
      %v870 = vunpack.c.h.b16 %v386
      %v871 = vunpack.c.l.b16 %v387
      %v872 = vunpack.c.h.b16 %v387
      %v873 = vunpack.c.l.b16 %v388
      %v874 = vunpack.c.h.b16 %v388
      %v875 = vunpack.c.l.b16 %v389
      %v876 = vunpack.c.h.b16 %v389
      %v877 = vunpack.c.l.b16 %v390
      %v878 = vunpack.c.h.b16 %v390
      %v879 = vunpack.c.l.b16 %v391
      %v880 = vunpack.c.h.b16 %v391
      %v881 = vunpack.c.l.b16 %v392
      %v882 = vunpack.c.h.b16 %v392
      %v883 = vunpack.c.l.b16 %v393
      %v884 = vunpack.c.h.b16 %v393
      %v885 = vunpack.c.l.b16 %v394
      %v886 = vunpack.c.h.b16 %v394
      %v887 = vunpack.c.l.b16 %v395
      %v888 = vunpack.c.h.b16 %v395
      %v889 = vunpack.c.l.b16 %v396
      %v890 = vunpack.c.h.b16 %v396
      %v891 = vunpack.c.l.b16 %v397
      %v892 = vunpack.c.h.b16 %v397
      %v893 = vunpack.c.l.b16 %v398
      %v894 = vunpack.c.h.b16 %v398
      %v895 = vunpack.c.l.b16 %v399
      %v896 = vunpack.c.h.b16 %v399
      %v897 = vunpack.c.l.b16 %v400
      %v898 = vunpack.c.h.b16 %v400
      %v899 = vunpack.c.l.b16 %v401
      %v900 = vunpack.c.h.b16 %v401
      %v901 = vunpack.c.l.b16 %v402
      %v902 = vunpack.c.h.b16 %v402
      %v903 = vunpack.c.l.b16 %v403
      %v904 = vunpack.c.h.b16 %v403
      %v905 = vunpack.c.l.b16 %v404
      %v906 = vunpack.c.h.b16 %v404
      %v907 = vunpack.c.l.b16 %v405
      %v908 = vunpack.c.h.b16 %v405
      %v909 = vunpack.c.l.b16 %v406
      %v910 = vunpack.c.h.b16 %v406
      %v911 = vunpack.c.l.b16 %v407
      %v912 = vunpack.c.h.b16 %v407
      %v913 = vunpack.c.l.b16 %v408
      %v914 = vunpack.c.h.b16 %v408
      %v915 = vunpack.c.l.b16 %v409
      %v916 = vunpack.c.h.b16 %v409
      %v917 = vunpack.c.l.b16 %v410
      %v918 = vunpack.c.h.b16 %v410
      %v919 = vunpack.c.l.b16 %v411
      %v920 = vunpack.c.h.b16 %v411
      %v921 = vunpack.c.l.b16 %v412
      %v922 = vunpack.c.h.b16 %v412
      %v923 = vunpack.c.l.b16 %v413
      %v924 = vunpack.c.h.b16 %v413
      %v925 = vunpack.c.l.b16 %v414
      %v926 = vunpack.c.h.b16 %v414
      %v927 = vunpack.c.l.b16 %v415
      %v928 = vunpack.c.h.b16 %v415
      %v929 = vunpack.c.l.b16 %v416
      %v930 = vunpack.c.h.b16 %v416
      %v931 = vunpack.c.l.b16 %v417
      %v932 = vunpack.c.h.b16 %v417
      %v933 = vunpack.c.l.b16 %v418
      %v934 = vunpack.c.h.b16 %v418
      %v935 = vunpack.c.l.b16 %v419
      %v936 = vunpack.c.h.b16 %v419
      %v937 = vunpack.c.l.b16 %v420
      %v938 = vunpack.c.h.b16 %v420
      %v939 = vunpack.c.l.b16 %v421
      %v940 = vunpack.c.h.b16 %v421
      %v941 = vunpack.c.l.b16 %v422
      %v942 = vunpack.c.h.b16 %v422
      %v943 = vunpack.c.l.b16 %v423
      %v944 = vunpack.c.h.b16 %v423
      %v945 = vunpack.c.l.b16 %v424
      %v946 = vunpack.c.h.b16 %v424
      %v947 = vunpack.c.l.b16 %v425
      %v948 = vunpack.c.h.b16 %v425
      %v949 = vunpack.c.l.b16 %v426
      %v950 = vunpack.c.h.b16 %v426
      %v951 = vunpack.c.l.b16 %v427
      %v952 = vunpack.c.h.b16 %v427
      %v953 = vunpack.c.l.b16 %v428
      %v954 = vunpack.c.h.b16 %v428
      %v955 = vunpack.c.l.b16 %v429
      %v956 = vunpack.c.h.b16 %v429
      %v957 = vunpack.c.l.b16 %v430
      %v958 = vunpack.c.h.b16 %v430
      %v959 = vunpack.c.l.b16 %v431
      %v960 = vunpack.c.h.b16 %v431
      %v961 = vunpack.c.l.b16 %v432
      %v962 = vunpack.c.h.b16 %v432
      %v963 = vunpack.c.l.b16 %v433
      %v964 = vunpack.c.h.b16 %v433
      %v965 = vunpack.c.l.b16 %v434
      %v966 = vunpack.c.h.b16 %v434
      %v967 = vunpack.c.l.b16 %v435
      %v968 = vunpack.c.h.b16 %v435
      %v969 = vunpack.c.l.b16 %v436
      %v970 = vunpack.c.h.b16 %v436
      %v971 = vunpack.c.l.b16 %v437
      %v972 = vunpack.c.h.b16 %v437
      %v973 = vunpack.c.l.b16 %v438
      %v974 = vunpack.c.h.b16 %v438
      %v975 = vunpack.c.l.b16 %v439
      %v976 = vunpack.c.h.b16 %v439
      %v977 = vunpack.c.l.b16 %v440
      %v978 = vunpack.c.h.b16 %v440
      %v979 = vunpack.c.l.b16 %v441
      %v980 = vunpack.c.h.b16 %v441
      %v981 = vunpack.c.l.b16 %v442
      %v982 = vunpack.c.h.b16 %v442
      %v983 = vunpack.c.l.b16 %v443
      %v984 = vunpack.c.h.b16 %v443
      %v985 = vunpack.c.l.b16 %v444
      %v986 = vunpack.c.h.b16 %v444
      %v987 = vunpack.c.l.b16 %v445
      %v988 = vunpack.c.h.b16 %v445
      %v989 = vunpack.c.l.b16 %v446
      %v990 = vunpack.c.h.b16 %v446
      %v991 = vunpack.c.l.b16 %v447
      %v992 = vunpack.c.h.b16 %v447
      %v993 = vunpack.c.l.b16 %v448
      %v994 = vunpack.c.h.b16 %v448
      %v995 = vunpack.c.l.b16 %v449
      %v996 = vunpack.c.h.b16 %v449
      %v997 = vunpack.c.l.b16 %v450
      %v998 = vunpack.c.h.b16 %v450
      %v999 = vunpack.c.l.b16 %v451
      %v1000 = vunpack.c.h.b16 %v451
      %v1001 = vunpack.c.l.b16 %v452
      %v1002 = vunpack.c.h.b16 %v452
      %v1003 = vunpack.c.l.b16 %v453
      %v1004 = vunpack.c.h.b16 %v453
      %v1005 = vunpack.c.l.b16 %v454
      %v1006 = vunpack.c.h.b16 %v454
      %v1007 = vunpack.c.l.b16 %v455
      %v1008 = vunpack.c.h.b16 %v455
      %v1009 = vunpack.c.l.b16 %v456
      %v1010 = vunpack.c.h.b16 %v456
      %v1011 = vunpack.c.l.b16 %v457
      %v1012 = vunpack.c.h.b16 %v457
      %v1013 = vunpack.c.l.b16 %v458
      %v1014 = vunpack.c.h.b16 %v458
      %v1015 = vunpack.c.l.b16 %v459
      %v1016 = vunpack.c.h.b16 %v459
      %v1017 = vunpack.c.l.b16 %v460
      %v1018 = vunpack.c.h.b16 %v460
      %v1019 = vunpack.c.l.b16 %v461
      %v1020 = vunpack.c.h.b16 %v461
      %v1021 = vunpack.c.l.b16 %v462
      %v1022 = vunpack.c.h.b16 %v462
      %v1023 = vunpack.c.l.b16 %v463
      %v1024 = vunpack.c.h.b16 %v463
      %v1025 = vunpack.c.l.b16 %v464
      %v1026 = vunpack.c.h.b16 %v464
      %v1027 = vunpack.c.l.b16 %v465
      %v1028 = vunpack.c.h.b16 %v465
      %v1029 = vunpack.c.l.b16 %v466
      %v1030 = vunpack.c.h.b16 %v466
      %v1031 = vunpack.c.l.b16 %v467
      %v1032 = vunpack.c.h.b16 %v467
      %v1033 = vunpack.c.l.b16 %v468
      %v1034 = vunpack.c.h.b16 %v468
      %v1035 = vunpack.c.l.b16 %v469
      %v1036 = vunpack.c.h.b16 %v469
      %v1037 = vunpack.c.l.b16 %v470
      %v1038 = vunpack.c.h.b16 %v470
      %v1039 = vunpack.c.l.b16 %v471
      %v1040 = vunpack.c.h.b16 %v471
      %v1041 = vunpack.c.l.b16 %v472
      %v1042 = vunpack.c.h.b16 %v472
      %v1043 = vunpack.c.l.b16 %v473
      %v1044 = vunpack.c.h.b16 %v473
      %v1045 = vunpack.c.l.b16 %v474
      %v1046 = vunpack.c.h.b16 %v474
      %v1047 = vunpack.c.l.b16 %v475
      %v1048 = vunpack.c.h.b16 %v475
      %v1049 = vunpack.c.l.b16 %v476
      %v1050 = vunpack.c.h.b16 %v476
      %v1051 = vunpack.c.l.b16 %v477
      %v1052 = vunpack.c.h.b16 %v477
      %v1053 = vunpack.c.l.b16 %v478
      %v1054 = vunpack.c.h.b16 %v478
      %v1055 = vunpack.c.l.b16 %v479
      %v1056 = vunpack.c.h.b16 %v479
      %v1057 = vunpack.c.l.b16 %v480
      %v1058 = vunpack.c.h.b16 %v480
      %v1059 = vunpack.c.l.b16 %v481
      %v1060 = vunpack.c.h.b16 %v481
      %v1061 = vunpack.c.l.b16 %v482
      %v1062 = vunpack.c.h.b16 %v482
      %v1063 = vunpack.c.l.b16 %v483
      %v1064 = vunpack.c.h.b16 %v483
      %v1065 = vunpack.c.l.b16 %v484
      %v1066 = vunpack.c.h.b16 %v484
      %v1067 = vunpack.c.l.b16 %v485
      %v1068 = vunpack.c.h.b16 %v485
      %v1069 = vunpack.c.l.b16 %v486
      %v1070 = vunpack.c.h.b16 %v486
      %v1071 = vunpack.c.l.b16 %v487
      %v1072 = vunpack.c.h.b16 %v487
      %v1073 = vunpack.c.l.b16 %v488
      %v1074 = vunpack.c.h.b16 %v488
      %v1075 = vunpack.c.l.b16 %v489
      %v1076 = vunpack.c.h.b16 %v489
      %v1077 = vunpack.c.l.b16 %v490
      %v1078 = vunpack.c.h.b16 %v490
      %v1079 = vunpack.c.l.b16 %v491
      %v1080 = vunpack.c.h.b16 %v491
      %v1081 = vunpack.c.l.b16 %v492
      %v1082 = vunpack.c.h.b16 %v492
      %v1083 = vunpack.c.l.b16 %v493
      %v1084 = vunpack.c.h.b16 %v493
      %v1085 = vunpack.c.l.b16 %v494
      %v1086 = vunpack.c.h.b16 %v494
      %v1087 = vunpack.c.l.b16 %v495
      %v1088 = vunpack.c.h.b16 %v495
      %v1089 = vunpack.c.l.b16 %v496
      %v1090 = vunpack.c.h.b16 %v496
      %v1091 = vunpack.c.l.b16 %v497
      %v1092 = vunpack.c.h.b16 %v497
      %v1093 = vunpack.c.l.b16 %v498
      %v1094 = vunpack.c.h.b16 %v498
      %v1095 = vunpack.c.l.b16 %v499
      %v1096 = vunpack.c.h.b16 %v499
      %v1097 = vunpack.c.l.b16 %v500
      %v1098 = vunpack.c.h.b16 %v500
      %v1099 = vunpack.c.l.b16 %v501
      %v1100 = vunpack.c.h.b16 %v501
      %v1101 = vunpack.c.l.b16 %v502
      %v1102 = vunpack.c.h.b16 %v502
      %v1103 = vunpack.c.l.b16 %v503
      %v1104 = vunpack.c.h.b16 %v503
      %v1105 = vunpack.c.l.b16 %v504
      %v1106 = vunpack.c.h.b16 %v504
      %v1107 = vunpack.c.l.b16 %v505
      %v1108 = vunpack.c.h.b16 %v505
      %v1109 = vunpack.c.l.b16 %v506
      %v1110 = vunpack.c.h.b16 %v506
      %v1111 = vunpack.c.l.b16 %v507
      %v1112 = vunpack.c.h.b16 %v507
      %v1113 = vunpack.c.l.b16 %v508
      %v1114 = vunpack.c.h.b16 %v508
      %v1115 = vunpack.c.l.b16 %v509
      %v1116 = vunpack.c.h.b16 %v509
      %v1117 = vunpack.c.l.b16 %v510
      %v1118 = vunpack.c.h.b16 %v510
      %v1119 = vunpack.c.l.b16 %v511
      %v1120 = vunpack.c.h.b16 %v511
      %v1121 = vunpack.c.l.b16 %v512
      %v1122 = vunpack.c.h.b16 %v512
      %v1123 = vunpack.c.l.b16 %v513
      %v1124 = vunpack.c.h.b16 %v513
      %v1125 = vunpack.c.l.b16 %v514
      %v1126 = vunpack.c.h.b16 %v514
      %v1127 = vunpack.c.l.b16 %v515
      %v1128 = vunpack.c.h.b16 %v515
      %v1129 = vunpack.c.l.b16 %v516
      %v1130 = vunpack.c.h.b16 %v516
      %v1131 = vunpack.c.l.b16 %v517
      %v1132 = vunpack.c.h.b16 %v517
      %v1133 = vunpack.c.l.b16 %v518
      %v1134 = vunpack.c.h.b16 %v518
      %v1135 = vunpack.c.l.b16 %v519
      %v1136 = vunpack.c.h.b16 %v519
      %v1137 = vunpack.c.l.b16 %v520
      %v1138 = vunpack.c.h.b16 %v520
      %v1139 = vunpack.c.l.b16 %v521
      %v1140 = vunpack.c.h.b16 %v521
      %v1141 = vunpack.c.l.b16 %v522
      %v1142 = vunpack.c.h.b16 %v522
      %v1143 = vunpack.c.l.b16 %v523
      %v1144 = vunpack.c.h.b16 %v523
      %v1145 = vunpack.c.l.b16 %v524
      %v1146 = vunpack.c.h.b16 %v524
      %v1147 = vunpack.c.l.b16 %v525
      %v1148 = vunpack.c.h.b16 %v525
      %v1149 = vunpack.c.l.b16 %v526
      %v1150 = vunpack.c.h.b16 %v526
      %v1151 = vunpack.c.l.b16 %v527
      %v1152 = vunpack.c.h.b16 %v527
      %v1153 = vunpack.c.l.b16 %v528
      %v1154 = vunpack.c.h.b16 %v528
      %v1155 = vunpack.c.l.b16 %v529
      %v1156 = vunpack.c.h.b16 %v529
      %v1157 = vpack.c.b16 %v759, %v757
      %v1158 = vpack.c.b16 %v760, %v758
      %v1159 = vpack.c.b16 %v763, %v761
      %v1160 = vpack.c.b16 %v764, %v762
      %v1161 = vpack.c.b16 %v767, %v765
      %v1162 = vpack.c.b16 %v768, %v766
      %v1163 = vpack.c.b16 %v771, %v769
      %v1164 = vpack.c.b16 %v772, %v770
      %v1165 = vpack.c.b16 %v775, %v773
      %v1166 = vpack.c.b16 %v776, %v774
      %v1167 = vpack.c.b16 %v779, %v777
      %v1168 = vpack.c.b16 %v780, %v778
      %v1169 = vpack.c.b16 %v783, %v781
      %v1170 = vpack.c.b16 %v784, %v782
      %v1171 = vpack.c.b16 %v787, %v785
      %v1172 = vpack.c.b16 %v788, %v786
      %v1173 = vpack.c.b16 %v791, %v789
      %v1174 = vpack.c.b16 %v792, %v790
      %v1175 = vpack.c.b16 %v795, %v793
      %v1176 = vpack.c.b16 %v796, %v794
      %v1177 = vpack.c.b16 %v799, %v797
      %v1178 = vpack.c.b16 %v800, %v798
      %v1179 = vpack.c.b16 %v803, %v801
      %v1180 = vpack.c.b16 %v804, %v802
      %v1181 = vpack.c.b16 %v807, %v805
      %v1182 = vpack.c.b16 %v808, %v806
      %v1183 = vpack.c.b16 %v811, %v809
      %v1184 = vpack.c.b16 %v812, %v810
      %v1185 = vpack.c.b16 %v815, %v813
      %v1186 = vpack.c.b16 %v816, %v814
      %v1187 = vpack.c.b16 %v819, %v817
      %v1188 = vpack.c.b16 %v820, %v818
      %v1189 = vpack.c.b16 %v823, %v821
      %v1190 = vpack.c.b16 %v824, %v822
      %v1191 = vpack.c.b16 %v827, %v825
      %v1192 = vpack.c.b16 %v828, %v826
      %v1193 = vpack.c.b16 %v831, %v829
      %v1194 = vpack.c.b16 %v832, %v830
      %v1195 = vpack.c.b16 %v835, %v833
      %v1196 = vpack.c.b16 %v836, %v834
      %v1197 = vpack.c.b16 %v839, %v837
      %v1198 = vpack.c.b16 %v840, %v838
      %v1199 = vpack.c.b16 %v843, %v841
      %v1200 = vpack.c.b16 %v844, %v842
      %v1201 = vpack.c.b16 %v847, %v845
      %v1202 = vpack.c.b16 %v848, %v846
      %v1203 = vpack.c.b16 %v851, %v849
      %v1204 = vpack.c.b16 %v852, %v850
      %v1205 = vpack.c.b16 %v855, %v853
      %v1206 = vpack.c.b16 %v856, %v854
      %v1207 = vpack.c.b16 %v859, %v857
      %v1208 = vpack.c.b16 %v860, %v858
      %v1209 = vpack.c.b16 %v863, %v861
      %v1210 = vpack.c.b16 %v864, %v862
      %v1211 = vpack.c.b16 %v867, %v865
      %v1212 = vpack.c.b16 %v868, %v866
      %v1213 = vpack.c.b16 %v871, %v869
      %v1214 = vpack.c.b16 %v872, %v870
      %v1215 = vpack.c.b16 %v875, %v873
      %v1216 = vpack.c.b16 %v876, %v874
      %v1217 = vpack.c.b16 %v879, %v877
      %v1218 = vpack.c.b16 %v880, %v878
      %v1219 = vpack.c.b16 %v883, %v881
      %v1220 = vpack.c.b16 %v884, %v882
      %v1221 = vpack.c.b16 %v887, %v885
      %v1222 = vpack.c.b16 %v888, %v886
      %v1223 = vpack.c.b16 %v891, %v889
      %v1224 = vpack.c.b16 %v892, %v890
      %v1225 = vpack.c.b16 %v895, %v893
      %v1226 = vpack.c.b16 %v896, %v894
      %v1227 = vpack.c.b16 %v899, %v897
      %v1228 = vpack.c.b16 %v900, %v898
      %v1229 = vpack.c.b16 %v903, %v901
      %v1230 = vpack.c.b16 %v904, %v902
      %v1231 = vpack.c.b16 %v907, %v905
      %v1232 = vpack.c.b16 %v908, %v906
      %v1233 = vpack.c.b16 %v911, %v909
      %v1234 = vpack.c.b16 %v912, %v910
      %v1235 = vpack.c.b16 %v915, %v913
      %v1236 = vpack.c.b16 %v916, %v914
      %v1237 = vpack.c.b16 %v919, %v917
      %v1238 = vpack.c.b16 %v920, %v918
      %v1239 = vpack.c.b16 %v923, %v921
      %v1240 = vpack.c.b16 %v924, %v922
      %v1241 = vpack.c.b16 %v927, %v925
      %v1242 = vpack.c.b16 %v928, %v926
      %v1243 = vpack.c.b16 %v931, %v929
      %v1244 = vpack.c.b16 %v932, %v930
      %v1245 = vpack.c.b16 %v935, %v933
      %v1246 = vpack.c.b16 %v936, %v934
      %v1247 = vpack.c.b16 %v939, %v937
      %v1248 = vpack.c.b16 %v940, %v938
      %v1249 = vpack.c.b16 %v943, %v941
      %v1250 = vpack.c.b16 %v944, %v942
      %v1251 = vpack.c.b16 %v947, %v945
      %v1252 = vpack.c.b16 %v948, %v946
      %v1253 = vpack.c.b16 %v951, %v949
      %v1254 = vpack.c.b16 %v952, %v950
      %v1255 = vpack.c.b16 %v955, %v953
      %v1256 = vpack.c.b16 %v956, %v954
      %v1257 = vpack.c.b16 %v959, %v957
      %v1258 = vpack.c.b16 %v960, %v958
      %v1259 = vpack.c.b16 %v963, %v961
      %v1260 = vpack.c.b16 %v964, %v962
      %v1261 = vpack.c.b16 %v967, %v965
      %v1262 = vpack.c.b16 %v968, %v966
      %v1263 = vpack.c.b16 %v971, %v969
      %v1264 = vpack.c.b16 %v972, %v970
      %v1265 = vpack.c.b16 %v975, %v973
      %v1266 = vpack.c.b16 %v976, %v974
      %v1267 = vpack.c.b16 %v979, %v977
      %v1268 = vpack.c.b16 %v980, %v978
      %v1269 = vpack.c.b16 %v983, %v981
      %v1270 = vpack.c.b16 %v984, %v982
      %v1271 = vpack.c.b16 %v987, %v985
      %v1272 = vpack.c.b16 %v988, %v986
      %v1273 = vpack.c.b16 %v991, %v989
      %v1274 = vpack.c.b16 %v992, %v990
      %v1275 = vpack.c.b16 %v995, %v993
      %v1276 = vpack.c.b16 %v996, %v994
      %v1277 = vpack.c.b16 %v999, %v997
      %v1278 = vpack.c.b16 %v1000, %v998
      %v1279 = vpack.c.b16 %v1003, %v1001
      %v1280 = vpack.c.b16 %v1004, %v1002
      %v1281 = vpack.c.b16 %v1007, %v1005
      %v1282 = vpack.c.b16 %v1008, %v1006
      %v1283 = vpack.c.b16 %v1011, %v1009
      %v1284 = vpack.c.b16 %v1012, %v1010
      %v1285 = vpack.c.b16 %v1015, %v1013
      %v1286 = vpack.c.b16 %v1016, %v1014
      %v1287 = vpack.c.b16 %v1019, %v1017
      %v1288 = vpack.c.b16 %v1020, %v1018
      %v1289 = vpack.c.b16 %v1023, %v1021
      %v1290 = vpack.c.b16 %v1024, %v1022
      %v1291 = vpack.c.b16 %v1027, %v1025
      %v1292 = vpack.c.b16 %v1028, %v1026
      %v1293 = vpack.c.b16 %v1031, %v1029
      %v1294 = vpack.c.b16 %v1032, %v1030
      %v1295 = vpack.c.b16 %v1035, %v1033
      %v1296 = vpack.c.b16 %v1036, %v1034
      %v1297 = vpack.c.b16 %v1039, %v1037
      %v1298 = vpack.c.b16 %v1040, %v1038
      %v1299 = vpack.c.b16 %v1043, %v1041
      %v1300 = vpack.c.b16 %v1044, %v1042
      %v1301 = vpack.c.b16 %v1047, %v1045
      %v1302 = vpack.c.b16 %v1048, %v1046
      %v1303 = vpack.c.b16 %v1051, %v1049
      %v1304 = vpack.c.b16 %v1052, %v1050
      %v1305 = vpack.c.b16 %v1055, %v1053
      %v1306 = vpack.c.b16 %v1056, %v1054
      %v1307 = vpack.c.b16 %v1059, %v1057
      %v1308 = vpack.c.b16 %v1060, %v1058
      %v1309 = vpack.c.b16 %v1063, %v1061
      %v1310 = vpack.c.b16 %v1064, %v1062
      %v1311 = vpack.c.b16 %v1067, %v1065
      %v1312 = vpack.c.b16 %v1068, %v1066
      %v1313 = vpack.c.b16 %v1071, %v1069
      %v1314 = vpack.c.b16 %v1072, %v1070
      %v1315 = vpack.c.b16 %v1075, %v1073
      %v1316 = vpack.c.b16 %v1076, %v1074
      %v1317 = vpack.c.b16 %v1079, %v1077
      %v1318 = vpack.c.b16 %v1080, %v1078
      %v1319 = vpack.c.b16 %v1083, %v1081
      %v1320 = vpack.c.b16 %v1084, %v1082
      %v1321 = vpack.c.b16 %v1087, %v1085
      %v1322 = vpack.c.b16 %v1088, %v1086
      %v1323 = vpack.c.b16 %v1091, %v1089
      %v1324 = vpack.c.b16 %v1092, %v1090
      %v1325 = vpack.c.b16 %v1095, %v1093
      %v1326 = vpack.c.b16 %v1096, %v1094
      %v1327 = vpack.c.b16 %v1099, %v1097
      %v1328 = vpack.c.b16 %v1100, %v1098
      %v1329 = vpack.c.b16 %v1103, %v1101
      %v1330 = vpack.c.b16 %v1104, %v1102
      %v1331 = vpack.c.b16 %v1107, %v1105
      %v1332 = vpack.c.b16 %v1108, %v1106
      %v1333 = vpack.c.b16 %v1111, %v1109
      %v1334 = vpack.c.b16 %v1112, %v1110
      %v1335 = vpack.c.b16 %v1115, %v1113
      %v1336 = vpack.c.b16 %v1116, %v1114
      %v1337 = vpack.c.b16 %v1119, %v1117
      %v1338 = vpack.c.b16 %v1120, %v1118
      %v1339 = vpack.c.b16 %v1123, %v1121
      %v1340 = vpack.c.b16 %v1124, %v1122
      %v1341 = vpack.c.b16 %v1127, %v1125
      %v1342 = vpack.c.b16 %v1128, %v1126
      %v1343 = vpack.c.b16 %v1131, %v1129
      %v1344 = vpack.c.b16 %v1132, %v1130
      %v1345 = vpack.c.b16 %v1135, %v1133
      %v1346 = vpack.c.b16 %v1136, %v1134
      %v1347 = vpack.c.b16 %v1139, %v1137
      %v1348 = vpack.c.b16 %v1140, %v1138
      %v1349 = vpack.c.b16 %v1143, %v1141
      %v1350 = vpack.c.b16 %v1144, %v1142
      %v1351 = vpack.c.b16 %v1147, %v1145
      %v1352 = vpack.c.b16 %v1148, %v1146
      %v1353 = vpack.c.b16 %v1151, %v1149
      %v1354 = vpack.c.b16 %v1152, %v1150
      %v1355 = vpack.c.b16 %v1155, %v1153
      %v1356 = vpack.c.b16 %v1156, %v1154
      %v1484 = vunpack.c.l.b16 %v530
      %v1485 = vunpack.c.l.b16 %v531
      %v1486 = vunpack.c.l.b16 %v532
      %v1487 = vunpack.c.l.b16 %v533
      %v1488 = vunpack.c.l.b16 %v534
      %v1489 = vunpack.c.l.b16 %v535
      %v1490 = vunpack.c.l.b16 %v536
      %v1491 = vunpack.c.l.b16 %v537
      %v1492 = vunpack.c.l.b16 %v538
      %v1493 = vunpack.c.l.b16 %v539
      %v1494 = vunpack.c.l.b16 %v540
      %v1495 = vunpack.c.l.b16 %v541
      %v1496 = vunpack.c.l.b16 %v542
      %v1497 = vunpack.c.l.b16 %v543
      %v1498 = vunpack.c.l.b16 %v544
      %v1499 = vunpack.c.l.b16 %v545
      %v1500 = vunpack.c.l.b16 %v546
      %v1501 = vunpack.c.l.b16 %v547
      %v1502 = vunpack.c.l.b16 %v548
      %v1503 = vunpack.c.l.b16 %v549
      %v1504 = vunpack.c.l.b16 %v550
      %v1505 = vunpack.c.l.b16 %v551
      %v1506 = vunpack.c.l.b16 %v552
      %v1507 = vunpack.c.l.b16 %v553
      %v1508 = vunpack.c.l.b16 %v554
      %v1509 = vunpack.c.l.b16 %v555
      %v1510 = vunpack.c.l.b16 %v556
      %v1511 = vpack.c.b16 %v1485, %v1484
      %v1512 = vpack.c.b16 %v1487, %v1486
      %v1513 = vpack.c.b16 %v1489, %v1488
      %v1514 = vpack.c.b16 %v1491, %v1490
      %v1515 = vpack.c.b16 %v1493, %v1492
      %v1516 = vpack.c.b16 %v1495, %v1494
      %v1517 = vpack.c.b16 %v1497, %v1496
      %v1518 = vpack.c.b16 %v1499, %v1498
      %v1519 = vpack.c.b16 %v1501, %v1500
      %v1520 = vpack.c.b16 %v1503, %v1502
      %v1521 = vpack.c.b16 %v1505, %v1504
      %v1522 = vpack.c.b16 %v1507, %v1506
      %v1523 = vpack.c.b16 %v1509, %v1508
      %v1524 = vpack.c.b16 %v1510, %v1510
      %vm1538 = vcmask 719872
      %v1540 = vsel %vm1538, %v1158, 0
      %v1543 = vsel %vm1538, %v1160, 0
      %v1546 = vsel %vm1538, %v1162, 0
      %v1549 = vsel %vm1538, %v1164, 0
      %v1552 = vsel %vm1538, %v1166, 0
      %v1555 = vsel %vm1538, %v1168, 0
      %v1558 = vsel %vm1538, %v1170, 0
      %v1561 = vsel %vm1538, %v1172, 0
      %v1564 = vsel %vm1538, %v1174, 0
      %v1567 = vsel %vm1538, %v1176, 0
      %v1570 = vsel %vm1538, %v1178, 0
      %v1573 = vsel %vm1538, %v1180, 0
      %v1576 = vsel %vm1538, %v1182, 0
      %v1579 = vsel %vm1538, %v1184, 0
      %v1582 = vsel %vm1538, %v1186, 0
      %v1585 = vsel %vm1538, %v1188, 0
      %v1588 = vsel %vm1538, %v1190, 0
      %v1591 = vsel %vm1538, %v1192, 0
      %v1594 = vsel %vm1538, %v1194, 0
      %v1597 = vsel %vm1538, %v1196, 0
      %v1600 = vsel %vm1538, %v1198, 0
      %v1603 = vsel %vm1538, %v1200, 0
      %v1606 = vsel %vm1538, %v1202, 0
      %v1609 = vsel %vm1538, %v1204, 0
      %v1612 = vsel %vm1538, %v1206, 0
      %v1615 = vsel %vm1538, %v1208, 0
      %v1618 = vsel %vm1538, %v1210, 0
      %v1621 = vsel %vm1538, %v1212, 0
      %v1624 = vsel %vm1538, %v1214, 0
      %v1627 = vsel %vm1538, %v1216, 0
      %v1630 = vsel %vm1538, %v1218, 0
      %v1633 = vsel %vm1538, %v1220, 0
      %v1636 = vsel %vm1538, %v1222, 0
      %v1639 = vsel %vm1538, %v1224, 0
      %v1642 = vsel %vm1538, %v1226, 0
      %v1645 = vsel %vm1538, %v1228, 0
      %v1648 = vsel %vm1538, %v1230, 0
      %v1651 = vsel %vm1538, %v1232, 0
      %v1654 = vsel %vm1538, %v1234, 0
      %v1657 = vsel %vm1538, %v1236, 0
      %v1660 = vsel %vm1538, %v1238, 0
      %v1663 = vsel %vm1538, %v1240, 0
      %v1666 = vsel %vm1538, %v1242, 0
      %v1669 = vsel %vm1538, %v1244, 0
      %v1672 = vsel %vm1538, %v1246, 0
      %v1675 = vsel %vm1538, %v1248, 0
      %v1678 = vsel %vm1538, %v1250, 0
      %v1681 = vsel %vm1538, %v1252, 0
      %v1684 = vsel %vm1538, %v1254, 0
      %v1687 = vsel %vm1538, %v1256, 0
      %v1690 = vsel %vm1538, %v1258, 0
      %v1693 = vsel %vm1538, %v1260, 0
      %v1696 = vsel %vm1538, %v1262, 0
      %v1699 = vsel %vm1538, %v1264, 0
      %v1702 = vsel %vm1538, %v1266, 0
      %v1705 = vsel %vm1538, %v1268, 0
      %v1708 = vsel %vm1538, %v1270, 0
      %v1711 = vsel %vm1538, %v1272, 0
      %v1714 = vsel %vm1538, %v1274, 0
      %v1717 = vsel %vm1538, %v1276, 0
      %v1720 = vsel %vm1538, %v1278, 0
      %v1723 = vsel %vm1538, %v1280, 0
      %v1726 = vsel %vm1538, %v1282, 0
      %v1729 = vsel %vm1538, %v1284, 0
      %v1732 = vsel %vm1538, %v1286, 0
      %v1735 = vsel %vm1538, %v1288, 0
      %v1738 = vsel %vm1538, %v1290, 0
      %v1741 = vsel %vm1538, %v1292, 0
      %v1744 = vsel %vm1538, %v1294, 0
      %v1747 = vsel %vm1538, %v1296, 0
      %v1750 = vsel %vm1538, %v1298, 0
      %v1753 = vsel %vm1538, %v1300, 0
      %v1756 = vsel %vm1538, %v1302, 0
      %v1759 = vsel %vm1538, %v1304, 0
      %v1762 = vsel %vm1538, %v1306, 0
      %v1765 = vsel %vm1538, %v1308, 0
      %v1768 = vsel %vm1538, %v1310, 0
      %v1771 = vsel %vm1538, %v1312, 0
      %v1774 = vsel %vm1538, %v1314, 0
      %v1777 = vsel %vm1538, %v1316, 0
      %v1780 = vsel %vm1538, %v1318, 0
      %v1783 = vsel %vm1538, %v1320, 0
      %v1786 = vsel %vm1538, %v1322, 0
      %v1789 = vsel %vm1538, %v1324, 0
      %v1792 = vsel %vm1538, %v1326, 0
      %v1795 = vsel %vm1538, %v1328, 0
      %v1798 = vsel %vm1538, %v1330, 0
      %v1801 = vsel %vm1538, %v1332, 0
      %v1804 = vsel %vm1538, %v1334, 0
      %v1807 = vsel %vm1538, %v1336, 0
      %v1810 = vsel %vm1538, %v1338, 0
      %v1813 = vsel %vm1538, %v1340, 0
      %v1816 = vsel %vm1538, %v1342, 0
      %v1819 = vsel %vm1538, %v1344, 0
      %v1822 = vsel %vm1538, %v1346, 0
      %v1825 = vsel %vm1538, %v1348, 0
      %v1828 = vsel %vm1538, %v1350, 0
      %v1831 = vsel %vm1538, %v1352, 0
      %v1834 = vsel %vm1538, %v1354, 0
      %v1837 = vsel %vm1538, %v1356, 0
      %vm1839 = vcmask 1043456
      %v1841 = vsel %vm1839, %v1524, 0
      %1843 = vmatprep.subr.bf16.mxu0 0
      %1844 = vmatpush1.bf16.msra.mxu0 %v1511
      %1845 = vmatprep.subr.bf16.mxu0 0
      %1846 = vmatpush1.bf16.msra.mxu0 %v1512
      %1847 = vmatprep.subr.bf16.mxu0 0
      %1848 = vmatpush1.bf16.msra.mxu0 %v1513
      %1849 = vmatprep.subr.bf16.mxu0 0
      %1850 = vmatpush1.bf16.msra.mxu0 %v1514
      %1851 = vmatprep.subr.bf16.mxu0 0
      %1852 = vmatpush1.bf16.msra.mxu0 %v1515
      %1853 = vmatprep.subr.bf16.mxu0 0
      %1854 = vmatpush1.bf16.msra.mxu0 %v1516
      %1855 = vmatprep.subr.bf16.mxu0 0
      %1856 = vmatpush1.bf16.msra.mxu0 %v1517
      %1857 = vmatprep.subr.bf16.mxu0 0
      %1858 = vmatpush1.bf16.msra.mxu0 %v1518
      %1859 = vmatprep.subr.bf16.mxu0 0
      %1860 = vmatpush1.bf16.msra.mxu0 %v1519
      %1861 = vmatprep.subr.bf16.mxu0 0
      %1862 = vmatpush1.bf16.msra.mxu0 %v1520
      %1863 = vmatprep.subr.bf16.mxu0 0
      %1864 = vmatpush1.bf16.msra.mxu0 %v1521
      %1865 = vmatprep.subr.bf16.mxu0 0
      %1866 = vmatpush1.bf16.msra.mxu0 %v1522
      %1867 = vmatprep.subr.bf16.mxu0 0
      %1868 = vmatpush1.bf16.msra.mxu0 %v1523
      %1869 = vmatprep.subr.bf16.mxu0 0
      %1870 = vmatpush1.bf16.msra.mxu0 %v1841
      %1871 = vmatprep.subr.bf16.mxu0 0
      %1872 = vmatpush1.bf16.msra.mxu0 0
      %1873 = vmatprep.subr.bf16.mxu0 0
      %1874 = vmatpush1.bf16.msra.mxu0 0
      %1875 = vmatprep.mubr.bf16.mxu0 %v1540
      %1876 = vmatmul.mubr.bf16.gmra.mrb[0].mxu0 %v1157
      %v1877 = vpop.f32.mrb[0].mxu0
      %v1878 = vadd.f32 0.0, %v1877
      %v1879 = vpop.f32.mrb[0].mxu0
      %v1880 = vpop.f32.mrb[0].mxu0
      %v1881 = vadd.f32 0.0, %v1880
      %v1882 = vpop.f32.mrb[0].mxu0
      %1883 = vmatprep.mubr.bf16.mxu0 %v1543
      %1884 = vmatmul.mubr.bf16.gmra.mrb[0].mxu0 %v1159
      %v1885 = vpop.f32.mrb[0].mxu0
      %v1886 = vadd.f32 0.0, %v1885
      %v1887 = vpop.f32.mrb[0].mxu0
      %v1888 = vpop.f32.mrb[0].mxu0
      %v1889 = vadd.f32 0.0, %v1888
      %v1890 = vpop.f32.mrb[0].mxu0
      %1891 = vmatprep.mubr.bf16.mxu0 %v1546
      %1892 = vmatmul.mubr.bf16.gmra.mrb[0].mxu0 %v1161
      %v1893 = vpop.f32.mrb[0].mxu0
      %v1894 = vadd.f32 0.0, %v1893
      %v1895 = vpop.f32.mrb[0].mxu0
      %v1896 = vpop.f32.mrb[0].mxu0
      %v1897 = vadd.f32 0.0, %v1896
      %v1898 = vpop.f32.mrb[0].mxu0
      %1899 = vmatprep.mubr.bf16.mxu0 %v1549
      %1900 = vmatmul.mubr.bf16.gmra.mrb[0].mxu0 %v1163
      %v1901 = vpop.f32.mrb[0].mxu0
      %v1902 = vadd.f32 0.0, %v1901
      %v1903 = vpop.f32.mrb[0].mxu0
      %v1904 = vpop.f32.mrb[0].mxu0
      %v1905 = vadd.f32 0.0, %v1904
      %v1906 = vpop.f32.mrb[0].mxu0
      %1907 = vmatprep.mubr.bf16.mxu0 %v1552
      %1908 = vmatmul.mubr.bf16.gmra.mrb[0].mxu0 %v1165
      %v1909 = vpop.f32.mrb[0].mxu0
      %v1910 = vadd.f32 0.0, %v1909
      %v1911 = vpop.f32.mrb[0].mxu0
      %v1912 = vpop.f32.mrb[0].mxu0
      %v1913 = vadd.f32 0.0, %v1912
      %v1914 = vpop.f32.mrb[0].mxu0
      %1915 = vmatprep.mubr.bf16.mxu0 %v1555
      %1916 = vmatmul.mubr.bf16.gmra.mrb[0].mxu0 %v1167
      %v1917 = vpop.f32.mrb[0].mxu0
      %v1918 = vadd.f32 0.0, %v1917
      %v1919 = vpop.f32.mrb[0].mxu0
      %v1920 = vpop.f32.mrb[0].mxu0
      %v1921 = vadd.f32 0.0, %v1920
      %v1922 = vpop.f32.mrb[0].mxu0
      %1923 = vmatprep.mubr.bf16.mxu0 %v1558
      %1924 = vmatmul.mubr.bf16.gmra.mrb[0].mxu0 %v1169
      %v1925 = vpop.f32.mrb[0].mxu0
      %v1926 = vadd.f32 0.0, %v1925
      %v1927 = vpop.f32.mrb[0].mxu0
      %v1928 = vpop.f32.mrb[0].mxu0
      %v1929 = vadd.f32 0.0, %v1928
      %v1930 = vpop.f32.mrb[0].mxu0
      %1931 = vmatprep.mubr.bf16.mxu0 %v1561
      %1932 = vmatmul.mubr.bf16.gmra.mrb[0].mxu0 %v1171
      %v1933 = vpop.f32.mrb[0].mxu0
      %v1934 = vadd.f32 0.0, %v1933
      %v1935 = vpop.f32.mrb[0].mxu0
      %v1936 = vpop.f32.mrb[0].mxu0
      %v1937 = vadd.f32 0.0, %v1936
      %v1938 = vpop.f32.mrb[0].mxu0
      %1939 = vmatprep.mubr.bf16.mxu0 %v1564
      %1940 = vmatmul.mubr.bf16.gmra.mrb[0].mxu0 %v1173
      %v1941 = vpop.f32.mrb[0].mxu0
      %v1942 = vadd.f32 0.0, %v1941
      %v1943 = vpop.f32.mrb[0].mxu0
      %v1944 = vpop.f32.mrb[0].mxu0
      %v1945 = vadd.f32 0.0, %v1944
      %v1946 = vpop.f32.mrb[0].mxu0
      %1947 = vmatprep.mubr.bf16.mxu0 %v1567
      %1948 = vmatmul.mubr.bf16.gmra.mrb[0].mxu0 %v1175
      %v1949 = vpop.f32.mrb[0].mxu0
      %v1950 = vadd.f32 0.0, %v1949
      %v1951 = vpop.f32.mrb[0].mxu0
      %v1952 = vpop.f32.mrb[0].mxu0
      %v1953 = vadd.f32 0.0, %v1952
      %v1954 = vpop.f32.mrb[0].mxu0
      %1955 = vmatprep.mubr.bf16.mxu0 %v1570
      %1956 = vmatmul.mubr.bf16.gmra.mrb[0].mxu0 %v1177
      %v1957 = vpop.f32.mrb[0].mxu0
      %v1958 = vadd.f32 0.0, %v1957
      %v1959 = vpop.f32.mrb[0].mxu0
      %v1960 = vpop.f32.mrb[0].mxu0
      %v1961 = vadd.f32 0.0, %v1960
      %v1962 = vpop.f32.mrb[0].mxu0
      %1963 = vmatprep.mubr.bf16.mxu0 %v1573
      %1964 = vmatmul.mubr.bf16.gmra.mrb[0].mxu0 %v1179
      %v1965 = vpop.f32.mrb[0].mxu0
      %v1966 = vadd.f32 0.0, %v1965
      %v1967 = vpop.f32.mrb[0].mxu0
      %v1968 = vpop.f32.mrb[0].mxu0
      %v1969 = vadd.f32 0.0, %v1968
      %v1970 = vpop.f32.mrb[0].mxu0
      %1971 = vmatprep.mubr.bf16.mxu0 %v1576
      %1972 = vmatmul.mubr.bf16.gmra.mrb[0].mxu0 %v1181
      %v1973 = vpop.f32.mrb[0].mxu0
      %v1974 = vadd.f32 0.0, %v1973
      %v1975 = vpop.f32.mrb[0].mxu0
      %v1976 = vpop.f32.mrb[0].mxu0
      %v1977 = vadd.f32 0.0, %v1976
      %v1978 = vpop.f32.mrb[0].mxu0
      %1979 = vmatprep.mubr.bf16.mxu0 %v1579
      %1980 = vmatmul.mubr.bf16.gmra.mrb[0].mxu0 %v1183
      %v1981 = vpop.f32.mrb[0].mxu0
      %v1982 = vadd.f32 0.0, %v1981
      %v1983 = vpop.f32.mrb[0].mxu0
      %v1984 = vpop.f32.mrb[0].mxu0
      %v1985 = vadd.f32 0.0, %v1984
      %v1986 = vpop.f32.mrb[0].mxu0
      %1987 = vmatprep.mubr.bf16.mxu0 %v1582
      %1988 = vmatmul.mubr.bf16.gmra.mrb[0].mxu0 %v1185
      %v1989 = vpop.f32.mrb[0].mxu0
      %v1990 = vadd.f32 0.0, %v1989
      %v1991 = vpop.f32.mrb[0].mxu0
      %v1992 = vpop.f32.mrb[0].mxu0
      %v1993 = vadd.f32 0.0, %v1992
      %v1994 = vpop.f32.mrb[0].mxu0
      %1995 = vmatprep.mubr.bf16.mxu0 %v1585
      %1996 = vmatmul.mubr.bf16.gmra.mrb[0].mxu0 %v1187
      %v1997 = vpop.f32.mrb[0].mxu0
      %v1998 = vadd.f32 0.0, %v1997
      %v1999 = vpop.f32.mrb[0].mxu0
      %v2000 = vpop.f32.mrb[0].mxu0
      %v2001 = vadd.f32 0.0, %v2000
      %v2002 = vpop.f32.mrb[0].mxu0
      %2003 = vmatprep.mubr.bf16.mxu0 %v1588
      %2004 = vmatmul.mubr.bf16.gmra.mrb[0].mxu0 %v1189
      %v2005 = vpop.f32.mrb[0].mxu0
      %v2006 = vadd.f32 0.0, %v2005
      %v2007 = vpop.f32.mrb[0].mxu0
      %v2008 = vpop.f32.mrb[0].mxu0
      %v2009 = vadd.f32 0.0, %v2008
      %v2010 = vpop.f32.mrb[0].mxu0
      %2011 = vmatprep.mubr.bf16.mxu0 %v1591
      %2012 = vmatmul.mubr.bf16.gmra.mrb[0].mxu0 %v1191
      %v2013 = vpop.f32.mrb[0].mxu0
      %v2014 = vadd.f32 0.0, %v2013
      %v2015 = vpop.f32.mrb[0].mxu0
      %v2016 = vpop.f32.mrb[0].mxu0
      %v2017 = vadd.f32 0.0, %v2016
      %v2018 = vpop.f32.mrb[0].mxu0
      %2019 = vmatprep.mubr.bf16.mxu0 %v1594
      %2020 = vmatmul.mubr.bf16.gmra.mrb[0].mxu0 %v1193
      %v2021 = vpop.f32.mrb[0].mxu0
      %v2022 = vadd.f32 0.0, %v2021
      %v2023 = vpop.f32.mrb[0].mxu0
      %v2024 = vpop.f32.mrb[0].mxu0
      %v2025 = vadd.f32 0.0, %v2024
      %v2026 = vpop.f32.mrb[0].mxu0
      %2027 = vmatprep.mubr.bf16.mxu0 %v1597
      %2028 = vmatmul.mubr.bf16.gmra.mrb[0].mxu0 %v1195
      %v2029 = vpop.f32.mrb[0].mxu0
      %v2030 = vadd.f32 0.0, %v2029
      %v2031 = vpop.f32.mrb[0].mxu0
      %v2032 = vpop.f32.mrb[0].mxu0
      %v2033 = vadd.f32 0.0, %v2032
      %v2034 = vpop.f32.mrb[0].mxu0
      %2035 = vmatprep.mubr.bf16.mxu0 %v1600
      %2036 = vmatmul.mubr.bf16.gmra.mrb[0].mxu0 %v1197
      %v2037 = vpop.f32.mrb[0].mxu0
      %v2038 = vadd.f32 0.0, %v2037
      %v2039 = vpop.f32.mrb[0].mxu0
      %v2040 = vpop.f32.mrb[0].mxu0
      %v2041 = vadd.f32 0.0, %v2040
      %v2042 = vpop.f32.mrb[0].mxu0
      %2043 = vmatprep.mubr.bf16.mxu0 %v1603
      %2044 = vmatmul.mubr.bf16.gmra.mrb[0].mxu0 %v1199
      %v2045 = vpop.f32.mrb[0].mxu0
      %v2046 = vadd.f32 0.0, %v2045
      %v2047 = vpop.f32.mrb[0].mxu0
      %v2048 = vpop.f32.mrb[0].mxu0
      %v2049 = vadd.f32 0.0, %v2048
      %v2050 = vpop.f32.mrb[0].mxu0
      %2051 = vmatprep.mubr.bf16.mxu0 %v1606
      %2052 = vmatmul.mubr.bf16.gmra.mrb[0].mxu0 %v1201
      %v2053 = vpop.f32.mrb[0].mxu0
      %v2054 = vadd.f32 0.0, %v2053
      %v2055 = vpop.f32.mrb[0].mxu0
      %v2056 = vpop.f32.mrb[0].mxu0
      %v2057 = vadd.f32 0.0, %v2056
      %v2058 = vpop.f32.mrb[0].mxu0
      %2059 = vmatprep.mubr.bf16.mxu0 %v1609
      %2060 = vmatmul.mubr.bf16.gmra.mrb[0].mxu0 %v1203
      %v2061 = vpop.f32.mrb[0].mxu0
      %v2062 = vadd.f32 0.0, %v2061
      %v2063 = vpop.f32.mrb[0].mxu0
      %v2064 = vpop.f32.mrb[0].mxu0
      %v2065 = vadd.f32 0.0, %v2064
      %v2066 = vpop.f32.mrb[0].mxu0
      %2067 = vmatprep.mubr.bf16.mxu0 %v1612
      %2068 = vmatmul.mubr.bf16.gmra.mrb[0].mxu0 %v1205
      %v2069 = vpop.f32.mrb[0].mxu0
      %v2070 = vadd.f32 0.0, %v2069
      %v2071 = vpop.f32.mrb[0].mxu0
      %v2072 = vpop.f32.mrb[0].mxu0
      %v2073 = vadd.f32 0.0, %v2072
      %v2074 = vpop.f32.mrb[0].mxu0
      %2075 = vmatprep.mubr.bf16.mxu0 %v1615
      %2076 = vmatmul.mubr.bf16.gmra.mrb[0].mxu0 %v1207
      %v2077 = vpop.f32.mrb[0].mxu0
      %v2078 = vadd.f32 0.0, %v2077
      %v2079 = vpop.f32.mrb[0].mxu0
      %v2080 = vpop.f32.mrb[0].mxu0
      %v2081 = vadd.f32 0.0, %v2080
      %v2082 = vpop.f32.mrb[0].mxu0
      %2083 = vmatprep.mubr.bf16.mxu0 %v1618
      %2084 = vmatmul.mubr.bf16.gmra.mrb[0].mxu0 %v1209
      %v2085 = vpop.f32.mrb[0].mxu0
      %v2086 = vadd.f32 0.0, %v2085
      %v2087 = vpop.f32.mrb[0].mxu0
      %v2088 = vpop.f32.mrb[0].mxu0
      %v2089 = vadd.f32 0.0, %v2088
      %v2090 = vpop.f32.mrb[0].mxu0
      %2091 = vmatprep.mubr.bf16.mxu0 %v1621
      %2092 = vmatmul.mubr.bf16.gmra.mrb[0].mxu0 %v1211
      %v2093 = vpop.f32.mrb[0].mxu0
      %v2094 = vadd.f32 0.0, %v2093
      %v2095 = vpop.f32.mrb[0].mxu0
      %v2096 = vpop.f32.mrb[0].mxu0
      %v2097 = vadd.f32 0.0, %v2096
      %v2098 = vpop.f32.mrb[0].mxu0
      %2099 = vmatprep.mubr.bf16.mxu0 %v1624
      %2100 = vmatmul.mubr.bf16.gmra.mrb[0].mxu0 %v1213
      %v2101 = vpop.f32.mrb[0].mxu0
      %v2102 = vadd.f32 0.0, %v2101
      %v2103 = vpop.f32.mrb[0].mxu0
      %v2104 = vpop.f32.mrb[0].mxu0
      %v2105 = vadd.f32 0.0, %v2104
      %v2106 = vpop.f32.mrb[0].mxu0
      %2107 = vmatprep.mubr.bf16.mxu0 %v1627
      %2108 = vmatmul.mubr.bf16.gmra.mrb[0].mxu0 %v1215
      %v2109 = vpop.f32.mrb[0].mxu0
      %v2110 = vadd.f32 0.0, %v2109
      %v2111 = vpop.f32.mrb[0].mxu0
      %v2112 = vpop.f32.mrb[0].mxu0
      %v2113 = vadd.f32 0.0, %v2112
      %v2114 = vpop.f32.mrb[0].mxu0
      %2115 = vmatprep.mubr.bf16.mxu0 %v1630
      %2116 = vmatmul.mubr.bf16.gmra.mrb[0].mxu0 %v1217
      %v2117 = vpop.f32.mrb[0].mxu0
      %v2118 = vadd.f32 0.0, %v2117
      %v2119 = vpop.f32.mrb[0].mxu0
      %v2120 = vpop.f32.mrb[0].mxu0
      %v2121 = vadd.f32 0.0, %v2120
      %v2122 = vpop.f32.mrb[0].mxu0
      %2123 = vmatprep.mubr.bf16.mxu0 %v1633
      %2124 = vmatmul.mubr.bf16.gmra.mrb[0].mxu0 %v1219
      %v2125 = vpop.f32.mrb[0].mxu0
      %v2126 = vadd.f32 0.0, %v2125
      %v2127 = vpop.f32.mrb[0].mxu0
      %v2128 = vpop.f32.mrb[0].mxu0
      %v2129 = vadd.f32 0.0, %v2128
      %v2130 = vpop.f32.mrb[0].mxu0
      %2131 = vmatprep.mubr.bf16.mxu0 %v1636
      %2132 = vmatmul.mubr.bf16.gmra.mrb[0].mxu0 %v1221
      %v2133 = vpop.f32.mrb[0].mxu0
      %v2134 = vadd.f32 0.0, %v2133
      %v2135 = vpop.f32.mrb[0].mxu0
      %v2136 = vpop.f32.mrb[0].mxu0
      %v2137 = vadd.f32 0.0, %v2136
      %v2138 = vpop.f32.mrb[0].mxu0
      %2139 = vmatprep.mubr.bf16.mxu0 %v1639
      %2140 = vmatmul.mubr.bf16.gmra.mrb[0].mxu0 %v1223
      %v2141 = vpop.f32.mrb[0].mxu0
      %v2142 = vadd.f32 0.0, %v2141
      %v2143 = vpop.f32.mrb[0].mxu0
      %v2144 = vpop.f32.mrb[0].mxu0
      %v2145 = vadd.f32 0.0, %v2144
      %v2146 = vpop.f32.mrb[0].mxu0
      %2147 = vmatprep.mubr.bf16.mxu0 %v1642
      %2148 = vmatmul.mubr.bf16.gmra.mrb[0].mxu0 %v1225
      %v2149 = vpop.f32.mrb[0].mxu0
      %v2150 = vadd.f32 0.0, %v2149
      %v2151 = vpop.f32.mrb[0].mxu0
      %v2152 = vpop.f32.mrb[0].mxu0
      %v2153 = vadd.f32 0.0, %v2152
      %v2154 = vpop.f32.mrb[0].mxu0
      %2155 = vmatprep.mubr.bf16.mxu0 %v1645
      %2156 = vmatmul.mubr.bf16.gmra.mrb[0].mxu0 %v1227
      %v2157 = vpop.f32.mrb[0].mxu0
      %v2158 = vadd.f32 0.0, %v2157
      %v2159 = vpop.f32.mrb[0].mxu0
      %v2160 = vpop.f32.mrb[0].mxu0
      %v2161 = vadd.f32 0.0, %v2160
      %v2162 = vpop.f32.mrb[0].mxu0
      %2163 = vmatprep.mubr.bf16.mxu0 %v1648
      %2164 = vmatmul.mubr.bf16.gmra.mrb[0].mxu0 %v1229
      %v2165 = vpop.f32.mrb[0].mxu0
      %v2166 = vadd.f32 0.0, %v2165
      %v2167 = vpop.f32.mrb[0].mxu0
      %v2168 = vpop.f32.mrb[0].mxu0
      %v2169 = vadd.f32 0.0, %v2168
      %v2170 = vpop.f32.mrb[0].mxu0
      %2171 = vmatprep.mubr.bf16.mxu0 %v1651
      %2172 = vmatmul.mubr.bf16.gmra.mrb[0].mxu0 %v1231
      %v2173 = vpop.f32.mrb[0].mxu0
      %v2174 = vadd.f32 0.0, %v2173
      %v2175 = vpop.f32.mrb[0].mxu0
      %v2176 = vpop.f32.mrb[0].mxu0
      %v2177 = vadd.f32 0.0, %v2176
      %v2178 = vpop.f32.mrb[0].mxu0
      %2179 = vmatprep.mubr.bf16.mxu0 %v1654
      %2180 = vmatmul.mubr.bf16.gmra.mrb[0].mxu0 %v1233
      %v2181 = vpop.f32.mrb[0].mxu0
      %v2182 = vadd.f32 0.0, %v2181
      %v2183 = vpop.f32.mrb[0].mxu0
      %v2184 = vpop.f32.mrb[0].mxu0
      %v2185 = vadd.f32 0.0, %v2184
      %v2186 = vpop.f32.mrb[0].mxu0
      %2187 = vmatprep.mubr.bf16.mxu0 %v1657
      %2188 = vmatmul.mubr.bf16.gmra.mrb[0].mxu0 %v1235
      %v2189 = vpop.f32.mrb[0].mxu0
      %v2190 = vadd.f32 0.0, %v2189
      %v2191 = vpop.f32.mrb[0].mxu0
      %v2192 = vpop.f32.mrb[0].mxu0
      %v2193 = vadd.f32 0.0, %v2192
      %v2194 = vpop.f32.mrb[0].mxu0
      %2195 = vmatprep.mubr.bf16.mxu0 %v1660
      %2196 = vmatmul.mubr.bf16.gmra.mrb[0].mxu0 %v1237
      %v2197 = vpop.f32.mrb[0].mxu0
      %v2198 = vadd.f32 0.0, %v2197
      %v2199 = vpop.f32.mrb[0].mxu0
      %v2200 = vpop.f32.mrb[0].mxu0
      %v2201 = vadd.f32 0.0, %v2200
      %v2202 = vpop.f32.mrb[0].mxu0
      %2203 = vmatprep.mubr.bf16.mxu0 %v1663
      %2204 = vmatmul.mubr.bf16.gmra.mrb[0].mxu0 %v1239
      %v2205 = vpop.f32.mrb[0].mxu0
      %v2206 = vadd.f32 0.0, %v2205
      %v2207 = vpop.f32.mrb[0].mxu0
      %v2208 = vpop.f32.mrb[0].mxu0
      %v2209 = vadd.f32 0.0, %v2208
      %v2210 = vpop.f32.mrb[0].mxu0
      %2211 = vmatprep.mubr.bf16.mxu0 %v1666
      %2212 = vmatmul.mubr.bf16.gmra.mrb[0].mxu0 %v1241
      %v2213 = vpop.f32.mrb[0].mxu0
      %v2214 = vadd.f32 0.0, %v2213
      %v2215 = vpop.f32.mrb[0].mxu0
      %v2216 = vpop.f32.mrb[0].mxu0
      %v2217 = vadd.f32 0.0, %v2216
      %v2218 = vpop.f32.mrb[0].mxu0
      %2219 = vmatprep.mubr.bf16.mxu0 %v1669
      %2220 = vmatmul.mubr.bf16.gmra.mrb[0].mxu0 %v1243
      %v2221 = vpop.f32.mrb[0].mxu0
      %v2222 = vadd.f32 0.0, %v2221
      %v2223 = vpop.f32.mrb[0].mxu0
      %v2224 = vpop.f32.mrb[0].mxu0
      %v2225 = vadd.f32 0.0, %v2224
      %v2226 = vpop.f32.mrb[0].mxu0
      %2227 = vmatprep.mubr.bf16.mxu0 %v1672
      %2228 = vmatmul.mubr.bf16.gmra.mrb[0].mxu0 %v1245
      %v2229 = vpop.f32.mrb[0].mxu0
      %v2230 = vadd.f32 0.0, %v2229
      %v2231 = vpop.f32.mrb[0].mxu0
      %v2232 = vpop.f32.mrb[0].mxu0
      %v2233 = vadd.f32 0.0, %v2232
      %v2234 = vpop.f32.mrb[0].mxu0
      %2235 = vmatprep.mubr.bf16.mxu0 %v1675
      %2236 = vmatmul.mubr.bf16.gmra.mrb[0].mxu0 %v1247
      %v2237 = vpop.f32.mrb[0].mxu0
      %v2238 = vadd.f32 0.0, %v2237
      %v2239 = vpop.f32.mrb[0].mxu0
      %v2240 = vpop.f32.mrb[0].mxu0
      %v2241 = vadd.f32 0.0, %v2240
      %v2242 = vpop.f32.mrb[0].mxu0
      %2243 = vmatprep.mubr.bf16.mxu0 %v1678
      %2244 = vmatmul.mubr.bf16.gmra.mrb[0].mxu0 %v1249
      %v2245 = vpop.f32.mrb[0].mxu0
      %v2246 = vadd.f32 0.0, %v2245
      %v2247 = vpop.f32.mrb[0].mxu0
      %v2248 = vpop.f32.mrb[0].mxu0
      %v2249 = vadd.f32 0.0, %v2248
      %v2250 = vpop.f32.mrb[0].mxu0
      %2251 = vmatprep.mubr.bf16.mxu0 %v1681
      %2252 = vmatmul.mubr.bf16.gmra.mrb[0].mxu0 %v1251
      %v2253 = vpop.f32.mrb[0].mxu0
      %v2254 = vadd.f32 0.0, %v2253
      %v2255 = vpop.f32.mrb[0].mxu0
      %v2256 = vpop.f32.mrb[0].mxu0
      %v2257 = vadd.f32 0.0, %v2256
      %v2258 = vpop.f32.mrb[0].mxu0
      %2259 = vmatprep.mubr.bf16.mxu0 %v1684
      %2260 = vmatmul.mubr.bf16.gmra.mrb[0].mxu0 %v1253
      %v2261 = vpop.f32.mrb[0].mxu0
      %v2262 = vadd.f32 0.0, %v2261
      %v2263 = vpop.f32.mrb[0].mxu0
      %v2264 = vpop.f32.mrb[0].mxu0
      %v2265 = vadd.f32 0.0, %v2264
      %v2266 = vpop.f32.mrb[0].mxu0
      %2267 = vmatprep.mubr.bf16.mxu0 %v1687
      %2268 = vmatmul.mubr.bf16.gmra.mrb[0].mxu0 %v1255
      %v2269 = vpop.f32.mrb[0].mxu0
      %v2270 = vadd.f32 0.0, %v2269
      %v2271 = vpop.f32.mrb[0].mxu0
      %v2272 = vpop.f32.mrb[0].mxu0
      %v2273 = vadd.f32 0.0, %v2272
      %v2274 = vpop.f32.mrb[0].mxu0
      %2275 = vmatprep.mubr.bf16.mxu0 %v1690
      %2276 = vmatmul.mubr.bf16.gmra.mrb[0].mxu0 %v1257
      %v2277 = vpop.f32.mrb[0].mxu0
      %v2278 = vadd.f32 0.0, %v2277
      %v2279 = vpop.f32.mrb[0].mxu0
      %v2280 = vpop.f32.mrb[0].mxu0
      %v2281 = vadd.f32 0.0, %v2280
      %v2282 = vpop.f32.mrb[0].mxu0
      %2283 = vmatprep.mubr.bf16.mxu0 %v1693
      %2284 = vmatmul.mubr.bf16.gmra.mrb[0].mxu0 %v1259
      %v2285 = vpop.f32.mrb[0].mxu0
      %v2286 = vadd.f32 0.0, %v2285
      %v2287 = vpop.f32.mrb[0].mxu0
      %v2288 = vpop.f32.mrb[0].mxu0
      %v2289 = vadd.f32 0.0, %v2288
      %v2290 = vpop.f32.mrb[0].mxu0
      %2291 = vmatprep.mubr.bf16.mxu0 %v1696
      %2292 = vmatmul.mubr.bf16.gmra.mrb[0].mxu0 %v1261
      %v2293 = vpop.f32.mrb[0].mxu0
      %v2294 = vadd.f32 0.0, %v2293
      %v2295 = vpop.f32.mrb[0].mxu0
      %v2296 = vpop.f32.mrb[0].mxu0
      %v2297 = vadd.f32 0.0, %v2296
      %v2298 = vpop.f32.mrb[0].mxu0
      %2299 = vmatprep.mubr.bf16.mxu0 %v1699
      %2300 = vmatmul.mubr.bf16.gmra.mrb[0].mxu0 %v1263
      %v2301 = vpop.f32.mrb[0].mxu0
      %v2302 = vadd.f32 0.0, %v2301
      %v2303 = vpop.f32.mrb[0].mxu0
      %v2304 = vpop.f32.mrb[0].mxu0
      %v2305 = vadd.f32 0.0, %v2304
      %v2306 = vpop.f32.mrb[0].mxu0
      %2307 = vmatprep.mubr.bf16.mxu0 %v1702
      %2308 = vmatmul.mubr.bf16.gmra.mrb[0].mxu0 %v1265
      %v2309 = vpop.f32.mrb[0].mxu0
      %v2310 = vadd.f32 0.0, %v2309
      %v2311 = vpop.f32.mrb[0].mxu0
      %v2312 = vpop.f32.mrb[0].mxu0
      %v2313 = vadd.f32 0.0, %v2312
      %v2314 = vpop.f32.mrb[0].mxu0
      %2315 = vmatprep.mubr.bf16.mxu0 %v1705
      %2316 = vmatmul.mubr.bf16.gmra.mrb[0].mxu0 %v1267
      %v2317 = vpop.f32.mrb[0].mxu0
      %v2318 = vadd.f32 0.0, %v2317
      %v2319 = vpop.f32.mrb[0].mxu0
      %v2320 = vpop.f32.mrb[0].mxu0
      %v2321 = vadd.f32 0.0, %v2320
      %v2322 = vpop.f32.mrb[0].mxu0
      %2323 = vmatprep.mubr.bf16.mxu0 %v1708
      %2324 = vmatmul.mubr.bf16.gmra.mrb[0].mxu0 %v1269
      %v2325 = vpop.f32.mrb[0].mxu0
      %v2326 = vadd.f32 0.0, %v2325
      %v2327 = vpop.f32.mrb[0].mxu0
      %v2328 = vpop.f32.mrb[0].mxu0
      %v2329 = vadd.f32 0.0, %v2328
      %v2330 = vpop.f32.mrb[0].mxu0
      %2331 = vmatprep.mubr.bf16.mxu0 %v1711
      %2332 = vmatmul.mubr.bf16.gmra.mrb[0].mxu0 %v1271
      %v2333 = vpop.f32.mrb[0].mxu0
      %v2334 = vadd.f32 0.0, %v2333
      %v2335 = vpop.f32.mrb[0].mxu0
      %v2336 = vpop.f32.mrb[0].mxu0
      %v2337 = vadd.f32 0.0, %v2336
      %v2338 = vpop.f32.mrb[0].mxu0
      %2339 = vmatprep.mubr.bf16.mxu0 %v1714
      %2340 = vmatmul.mubr.bf16.gmra.mrb[0].mxu0 %v1273
      %v2341 = vpop.f32.mrb[0].mxu0
      %v2342 = vadd.f32 0.0, %v2341
      %v2343 = vpop.f32.mrb[0].mxu0
      %v2344 = vpop.f32.mrb[0].mxu0
      %v2345 = vadd.f32 0.0, %v2344
      %v2346 = vpop.f32.mrb[0].mxu0
      %2347 = vmatprep.mubr.bf16.mxu0 %v1717
      %2348 = vmatmul.mubr.bf16.gmra.mrb[0].mxu0 %v1275
      %v2349 = vpop.f32.mrb[0].mxu0
      %v2350 = vadd.f32 0.0, %v2349
      %v2351 = vpop.f32.mrb[0].mxu0
      %v2352 = vpop.f32.mrb[0].mxu0
      %v2353 = vadd.f32 0.0, %v2352
      %v2354 = vpop.f32.mrb[0].mxu0
      %2355 = vmatprep.mubr.bf16.mxu0 %v1720
      %2356 = vmatmul.mubr.bf16.gmra.mrb[0].mxu0 %v1277
      %v2357 = vpop.f32.mrb[0].mxu0
      %v2358 = vadd.f32 0.0, %v2357
      %v2359 = vpop.f32.mrb[0].mxu0
      %v2360 = vpop.f32.mrb[0].mxu0
      %v2361 = vadd.f32 0.0, %v2360
      %v2362 = vpop.f32.mrb[0].mxu0
      %2363 = vmatprep.mubr.bf16.mxu0 %v1723
      %2364 = vmatmul.mubr.bf16.gmra.mrb[0].mxu0 %v1279
      %v2365 = vpop.f32.mrb[0].mxu0
      %v2366 = vadd.f32 0.0, %v2365
      %v2367 = vpop.f32.mrb[0].mxu0
      %v2368 = vpop.f32.mrb[0].mxu0
      %v2369 = vadd.f32 0.0, %v2368
      %v2370 = vpop.f32.mrb[0].mxu0
      %2371 = vmatprep.mubr.bf16.mxu0 %v1726
      %2372 = vmatmul.mubr.bf16.gmra.mrb[0].mxu0 %v1281
      %v2373 = vpop.f32.mrb[0].mxu0
      %v2374 = vadd.f32 0.0, %v2373
      %v2375 = vpop.f32.mrb[0].mxu0
      %v2376 = vpop.f32.mrb[0].mxu0
      %v2377 = vadd.f32 0.0, %v2376
      %v2378 = vpop.f32.mrb[0].mxu0
      %2379 = vmatprep.mubr.bf16.mxu0 %v1729
      %2380 = vmatmul.mubr.bf16.gmra.mrb[0].mxu0 %v1283
      %v2381 = vpop.f32.mrb[0].mxu0
      %v2382 = vadd.f32 0.0, %v2381
      %v2383 = vpop.f32.mrb[0].mxu0
      %v2384 = vpop.f32.mrb[0].mxu0
      %v2385 = vadd.f32 0.0, %v2384
      %v2386 = vpop.f32.mrb[0].mxu0
      %2387 = vmatprep.mubr.bf16.mxu0 %v1732
      %2388 = vmatmul.mubr.bf16.gmra.mrb[0].mxu0 %v1285
      %v2389 = vpop.f32.mrb[0].mxu0
      %v2390 = vadd.f32 0.0, %v2389
      %v2391 = vpop.f32.mrb[0].mxu0
      %v2392 = vpop.f32.mrb[0].mxu0
      %v2393 = vadd.f32 0.0, %v2392
      %v2394 = vpop.f32.mrb[0].mxu0
      %2395 = vmatprep.mubr.bf16.mxu0 %v1735
      %2396 = vmatmul.mubr.bf16.gmra.mrb[0].mxu0 %v1287
      %v2397 = vpop.f32.mrb[0].mxu0
      %v2398 = vadd.f32 0.0, %v2397
      %v2399 = vpop.f32.mrb[0].mxu0
      %v2400 = vpop.f32.mrb[0].mxu0
      %v2401 = vadd.f32 0.0, %v2400
      %v2402 = vpop.f32.mrb[0].mxu0
      %2403 = vmatprep.mubr.bf16.mxu0 %v1738
      %2404 = vmatmul.mubr.bf16.gmra.mrb[0].mxu0 %v1289
      %v2405 = vpop.f32.mrb[0].mxu0
      %v2406 = vadd.f32 0.0, %v2405
      %v2407 = vpop.f32.mrb[0].mxu0
      %v2408 = vpop.f32.mrb[0].mxu0
      %v2409 = vadd.f32 0.0, %v2408
      %v2410 = vpop.f32.mrb[0].mxu0
      %2411 = vmatprep.mubr.bf16.mxu0 %v1741
      %2412 = vmatmul.mubr.bf16.gmra.mrb[0].mxu0 %v1291
      %v2413 = vpop.f32.mrb[0].mxu0
      %v2414 = vadd.f32 0.0, %v2413
      %v2415 = vpop.f32.mrb[0].mxu0
      %v2416 = vpop.f32.mrb[0].mxu0
      %v2417 = vadd.f32 0.0, %v2416
      %v2418 = vpop.f32.mrb[0].mxu0
      %2419 = vmatprep.mubr.bf16.mxu0 %v1744
      %2420 = vmatmul.mubr.bf16.gmra.mrb[0].mxu0 %v1293
      %v2421 = vpop.f32.mrb[0].mxu0
      %v2422 = vadd.f32 0.0, %v2421
      %v2423 = vpop.f32.mrb[0].mxu0
      %v2424 = vpop.f32.mrb[0].mxu0
      %v2425 = vadd.f32 0.0, %v2424
      %v2426 = vpop.f32.mrb[0].mxu0
      %2427 = vmatprep.mubr.bf16.mxu0 %v1747
      %2428 = vmatmul.mubr.bf16.gmra.mrb[0].mxu0 %v1295
      %v2429 = vpop.f32.mrb[0].mxu0
      %v2430 = vadd.f32 0.0, %v2429
      %v2431 = vpop.f32.mrb[0].mxu0
      %v2432 = vpop.f32.mrb[0].mxu0
      %v2433 = vadd.f32 0.0, %v2432
      %v2434 = vpop.f32.mrb[0].mxu0
      %2435 = vmatprep.mubr.bf16.mxu0 %v1750
      %2436 = vmatmul.mubr.bf16.gmra.mrb[0].mxu0 %v1297
      %v2437 = vpop.f32.mrb[0].mxu0
      %v2438 = vadd.f32 0.0, %v2437
      %v2439 = vpop.f32.mrb[0].mxu0
      %v2440 = vpop.f32.mrb[0].mxu0
      %v2441 = vadd.f32 0.0, %v2440
      %v2442 = vpop.f32.mrb[0].mxu0
      %2443 = vmatprep.mubr.bf16.mxu0 %v1753
      %2444 = vmatmul.mubr.bf16.gmra.mrb[0].mxu0 %v1299
      %v2445 = vpop.f32.mrb[0].mxu0
      %v2446 = vadd.f32 0.0, %v2445
      %v2447 = vpop.f32.mrb[0].mxu0
      %v2448 = vpop.f32.mrb[0].mxu0
      %v2449 = vadd.f32 0.0, %v2448
      %v2450 = vpop.f32.mrb[0].mxu0
      %2451 = vmatprep.mubr.bf16.mxu0 %v1756
      %2452 = vmatmul.mubr.bf16.gmra.mrb[0].mxu0 %v1301
      %v2453 = vpop.f32.mrb[0].mxu0
      %v2454 = vadd.f32 0.0, %v2453
      %v2455 = vpop.f32.mrb[0].mxu0
      %v2456 = vpop.f32.mrb[0].mxu0
      %v2457 = vadd.f32 0.0, %v2456
      %v2458 = vpop.f32.mrb[0].mxu0
      %2459 = vmatprep.mubr.bf16.mxu0 %v1759
      %2460 = vmatmul.mubr.bf16.gmra.mrb[0].mxu0 %v1303
      %v2461 = vpop.f32.mrb[0].mxu0
      %v2462 = vadd.f32 0.0, %v2461
      %v2463 = vpop.f32.mrb[0].mxu0
      %v2464 = vpop.f32.mrb[0].mxu0
      %v2465 = vadd.f32 0.0, %v2464
      %v2466 = vpop.f32.mrb[0].mxu0
      %2467 = vmatprep.mubr.bf16.mxu0 %v1762
      %2468 = vmatmul.mubr.bf16.gmra.mrb[0].mxu0 %v1305
      %v2469 = vpop.f32.mrb[0].mxu0
      %v2470 = vadd.f32 0.0, %v2469
      %v2471 = vpop.f32.mrb[0].mxu0
      %v2472 = vpop.f32.mrb[0].mxu0
      %v2473 = vadd.f32 0.0, %v2472
      %v2474 = vpop.f32.mrb[0].mxu0
      %2475 = vmatprep.mubr.bf16.mxu0 %v1765
      %2476 = vmatmul.mubr.bf16.gmra.mrb[0].mxu0 %v1307
      %v2477 = vpop.f32.mrb[0].mxu0
      %v2478 = vadd.f32 0.0, %v2477
      %v2479 = vpop.f32.mrb[0].mxu0
      %v2480 = vpop.f32.mrb[0].mxu0
      %v2481 = vadd.f32 0.0, %v2480
      %v2482 = vpop.f32.mrb[0].mxu0
      %2483 = vmatprep.mubr.bf16.mxu0 %v1768
      %2484 = vmatmul.mubr.bf16.gmra.mrb[0].mxu0 %v1309
      %v2485 = vpop.f32.mrb[0].mxu0
      %v2486 = vadd.f32 0.0, %v2485
      %v2487 = vpop.f32.mrb[0].mxu0
      %v2488 = vpop.f32.mrb[0].mxu0
      %v2489 = vadd.f32 0.0, %v2488
      %v2490 = vpop.f32.mrb[0].mxu0
      %2491 = vmatprep.mubr.bf16.mxu0 %v1771
      %2492 = vmatmul.mubr.bf16.gmra.mrb[0].mxu0 %v1311
      %v2493 = vpop.f32.mrb[0].mxu0
      %v2494 = vadd.f32 0.0, %v2493
      %v2495 = vpop.f32.mrb[0].mxu0
      %v2496 = vpop.f32.mrb[0].mxu0
      %v2497 = vadd.f32 0.0, %v2496
      %v2498 = vpop.f32.mrb[0].mxu0
      %2499 = vmatprep.mubr.bf16.mxu0 %v1774
      %2500 = vmatmul.mubr.bf16.gmra.mrb[0].mxu0 %v1313
      %v2501 = vpop.f32.mrb[0].mxu0
      %v2502 = vadd.f32 0.0, %v2501
      %v2503 = vpop.f32.mrb[0].mxu0
      %v2504 = vpop.f32.mrb[0].mxu0
      %v2505 = vadd.f32 0.0, %v2504
      %v2506 = vpop.f32.mrb[0].mxu0
      %2507 = vmatprep.mubr.bf16.mxu0 %v1777
      %2508 = vmatmul.mubr.bf16.gmra.mrb[0].mxu0 %v1315
      %v2509 = vpop.f32.mrb[0].mxu0
      %v2510 = vadd.f32 0.0, %v2509
      %v2511 = vpop.f32.mrb[0].mxu0
      %v2512 = vpop.f32.mrb[0].mxu0
      %v2513 = vadd.f32 0.0, %v2512
      %v2514 = vpop.f32.mrb[0].mxu0
      %2515 = vmatprep.mubr.bf16.mxu0 %v1780
      %2516 = vmatmul.mubr.bf16.gmra.mrb[0].mxu0 %v1317
      %v2517 = vpop.f32.mrb[0].mxu0
      %v2518 = vadd.f32 0.0, %v2517
      %v2519 = vpop.f32.mrb[0].mxu0
      %v2520 = vpop.f32.mrb[0].mxu0
      %v2521 = vadd.f32 0.0, %v2520
      %v2522 = vpop.f32.mrb[0].mxu0
      %2523 = vmatprep.mubr.bf16.mxu0 %v1783
      %2524 = vmatmul.mubr.bf16.gmra.mrb[0].mxu0 %v1319
      %v2525 = vpop.f32.mrb[0].mxu0
      %v2526 = vadd.f32 0.0, %v2525
      %v2527 = vpop.f32.mrb[0].mxu0
      %v2528 = vpop.f32.mrb[0].mxu0
      %v2529 = vadd.f32 0.0, %v2528
      %v2530 = vpop.f32.mrb[0].mxu0
      %2531 = vmatprep.mubr.bf16.mxu0 %v1786
      %2532 = vmatmul.mubr.bf16.gmra.mrb[0].mxu0 %v1321
      %v2533 = vpop.f32.mrb[0].mxu0
      %v2534 = vadd.f32 0.0, %v2533
      %v2535 = vpop.f32.mrb[0].mxu0
      %v2536 = vpop.f32.mrb[0].mxu0
      %v2537 = vadd.f32 0.0, %v2536
      %v2538 = vpop.f32.mrb[0].mxu0
      %2539 = vmatprep.mubr.bf16.mxu0 %v1789
      %2540 = vmatmul.mubr.bf16.gmra.mrb[0].mxu0 %v1323
      %v2541 = vpop.f32.mrb[0].mxu0
      %v2542 = vadd.f32 0.0, %v2541
      %v2543 = vpop.f32.mrb[0].mxu0
      %v2544 = vpop.f32.mrb[0].mxu0
      %v2545 = vadd.f32 0.0, %v2544
      %v2546 = vpop.f32.mrb[0].mxu0
      %2547 = vmatprep.mubr.bf16.mxu0 %v1792
      %2548 = vmatmul.mubr.bf16.gmra.mrb[0].mxu0 %v1325
      %v2549 = vpop.f32.mrb[0].mxu0
      %v2550 = vadd.f32 0.0, %v2549
      %v2551 = vpop.f32.mrb[0].mxu0
      %v2552 = vpop.f32.mrb[0].mxu0
      %v2553 = vadd.f32 0.0, %v2552
      %v2554 = vpop.f32.mrb[0].mxu0
      %2555 = vmatprep.mubr.bf16.mxu0 %v1795
      %2556 = vmatmul.mubr.bf16.gmra.mrb[0].mxu0 %v1327
      %v2557 = vpop.f32.mrb[0].mxu0
      %v2558 = vadd.f32 0.0, %v2557
      %v2559 = vpop.f32.mrb[0].mxu0
      %v2560 = vpop.f32.mrb[0].mxu0
      %v2561 = vadd.f32 0.0, %v2560
      %v2562 = vpop.f32.mrb[0].mxu0
      %2563 = vmatprep.mubr.bf16.mxu0 %v1798
      %2564 = vmatmul.mubr.bf16.gmra.mrb[0].mxu0 %v1329
      %v2565 = vpop.f32.mrb[0].mxu0
      %v2566 = vadd.f32 0.0, %v2565
      %v2567 = vpop.f32.mrb[0].mxu0
      %v2568 = vpop.f32.mrb[0].mxu0
      %v2569 = vadd.f32 0.0, %v2568
      %v2570 = vpop.f32.mrb[0].mxu0
      %2571 = vmatprep.mubr.bf16.mxu0 %v1801
      %2572 = vmatmul.mubr.bf16.gmra.mrb[0].mxu0 %v1331
      %v2573 = vpop.f32.mrb[0].mxu0
      %v2574 = vadd.f32 0.0, %v2573
      %v2575 = vpop.f32.mrb[0].mxu0
      %v2576 = vpop.f32.mrb[0].mxu0
      %v2577 = vadd.f32 0.0, %v2576
      %v2578 = vpop.f32.mrb[0].mxu0
      %2579 = vmatprep.mubr.bf16.mxu0 %v1804
      %2580 = vmatmul.mubr.bf16.gmra.mrb[0].mxu0 %v1333
      %v2581 = vpop.f32.mrb[0].mxu0
      %v2582 = vadd.f32 0.0, %v2581
      %v2583 = vpop.f32.mrb[0].mxu0
      %v2584 = vpop.f32.mrb[0].mxu0
      %v2585 = vadd.f32 0.0, %v2584
      %v2586 = vpop.f32.mrb[0].mxu0
      %2587 = vmatprep.mubr.bf16.mxu0 %v1807
      %2588 = vmatmul.mubr.bf16.gmra.mrb[0].mxu0 %v1335
      %v2589 = vpop.f32.mrb[0].mxu0
      %v2590 = vadd.f32 0.0, %v2589
      %v2591 = vpop.f32.mrb[0].mxu0
      %v2592 = vpop.f32.mrb[0].mxu0
      %v2593 = vadd.f32 0.0, %v2592
      %v2594 = vpop.f32.mrb[0].mxu0
      %2595 = vmatprep.mubr.bf16.mxu0 %v1810
      %2596 = vmatmul.mubr.bf16.gmra.mrb[0].mxu0 %v1337
      %v2597 = vpop.f32.mrb[0].mxu0
      %v2598 = vadd.f32 0.0, %v2597
      %v2599 = vpop.f32.mrb[0].mxu0
      %v2600 = vpop.f32.mrb[0].mxu0
      %v2601 = vadd.f32 0.0, %v2600
      %v2602 = vpop.f32.mrb[0].mxu0
      %2603 = vmatprep.mubr.bf16.mxu0 %v1813
      %2604 = vmatmul.mubr.bf16.gmra.mrb[0].mxu0 %v1339
      %v2605 = vpop.f32.mrb[0].mxu0
      %v2606 = vadd.f32 0.0, %v2605
      %v2607 = vpop.f32.mrb[0].mxu0
      %v2608 = vpop.f32.mrb[0].mxu0
      %v2609 = vadd.f32 0.0, %v2608
      %v2610 = vpop.f32.mrb[0].mxu0
      %2611 = vmatprep.mubr.bf16.mxu0 %v1816
      %2612 = vmatmul.mubr.bf16.gmra.mrb[0].mxu0 %v1341
      %v2613 = vpop.f32.mrb[0].mxu0
      %v2614 = vadd.f32 0.0, %v2613
      %v2615 = vpop.f32.mrb[0].mxu0
      %v2616 = vpop.f32.mrb[0].mxu0
      %v2617 = vadd.f32 0.0, %v2616
      %v2618 = vpop.f32.mrb[0].mxu0
      %2619 = vmatprep.mubr.bf16.mxu0 %v1819
      %2620 = vmatmul.mubr.bf16.gmra.mrb[0].mxu0 %v1343
      %v2621 = vpop.f32.mrb[0].mxu0
      %v2622 = vadd.f32 0.0, %v2621
      %v2623 = vpop.f32.mrb[0].mxu0
      %v2624 = vpop.f32.mrb[0].mxu0
      %v2625 = vadd.f32 0.0, %v2624
      %v2626 = vpop.f32.mrb[0].mxu0
      %2627 = vmatprep.mubr.bf16.mxu0 %v1822
      %2628 = vmatmul.mubr.bf16.gmra.mrb[0].mxu0 %v1345
      %v2629 = vpop.f32.mrb[0].mxu0
      %v2630 = vadd.f32 0.0, %v2629
      %v2631 = vpop.f32.mrb[0].mxu0
      %v2632 = vpop.f32.mrb[0].mxu0
      %v2633 = vadd.f32 0.0, %v2632
      %v2634 = vpop.f32.mrb[0].mxu0
      %2635 = vmatprep.mubr.bf16.mxu0 %v1825
      %2636 = vmatmul.mubr.bf16.gmra.mrb[0].mxu0 %v1347
      %v2637 = vpop.f32.mrb[0].mxu0
      %v2638 = vadd.f32 0.0, %v2637
      %v2639 = vpop.f32.mrb[0].mxu0
      %v2640 = vpop.f32.mrb[0].mxu0
      %v2641 = vadd.f32 0.0, %v2640
      %v2642 = vpop.f32.mrb[0].mxu0
      %2643 = vmatprep.mubr.bf16.mxu0 %v1828
      %2644 = vmatmul.mubr.bf16.gmra.mrb[0].mxu0 %v1349
      %v2645 = vpop.f32.mrb[0].mxu0
      %v2646 = vadd.f32 0.0, %v2645
      %v2647 = vpop.f32.mrb[0].mxu0
      %v2648 = vpop.f32.mrb[0].mxu0
      %v2649 = vadd.f32 0.0, %v2648
      %v2650 = vpop.f32.mrb[0].mxu0
      %2651 = vmatprep.mubr.bf16.mxu0 %v1831
      %2652 = vmatmul.mubr.bf16.gmra.mrb[0].mxu0 %v1351
      %v2653 = vpop.f32.mrb[0].mxu0
      %v2654 = vadd.f32 0.0, %v2653
      %v2655 = vpop.f32.mrb[0].mxu0
      %v2656 = vpop.f32.mrb[0].mxu0
      %v2657 = vadd.f32 0.0, %v2656
      %v2658 = vpop.f32.mrb[0].mxu0
      %2659 = vmatprep.mubr.bf16.mxu0 %v1834
      %2660 = vmatmul.mubr.bf16.gmra.mrb[0].mxu0 %v1353
      %v2661 = vpop.f32.mrb[0].mxu0
      %v2662 = vadd.f32 0.0, %v2661
      %v2663 = vpop.f32.mrb[0].mxu0
      %v2664 = vpop.f32.mrb[0].mxu0
      %v2665 = vadd.f32 0.0, %v2664
      %v2666 = vpop.f32.mrb[0].mxu0
      %2667 = vmatprep.mubr.bf16.mxu0 %v1837
      %2668 = vmatmul.mubr.bf16.gmra.mrb[0].mxu0 %v1355
      %v2669 = vpop.f32.mrb[0].mxu0
      %v2670 = vadd.f32 0.0, %v2669
      %v2671 = vpop.f32.mrb[0].mxu0
      %v2672 = vpop.f32.mrb[0].mxu0
      %v2673 = vadd.f32 0.0, %v2672
      %v2674 = vpop.f32.mrb[0].mxu0
      %2675 = vdwg.mxu0
      %v2676 = vmax.f32 %v1878, %v2078
      %v2677 = vmax.f32 %v1881, %v2081
      %v2678 = vmax.f32 %v1886, %v2086
      %v2679 = vmax.f32 %v1889, %v2089
      %v2680 = vmax.f32 %v1894, %v2094
      %v2681 = vmax.f32 %v1897, %v2097
      %v2682 = vmax.f32 %v1902, %v2102
      %v2683 = vmax.f32 %v1905, %v2105
      %v2684 = vmax.f32 %v1910, %v2110
      %v2685 = vmax.f32 %v1913, %v2113
      %v2686 = vmax.f32 %v1918, %v2118
      %v2687 = vmax.f32 %v1921, %v2121
      %v2688 = vmax.f32 %v1926, %v2126
      %v2689 = vmax.f32 %v1929, %v2129
      %v2690 = vmax.f32 %v1934, %v2134
      %v2691 = vmax.f32 %v1937, %v2137
      %v2692 = vmax.f32 %v1942, %v2142
      %v2693 = vmax.f32 %v1945, %v2145
      %v2694 = vmax.f32 %v1950, %v2150
      %v2695 = vmax.f32 %v1953, %v2153
      %v2696 = vmax.f32 %v1958, %v2158
      %v2697 = vmax.f32 %v1961, %v2161
      %v2698 = vmax.f32 %v1966, %v2166
      %v2699 = vmax.f32 %v1969, %v2169
      %v2700 = vmax.f32 %v1974, %v2174
      %v2701 = vmax.f32 %v1977, %v2177
      %v2702 = vmax.f32 %v1982, %v2182
      %v2703 = vmax.f32 %v1985, %v2185
      %v2704 = vmax.f32 %v1990, %v2190
      %v2705 = vmax.f32 %v1993, %v2193
      %v2706 = vmax.f32 %v1998, %v2198
      %v2707 = vmax.f32 %v2001, %v2201
      %v2708 = vmax.f32 %v2006, %v2206
      %v2709 = vmax.f32 %v2009, %v2209
      %v2710 = vmax.f32 %v2014, %v2214
      %v2711 = vmax.f32 %v2017, %v2217
      %v2712 = vmax.f32 %v2022, %v2222
      %v2713 = vmax.f32 %v2025, %v2225
      %v2714 = vmax.f32 %v2030, %v2230
      %v2715 = vmax.f32 %v2033, %v2233
      %v2716 = vmax.f32 %v2038, %v2238
      %v2717 = vmax.f32 %v2041, %v2241
      %v2718 = vmax.f32 %v2046, %v2246
      %v2719 = vmax.f32 %v2049, %v2249
      %v2720 = vmax.f32 %v2054, %v2254
      %v2721 = vmax.f32 %v2057, %v2257
      %v2722 = vmax.f32 %v2062, %v2262
      %v2723 = vmax.f32 %v2065, %v2265
      %v2724 = vmax.f32 %v2070, %v2270
      %v2725 = vmax.f32 %v2073, %v2273
      %v2726 = vmax.f32 %v2278, %v2478
      %v2727 = vmax.f32 %v2281, %v2481
      %v2728 = vmax.f32 %v2286, %v2486
      %v2729 = vmax.f32 %v2289, %v2489
      %v2730 = vmax.f32 %v2294, %v2494
      %v2731 = vmax.f32 %v2297, %v2497
      %v2732 = vmax.f32 %v2302, %v2502
      %v2733 = vmax.f32 %v2305, %v2505
      %v2734 = vmax.f32 %v2310, %v2510
      %v2735 = vmax.f32 %v2313, %v2513
      %v2736 = vmax.f32 %v2318, %v2518
      %v2737 = vmax.f32 %v2321, %v2521
      %v2738 = vmax.f32 %v2326, %v2526
      %v2739 = vmax.f32 %v2329, %v2529
      %v2740 = vmax.f32 %v2334, %v2534
      %v2741 = vmax.f32 %v2337, %v2537
      %v2742 = vmax.f32 %v2342, %v2542
      %v2743 = vmax.f32 %v2345, %v2545
      %v2744 = vmax.f32 %v2350, %v2550
      %v2745 = vmax.f32 %v2353, %v2553
      %v2746 = vmax.f32 %v2358, %v2558
      %v2747 = vmax.f32 %v2361, %v2561
      %v2748 = vmax.f32 %v2366, %v2566
      %v2749 = vmax.f32 %v2369, %v2569
      %v2750 = vmax.f32 %v2374, %v2574
      %v2751 = vmax.f32 %v2377, %v2577
      %v2752 = vmax.f32 %v2382, %v2582
      %v2753 = vmax.f32 %v2385, %v2585
      %v2754 = vmax.f32 %v2390, %v2590
      %v2755 = vmax.f32 %v2393, %v2593
      %v2756 = vmax.f32 %v2398, %v2598
      %v2757 = vmax.f32 %v2401, %v2601
      %v2758 = vmax.f32 %v2406, %v2606
      %v2759 = vmax.f32 %v2409, %v2609
      %v2760 = vmax.f32 %v2414, %v2614
      %v2761 = vmax.f32 %v2417, %v2617
      %v2762 = vmax.f32 %v2422, %v2622
      %v2763 = vmax.f32 %v2425, %v2625
      %v2764 = vmax.f32 %v2430, %v2630
      %v2765 = vmax.f32 %v2433, %v2633
      %v2766 = vmax.f32 %v2438, %v2638
      %v2767 = vmax.f32 %v2441, %v2641
      %v2768 = vmax.f32 %v2446, %v2646
      %v2769 = vmax.f32 %v2449, %v2649
      %v2770 = vmax.f32 %v2454, %v2654
      %v2771 = vmax.f32 %v2457, %v2657
      %v2772 = vmax.f32 %v2462, %v2662
      %v2773 = vmax.f32 %v2465, %v2665
      %v2774 = vmax.f32 %v2470, %v2670
      %v2775 = vmax.f32 %v2473, %v2673
      %v2776 = vmax.f32 %v2676, %v2726
      %v2777 = vmax.f32 %v2677, %v2727
      %v2778 = vmax.f32 %v2678, %v2728
      %v2779 = vmax.f32 %v2679, %v2729
      %v2780 = vmax.f32 %v2680, %v2730
      %v2781 = vmax.f32 %v2681, %v2731
      %v2782 = vmax.f32 %v2682, %v2732
      %v2783 = vmax.f32 %v2683, %v2733
      %v2784 = vmax.f32 %v2684, %v2734
      %v2785 = vmax.f32 %v2685, %v2735
      %v2786 = vmax.f32 %v2686, %v2736
      %v2787 = vmax.f32 %v2687, %v2737
      %v2788 = vmax.f32 %v2688, %v2738
      %v2789 = vmax.f32 %v2689, %v2739
      %v2790 = vmax.f32 %v2690, %v2740
      %v2791 = vmax.f32 %v2691, %v2741
      %v2792 = vmax.f32 %v2692, %v2742
      %v2793 = vmax.f32 %v2693, %v2743
      %v2794 = vmax.f32 %v2694, %v2744
      %v2795 = vmax.f32 %v2695, %v2745
      %v2796 = vmax.f32 %v2696, %v2746
      %v2797 = vmax.f32 %v2697, %v2747
      %v2798 = vmax.f32 %v2698, %v2748
      %v2799 = vmax.f32 %v2699, %v2749
      %v2800 = vmax.f32 %v2700, %v2750
      %v2801 = vmax.f32 %v2701, %v2751
      %v2802 = vmax.f32 %v2702, %v2752
      %v2803 = vmax.f32 %v2703, %v2753
      %v2804 = vmax.f32 %v2704, %v2754
      %v2805 = vmax.f32 %v2705, %v2755
      %v2806 = vmax.f32 %v2706, %v2756
      %v2807 = vmax.f32 %v2707, %v2757
      %v2808 = vmax.f32 %v2708, %v2758
      %v2809 = vmax.f32 %v2709, %v2759
      %v2810 = vmax.f32 %v2710, %v2760
      %v2811 = vmax.f32 %v2711, %v2761
      %v2812 = vmax.f32 %v2712, %v2762
      %v2813 = vmax.f32 %v2713, %v2763
      %v2814 = vmax.f32 %v2714, %v2764
      %v2815 = vmax.f32 %v2715, %v2765
      %v2816 = vmax.f32 %v2716, %v2766
      %v2817 = vmax.f32 %v2717, %v2767
      %v2818 = vmax.f32 %v2718, %v2768
      %v2819 = vmax.f32 %v2719, %v2769
      %v2820 = vmax.f32 %v2720, %v2770
      %v2821 = vmax.f32 %v2721, %v2771
      %v2822 = vmax.f32 %v2722, %v2772
      %v2823 = vmax.f32 %v2723, %v2773
      %v2824 = vmax.f32 %v2724, %v2774
      %v2825 = vmax.f32 %v2725, %v2775
      %v2826 = vmin.f32 %v1878, %v2078
      %v2827 = vmin.f32 %v1881, %v2081
      %v2828 = vmin.f32 %v1886, %v2086
      %v2829 = vmin.f32 %v1889, %v2089
      %v2830 = vmin.f32 %v1894, %v2094
      %v2831 = vmin.f32 %v1897, %v2097
      %v2832 = vmin.f32 %v1902, %v2102
      %v2833 = vmin.f32 %v1905, %v2105
      %v2834 = vmin.f32 %v1910, %v2110
      %v2835 = vmin.f32 %v1913, %v2113
      %v2836 = vmin.f32 %v1918, %v2118
      %v2837 = vmin.f32 %v1921, %v2121
      %v2838 = vmin.f32 %v1926, %v2126
      %v2839 = vmin.f32 %v1929, %v2129
      %v2840 = vmin.f32 %v1934, %v2134
      %v2841 = vmin.f32 %v1937, %v2137
      %v2842 = vmin.f32 %v1942, %v2142
      %v2843 = vmin.f32 %v1945, %v2145
      %v2844 = vmin.f32 %v1950, %v2150
      %v2845 = vmin.f32 %v1953, %v2153
      %v2846 = vmin.f32 %v1958, %v2158
      %v2847 = vmin.f32 %v1961, %v2161
      %v2848 = vmin.f32 %v1966, %v2166
      %v2849 = vmin.f32 %v1969, %v2169
      %v2850 = vmin.f32 %v1974, %v2174
      %v2851 = vmin.f32 %v1977, %v2177
      %v2852 = vmin.f32 %v1982, %v2182
      %v2853 = vmin.f32 %v1985, %v2185
      %v2854 = vmin.f32 %v1990, %v2190
      %v2855 = vmin.f32 %v1993, %v2193
      %v2856 = vmin.f32 %v1998, %v2198
      %v2857 = vmin.f32 %v2001, %v2201
      %v2858 = vmin.f32 %v2006, %v2206
      %v2859 = vmin.f32 %v2009, %v2209
      %v2860 = vmin.f32 %v2014, %v2214
      %v2861 = vmin.f32 %v2017, %v2217
      %v2862 = vmin.f32 %v2022, %v2222
      %v2863 = vmin.f32 %v2025, %v2225
      %v2864 = vmin.f32 %v2030, %v2230
      %v2865 = vmin.f32 %v2033, %v2233
      %v2866 = vmin.f32 %v2038, %v2238
      %v2867 = vmin.f32 %v2041, %v2241
      %v2868 = vmin.f32 %v2046, %v2246
      %v2869 = vmin.f32 %v2049, %v2249
      %v2870 = vmin.f32 %v2054, %v2254
      %v2871 = vmin.f32 %v2057, %v2257
      %v2872 = vmin.f32 %v2062, %v2262
      %v2873 = vmin.f32 %v2065, %v2265
      %v2874 = vmin.f32 %v2070, %v2270
      %v2875 = vmin.f32 %v2073, %v2273
      %v2876 = vmin.f32 %v2278, %v2478
      %v2877 = vmin.f32 %v2281, %v2481
      %v2878 = vmin.f32 %v2286, %v2486
      %v2879 = vmin.f32 %v2289, %v2489
      %v2880 = vmin.f32 %v2294, %v2494
      %v2881 = vmin.f32 %v2297, %v2497
      %v2882 = vmin.f32 %v2302, %v2502
      %v2883 = vmin.f32 %v2305, %v2505
      %v2884 = vmin.f32 %v2310, %v2510
      %v2885 = vmin.f32 %v2313, %v2513
      %v2886 = vmin.f32 %v2318, %v2518
      %v2887 = vmin.f32 %v2321, %v2521
      %v2888 = vmin.f32 %v2326, %v2526
      %v2889 = vmin.f32 %v2329, %v2529
      %v2890 = vmin.f32 %v2334, %v2534
      %v2891 = vmin.f32 %v2337, %v2537
      %v2892 = vmin.f32 %v2342, %v2542
      %v2893 = vmin.f32 %v2345, %v2545
      %v2894 = vmin.f32 %v2350, %v2550
      %v2895 = vmin.f32 %v2353, %v2553
      %v2896 = vmin.f32 %v2358, %v2558
      %v2897 = vmin.f32 %v2361, %v2561
      %v2898 = vmin.f32 %v2366, %v2566
      %v2899 = vmin.f32 %v2369, %v2569
      %v2900 = vmin.f32 %v2374, %v2574
      %v2901 = vmin.f32 %v2377, %v2577
      %v2902 = vmin.f32 %v2382, %v2582
      %v2903 = vmin.f32 %v2385, %v2585
      %v2904 = vmin.f32 %v2390, %v2590
      %v2905 = vmin.f32 %v2393, %v2593
      %v2906 = vmin.f32 %v2398, %v2598
      %v2907 = vmin.f32 %v2401, %v2601
      %v2908 = vmin.f32 %v2406, %v2606
      %v2909 = vmin.f32 %v2409, %v2609
      %v2910 = vmin.f32 %v2414, %v2614
      %v2911 = vmin.f32 %v2417, %v2617
      %v2912 = vmin.f32 %v2422, %v2622
      %v2913 = vmin.f32 %v2425, %v2625
      %v2914 = vmin.f32 %v2430, %v2630
      %v2915 = vmin.f32 %v2433, %v2633
      %v2916 = vmin.f32 %v2438, %v2638
      %v2917 = vmin.f32 %v2441, %v2641
      %v2918 = vmin.f32 %v2446, %v2646
      %v2919 = vmin.f32 %v2449, %v2649
      %v2920 = vmin.f32 %v2454, %v2654
      %v2921 = vmin.f32 %v2457, %v2657
      %v2922 = vmin.f32 %v2462, %v2662
      %v2923 = vmin.f32 %v2465, %v2665
      %v2924 = vmin.f32 %v2470, %v2670
      %v2925 = vmin.f32 %v2473, %v2673
      %v2926 = vmin.f32 %v2826, %v2876
      %v2927 = vmin.f32 %v2827, %v2877
      %v2928 = vmin.f32 %v2828, %v2878
      %v2929 = vmin.f32 %v2829, %v2879
      %v2930 = vmin.f32 %v2830, %v2880
      %v2931 = vmin.f32 %v2831, %v2881
      %v2932 = vmin.f32 %v2832, %v2882
      %v2933 = vmin.f32 %v2833, %v2883
      %v2934 = vmin.f32 %v2834, %v2884
      %v2935 = vmin.f32 %v2835, %v2885
      %v2936 = vmin.f32 %v2836, %v2886
      %v2937 = vmin.f32 %v2837, %v2887
      %v2938 = vmin.f32 %v2838, %v2888
      %v2939 = vmin.f32 %v2839, %v2889
      %v2940 = vmin.f32 %v2840, %v2890
      %v2941 = vmin.f32 %v2841, %v2891
      %v2942 = vmin.f32 %v2842, %v2892
      %v2943 = vmin.f32 %v2843, %v2893
      %v2944 = vmin.f32 %v2844, %v2894
      %v2945 = vmin.f32 %v2845, %v2895
      %v2946 = vmin.f32 %v2846, %v2896
      %v2947 = vmin.f32 %v2847, %v2897
      %v2948 = vmin.f32 %v2848, %v2898
      %v2949 = vmin.f32 %v2849, %v2899
      %v2950 = vmin.f32 %v2850, %v2900
      %v2951 = vmin.f32 %v2851, %v2901
      %v2952 = vmin.f32 %v2852, %v2902
      %v2953 = vmin.f32 %v2853, %v2903
      %v2954 = vmin.f32 %v2854, %v2904
      %v2955 = vmin.f32 %v2855, %v2905
      %v2956 = vmin.f32 %v2856, %v2906
      %v2957 = vmin.f32 %v2857, %v2907
      %v2958 = vmin.f32 %v2858, %v2908
      %v2959 = vmin.f32 %v2859, %v2909
      %v2960 = vmin.f32 %v2860, %v2910
      %v2961 = vmin.f32 %v2861, %v2911
      %v2962 = vmin.f32 %v2862, %v2912
      %v2963 = vmin.f32 %v2863, %v2913
      %v2964 = vmin.f32 %v2864, %v2914
      %v2965 = vmin.f32 %v2865, %v2915
      %v2966 = vmin.f32 %v2866, %v2916
      %v2967 = vmin.f32 %v2867, %v2917
      %v2968 = vmin.f32 %v2868, %v2918
      %v2969 = vmin.f32 %v2869, %v2919
      %v2970 = vmin.f32 %v2870, %v2920
      %v2971 = vmin.f32 %v2871, %v2921
      %v2972 = vmin.f32 %v2872, %v2922
      %v2973 = vmin.f32 %v2873, %v2923
      %v2974 = vmin.f32 %v2874, %v2924
      %v2975 = vmin.f32 %v2875, %v2925
      %v2976 = vld [vmem:[%s315] sm:$0x1]
      %vm2977 = vcmp.ge.f32.partialorder %v2976, 0.0
      %v2978 = vsel %vm2977, 1, 0
      %v2979 = vlaneseq
      %v2980 = vshrl.u32 %v2979, 7
      %v2981 = vsub.s32 0, %v2980
      %v2982 = vrot.slane %v2978, %v2981
      %vm2983 = vcmp.eq.s32.totalorder %v2982, 1
      %v2984 = vsel %vm2983, %v2776, %v2926
      %v2985 = vsel %vm2983, %v2777, %v2927
      %v2986 = vsel %vm2983, %v2778, %v2928
      %v2987 = vsel %vm2983, %v2779, %v2929
      %v2988 = vsel %vm2983, %v2780, %v2930
      %v2989 = vsel %vm2983, %v2781, %v2931
      %v2990 = vsel %vm2983, %v2782, %v2932
      %v2991 = vsel %vm2983, %v2783, %v2933
      %v2992 = vsel %vm2983, %v2784, %v2934
      %v2993 = vsel %vm2983, %v2785, %v2935
      %v2994 = vsel %vm2983, %v2786, %v2936
      %v2995 = vsel %vm2983, %v2787, %v2937
      %v2996 = vsel %vm2983, %v2788, %v2938
      %v2997 = vsel %vm2983, %v2789, %v2939
      %v2998 = vsel %vm2983, %v2790, %v2940
      %v2999 = vsel %vm2983, %v2791, %v2941
      %v3000 = vsel %vm2983, %v2792, %v2942
      %v3001 = vsel %vm2983, %v2793, %v2943
      %v3002 = vsel %vm2983, %v2794, %v2944
      %v3003 = vsel %vm2983, %v2795, %v2945
      %v3004 = vsel %vm2983, %v2796, %v2946
      %v3005 = vsel %vm2983, %v2797, %v2947
      %v3006 = vsel %vm2983, %v2798, %v2948
      %v3007 = vsel %vm2983, %v2799, %v2949
      %v3008 = vsel %vm2983, %v2800, %v2950
      %v3009 = vsel %vm2983, %v2801, %v2951
      %v3010 = vsel %vm2983, %v2802, %v2952
      %v3011 = vsel %vm2983, %v2803, %v2953
      %v3012 = vsel %vm2983, %v2804, %v2954
      %v3013 = vsel %vm2983, %v2805, %v2955
      %v3014 = vsel %vm2983, %v2806, %v2956
      %v3015 = vsel %vm2983, %v2807, %v2957
      %v3016 = vsel %vm2983, %v2808, %v2958
      %v3017 = vsel %vm2983, %v2809, %v2959
      %v3018 = vsel %vm2983, %v2810, %v2960
      %v3019 = vsel %vm2983, %v2811, %v2961
      %v3020 = vsel %vm2983, %v2812, %v2962
      %v3021 = vsel %vm2983, %v2813, %v2963
      %v3022 = vsel %vm2983, %v2814, %v2964
      %v3023 = vsel %vm2983, %v2815, %v2965
      %v3024 = vsel %vm2983, %v2816, %v2966
      %v3025 = vsel %vm2983, %v2817, %v2967
      %v3026 = vsel %vm2983, %v2818, %v2968
      %v3027 = vsel %vm2983, %v2819, %v2969
      %v3028 = vsel %vm2983, %v2820, %v2970
      %v3029 = vsel %vm2983, %v2821, %v2971
      %v3030 = vsel %vm2983, %v2822, %v2972
      %v3031 = vsel %vm2983, %v2823, %v2973
      %v3032 = vsel %vm2983, %v2824, %v2974
      %v3033 = vsel %vm2983, %v2825, %v2975
      %v3034 = vld [vmem:[%s312] sm:$0x1]
      %v3036 = vlaneseq
      %v3037 = vshrl.u32 %v3036, 7
      %v3038 = vsub.s32 0, %v3037
      %v3039 = vrot.slane %v3034, %v3038
      %v3041 = vadd.f32 %v2984, %v3039
      %v3042 = vadd.f32 %v2985, %v3039
      %v3043 = vadd.f32 %v2986, %v3039
      %v3044 = vadd.f32 %v2987, %v3039
      %v3045 = vadd.f32 %v2988, %v3039
      %v3046 = vadd.f32 %v2989, %v3039
      %v3047 = vadd.f32 %v2990, %v3039
      %v3048 = vadd.f32 %v2991, %v3039
      %v3049 = vadd.f32 %v2992, %v3039
      %v3050 = vadd.f32 %v2993, %v3039
      %v3051 = vadd.f32 %v2994, %v3039
      %v3052 = vadd.f32 %v2995, %v3039
      %v3053 = vadd.f32 %v2996, %v3039
      %v3054 = vadd.f32 %v2997, %v3039
      %v3055 = vadd.f32 %v2998, %v3039
      %v3056 = vadd.f32 %v2999, %v3039
      %v3057 = vadd.f32 %v3000, %v3039
      %v3058 = vadd.f32 %v3001, %v3039
      %v3059 = vadd.f32 %v3002, %v3039
      %v3060 = vadd.f32 %v3003, %v3039
      %v3061 = vadd.f32 %v3004, %v3039
      %v3062 = vadd.f32 %v3005, %v3039
      %v3063 = vadd.f32 %v3006, %v3039
      %v3064 = vadd.f32 %v3007, %v3039
      %v3065 = vadd.f32 %v3008, %v3039
      %v3066 = vadd.f32 %v3009, %v3039
      %v3067 = vadd.f32 %v3010, %v3039
      %v3068 = vadd.f32 %v3011, %v3039
      %v3069 = vadd.f32 %v3012, %v3039
      %v3070 = vadd.f32 %v3013, %v3039
      %v3071 = vadd.f32 %v3014, %v3039
      %v3072 = vadd.f32 %v3015, %v3039
      %v3073 = vadd.f32 %v3016, %v3039
      %v3074 = vadd.f32 %v3017, %v3039
      %v3075 = vadd.f32 %v3018, %v3039
      %v3076 = vadd.f32 %v3019, %v3039
      %v3077 = vadd.f32 %v3020, %v3039
      %v3078 = vadd.f32 %v3021, %v3039
      %v3079 = vadd.f32 %v3022, %v3039
      %v3080 = vadd.f32 %v3023, %v3039
      %v3081 = vadd.f32 %v3024, %v3039
      %v3082 = vadd.f32 %v3025, %v3039
      %v3083 = vadd.f32 %v3026, %v3039
      %v3084 = vadd.f32 %v3027, %v3039
      %v3085 = vadd.f32 %v3028, %v3039
      %v3086 = vadd.f32 %v3029, %v3039
      %v3087 = vadd.f32 %v3030, %v3039
      %v3088 = vadd.f32 %v3031, %v3039
      %v3089 = vadd.f32 %v3032, %v3039
      %v3090 = vadd.f32 %v3033, %v3039
      %v3091 = vmax.f32 %v3041, 0.0
      %v3092 = vmax.f32 %v3042, 0.0
      %v3093 = vmax.f32 %v3043, 0.0
      %v3094 = vmax.f32 %v3044, 0.0
      %v3095 = vmax.f32 %v3045, 0.0
      %v3096 = vmax.f32 %v3046, 0.0
      %v3097 = vmax.f32 %v3047, 0.0
      %v3098 = vmax.f32 %v3048, 0.0
      %v3099 = vmax.f32 %v3049, 0.0
      %v3100 = vmax.f32 %v3050, 0.0
      %v3101 = vmax.f32 %v3051, 0.0
      %v3102 = vmax.f32 %v3052, 0.0
      %v3103 = vmax.f32 %v3053, 0.0
      %v3104 = vmax.f32 %v3054, 0.0
      %v3105 = vmax.f32 %v3055, 0.0
      %v3106 = vmax.f32 %v3056, 0.0
      %v3107 = vmax.f32 %v3057, 0.0
      %v3108 = vmax.f32 %v3058, 0.0
      %v3109 = vmax.f32 %v3059, 0.0
      %v3110 = vmax.f32 %v3060, 0.0
      %v3111 = vmax.f32 %v3061, 0.0
      %v3112 = vmax.f32 %v3062, 0.0
      %v3113 = vmax.f32 %v3063, 0.0
      %v3114 = vmax.f32 %v3064, 0.0
      %v3115 = vmax.f32 %v3065, 0.0
      %v3116 = vmax.f32 %v3066, 0.0
      %v3117 = vmax.f32 %v3067, 0.0
      %v3118 = vmax.f32 %v3068, 0.0
      %v3119 = vmax.f32 %v3069, 0.0
      %v3120 = vmax.f32 %v3070, 0.0
      %v3121 = vmax.f32 %v3071, 0.0
      %v3122 = vmax.f32 %v3072, 0.0
      %v3123 = vmax.f32 %v3073, 0.0
      %v3124 = vmax.f32 %v3074, 0.0
      %v3125 = vmax.f32 %v3075, 0.0
      %v3126 = vmax.f32 %v3076, 0.0
      %v3127 = vmax.f32 %v3077, 0.0
      %v3128 = vmax.f32 %v3078, 0.0
      %v3129 = vmax.f32 %v3079, 0.0
      %v3130 = vmax.f32 %v3080, 0.0
      %v3131 = vmax.f32 %v3081, 0.0
      %v3132 = vmax.f32 %v3082, 0.0
      %v3133 = vmax.f32 %v3083, 0.0
      %v3134 = vmax.f32 %v3084, 0.0
      %v3135 = vmax.f32 %v3085, 0.0
      %v3136 = vmax.f32 %v3086, 0.0
      %v3137 = vmax.f32 %v3087, 0.0
      %v3138 = vmax.f32 %v3088, 0.0
      %v3139 = vmax.f32 %v3089, 0.0
      %v3140 = vmax.f32 %v3090, 0.0
      %v3142 = vlaneseq
      %v3143 = vshrl.u32 %v3142, 7
      %v3144 = vsub.s32 0, %v3143
      %v3145 = vrot.slane %v2976, %v3144
      %v3147 = vmul.f32 %v3091, %v3145
      %v3148 = vmul.f32 %v3092, %v3145
      %v3149 = vmul.f32 %v3093, %v3145
      %v3150 = vmul.f32 %v3094, %v3145
      %v3151 = vmul.f32 %v3095, %v3145
      %v3152 = vmul.f32 %v3096, %v3145
      %v3153 = vmul.f32 %v3097, %v3145
      %v3154 = vmul.f32 %v3098, %v3145
      %v3155 = vmul.f32 %v3099, %v3145
      %v3156 = vmul.f32 %v3100, %v3145
      %v3157 = vmul.f32 %v3101, %v3145
      %v3158 = vmul.f32 %v3102, %v3145
      %v3159 = vmul.f32 %v3103, %v3145
      %v3160 = vmul.f32 %v3104, %v3145
      %v3161 = vmul.f32 %v3105, %v3145
      %v3162 = vmul.f32 %v3106, %v3145
      %v3163 = vmul.f32 %v3107, %v3145
      %v3164 = vmul.f32 %v3108, %v3145
      %v3165 = vmul.f32 %v3109, %v3145
      %v3166 = vmul.f32 %v3110, %v3145
      %v3167 = vmul.f32 %v3111, %v3145
      %v3168 = vmul.f32 %v3112, %v3145
      %v3169 = vmul.f32 %v3113, %v3145
      %v3170 = vmul.f32 %v3114, %v3145
      %v3171 = vmul.f32 %v3115, %v3145
      %v3172 = vmul.f32 %v3116, %v3145
      %v3173 = vmul.f32 %v3117, %v3145
      %v3174 = vmul.f32 %v3118, %v3145
      %v3175 = vmul.f32 %v3119, %v3145
      %v3176 = vmul.f32 %v3120, %v3145
      %v3177 = vmul.f32 %v3121, %v3145
      %v3178 = vmul.f32 %v3122, %v3145
      %v3179 = vmul.f32 %v3123, %v3145
      %v3180 = vmul.f32 %v3124, %v3145
      %v3181 = vmul.f32 %v3125, %v3145
      %v3182 = vmul.f32 %v3126, %v3145
      %v3183 = vmul.f32 %v3127, %v3145
      %v3184 = vmul.f32 %v3128, %v3145
      %v3185 = vmul.f32 %v3129, %v3145
      %v3186 = vmul.f32 %v3130, %v3145
      %v3187 = vmul.f32 %v3131, %v3145
      %v3188 = vmul.f32 %v3132, %v3145
      %v3189 = vmul.f32 %v3133, %v3145
      %v3190 = vmul.f32 %v3134, %v3145
      %v3191 = vmul.f32 %v3135, %v3145
      %v3192 = vmul.f32 %v3136, %v3145
      %v3193 = vmul.f32 %v3137, %v3145
      %v3194 = vmul.f32 %v3138, %v3145
      %v3195 = vmul.f32 %v3139, %v3145
      %v3196 = vmul.f32 %v3140, %v3145
      %v3197 = vld [vmem:[%s318] sm:$0x1]
      %v3199 = vlaneseq
      %v3200 = vshrl.u32 %v3199, 7
      %v3201 = vsub.s32 0, %v3200
      %v3202 = vrot.slane %v3197, %v3201
      %v3204 = vadd.f32 %v3147, %v3202
      %v3205 = vadd.f32 %v3148, %v3202
      %v3206 = vadd.f32 %v3149, %v3202
      %v3207 = vadd.f32 %v3150, %v3202
      %v3208 = vadd.f32 %v3151, %v3202
      %v3209 = vadd.f32 %v3152, %v3202
      %v3210 = vadd.f32 %v3153, %v3202
      %v3211 = vadd.f32 %v3154, %v3202
      %v3212 = vadd.f32 %v3155, %v3202
      %v3213 = vadd.f32 %v3156, %v3202
      %v3214 = vadd.f32 %v3157, %v3202
      %v3215 = vadd.f32 %v3158, %v3202
      %v3216 = vadd.f32 %v3159, %v3202
      %v3217 = vadd.f32 %v3160, %v3202
      %v3218 = vadd.f32 %v3161, %v3202
      %v3219 = vadd.f32 %v3162, %v3202
      %v3220 = vadd.f32 %v3163, %v3202
      %v3221 = vadd.f32 %v3164, %v3202
      %v3222 = vadd.f32 %v3165, %v3202
      %v3223 = vadd.f32 %v3166, %v3202
      %v3224 = vadd.f32 %v3167, %v3202
      %v3225 = vadd.f32 %v3168, %v3202
      %v3226 = vadd.f32 %v3169, %v3202
      %v3227 = vadd.f32 %v3170, %v3202
      %v3228 = vadd.f32 %v3171, %v3202
      %v3229 = vadd.f32 %v3172, %v3202
      %v3230 = vadd.f32 %v3173, %v3202
      %v3231 = vadd.f32 %v3174, %v3202
      %v3232 = vadd.f32 %v3175, %v3202
      %v3233 = vadd.f32 %v3176, %v3202
      %v3234 = vadd.f32 %v3177, %v3202
      %v3235 = vadd.f32 %v3178, %v3202
      %v3236 = vadd.f32 %v3179, %v3202
      %v3237 = vadd.f32 %v3180, %v3202
      %v3238 = vadd.f32 %v3181, %v3202
      %v3239 = vadd.f32 %v3182, %v3202
      %v3240 = vadd.f32 %v3183, %v3202
      %v3241 = vadd.f32 %v3184, %v3202
      %v3242 = vadd.f32 %v3185, %v3202
      %v3243 = vadd.f32 %v3186, %v3202
      %v3244 = vadd.f32 %v3187, %v3202
      %v3245 = vadd.f32 %v3188, %v3202
      %v3246 = vadd.f32 %v3189, %v3202
      %v3247 = vadd.f32 %v3190, %v3202
      %v3248 = vadd.f32 %v3191, %v3202
      %v3249 = vadd.f32 %v3192, %v3202
      %v3250 = vadd.f32 %v3193, %v3202
      %v3251 = vadd.f32 %v3194, %v3202
      %v3252 = vadd.f32 %v3195, %v3202
      %v3253 = vadd.f32 %v3196, %v3202
      %v3254 = vpack.c.bf16 %v3205, %v3204
      %v3255 = vpack.c.bf16 %v3207, %v3206
      %v3256 = vpack.c.bf16 %v3209, %v3208
      %v3257 = vpack.c.bf16 %v3211, %v3210
      %v3258 = vpack.c.bf16 %v3213, %v3212
      %v3259 = vpack.c.bf16 %v3215, %v3214
      %v3260 = vpack.c.bf16 %v3217, %v3216
      %v3261 = vpack.c.bf16 %v3219, %v3218
      %v3262 = vpack.c.bf16 %v3221, %v3220
      %v3263 = vpack.c.bf16 %v3223, %v3222
      %v3264 = vpack.c.bf16 %v3225, %v3224
      %v3265 = vpack.c.bf16 %v3227, %v3226
      %v3266 = vpack.c.bf16 %v3229, %v3228
      %v3267 = vpack.c.bf16 %v3231, %v3230
      %v3268 = vpack.c.bf16 %v3233, %v3232
      %v3269 = vpack.c.bf16 %v3235, %v3234
      %v3270 = vpack.c.bf16 %v3237, %v3236
      %v3271 = vpack.c.bf16 %v3239, %v3238
      %v3272 = vpack.c.bf16 %v3241, %v3240
      %v3273 = vpack.c.bf16 %v3243, %v3242
      %v3274 = vpack.c.bf16 %v3245, %v3244
      %v3275 = vpack.c.bf16 %v3247, %v3246
      %v3276 = vpack.c.bf16 %v3249, %v3248
      %v3277 = vpack.c.bf16 %v3251, %v3250
      %v3278 = vpack.c.bf16 %v3253, %v3252
      %v3304 = vunpack.c.l.b16 %v3254
      %v3305 = vunpack.c.h.b16 %v3254
      %v3306 = vunpack.c.l.b16 %v3255
      %v3307 = vunpack.c.h.b16 %v3255
      %v3308 = vunpack.c.l.b16 %v3256
      %v3309 = vunpack.c.h.b16 %v3256
      %v3310 = vunpack.c.l.b16 %v3257
      %v3311 = vunpack.c.h.b16 %v3257
      %v3312 = vunpack.c.l.b16 %v3258
      %v3313 = vunpack.c.h.b16 %v3258
      %v3314 = vunpack.c.l.b16 %v3259
      %v3315 = vunpack.c.h.b16 %v3259
      %v3316 = vunpack.c.l.b16 %v3260
      %v3317 = vunpack.c.h.b16 %v3260
      %v3318 = vunpack.c.l.b16 %v3261
      %v3319 = vunpack.c.h.b16 %v3261
      %v3320 = vunpack.c.l.b16 %v3262
      %v3321 = vunpack.c.h.b16 %v3262
      %v3322 = vunpack.c.l.b16 %v3263
      %v3323 = vunpack.c.h.b16 %v3263
      %v3324 = vunpack.c.l.b16 %v3264
      %v3325 = vunpack.c.h.b16 %v3264
      %v3326 = vunpack.c.l.b16 %v3265
      %v3327 = vunpack.c.h.b16 %v3265
      %v3328 = vunpack.c.l.b16 %v3266
      %v3329 = vunpack.c.h.b16 %v3266
      %v3330 = vunpack.c.l.b16 %v3267
      %v3331 = vunpack.c.h.b16 %v3267
      %v3332 = vunpack.c.l.b16 %v3268
      %v3333 = vunpack.c.h.b16 %v3268
      %v3334 = vunpack.c.l.b16 %v3269
      %v3335 = vunpack.c.h.b16 %v3269
      %v3336 = vunpack.c.l.b16 %v3270
      %v3337 = vunpack.c.h.b16 %v3270
      %v3338 = vunpack.c.l.b16 %v3271
      %v3339 = vunpack.c.h.b16 %v3271
      %v3340 = vunpack.c.l.b16 %v3272
      %v3341 = vunpack.c.h.b16 %v3272
      %v3342 = vunpack.c.l.b16 %v3273
      %v3343 = vunpack.c.h.b16 %v3273
      %v3344 = vunpack.c.l.b16 %v3274
      %v3345 = vunpack.c.h.b16 %v3274
      %v3346 = vunpack.c.l.b16 %v3275
      %v3347 = vunpack.c.h.b16 %v3275
      %v3348 = vunpack.c.l.b16 %v3276
      %v3349 = vunpack.c.h.b16 %v3276
      %v3350 = vunpack.c.l.b16 %v3277
      %v3351 = vunpack.c.h.b16 %v3277
      %v3352 = vunpack.c.l.b16 %v3278
      %v3353 = vunpack.c.h.b16 %v3278
      %v3354 = vpack.c.b16 %v3304, %v3304
      %v3355 = vpack.c.b16 %v3305, %v3305
      %v3356 = vpack.c.b16 %v3306, %v3306
      %v3357 = vpack.c.b16 %v3307, %v3307
      %v3358 = vpack.c.b16 %v3308, %v3308
      %v3359 = vpack.c.b16 %v3309, %v3309
      %v3360 = vpack.c.b16 %v3310, %v3310
      %v3361 = vpack.c.b16 %v3311, %v3311
      %v3362 = vpack.c.b16 %v3312, %v3312
      %v3363 = vpack.c.b16 %v3313, %v3313
      %v3364 = vpack.c.b16 %v3314, %v3314
      %v3365 = vpack.c.b16 %v3315, %v3315
      %v3366 = vpack.c.b16 %v3316, %v3316
      %v3367 = vpack.c.b16 %v3317, %v3317
      %v3368 = vpack.c.b16 %v3318, %v3318
      %v3369 = vpack.c.b16 %v3319, %v3319
      %v3370 = vpack.c.b16 %v3320, %v3320
      %v3371 = vpack.c.b16 %v3321, %v3321
      %v3372 = vpack.c.b16 %v3322, %v3322
      %v3373 = vpack.c.b16 %v3323, %v3323
      %v3374 = vpack.c.b16 %v3324, %v3324
      %v3375 = vpack.c.b16 %v3325, %v3325
      %v3376 = vpack.c.b16 %v3326, %v3326
      %v3377 = vpack.c.b16 %v3327, %v3327
      %v3378 = vpack.c.b16 %v3328, %v3328
      %v3379 = vpack.c.b16 %v3329, %v3329
      %v3380 = vpack.c.b16 %v3330, %v3330
      %v3381 = vpack.c.b16 %v3331, %v3331
      %v3382 = vpack.c.b16 %v3332, %v3332
      %v3383 = vpack.c.b16 %v3333, %v3333
      %v3384 = vpack.c.b16 %v3334, %v3334
      %v3385 = vpack.c.b16 %v3335, %v3335
      %v3386 = vpack.c.b16 %v3336, %v3336
      %v3387 = vpack.c.b16 %v3337, %v3337
      %v3388 = vpack.c.b16 %v3338, %v3338
      %v3389 = vpack.c.b16 %v3339, %v3339
      %v3390 = vpack.c.b16 %v3340, %v3340
      %v3391 = vpack.c.b16 %v3341, %v3341
      %v3392 = vpack.c.b16 %v3342, %v3342
      %v3393 = vpack.c.b16 %v3343, %v3343
      %v3394 = vpack.c.b16 %v3344, %v3344
      %v3395 = vpack.c.b16 %v3345, %v3345
      %v3396 = vpack.c.b16 %v3346, %v3346
      %v3397 = vpack.c.b16 %v3347, %v3347
      %v3398 = vpack.c.b16 %v3348, %v3348
      %v3399 = vpack.c.b16 %v3349, %v3349
      %v3400 = vpack.c.b16 %v3350, %v3350
      %v3401 = vpack.c.b16 %v3351, %v3351
      %v3402 = vpack.c.b16 %v3352, %v3352
      %v3403 = vpack.c.b16 %v3353, %v3353
      %vm3454 = vcmask 257024
      %3455 = vst.msk [vmem:[%s327] sm:$0xf] %vm3454, %v3354
      %3456 = vst.msk [vmem:[%s327 + $0x4] sm:$0xf] %vm3454, %v3355
      %3457 = vst.msk [vmem:[%s327 + $0x8] sm:$0xf] %vm3454, %v3356
      %3458 = vst.msk [vmem:[%s327 + $0xc] sm:$0xf] %vm3454, %v3357
      %3459 = vst.msk [vmem:[%s327 + $0x10] sm:$0xf] %vm3454, %v3358
      %3460 = vst.msk [vmem:[%s327 + $0x14] sm:$0xf] %vm3454, %v3359
      %3461 = vst.msk [vmem:[%s327 + $0x18] sm:$0xf] %vm3454, %v3360
      %3462 = vst.msk [vmem:[%s327 + $0x1c] sm:$0xf] %vm3454, %v3361
      %3463 = vst.msk [vmem:[%s327 + $0x20] sm:$0xf] %vm3454, %v3362
      %3464 = vst.msk [vmem:[%s327 + $0x24] sm:$0xf] %vm3454, %v3363
      %3465 = vst.msk [vmem:[%s327 + $0x28] sm:$0xf] %vm3454, %v3364
      %3466 = vst.msk [vmem:[%s327 + $0x2c] sm:$0xf] %vm3454, %v3365
      %3467 = vst.msk [vmem:[%s327 + $0x30] sm:$0xf] %vm3454, %v3366
      %3468 = vst.msk [vmem:[%s327 + $0x34] sm:$0xf] %vm3454, %v3367
      %3469 = vst.msk [vmem:[%s327 + $0x38] sm:$0xf] %vm3454, %v3368
      %3470 = vst.msk [vmem:[%s327 + $0x3c] sm:$0xf] %vm3454, %v3369
      %3471 = vst.msk [vmem:[%s327 + $0x40] sm:$0xf] %vm3454, %v3370
      %3472 = vst.msk [vmem:[%s327 + $0x44] sm:$0xf] %vm3454, %v3371
      %3473 = vst.msk [vmem:[%s327 + $0x48] sm:$0xf] %vm3454, %v3372
      %3474 = vst.msk [vmem:[%s327 + $0x4c] sm:$0xf] %vm3454, %v3373
      %3475 = vst.msk [vmem:[%s327 + $0x50] sm:$0xf] %vm3454, %v3374
      %3476 = vst.msk [vmem:[%s327 + $0x54] sm:$0xf] %vm3454, %v3375
      %3477 = vst.msk [vmem:[%s327 + $0x58] sm:$0xf] %vm3454, %v3376
      %3478 = vst.msk [vmem:[%s327 + $0x5c] sm:$0xf] %vm3454, %v3377
      %3479 = vst.msk [vmem:[%s327 + $0x60] sm:$0xf] %vm3454, %v3378
      %3480 = vst.msk [vmem:[%s327 + $0x64] sm:$0xf] %vm3454, %v3379
      %3481 = vst.msk [vmem:[%s327 + $0x68] sm:$0xf] %vm3454, %v3380
      %3482 = vst.msk [vmem:[%s327 + $0x6c] sm:$0xf] %vm3454, %v3381
      %3483 = vst.msk [vmem:[%s327 + $0x70] sm:$0xf] %vm3454, %v3382
      %3484 = vst.msk [vmem:[%s327 + $0x74] sm:$0xf] %vm3454, %v3383
      %3485 = vst.msk [vmem:[%s327 + $0x78] sm:$0xf] %vm3454, %v3384
      %3486 = vst.msk [vmem:[%s327 + $0x7c] sm:$0xf] %vm3454, %v3385
      %3487 = vst.msk [vmem:[%s327 + $0x80] sm:$0xf] %vm3454, %v3386
      %3488 = vst.msk [vmem:[%s327 + $0x84] sm:$0xf] %vm3454, %v3387
      %3489 = vst.msk [vmem:[%s327 + $0x88] sm:$0xf] %vm3454, %v3388
      %3490 = vst.msk [vmem:[%s327 + $0x8c] sm:$0xf] %vm3454, %v3389
      %3491 = vst.msk [vmem:[%s327 + $0x90] sm:$0xf] %vm3454, %v3390
      %3492 = vst.msk [vmem:[%s327 + $0x94] sm:$0xf] %vm3454, %v3391
      %3493 = vst.msk [vmem:[%s327 + $0x98] sm:$0xf] %vm3454, %v3392
      %3494 = vst.msk [vmem:[%s327 + $0x9c] sm:$0xf] %vm3454, %v3393
      %3495 = vst.msk [vmem:[%s327 + $0xa0] sm:$0xf] %vm3454, %v3394
      %3496 = vst.msk [vmem:[%s327 + $0xa4] sm:$0xf] %vm3454, %v3395
      %3497 = vst.msk [vmem:[%s327 + $0xa8] sm:$0xf] %vm3454, %v3396
      %3498 = vst.msk [vmem:[%s327 + $0xac] sm:$0xf] %vm3454, %v3397
      %3499 = vst.msk [vmem:[%s327 + $0xb0] sm:$0xf] %vm3454, %v3398
      %3500 = vst.msk [vmem:[%s327 + $0xb4] sm:$0xf] %vm3454, %v3399
      %3501 = vst.msk [vmem:[%s327 + $0xb8] sm:$0xf] %vm3454, %v3400
      %3502 = vst.msk [vmem:[%s327 + $0xbc] sm:$0xf] %vm3454, %v3401
      %3503 = vst.msk [vmem:[%s327 + $0xc0] sm:$0xf] %vm3454, %v3402
      %3504 = vst.msk [vmem:[%s327 + $0xc4] sm:$0xf] %vm3454, %v3403
      %s3505 = smul.u32 50, %s21
      %p3506 = scmp.lt.s32.totalorder %s20, 2
      %s3507 = scalar_select %p3506, %s20, 2
      %p3508 = scmp.lt.s32.totalorder %s3505, 49
      %s3509 = scalar_select %p3508, %s3505, 49
      %s3510 = smul.addr %s3507, 50
      %s3511 = sadd.s32 %s3509, %s3510
      %s3512 = smul.addr %s3511, 4
      %s3513 = scalar_lea.vmem %s5, %s3512
      // Predicated region
      $region41: #{discriminator_forward.4} parent=39 // pred_check
        %p3514 = pneg %p180
      $region42: #{discriminator_forward.4} parent=39 // pred_check_branch
        %3516 = sbr.rel (%p3514) target = $region44
      $region43: #{discriminator_forward.4} parent=39 // pred_region
        %s3517 = smul.u32 50, %s21
      $region44: #{discriminator_forward.4} parent=39 // pred_fallthru
        _
    $region40: #{discriminator_forward.4} parent=5 // pred_fallthru
      _
    %p3518 = scmp.le.s32.totalorder 2, %s11
    // Predicated region
    $region45: #{discriminator_forward.4} parent=5 // pred_check
      %p3519 = pneg %p3518
    $region46: #{discriminator_forward.4} parent=5 // pred_check_branch
      %3521 = sbr.rel (%p3519) target = $region48
    $region47: #{discriminator_forward.4} parent=5 // pred_region
      %s3522 = ssub.s32 %s11, 2
      // Predicated region
      $region49: #{discriminator_forward.4} parent=47 // pred_check
        %p3523 = pneg %p186
      $region50: #{discriminator_forward.4} parent=47 // pred_check_branch
        %3525 = sbr.rel (%p3523) target = $region52
      $region51: #{discriminator_forward.4} parent=47 // pred_region
        %s3526 = smul.u32 50, %s23
        %p3527 = scmp.lt.s32.totalorder %s22, 2
        %s3528 = scalar_select %p3527, %s22, 2
        %p3529 = scmp.lt.s32.totalorder %s3526, 49
        %s3530 = scalar_select %p3529, %s3526, 49
        %s3531 = smul.addr %s3528, 50
        %s3532 = sadd.s32 %s3530, %s3531
        %s3533 = smul.addr %s3532, 4
        %s3534 = scalar_lea.vmem %s5, %s3533
      $region52: #{discriminator_forward.4} parent=47 // pred_fallthru
        _
    $region48: #{discriminator_forward.4} parent=5 // pred_fallthru
      _
  $region6: #{discriminator_forward.4} parent=0 // loop_footer
    %s15 = sadd.s32 1, %s11
  $region7: #{discriminator_forward.4} parent=0 // loop_footer_branch
    %10 = sbr.rel target = $region3
  $region8: #{discriminator_forward.4} parent=0 // loop_exit
    _

// kernel: tile.7
$region0: #{tile.7}
  %s0 = inlined_call_operand.vmem [shape: f32[3,2,1,1,36,48], index: 0, kind: input, shape index: {}]
  %s1 = inlined_call_operand.vmem [shape: f32[3,72,48], index: 1, kind: output, shape index: {}]
  $region1: #{tile.7} parent=0
    #allocation0 [shape = 'u8[589824]{0}', space=vmem, size = 0x90000, scoped, tag = 'scoped mem for input reshape']
    %s3 = sshllo.u32 0, 2
    %s4 = smul.addr 2, 143
    %s5 = scalar_lea.vmem %s0, %s4
    %v6 = vld [vmem:[%s5] sm:%s3]
    %s7 = scalar_lea.vmem [#allocation0], 1144
    %8 = vst [vmem:[%s7] sm:%s3] %v6
    %s9 = smul.addr 2, 142
    %s10 = scalar_lea.vmem %s0, %s9
    %v11 = vld [vmem:[%s10] sm:%s3]
    %s12 = scalar_lea.vmem [#allocation0], 1136
    %13 = vst [vmem:[%s12] sm:%s3] %v11
    %s14 = smul.addr 2, 141
    %s15 = scalar_lea.vmem %s0, %s14
    %v16 = vld [vmem:[%s15] sm:%s3]
    %s17 = scalar_lea.vmem [#allocation0], 1128
    %18 = vst [vmem:[%s17] sm:%s3] %v16
    %s19 = smul.addr 2, 140
    %s20 = scalar_lea.vmem %s0, %s19
    %v21 = vld [vmem:[%s20] sm:%s3]
    %s22 = scalar_lea.vmem [#allocation0], 1120
    %23 = vst [vmem:[%s22] sm:%s3] %v21
    %s24 = smul.addr 2, 139
    %s25 = scalar_lea.vmem %s0, %s24
    %v26 = vld [vmem:[%s25] sm:%s3]
    %s27 = scalar_lea.vmem [#allocation0], 1112
    %28 = vst [vmem:[%s27] sm:%s3] %v26
    %s29 = smul.addr 2, 138
    %s30 = scalar_lea.vmem %s0, %s29
    %v31 = vld [vmem:[%s30] sm:%s3]
    %s32 = scalar_lea.vmem [#allocation0], 1104
    %33 = vst [vmem:[%s32] sm:%s3] %v31
    %s34 = smul.addr 2, 137
    %s35 = scalar_lea.vmem %s0, %s34
    %v36 = vld [vmem:[%s35] sm:%s3]
    %s37 = scalar_lea.vmem [#allocation0], 1096
    %38 = vst [vmem:[%s37] sm:%s3] %v36
    %s39 = smul.addr 2, 136
    %s40 = scalar_lea.vmem %s0, %s39
    %v41 = vld [vmem:[%s40] sm:%s3]
    %s42 = scalar_lea.vmem [#allocation0], 1088
    %43 = vst [vmem:[%s42] sm:%s3] %v41
    %s44 = smul.addr 2, 135
    %s45 = scalar_lea.vmem %s0, %s44
    %v46 = vld [vmem:[%s45] sm:%s3]
    %s47 = scalar_lea.vmem [#allocation0], 1080
    %48 = vst [vmem:[%s47] sm:%s3] %v46
    %s49 = smul.addr 2, 134
    %s50 = scalar_lea.vmem %s0, %s49
    %v51 = vld [vmem:[%s50] sm:%s3]
    %s52 = scalar_lea.vmem [#allocation0], 1072
    %53 = vst [vmem:[%s52] sm:%s3] %v51
    %s54 = smul.addr 2, 133
    %s55 = scalar_lea.vmem %s0, %s54
    %v56 = vld [vmem:[%s55] sm:%s3]
    %s57 = scalar_lea.vmem [#allocation0], 1064
    %58 = vst [vmem:[%s57] sm:%s3] %v56
    %s59 = smul.addr 2, 132
    %s60 = scalar_lea.vmem %s0, %s59
    %v61 = vld [vmem:[%s60] sm:%s3]
    %s62 = scalar_lea.vmem [#allocation0], 1056
    %63 = vst [vmem:[%s62] sm:%s3] %v61
    %s64 = smul.addr 2, 131
    %s65 = scalar_lea.vmem %s0, %s64
    %v66 = vld [vmem:[%s65] sm:%s3]
    %s67 = scalar_lea.vmem [#allocation0], 1048
    %68 = vst [vmem:[%s67] sm:%s3] %v66
    %s69 = smul.addr 2, 130
    %s70 = scalar_lea.vmem %s0, %s69
    %v71 = vld [vmem:[%s70] sm:%s3]
    %s72 = scalar_lea.vmem [#allocation0], 1040
    %73 = vst [vmem:[%s72] sm:%s3] %v71
    %s74 = smul.addr 2, 129
    %s75 = scalar_lea.vmem %s0, %s74
    %v76 = vld [vmem:[%s75] sm:%s3]
    %s77 = scalar_lea.vmem [#allocation0], 1032
    %78 = vst [vmem:[%s77] sm:%s3] %v76
    %s79 = smul.addr 2, 128
    %s80 = scalar_lea.vmem %s0, %s79
    %v81 = vld [vmem:[%s80] sm:%s3]
    %s82 = scalar_lea.vmem [#allocation0], 1024
    %83 = vst [vmem:[%s82] sm:%s3] %v81
    %s84 = smul.addr 2, 127
    %s85 = scalar_lea.vmem %s0, %s84
    %v86 = vld [vmem:[%s85] sm:%s3]
    %s87 = scalar_lea.vmem [#allocation0], 1016
    %88 = vst [vmem:[%s87] sm:%s3] %v86
    %s89 = smul.addr 2, 126
    %s90 = scalar_lea.vmem %s0, %s89
    %v91 = vld [vmem:[%s90] sm:%s3]
    %s92 = scalar_lea.vmem [#allocation0], 1008
    %93 = vst [vmem:[%s92] sm:%s3] %v91
    %s94 = smul.addr 2, 125
    %s95 = scalar_lea.vmem %s0, %s94
    %v96 = vld [vmem:[%s95] sm:%s3]
    %s97 = scalar_lea.vmem [#allocation0], 1000
    %98 = vst [vmem:[%s97] sm:%s3] %v96
    %s99 = smul.addr 2, 124
    %s100 = scalar_lea.vmem %s0, %s99
    %v101 = vld [vmem:[%s100] sm:%s3]
    %s102 = scalar_lea.vmem [#allocation0], 992
    %103 = vst [vmem:[%s102] sm:%s3] %v101
    %s104 = smul.addr 2, 123
    %s105 = scalar_lea.vmem %s0, %s104
    %v106 = vld [vmem:[%s105] sm:%s3]
    %s107 = scalar_lea.vmem [#allocation0], 984
    %108 = vst [vmem:[%s107] sm:%s3] %v106
    %s109 = smul.addr 2, 122
    %s110 = scalar_lea.vmem %s0, %s109
    %v111 = vld [vmem:[%s110] sm:%s3]
    %s112 = scalar_lea.vmem [#allocation0], 976
    %113 = vst [vmem:[%s112] sm:%s3] %v111
    %s114 = smul.addr 2, 121
    %s115 = scalar_lea.vmem %s0, %s114
    %v116 = vld [vmem:[%s115] sm:%s3]
    %s117 = scalar_lea.vmem [#allocation0], 968
    %118 = vst [vmem:[%s117] sm:%s3] %v116
    %s119 = smul.addr 2, 120
    %s120 = scalar_lea.vmem %s0, %s119
    %v121 = vld [vmem:[%s120] sm:%s3]
    %s122 = scalar_lea.vmem [#allocation0], 960
    %123 = vst [vmem:[%s122] sm:%s3] %v121
    %s124 = smul.addr 2, 119
    %s125 = scalar_lea.vmem %s0, %s124
    %v126 = vld [vmem:[%s125] sm:%s3]
    %s127 = scalar_lea.vmem [#allocation0], 952
    %128 = vst [vmem:[%s127] sm:%s3] %v126
    %s129 = smul.addr 2, 118
    %s130 = scalar_lea.vmem %s0, %s129
    %v131 = vld [vmem:[%s130] sm:%s3]
    %s132 = scalar_lea.vmem [#allocation0], 944
    %133 = vst [vmem:[%s132] sm:%s3] %v131
    %s134 = smul.addr 2, 117
    %s135 = scalar_lea.vmem %s0, %s134
    %v136 = vld [vmem:[%s135] sm:%s3]
    %s137 = scalar_lea.vmem [#allocation0], 936
    %138 = vst [vmem:[%s137] sm:%s3] %v136
    %s139 = smul.addr 2, 116
    %s140 = scalar_lea.vmem %s0, %s139
    %v141 = vld [vmem:[%s140] sm:%s3]
    %s142 = scalar_lea.vmem [#allocation0], 928
    %143 = vst [vmem:[%s142] sm:%s3] %v141
    %s144 = smul.addr 2, 115
    %s145 = scalar_lea.vmem %s0, %s144
    %v146 = vld [vmem:[%s145] sm:%s3]
    %s147 = scalar_lea.vmem [#allocation0], 920
    %148 = vst [vmem:[%s147] sm:%s3] %v146
    %s149 = smul.addr 2, 114
    %s150 = scalar_lea.vmem %s0, %s149
    %v151 = vld [vmem:[%s150] sm:%s3]
    %s152 = scalar_lea.vmem [#allocation0], 912
    %153 = vst [vmem:[%s152] sm:%s3] %v151
    %s154 = smul.addr 2, 113
    %s155 = scalar_lea.vmem %s0, %s154
    %v156 = vld [vmem:[%s155] sm:%s3]
    %s157 = scalar_lea.vmem [#allocation0], 904
    %158 = vst [vmem:[%s157] sm:%s3] %v156
    %s159 = smul.addr 2, 112
    %s160 = scalar_lea.vmem %s0, %s159
    %v161 = vld [vmem:[%s160] sm:%s3]
    %s162 = scalar_lea.vmem [#allocation0], 896
    %163 = vst [vmem:[%s162] sm:%s3] %v161
    %s164 = smul.addr 2, 111
    %s165 = scalar_lea.vmem %s0, %s164
    %v166 = vld [vmem:[%s165] sm:%s3]
    %s167 = scalar_lea.vmem [#allocation0], 888
    %168 = vst [vmem:[%s167] sm:%s3] %v166
    %s169 = smul.addr 2, 110
    %s170 = scalar_lea.vmem %s0, %s169
    %v171 = vld [vmem:[%s170] sm:%s3]
    %s172 = scalar_lea.vmem [#allocation0], 880
    %173 = vst [vmem:[%s172] sm:%s3] %v171
    %s174 = smul.addr 2, 109
    %s175 = scalar_lea.vmem %s0, %s174
    %v176 = vld [vmem:[%s175] sm:%s3]
    %s177 = scalar_lea.vmem [#allocation0], 872
    %178 = vst [vmem:[%s177] sm:%s3] %v176
    %s179 = smul.addr 2, 108
    %s180 = scalar_lea.vmem %s0, %s179
    %v181 = vld [vmem:[%s180] sm:%s3]
    %s182 = scalar_lea.vmem [#allocation0], 864
    %183 = vst [vmem:[%s182] sm:%s3] %v181
    %s184 = smul.addr 2, 107
    %s185 = scalar_lea.vmem %s0, %s184
    %v186 = vld [vmem:[%s185] sm:%s3]
    %s187 = scalar_lea.vmem [#allocation0], 856
    %188 = vst [vmem:[%s187] sm:%s3] %v186
    %s189 = smul.addr 2, 106
    %s190 = scalar_lea.vmem %s0, %s189
    %v191 = vld [vmem:[%s190] sm:%s3]
    %s192 = scalar_lea.vmem [#allocation0], 848
    %193 = vst [vmem:[%s192] sm:%s3] %v191
    %s194 = smul.addr 2, 105
    %s195 = scalar_lea.vmem %s0, %s194
    %v196 = vld [vmem:[%s195] sm:%s3]
    %s197 = scalar_lea.vmem [#allocation0], 840
    %198 = vst [vmem:[%s197] sm:%s3] %v196
    %s199 = smul.addr 2, 104
    %s200 = scalar_lea.vmem %s0, %s199
    %v201 = vld [vmem:[%s200] sm:%s3]
    %s202 = scalar_lea.vmem [#allocation0], 832
    %203 = vst [vmem:[%s202] sm:%s3] %v201
    %s204 = smul.addr 2, 103
    %s205 = scalar_lea.vmem %s0, %s204
    %v206 = vld [vmem:[%s205] sm:%s3]
    %s207 = scalar_lea.vmem [#allocation0], 824
    %208 = vst [vmem:[%s207] sm:%s3] %v206
    %s209 = smul.addr 2, 102
    %s210 = scalar_lea.vmem %s0, %s209
    %v211 = vld [vmem:[%s210] sm:%s3]
    %s212 = scalar_lea.vmem [#allocation0], 816
    %213 = vst [vmem:[%s212] sm:%s3] %v211
    %s214 = smul.addr 2, 101
    %s215 = scalar_lea.vmem %s0, %s214
    %v216 = vld [vmem:[%s215] sm:%s3]
    %s217 = scalar_lea.vmem [#allocation0], 808
    %218 = vst [vmem:[%s217] sm:%s3] %v216
    %s219 = smul.addr 2, 100
    %s220 = scalar_lea.vmem %s0, %s219
    %v221 = vld [vmem:[%s220] sm:%s3]
    %s222 = scalar_lea.vmem [#allocation0], 800
    %223 = vst [vmem:[%s222] sm:%s3] %v221
    %s224 = smul.addr 2, 99
    %s225 = scalar_lea.vmem %s0, %s224
    %v226 = vld [vmem:[%s225] sm:%s3]
    %s227 = scalar_lea.vmem [#allocation0], 792
    %228 = vst [vmem:[%s227] sm:%s3] %v226
    %s229 = smul.addr 2, 98
    %s230 = scalar_lea.vmem %s0, %s229
    %v231 = vld [vmem:[%s230] sm:%s3]
    %s232 = scalar_lea.vmem [#allocation0], 784
    %233 = vst [vmem:[%s232] sm:%s3] %v231
    %s234 = smul.addr 2, 97
    %s235 = scalar_lea.vmem %s0, %s234
    %v236 = vld [vmem:[%s235] sm:%s3]
    %s237 = scalar_lea.vmem [#allocation0], 776
    %238 = vst [vmem:[%s237] sm:%s3] %v236
    %s239 = smul.addr 2, 96
    %s240 = scalar_lea.vmem %s0, %s239
    %v241 = vld [vmem:[%s240] sm:%s3]
    %s242 = scalar_lea.vmem [#allocation0], 768
    %243 = vst [vmem:[%s242] sm:%s3] %v241
    %s244 = smul.addr 2, 95
    %s245 = scalar_lea.vmem %s0, %s244
    %v246 = vld [vmem:[%s245] sm:%s3]
    %s247 = scalar_lea.vmem [#allocation0], 760
    %248 = vst [vmem:[%s247] sm:%s3] %v246
    %s249 = smul.addr 2, 94
    %s250 = scalar_lea.vmem %s0, %s249
    %v251 = vld [vmem:[%s250] sm:%s3]
    %s252 = scalar_lea.vmem [#allocation0], 752
    %253 = vst [vmem:[%s252] sm:%s3] %v251
    %s254 = smul.addr 2, 93
    %s255 = scalar_lea.vmem %s0, %s254
    %v256 = vld [vmem:[%s255] sm:%s3]
    %s257 = scalar_lea.vmem [#allocation0], 744
    %258 = vst [vmem:[%s257] sm:%s3] %v256
    %s259 = smul.addr 2, 92
    %s260 = scalar_lea.vmem %s0, %s259
    %v261 = vld [vmem:[%s260] sm:%s3]
    %s262 = scalar_lea.vmem [#allocation0], 736
    %263 = vst [vmem:[%s262] sm:%s3] %v261
    %s264 = smul.addr 2, 91
    %s265 = scalar_lea.vmem %s0, %s264
    %v266 = vld [vmem:[%s265] sm:%s3]
    %s267 = scalar_lea.vmem [#allocation0], 728
    %268 = vst [vmem:[%s267] sm:%s3] %v266
    %s269 = smul.addr 2, 90
    %s270 = scalar_lea.vmem %s0, %s269
    %v271 = vld [vmem:[%s270] sm:%s3]
    %s272 = scalar_lea.vmem [#allocation0], 720
    %273 = vst [vmem:[%s272] sm:%s3] %v271
    %s274 = smul.addr 2, 89
    %s275 = scalar_lea.vmem %s0, %s274
    %v276 = vld [vmem:[%s275] sm:%s3]
    %s277 = scalar_lea.vmem [#allocation0], 712
    %278 = vst [vmem:[%s277] sm:%s3] %v276
    %s279 = smul.addr 2, 88
    %s280 = scalar_lea.vmem %s0, %s279
    %v281 = vld [vmem:[%s280] sm:%s3]
    %s282 = scalar_lea.vmem [#allocation0], 704
    %283 = vst [vmem:[%s282] sm:%s3] %v281
    %s284 = smul.addr 2, 87
    %s285 = scalar_lea.vmem %s0, %s284
    %v286 = vld [vmem:[%s285] sm:%s3]
    %s287 = scalar_lea.vmem [#allocation0], 696
    %288 = vst [vmem:[%s287] sm:%s3] %v286
    %s289 = smul.addr 2, 86
    %s290 = scalar_lea.vmem %s0, %s289
    %v291 = vld [vmem:[%s290] sm:%s3]
    %s292 = scalar_lea.vmem [#allocation0], 688
    %293 = vst [vmem:[%s292] sm:%s3] %v291
    %s294 = smul.addr 2, 85
    %s295 = scalar_lea.vmem %s0, %s294
    %v296 = vld [vmem:[%s295] sm:%s3]
    %s297 = scalar_lea.vmem [#allocation0], 680
    %298 = vst [vmem:[%s297] sm:%s3] %v296
    %s299 = smul.addr 2, 84
    %s300 = scalar_lea.vmem %s0, %s299
    %v301 = vld [vmem:[%s300] sm:%s3]
    %s302 = scalar_lea.vmem [#allocation0], 672
    %303 = vst [vmem:[%s302] sm:%s3] %v301
    %s304 = smul.addr 2, 83
    %s305 = scalar_lea.vmem %s0, %s304
    %v306 = vld [vmem:[%s305] sm:%s3]
    %s307 = scalar_lea.vmem [#allocation0], 664
    %308 = vst [vmem:[%s307] sm:%s3] %v306
    %s309 = smul.addr 2, 82
    %s310 = scalar_lea.vmem %s0, %s309
    %v311 = vld [vmem:[%s310] sm:%s3]
    %s312 = scalar_lea.vmem [#allocation0], 656
    %313 = vst [vmem:[%s312] sm:%s3] %v311
    %s314 = smul.addr 2, 81
    %s315 = scalar_lea.vmem %s0, %s314
    %v316 = vld [vmem:[%s315] sm:%s3]
    %s317 = scalar_lea.vmem [#allocation0], 648
    %318 = vst [vmem:[%s317] sm:%s3] %v316
    %s319 = smul.addr 2, 80
    %s320 = scalar_lea.vmem %s0, %s319
    %v321 = vld [vmem:[%s320] sm:%s3]
    %s322 = scalar_lea.vmem [#allocation0], 640
    %323 = vst [vmem:[%s322] sm:%s3] %v321
    %s324 = smul.addr 2, 79
    %s325 = scalar_lea.vmem %s0, %s324
    %v326 = vld [vmem:[%s325] sm:%s3]
    %s327 = scalar_lea.vmem [#allocation0], 632
    %328 = vst [vmem:[%s327] sm:%s3] %v326
    %s329 = smul.addr 2, 78
    %s330 = scalar_lea.vmem %s0, %s329
    %v331 = vld [vmem:[%s330] sm:%s3]
    %s332 = scalar_lea.vmem [#allocation0], 624
    %333 = vst [vmem:[%s332] sm:%s3] %v331
    %s334 = smul.addr 2, 77
    %s335 = scalar_lea.vmem %s0, %s334
    %v336 = vld [vmem:[%s335] sm:%s3]
    %s337 = scalar_lea.vmem [#allocation0], 616
    %338 = vst [vmem:[%s337] sm:%s3] %v336
    %s339 = smul.addr 2, 76
    %s340 = scalar_lea.vmem %s0, %s339
    %v341 = vld [vmem:[%s340] sm:%s3]
    %s342 = scalar_lea.vmem [#allocation0], 608
    %343 = vst [vmem:[%s342] sm:%s3] %v341
    %s344 = smul.addr 2, 75
    %s345 = scalar_lea.vmem %s0, %s344
    %v346 = vld [vmem:[%s345] sm:%s3]
    %s347 = scalar_lea.vmem [#allocation0], 600
    %348 = vst [vmem:[%s347] sm:%s3] %v346
    %s349 = smul.addr 2, 74
    %s350 = scalar_lea.vmem %s0, %s349
    %v351 = vld [vmem:[%s350] sm:%s3]
    %s352 = scalar_lea.vmem [#allocation0], 592
    %353 = vst [vmem:[%s352] sm:%s3] %v351
    %s354 = smul.addr 2, 73
    %s355 = scalar_lea.vmem %s0, %s354
    %v356 = vld [vmem:[%s355] sm:%s3]
    %s357 = scalar_lea.vmem [#allocation0], 584
    %358 = vst [vmem:[%s357] sm:%s3] %v356
    %s359 = smul.addr 2, 72
    %s360 = scalar_lea.vmem %s0, %s359
    %v361 = vld [vmem:[%s360] sm:%s3]
    %s362 = scalar_lea.vmem [#allocation0], 576
    %363 = vst [vmem:[%s362] sm:%s3] %v361
    %s364 = smul.addr 2, 71
    %s365 = scalar_lea.vmem %s0, %s364
    %v366 = vld [vmem:[%s365] sm:%s3]
    %s367 = scalar_lea.vmem [#allocation0], 568
    %368 = vst [vmem:[%s367] sm:%s3] %v366
    %s369 = smul.addr 2, 70
    %s370 = scalar_lea.vmem %s0, %s369
    %v371 = vld [vmem:[%s370] sm:%s3]
    %s372 = scalar_lea.vmem [#allocation0], 560
    %373 = vst [vmem:[%s372] sm:%s3] %v371
    %s374 = smul.addr 2, 69
    %s375 = scalar_lea.vmem %s0, %s374
    %v376 = vld [vmem:[%s375] sm:%s3]
    %s377 = scalar_lea.vmem [#allocation0], 552
    %378 = vst [vmem:[%s377] sm:%s3] %v376
    %s379 = smul.addr 2, 68
    %s380 = scalar_lea.vmem %s0, %s379
    %v381 = vld [vmem:[%s380] sm:%s3]
    %s382 = scalar_lea.vmem [#allocation0], 544
    %383 = vst [vmem:[%s382] sm:%s3] %v381
    %s384 = smul.addr 2, 67
    %s385 = scalar_lea.vmem %s0, %s384
    %v386 = vld [vmem:[%s385] sm:%s3]
    %s387 = scalar_lea.vmem [#allocation0], 536
    %388 = vst [vmem:[%s387] sm:%s3] %v386
    %s389 = smul.addr 2, 66
    %s390 = scalar_lea.vmem %s0, %s389
    %v391 = vld [vmem:[%s390] sm:%s3]
    %s392 = scalar_lea.vmem [#allocation0], 528
    %393 = vst [vmem:[%s392] sm:%s3] %v391
    %s394 = smul.addr 2, 65
    %s395 = scalar_lea.vmem %s0, %s394
    %v396 = vld [vmem:[%s395] sm:%s3]
    %s397 = scalar_lea.vmem [#allocation0], 520
    %398 = vst [vmem:[%s397] sm:%s3] %v396
    %s399 = smul.addr 2, 64
    %s400 = scalar_lea.vmem %s0, %s399
    %v401 = vld [vmem:[%s400] sm:%s3]
    %s402 = scalar_lea.vmem [#allocation0], 512
    %403 = vst [vmem:[%s402] sm:%s3] %v401
    %s404 = smul.addr 2, 63
    %s405 = scalar_lea.vmem %s0, %s404
    %v406 = vld [vmem:[%s405] sm:%s3]
    %s407 = scalar_lea.vmem [#allocation0], 504
    %408 = vst [vmem:[%s407] sm:%s3] %v406
    %s409 = smul.addr 2, 62
    %s410 = scalar_lea.vmem %s0, %s409
    %v411 = vld [vmem:[%s410] sm:%s3]
    %s412 = scalar_lea.vmem [#allocation0], 496
    %413 = vst [vmem:[%s412] sm:%s3] %v411
    %s414 = smul.addr 2, 61
    %s415 = scalar_lea.vmem %s0, %s414
    %v416 = vld [vmem:[%s415] sm:%s3]
    %s417 = scalar_lea.vmem [#allocation0], 488
    %418 = vst [vmem:[%s417] sm:%s3] %v416
    %s419 = smul.addr 2, 60
    %s420 = scalar_lea.vmem %s0, %s419
    %v421 = vld [vmem:[%s420] sm:%s3]
    %s422 = scalar_lea.vmem [#allocation0], 480
    %423 = vst [vmem:[%s422] sm:%s3] %v421
    %s424 = smul.addr 2, 59
    %s425 = scalar_lea.vmem %s0, %s424
    %v426 = vld [vmem:[%s425] sm:%s3]
    %s427 = scalar_lea.vmem [#allocation0], 472
    %428 = vst [vmem:[%s427] sm:%s3] %v426
    %s429 = smul.addr 2, 58
    %s430 = scalar_lea.vmem %s0, %s429
    %v431 = vld [vmem:[%s430] sm:%s3]
    %s432 = scalar_lea.vmem [#allocation0], 464
    %433 = vst [vmem:[%s432] sm:%s3] %v431
    %s434 = smul.addr 2, 57
    %s435 = scalar_lea.vmem %s0, %s434
    %v436 = vld [vmem:[%s435] sm:%s3]
    %s437 = scalar_lea.vmem [#allocation0], 456
    %438 = vst [vmem:[%s437] sm:%s3] %v436
    %s439 = smul.addr 2, 56
    %s440 = scalar_lea.vmem %s0, %s439
    %v441 = vld [vmem:[%s440] sm:%s3]
    %s442 = scalar_lea.vmem [#allocation0], 448
    %443 = vst [vmem:[%s442] sm:%s3] %v441
    %s444 = smul.addr 2, 55
    %s445 = scalar_lea.vmem %s0, %s444
    %v446 = vld [vmem:[%s445] sm:%s3]
    %s447 = scalar_lea.vmem [#allocation0], 440
    %448 = vst [vmem:[%s447] sm:%s3] %v446
    %s449 = smul.addr 2, 54
    %s450 = scalar_lea.vmem %s0, %s449
    %v451 = vld [vmem:[%s450] sm:%s3]
    %s452 = scalar_lea.vmem [#allocation0], 432
    %453 = vst [vmem:[%s452] sm:%s3] %v451
    %s454 = smul.addr 2, 53
    %s455 = scalar_lea.vmem %s0, %s454
    %v456 = vld [vmem:[%s455] sm:%s3]
    %s457 = scalar_lea.vmem [#allocation0], 424
    %458 = vst [vmem:[%s457] sm:%s3] %v456
    %s459 = smul.addr 2, 52
    %s460 = scalar_lea.vmem %s0, %s459
    %v461 = vld [vmem:[%s460] sm:%s3]
    %s462 = scalar_lea.vmem [#allocation0], 416
    %463 = vst [vmem:[%s462] sm:%s3] %v461
    %s464 = smul.addr 2, 51
    %s465 = scalar_lea.vmem %s0, %s464
    %v466 = vld [vmem:[%s465] sm:%s3]
    %s467 = scalar_lea.vmem [#allocation0], 408
    %468 = vst [vmem:[%s467] sm:%s3] %v466
    %s469 = smul.addr 2, 50
    %s470 = scalar_lea.vmem %s0, %s469
    %v471 = vld [vmem:[%s470] sm:%s3]
    %s472 = scalar_lea.vmem [#allocation0], 400
    %473 = vst [vmem:[%s472] sm:%s3] %v471
    %s474 = smul.addr 2, 49
    %s475 = scalar_lea.vmem %s0, %s474
    %v476 = vld [vmem:[%s475] sm:%s3]
    %s477 = scalar_lea.vmem [#allocation0], 392
    %478 = vst [vmem:[%s477] sm:%s3] %v476
    %s479 = smul.addr 2, 48
    %s480 = scalar_lea.vmem %s0, %s479
    %v481 = vld [vmem:[%s480] sm:%s3]
    %s482 = scalar_lea.vmem [#allocation0], 384
    %483 = vst [vmem:[%s482] sm:%s3] %v481
    %s484 = smul.addr 2, 47
    %s485 = scalar_lea.vmem %s0, %s484
    %v486 = vld [vmem:[%s485] sm:%s3]
    %s487 = scalar_lea.vmem [#allocation0], 376
    %488 = vst [vmem:[%s487] sm:%s3] %v486
    %s489 = smul.addr 2, 46
    %s490 = scalar_lea.vmem %s0, %s489
    %v491 = vld [vmem:[%s490] sm:%s3]
    %s492 = scalar_lea.vmem [#allocation0], 368
    %493 = vst [vmem:[%s492] sm:%s3] %v491
    %s494 = smul.addr 2, 45
    %s495 = scalar_lea.vmem %s0, %s494
    %v496 = vld [vmem:[%s495] sm:%s3]
    %s497 = scalar_lea.vmem [#allocation0], 360
    %498 = vst [vmem:[%s497] sm:%s3] %v496
    %s499 = smul.addr 2, 44
    %s500 = scalar_lea.vmem %s0, %s499
    %v501 = vld [vmem:[%s500] sm:%s3]
    %s502 = scalar_lea.vmem [#allocation0], 352
    %503 = vst [vmem:[%s502] sm:%s3] %v501
    %s504 = smul.addr 2, 43
    %s505 = scalar_lea.vmem %s0, %s504
    %v506 = vld [vmem:[%s505] sm:%s3]
    %s507 = scalar_lea.vmem [#allocation0], 344
    %508 = vst [vmem:[%s507] sm:%s3] %v506
    %s509 = smul.addr 2, 42
    %s510 = scalar_lea.vmem %s0, %s509
    %v511 = vld [vmem:[%s510] sm:%s3]
    %s512 = scalar_lea.vmem [#allocation0], 336
    %513 = vst [vmem:[%s512] sm:%s3] %v511
    %s514 = smul.addr 2, 41
    %s515 = scalar_lea.vmem %s0, %s514
    %v516 = vld [vmem:[%s515] sm:%s3]
    %s517 = scalar_lea.vmem [#allocation0], 328
    %518 = vst [vmem:[%s517] sm:%s3] %v516
    %s519 = smul.addr 2, 40
    %s520 = scalar_lea.vmem %s0, %s519
    %v521 = vld [vmem:[%s520] sm:%s3]
    %s522 = scalar_lea.vmem [#allocation0], 320
    %523 = vst [vmem:[%s522] sm:%s3] %v521
    %s524 = smul.addr 2, 39
    %s525 = scalar_lea.vmem %s0, %s524
    %v526 = vld [vmem:[%s525] sm:%s3]
    %s527 = scalar_lea.vmem [#allocation0], 312
    %528 = vst [vmem:[%s527] sm:%s3] %v526
    %s529 = smul.addr 2, 38
    %s530 = scalar_lea.vmem %s0, %s529
    %v531 = vld [vmem:[%s530] sm:%s3]
    %s532 = scalar_lea.vmem [#allocation0], 304
    %533 = vst [vmem:[%s532] sm:%s3] %v531
    %s534 = smul.addr 2, 37
    %s535 = scalar_lea.vmem %s0, %s534
    %v536 = vld [vmem:[%s535] sm:%s3]
    %s537 = scalar_lea.vmem [#allocation0], 296
    %538 = vst [vmem:[%s537] sm:%s3] %v536
    %s539 = smul.addr 2, 36
    %s540 = scalar_lea.vmem %s0, %s539
    %v541 = vld [vmem:[%s540] sm:%s3]
    %s542 = scalar_lea.vmem [#allocation0], 288
    %543 = vst [vmem:[%s542] sm:%s3] %v541
    %s544 = smul.addr 2, 35
    %s545 = scalar_lea.vmem %s0, %s544
    %v546 = vld [vmem:[%s545] sm:%s3]
    %s547 = scalar_lea.vmem [#allocation0], 280
    %548 = vst [vmem:[%s547] sm:%s3] %v546
    %s549 = smul.addr 2, 34
    %s550 = scalar_lea.vmem %s0, %s549
    %v551 = vld [vmem:[%s550] sm:%s3]
    %s552 = scalar_lea.vmem [#allocation0], 272
    %553 = vst [vmem:[%s552] sm:%s3] %v551
    %s554 = smul.addr 2, 33
    %s555 = scalar_lea.vmem %s0, %s554
    %v556 = vld [vmem:[%s555] sm:%s3]
    %s557 = scalar_lea.vmem [#allocation0], 264
    %558 = vst [vmem:[%s557] sm:%s3] %v556
    %s559 = smul.addr 2, 32
    %s560 = scalar_lea.vmem %s0, %s559
    %v561 = vld [vmem:[%s560] sm:%s3]
    %s562 = scalar_lea.vmem [#allocation0], 256
    %563 = vst [vmem:[%s562] sm:%s3] %v561
    %s564 = smul.addr 2, 31
    %s565 = scalar_lea.vmem %s0, %s564
    %v566 = vld [vmem:[%s565] sm:%s3]
    %s567 = scalar_lea.vmem [#allocation0], 248
    %568 = vst [vmem:[%s567] sm:%s3] %v566
    %s569 = smul.addr 2, 30
    %s570 = scalar_lea.vmem %s0, %s569
    %v571 = vld [vmem:[%s570] sm:%s3]
    %s572 = scalar_lea.vmem [#allocation0], 240
    %573 = vst [vmem:[%s572] sm:%s3] %v571
    %s574 = smul.addr 2, 29
    %s575 = scalar_lea.vmem %s0, %s574
    %v576 = vld [vmem:[%s575] sm:%s3]
    %s577 = scalar_lea.vmem [#allocation0], 232
    %578 = vst [vmem:[%s577] sm:%s3] %v576
    %s579 = smul.addr 2, 28
    %s580 = scalar_lea.vmem %s0, %s579
    %v581 = vld [vmem:[%s580] sm:%s3]
    %s582 = scalar_lea.vmem [#allocation0], 224
    %583 = vst [vmem:[%s582] sm:%s3] %v581
    %s584 = smul.addr 2, 27
    %s585 = scalar_lea.vmem %s0, %s584
    %v586 = vld [vmem:[%s585] sm:%s3]
    %s587 = scalar_lea.vmem [#allocation0], 216
    %588 = vst [vmem:[%s587] sm:%s3] %v586
    %s589 = smul.addr 2, 26
    %s590 = scalar_lea.vmem %s0, %s589
    %v591 = vld [vmem:[%s590] sm:%s3]
    %s592 = scalar_lea.vmem [#allocation0], 208
    %593 = vst [vmem:[%s592] sm:%s3] %v591
    %s594 = smul.addr 2, 25
    %s595 = scalar_lea.vmem %s0, %s594
    %v596 = vld [vmem:[%s595] sm:%s3]
    %s597 = scalar_lea.vmem [#allocation0], 200
    %598 = vst [vmem:[%s597] sm:%s3] %v596
    %s599 = smul.addr 2, 24
    %s600 = scalar_lea.vmem %s0, %s599
    %v601 = vld [vmem:[%s600] sm:%s3]
    %s602 = scalar_lea.vmem [#allocation0], 192
    %603 = vst [vmem:[%s602] sm:%s3] %v601
    %s604 = smul.addr 2, 23
    %s605 = scalar_lea.vmem %s0, %s604
    %v606 = vld [vmem:[%s605] sm:%s3]
    %s607 = scalar_lea.vmem [#allocation0], 184
    %608 = vst [vmem:[%s607] sm:%s3] %v606
    %s609 = smul.addr 2, 22
    %s610 = scalar_lea.vmem %s0, %s609
    %v611 = vld [vmem:[%s610] sm:%s3]
    %s612 = scalar_lea.vmem [#allocation0], 176
    %613 = vst [vmem:[%s612] sm:%s3] %v611
    %s614 = smul.addr 2, 21
    %s615 = scalar_lea.vmem %s0, %s614
    %v616 = vld [vmem:[%s615] sm:%s3]
    %s617 = scalar_lea.vmem [#allocation0], 168
    %618 = vst [vmem:[%s617] sm:%s3] %v616
    %s619 = smul.addr 2, 20
    %s620 = scalar_lea.vmem %s0, %s619
    %v621 = vld [vmem:[%s620] sm:%s3]
    %s622 = scalar_lea.vmem [#allocation0], 160
    %623 = vst [vmem:[%s622] sm:%s3] %v621
    %s624 = smul.addr 2, 19
    %s625 = scalar_lea.vmem %s0, %s624
    %v626 = vld [vmem:[%s625] sm:%s3]
    %s627 = scalar_lea.vmem [#allocation0], 152
    %628 = vst [vmem:[%s627] sm:%s3] %v626
    %s629 = smul.addr 2, 18
    %s630 = scalar_lea.vmem %s0, %s629
    %v631 = vld [vmem:[%s630] sm:%s3]
    %s632 = scalar_lea.vmem [#allocation0], 144
    %633 = vst [vmem:[%s632] sm:%s3] %v631
    %s634 = smul.addr 2, 17
    %s635 = scalar_lea.vmem %s0, %s634
    %v636 = vld [vmem:[%s635] sm:%s3]
    %s637 = scalar_lea.vmem [#allocation0], 136
    %638 = vst [vmem:[%s637] sm:%s3] %v636
    %s639 = smul.addr 2, 16
    %s640 = scalar_lea.vmem %s0, %s639
    %v641 = vld [vmem:[%s640] sm:%s3]
    %s642 = scalar_lea.vmem [#allocation0], 128
    %643 = vst [vmem:[%s642] sm:%s3] %v641
    %s644 = smul.addr 2, 15
    %s645 = scalar_lea.vmem %s0, %s644
    %v646 = vld [vmem:[%s645] sm:%s3]
    %s647 = scalar_lea.vmem [#allocation0], 120
    %648 = vst [vmem:[%s647] sm:%s3] %v646
    %s649 = smul.addr 2, 14
    %s650 = scalar_lea.vmem %s0, %s649
    %v651 = vld [vmem:[%s650] sm:%s3]
    %s652 = scalar_lea.vmem [#allocation0], 112
    %653 = vst [vmem:[%s652] sm:%s3] %v651
    %s654 = smul.addr 2, 13
    %s655 = scalar_lea.vmem %s0, %s654
    %v656 = vld [vmem:[%s655] sm:%s3]
    %s657 = scalar_lea.vmem [#allocation0], 104
    %658 = vst [vmem:[%s657] sm:%s3] %v656
    %s659 = smul.addr 2, 12
    %s660 = scalar_lea.vmem %s0, %s659
    %v661 = vld [vmem:[%s660] sm:%s3]
    %s662 = scalar_lea.vmem [#allocation0], 96
    %663 = vst [vmem:[%s662] sm:%s3] %v661
    %s664 = smul.addr 2, 11
    %s665 = scalar_lea.vmem %s0, %s664
    %v666 = vld [vmem:[%s665] sm:%s3]
    %s667 = scalar_lea.vmem [#allocation0], 88
    %668 = vst [vmem:[%s667] sm:%s3] %v666
    %s669 = smul.addr 2, 10
    %s670 = scalar_lea.vmem %s0, %s669
    %v671 = vld [vmem:[%s670] sm:%s3]
    %s672 = scalar_lea.vmem [#allocation0], 80
    %673 = vst [vmem:[%s672] sm:%s3] %v671
    %s674 = smul.addr 2, 9
    %s675 = scalar_lea.vmem %s0, %s674
    %v676 = vld [vmem:[%s675] sm:%s3]
    %s677 = scalar_lea.vmem [#allocation0], 72
    %678 = vst [vmem:[%s677] sm:%s3] %v676
    %s679 = smul.addr 2, 8
    %s680 = scalar_lea.vmem %s0, %s679
    %v681 = vld [vmem:[%s680] sm:%s3]
    %s682 = scalar_lea.vmem [#allocation0], 64
    %683 = vst [vmem:[%s682] sm:%s3] %v681
    %s684 = smul.addr 2, 7
    %s685 = scalar_lea.vmem %s0, %s684
    %v686 = vld [vmem:[%s685] sm:%s3]
    %s687 = scalar_lea.vmem [#allocation0], 56
    %688 = vst [vmem:[%s687] sm:%s3] %v686
    %s689 = smul.addr 2, 6
    %s690 = scalar_lea.vmem %s0, %s689
    %v691 = vld [vmem:[%s690] sm:%s3]
    %s692 = scalar_lea.vmem [#allocation0], 48
    %693 = vst [vmem:[%s692] sm:%s3] %v691
    %s694 = smul.addr 2, 5
    %s695 = scalar_lea.vmem %s0, %s694
    %v696 = vld [vmem:[%s695] sm:%s3]
    %s697 = scalar_lea.vmem [#allocation0], 40
    %698 = vst [vmem:[%s697] sm:%s3] %v696
    %s699 = smul.addr 2, 4
    %s700 = scalar_lea.vmem %s0, %s699
    %v701 = vld [vmem:[%s700] sm:%s3]
    %s702 = scalar_lea.vmem [#allocation0], 32
    %703 = vst [vmem:[%s702] sm:%s3] %v701
    %s704 = smul.addr 2, 3
    %s705 = scalar_lea.vmem %s0, %s704
    %v706 = vld [vmem:[%s705] sm:%s3]
    %s707 = scalar_lea.vmem [#allocation0], 24
    %708 = vst [vmem:[%s707] sm:%s3] %v706
    %s709 = smul.addr 2, 2
    %s710 = scalar_lea.vmem %s0, %s709
    %v711 = vld [vmem:[%s710] sm:%s3]
    %s712 = scalar_lea.vmem [#allocation0], 16
    %713 = vst [vmem:[%s712] sm:%s3] %v711
    %s714 = scalar_lea.vmem %s0, 2
    %v715 = vld [vmem:[%s714] sm:%s3]
    %s716 = scalar_lea.vmem [#allocation0], 8
    %717 = vst [vmem:[%s716] sm:%s3] %v715
    %v718 = vld [vmem:[%s0] sm:%s3]
    %719 = vst [vmem:[#allocation0] sm:%s3] %v718
    %v720 = vld [vmem:[#allocation0] ss:$8 sm:$0xf]
    %v721 = vld [vmem:[#allocation0] ss:$8 sm:$0xf0]
    %vm722 = vcmask 1047556
    %v723 = vsel %vm722, %v721, %v720
    %vm724 = vcmask 293888
    %725 = vst.msk [vmem:[%s1] sm:$0xff] %vm724, %v723
    %s726 = scalar_lea.vmem [#allocation0], 64
    %v727 = vld [vmem:[%s726] ss:$8 sm:$0xf]
    %s728 = scalar_lea.vmem [#allocation0], 64
    %v729 = vld [vmem:[%s728] ss:$8 sm:$0xf0]
    %vm730 = vcmask 1047556
    %v731 = vsel %vm730, %v729, %v727
    %vm732 = vcmask 293888
    %s733 = scalar_lea.vmem %s1, 8
    %734 = vst.msk [vmem:[%s733] sm:$0xff] %vm732, %v731
    %s735 = scalar_lea.vmem [#allocation0], 128
    %v736 = vld [vmem:[%s735] ss:$8 sm:$0xf]
    %s737 = scalar_lea.vmem [#allocation0], 128
    %v738 = vld [vmem:[%s737] ss:$8 sm:$0xf0]
    %vm739 = vcmask 1047556
    %v740 = vsel %vm739, %v738, %v736
    %vm741 = vcmask 293888
    %s742 = scalar_lea.vmem %s1, 16
    %743 = vst.msk [vmem:[%s742] sm:$0xff] %vm741, %v740
    %s744 = scalar_lea.vmem [#allocation0], 192
    %v745 = vld [vmem:[%s744] ss:$8 sm:$0xf]
    %s746 = scalar_lea.vmem [#allocation0], 192
    %v747 = vld [vmem:[%s746] ss:$8 sm:$0xf0]
    %vm748 = vcmask 1047556
    %v749 = vsel %vm748, %v747, %v745
    %vm750 = vcmask 293888
    %s751 = scalar_lea.vmem %s1, 24
    %752 = vst.msk [vmem:[%s751] sm:$0xff] %vm750, %v749
    %s753 = scalar_lea.vmem [#allocation0], 256
    %v754 = vld [vmem:[%s753] ss:$8 sm:$0xf]
    %s755 = scalar_lea.vmem [#allocation0], 256
    %v756 = vld [vmem:[%s755] ss:$8 sm:$0xf0]
    %vm757 = vcmask 1047556
    %v758 = vsel %vm757, %v756, %v754
    %vm759 = vcmask 293888
    %s760 = scalar_lea.vmem %s1, 32
    %761 = vst.msk [vmem:[%s760] sm:$0xff] %vm759, %v758
    %s762 = scalar_lea.vmem [#allocation0], 320
    %v763 = vld [vmem:[%s762] ss:$8 sm:$0xf]
    %s764 = scalar_lea.vmem [#allocation0], 320
    %v765 = vld [vmem:[%s764] ss:$8 sm:$0xf0]
    %vm766 = vcmask 1047556
    %v767 = vsel %vm766, %v765, %v763
    %vm768 = vcmask 293888
    %s769 = scalar_lea.vmem %s1, 40
    %770 = vst.msk [vmem:[%s769] sm:$0xff] %vm768, %v767
    %s771 = scalar_lea.vmem [#allocation0], 384
    %v772 = vld [vmem:[%s771] ss:$8 sm:$0xf]
    %s773 = scalar_lea.vmem [#allocation0], 384
    %v774 = vld [vmem:[%s773] ss:$8 sm:$0xf0]
    %vm775 = vcmask 1047556
    %v776 = vsel %vm775, %v774, %v772
    %vm777 = vcmask 293888
    %s778 = scalar_lea.vmem %s1, 48
    %779 = vst.msk [vmem:[%s778] sm:$0xff] %vm777, %v776
    %s780 = scalar_lea.vmem [#allocation0], 448
    %v781 = vld [vmem:[%s780] ss:$8 sm:$0xf]
    %s782 = scalar_lea.vmem [#allocation0], 448
    %v783 = vld [vmem:[%s782] ss:$8 sm:$0xf0]
    %vm784 = vcmask 1047556
    %v785 = vsel %vm784, %v783, %v781
    %vm786 = vcmask 293888
    %s787 = scalar_lea.vmem %s1, 56
    %788 = vst.msk [vmem:[%s787] sm:$0xff] %vm786, %v785
    %s789 = scalar_lea.vmem [#allocation0], 512
    %v790 = vld [vmem:[%s789] ss:$8 sm:$0xf]
    %s791 = scalar_lea.vmem [#allocation0], 512
    %v792 = vld [vmem:[%s791] ss:$8 sm:$0xf0]
    %vm793 = vcmask 1047556
    %v794 = vsel %vm793, %v792, %v790
    %vm795 = vcmask 293888
    %s796 = scalar_lea.vmem %s1, 64
    %797 = vst.msk [vmem:[%s796] sm:$0xff] %vm795, %v794
    %s798 = scalar_lea.vmem [#allocation0], 576
    %v799 = vld [vmem:[%s798] ss:$8 sm:$0xf]
    %s800 = scalar_lea.vmem [#allocation0], 576
    %v801 = vld [vmem:[%s800] ss:$8 sm:$0xf0]
    %vm802 = vcmask 1047556
    %v803 = vsel %vm802, %v801, %v799
    %vm804 = vcmask 293888
    %s805 = scalar_lea.vmem %s1, 72
    %806 = vst.msk [vmem:[%s805] sm:$0xff] %vm804, %v803
    %s807 = scalar_lea.vmem [#allocation0], 640
    %v808 = vld [vmem:[%s807] ss:$8 sm:$0xf]
    %s809 = scalar_lea.vmem [#allocation0], 640
    %v810 = vld [vmem:[%s809] ss:$8 sm:$0xf0]
    %vm811 = vcmask 1047556
    %v812 = vsel %vm811, %v810, %v808
    %vm813 = vcmask 293888
    %s814 = scalar_lea.vmem %s1, 80
    %815 = vst.msk [vmem:[%s814] sm:$0xff] %vm813, %v812
    %s816 = scalar_lea.vmem [#allocation0], 704
    %v817 = vld [vmem:[%s816] ss:$8 sm:$0xf]
    %s818 = scalar_lea.vmem [#allocation0], 704
    %v819 = vld [vmem:[%s818] ss:$8 sm:$0xf0]
    %vm820 = vcmask 1047556
    %v821 = vsel %vm820, %v819, %v817
    %vm822 = vcmask 293888
    %s823 = scalar_lea.vmem %s1, 88
    %824 = vst.msk [vmem:[%s823] sm:$0xff] %vm822, %v821
    %s825 = scalar_lea.vmem [#allocation0], 768
    %v826 = vld [vmem:[%s825] ss:$8 sm:$0xf]
    %s827 = scalar_lea.vmem [#allocation0], 768
    %v828 = vld [vmem:[%s827] ss:$8 sm:$0xf0]
    %vm829 = vcmask 1047556
    %v830 = vsel %vm829, %v828, %v826
    %vm831 = vcmask 293888
    %s832 = scalar_lea.vmem %s1, 96
    %833 = vst.msk [vmem:[%s832] sm:$0xff] %vm831, %v830
    %s834 = scalar_lea.vmem [#allocation0], 832
    %v835 = vld [vmem:[%s834] ss:$8 sm:$0xf]
    %s836 = scalar_lea.vmem [#allocation0], 832
    %v837 = vld [vmem:[%s836] ss:$8 sm:$0xf0]
    %vm838 = vcmask 1047556
    %v839 = vsel %vm838, %v837, %v835
    %vm840 = vcmask 293888
    %s841 = scalar_lea.vmem %s1, 104
    %842 = vst.msk [vmem:[%s841] sm:$0xff] %vm840, %v839
    %s843 = scalar_lea.vmem [#allocation0], 896
    %v844 = vld [vmem:[%s843] ss:$8 sm:$0xf]
    %s845 = scalar_lea.vmem [#allocation0], 896
    %v846 = vld [vmem:[%s845] ss:$8 sm:$0xf0]
    %vm847 = vcmask 1047556
    %v848 = vsel %vm847, %v846, %v844
    %vm849 = vcmask 293888
    %s850 = scalar_lea.vmem %s1, 112
    %851 = vst.msk [vmem:[%s850] sm:$0xff] %vm849, %v848
    %s852 = scalar_lea.vmem [#allocation0], 960
    %v853 = vld [vmem:[%s852] ss:$8 sm:$0xf]
    %s854 = scalar_lea.vmem [#allocation0], 960
    %v855 = vld [vmem:[%s854] ss:$8 sm:$0xf0]
    %vm856 = vcmask 1047556
    %v857 = vsel %vm856, %v855, %v853
    %vm858 = vcmask 293888
    %s859 = scalar_lea.vmem %s1, 120
    %860 = vst.msk [vmem:[%s859] sm:$0xff] %vm858, %v857
    %s861 = scalar_lea.vmem [#allocation0], 1024
    %v862 = vld [vmem:[%s861] ss:$8 sm:$0xf]
    %s863 = scalar_lea.vmem [#allocation0], 1024
    %v864 = vld [vmem:[%s863] ss:$8 sm:$0xf0]
    %vm865 = vcmask 1047556
    %v866 = vsel %vm865, %v864, %v862
    %vm867 = vcmask 293888
    %s868 = scalar_lea.vmem %s1, 128
    %869 = vst.msk [vmem:[%s868] sm:$0xff] %vm867, %v866
    %s870 = scalar_lea.vmem [#allocation0], 1088
    %v871 = vld [vmem:[%s870] ss:$8 sm:$0xf]
    %s872 = scalar_lea.vmem [#allocation0], 1088
    %v873 = vld [vmem:[%s872] ss:$8 sm:$0xf0]
    %vm874 = vcmask 1047556
    %v875 = vsel %vm874, %v873, %v871
    %vm876 = vcmask 293888
    %s877 = scalar_lea.vmem %s1, 136
    %878 = vst.msk [vmem:[%s877] sm:$0xff] %vm876, %v875
    %s879 = scalar_lea.vmem [#allocation0], 1
    %v880 = vld [vmem:[%s879] ss:$8 sm:$0xf]
    %s881 = scalar_lea.vmem [#allocation0], 1
    %v882 = vld [vmem:[%s881] ss:$8 sm:$0xf0]
    %vm883 = vcmask 1047556
    %v884 = vsel %vm883, %v882, %v880
    %885 = vrot.lane.b32.xlu0 %v884, 36
    %v886 = vpop.permute.xlu0 %885
    %vm887 = vcmask 589088
    %888 = vst.msk [vmem:[%s1] sm:$0xff] %vm887, %v886
    %s889 = scalar_lea.vmem [#allocation0], 257
    %v890 = vld [vmem:[%s889] ss:$8 sm:$0xf]
    %s891 = scalar_lea.vmem [#allocation0], 257
    %v892 = vld [vmem:[%s891] ss:$8 sm:$0xf0]
    %vm893 = vcmask 1047556
    %v894 = vsel %vm893, %v892, %v890
    %895 = vrot.lane.b32.xlu0 %v894, 36
    %v896 = vpop.permute.xlu0 %895
    %vm897 = vcmask 589088
    %s898 = scalar_lea.vmem %s1, 32
    %899 = vst.msk [vmem:[%s898] sm:$0xff] %vm897, %v896
    %s900 = scalar_lea.vmem [#allocation0], 513
    %v901 = vld [vmem:[%s900] ss:$8 sm:$0xf]
    %s902 = scalar_lea.vmem [#allocation0], 513
    %v903 = vld [vmem:[%s902] ss:$8 sm:$0xf0]
    %vm904 = vcmask 1047556
    %v905 = vsel %vm904, %v903, %v901
    %906 = vrot.lane.b32.xlu0 %v905, 36
    %v907 = vpop.permute.xlu0 %906
    %vm908 = vcmask 589088
    %s909 = scalar_lea.vmem %s1, 64
    %910 = vst.msk [vmem:[%s909] sm:$0xff] %vm908, %v907
    %s911 = scalar_lea.vmem [#allocation0], 769
    %v912 = vld [vmem:[%s911] ss:$8 sm:$0xf]
    %s913 = scalar_lea.vmem [#allocation0], 769
    %v914 = vld [vmem:[%s913] ss:$8 sm:$0xf0]
    %vm915 = vcmask 1047556
    %v916 = vsel %vm915, %v914, %v912
    %917 = vrot.lane.b32.xlu0 %v916, 36
    %v918 = vpop.permute.xlu0 %917
    %vm919 = vcmask 589088
    %s920 = scalar_lea.vmem %s1, 96
    %921 = vst.msk [vmem:[%s920] sm:$0xff] %vm919, %v918
    %s922 = scalar_lea.vmem [#allocation0], 1025
    %v923 = vld [vmem:[%s922] ss:$8 sm:$0xf]
    %s924 = scalar_lea.vmem [#allocation0], 1025
    %v925 = vld [vmem:[%s924] ss:$8 sm:$0xf0]
    %vm926 = vcmask 1047556
    %v927 = vsel %vm926, %v925, %v923
    %928 = vrot.lane.b32.xlu0 %v927, 36
    %v929 = vpop.permute.xlu0 %928
    %vm930 = vcmask 589088
    %s931 = scalar_lea.vmem %s1, 128
    %932 = vst.msk [vmem:[%s931] sm:$0xff] %vm930, %v929
    %s933 = scalar_lea.vmem [#allocation0], 65
    %v934 = vld [vmem:[%s933] ss:$8 sm:$0xf]
    %s935 = scalar_lea.vmem [#allocation0], 65
    %v936 = vld [vmem:[%s935] ss:$8 sm:$0xf0]
    %vm937 = vcmask 1047556
    %v938 = vsel %vm937, %v936, %v934
    %939 = vrot.lane.b32.xlu0 %v938, 36
    %v940 = vpop.permute.xlu0 %939
    %vm941 = vcmask 589088
    %s942 = scalar_lea.vmem %s1, 8
    %943 = vst.msk [vmem:[%s942] sm:$0xff] %vm941, %v940
    %s944 = scalar_lea.vmem [#allocation0], 321
    %v945 = vld [vmem:[%s944] ss:$8 sm:$0xf]
    %s946 = scalar_lea.vmem [#allocation0], 321
    %v947 = vld [vmem:[%s946] ss:$8 sm:$0xf0]
    %vm948 = vcmask 1047556
    %v949 = vsel %vm948, %v947, %v945
    %950 = vrot.lane.b32.xlu0 %v949, 36
    %v951 = vpop.permute.xlu0 %950
    %vm952 = vcmask 589088
    %s953 = scalar_lea.vmem %s1, 40
    %954 = vst.msk [vmem:[%s953] sm:$0xff] %vm952, %v951
    %s955 = scalar_lea.vmem [#allocation0], 577
    %v956 = vld [vmem:[%s955] ss:$8 sm:$0xf]
    %s957 = scalar_lea.vmem [#allocation0], 577
    %v958 = vld [vmem:[%s957] ss:$8 sm:$0xf0]
    %vm959 = vcmask 1047556
    %v960 = vsel %vm959, %v958, %v956
    %961 = vrot.lane.b32.xlu0 %v960, 36
    %v962 = vpop.permute.xlu0 %961
    %vm963 = vcmask 589088
    %s964 = scalar_lea.vmem %s1, 72
    %965 = vst.msk [vmem:[%s964] sm:$0xff] %vm963, %v962
    %s966 = scalar_lea.vmem [#allocation0], 833
    %v967 = vld [vmem:[%s966] ss:$8 sm:$0xf]
    %s968 = scalar_lea.vmem [#allocation0], 833
    %v969 = vld [vmem:[%s968] ss:$8 sm:$0xf0]
    %vm970 = vcmask 1047556
    %v971 = vsel %vm970, %v969, %v967
    %972 = vrot.lane.b32.xlu0 %v971, 36
    %v973 = vpop.permute.xlu0 %972
    %vm974 = vcmask 589088
    %s975 = scalar_lea.vmem %s1, 104
    %976 = vst.msk [vmem:[%s975] sm:$0xff] %vm974, %v973
    %s977 = scalar_lea.vmem [#allocation0], 1089
    %v978 = vld [vmem:[%s977] ss:$8 sm:$0xf]
    %s979 = scalar_lea.vmem [#allocation0], 1089
    %v980 = vld [vmem:[%s979] ss:$8 sm:$0xf0]
    %vm981 = vcmask 1047556
    %v982 = vsel %vm981, %v980, %v978
    %983 = vrot.lane.b32.xlu0 %v982, 36
    %v984 = vpop.permute.xlu0 %983
    %vm985 = vcmask 589088
    %s986 = scalar_lea.vmem %s1, 136
    %987 = vst.msk [vmem:[%s986] sm:$0xff] %vm985, %v984
    %s988 = scalar_lea.vmem [#allocation0], 129
    %v989 = vld [vmem:[%s988] ss:$8 sm:$0xf]
    %s990 = scalar_lea.vmem [#allocation0], 129
    %v991 = vld [vmem:[%s990] ss:$8 sm:$0xf0]
    %vm992 = vcmask 1047556
    %v993 = vsel %vm992, %v991, %v989
    %994 = vrot.lane.b32.xlu0 %v993, 36
    %v995 = vpop.permute.xlu0 %994
    %vm996 = vcmask 589088
    %s997 = scalar_lea.vmem %s1, 16
    %998 = vst.msk [vmem:[%s997] sm:$0xff] %vm996, %v995
    %s999 = scalar_lea.vmem [#allocation0], 385
    %v1000 = vld [vmem:[%s999] ss:$8 sm:$0xf]
    %s1001 = scalar_lea.vmem [#allocation0], 385
    %v1002 = vld [vmem:[%s1001] ss:$8 sm:$0xf0]
    %vm1003 = vcmask 1047556
    %v1004 = vsel %vm1003, %v1002, %v1000
    %1005 = vrot.lane.b32.xlu0 %v1004, 36
    %v1006 = vpop.permute.xlu0 %1005
    %vm1007 = vcmask 589088
    %s1008 = scalar_lea.vmem %s1, 48
    %1009 = vst.msk [vmem:[%s1008] sm:$0xff] %vm1007, %v1006
    %s1010 = scalar_lea.vmem [#allocation0], 641
    %v1011 = vld [vmem:[%s1010] ss:$8 sm:$0xf]
    %s1012 = scalar_lea.vmem [#allocation0], 641
    %v1013 = vld [vmem:[%s1012] ss:$8 sm:$0xf0]
    %vm1014 = vcmask 1047556
    %v1015 = vsel %vm1014, %v1013, %v1011
    %1016 = vrot.lane.b32.xlu0 %v1015, 36
    %v1017 = vpop.permute.xlu0 %1016
    %vm1018 = vcmask 589088
    %s1019 = scalar_lea.vmem %s1, 80
    %1020 = vst.msk [vmem:[%s1019] sm:$0xff] %vm1018, %v1017
    %s1021 = scalar_lea.vmem [#allocation0], 897
    %v1022 = vld [vmem:[%s1021] ss:$8 sm:$0xf]
    %s1023 = scalar_lea.vmem [#allocation0], 897
    %v1024 = vld [vmem:[%s1023] ss:$8 sm:$0xf0]
    %vm1025 = vcmask 1047556
    %v1026 = vsel %vm1025, %v1024, %v1022
    %1027 = vrot.lane.b32.xlu0 %v1026, 36
    %v1028 = vpop.permute.xlu0 %1027
    %vm1029 = vcmask 589088
    %s1030 = scalar_lea.vmem %s1, 112
    %1031 = vst.msk [vmem:[%s1030] sm:$0xff] %vm1029, %v1028
    %s1032 = scalar_lea.vmem [#allocation0], 193
    %v1033 = vld [vmem:[%s1032] ss:$8 sm:$0xf]
    %s1034 = scalar_lea.vmem [#allocation0], 193
    %v1035 = vld [vmem:[%s1034] ss:$8 sm:$0xf0]
    %vm1036 = vcmask 1047556
    %v1037 = vsel %vm1036, %v1035, %v1033
    %1038 = vrot.lane.b32.xlu0 %v1037, 36
    %v1039 = vpop.permute.xlu0 %1038
    %vm1040 = vcmask 589088
    %s1041 = scalar_lea.vmem %s1, 24
    %1042 = vst.msk [vmem:[%s1041] sm:$0xff] %vm1040, %v1039
    %s1043 = scalar_lea.vmem [#allocation0], 449
    %v1044 = vld [vmem:[%s1043] ss:$8 sm:$0xf]
    %s1045 = scalar_lea.vmem [#allocation0], 449
    %v1046 = vld [vmem:[%s1045] ss:$8 sm:$0xf0]
    %vm1047 = vcmask 1047556
    %v1048 = vsel %vm1047, %v1046, %v1044
    %1049 = vrot.lane.b32.xlu0 %v1048, 36
    %v1050 = vpop.permute.xlu0 %1049
    %vm1051 = vcmask 589088
    %s1052 = scalar_lea.vmem %s1, 56
    %1053 = vst.msk [vmem:[%s1052] sm:$0xff] %vm1051, %v1050
    %s1054 = scalar_lea.vmem [#allocation0], 705
    %v1055 = vld [vmem:[%s1054] ss:$8 sm:$0xf]
    %s1056 = scalar_lea.vmem [#allocation0], 705
    %v1057 = vld [vmem:[%s1056] ss:$8 sm:$0xf0]
    %vm1058 = vcmask 1047556
    %v1059 = vsel %vm1058, %v1057, %v1055
    %1060 = vrot.lane.b32.xlu0 %v1059, 36
    %v1061 = vpop.permute.xlu0 %1060
    %vm1062 = vcmask 589088
    %s1063 = scalar_lea.vmem %s1, 88
    %1064 = vst.msk [vmem:[%s1063] sm:$0xff] %vm1062, %v1061
    %s1065 = scalar_lea.vmem [#allocation0], 961
    %v1066 = vld [vmem:[%s1065] ss:$8 sm:$0xf]
    %s1067 = scalar_lea.vmem [#allocation0], 961
    %v1068 = vld [vmem:[%s1067] ss:$8 sm:$0xf0]
    %vm1069 = vcmask 1047556
    %v1070 = vsel %vm1069, %v1068, %v1066
    %1071 = vrot.lane.b32.xlu0 %v1070, 36
    %v1072 = vpop.permute.xlu0 %1071
    %vm1073 = vcmask 589088
    %s1074 = scalar_lea.vmem %s1, 120
    %1075 = vst.msk [vmem:[%s1074] sm:$0xff] %vm1073, %v1072

// kernel: discriminator_forward.5
$region0: #{discriminator_forward.5}
  #allocation0 [shape = 'u32[]', space=smem, size = 0x4, offset = 0x4, fixed_abs, tag = 'smem constant byte address 0x4 - core index']
  #allocation1 [shape = 'u32[144,128]{1,0:T(1,128)}', space=vmem, size = 0x12000, scoped, tag = 'internal scratch']
  #allocation2 [shape = 'f32[1,1]{1,0:T(1,128)S(1)}', space=vmem, size = 0x200, scoped, tag = 'scoped memory for discriminator_forward.5']
  %s0 = inlined_call_operand.vmem [shape: bf16[3,4,72,288], index: 0, kind: input, shape index: {}]
  %s1 = inlined_call_operand.vmem [shape: bf16[3,288,48], index: 1, kind: input, shape index: {}]
  %s2 = inlined_call_operand.vmem [shape: f32[3,1,48], index: 2, kind: input, shape index: {}]
  %s3 = inlined_call_operand.vmem [shape: f32[3,1,48], index: 3, kind: input, shape index: {}]
  %s4 = inlined_call_operand.vmem [shape: f32[3,1,48], index: 4, kind: input, shape index: {}]
  %s5 = inlined_call_operand.vmem [shape: f32[3,72,48], index: 5, kind: input, shape index: {}]
  %s6 = inlined_call_operand.vmem [shape: f32[2,72], index: 6, kind: input, shape index: {}]
  %s7 = inlined_call_operand.<no memory space> [shape: f32[1,1], index: 7, kind: input, shape index: {}]
  %s8 = inlined_call_operand.vmem [shape: f32[2,1], index: 8, kind: output, shape index: {}]
  %s9 = sld [smem:[#allocation0]]
  $region73: #{discriminator_forward.5} parent=0
    _
  %s11 = ssub.s32 1, %s9
  %s12 = scalar_select 0, %s11, %s9
  %v13 = vstv %s7
  %14 = vst [vmem:[#allocation2] sm:$0x1] %v13
  loop: start=0, step=1, limit=5
  $region2: #{discriminator_forward.5} parent=0 // loop_pre_header
    _
  $region3: #{discriminator_forward.5} parent=0 // loop_header
    %s16 = sphi 0, %s20
    %p17 = scmp.ge.s32.totalorder %s16, 5
    %s26 = sphi 0, %s28
    %s29 = sphi 0, %s26
    %s30 = sphi 0, %s29
    %s46 = sphi 0, %s30
    %s52 = sphi 0, %s54
    %s55 = sphi 0, %s52
    %s56 = sphi 0, %s55
    %s72 = sphi 0, %s56
    %s78 = sphi 0, %s80
    %s81 = sphi 0, %s78
    %s82 = sphi 0, %s81
    %s98 = sphi 0, %s82
    %s104 = sphi 0, %s106
    %s107 = sphi 0, %s104
    %s108 = sphi 0, %s107
    %s124 = sphi 0, %s108
    %s130 = sphi 0, %s132
    %s133 = sphi 0, %s130
    %s134 = sphi 0, %s133
    %s150 = sphi 0, %s134
    %s156 = sphi 0, %s158
    %s159 = sphi 0, %s156
    %s160 = sphi 0, %s159
    %s176 = sphi 0, %s160
    %s180 = sphi 0, %s180
    %s182 = sphi 0, %s180
    %s183 = sphi 0, %s182
    %s197 = sphi 0, %s183
    %s201 = sphi 0, %s201
    %s203 = sphi 0, %s201
    %s204 = sphi 0, %s203
    %s218 = sphi 0, %s204
    %s222 = sphi 0, %s222
    %s224 = sphi 0, %s222
    %s225 = sphi 0, %s224
    %s239 = sphi 0, %s225
  $region4: #{discriminator_forward.5} parent=0 // loop_header_branch
    %19 = sbr.rel (%p17) target = $region8
  $region5: #{discriminator_forward.5} parent=0 // loop_body
    %s21 = ssub.s32 %s16, 1
    %s22 = ssub.s32 %s16, 2
    %s23 = sadd.s32 %s16, 1
    %s24 = ssub.s32 %s16, %s23
    %p25 = scmp.eq.s32.totalorder %s24, 0
    %s27 = sadd.s32 %s26, 1
    %s28 = scalar_select %p25, %s26, %s27
    %p31 = pneg %p25
    %p32 = scmp.eq.s32.totalorder %s16, 2
    %p33 = por %p31, %p32
    %p34 = scmp.ne.s32.totalorder %s26, %s29
    %p35 = scmp.eq.s32.totalorder %s16, 0
    %p36 = por %p34, %p35
    %p37 = scmp.ne.s32.totalorder %s26, %s29
    %p38 = scmp.eq.s32.totalorder %s21, 2
    %p39 = por %p37, %p38
    %p40 = scmp.ne.s32.totalorder %s29, %s30
    %p41 = scmp.eq.s32.totalorder %s21, 0
    %p42 = por %p40, %p41
    %p43 = scmp.ne.s32.totalorder %s29, %s30
    %p44 = scmp.eq.s32.totalorder %s22, 2
    %p45 = por %p43, %p44
    %p47 = scmp.ne.s32.totalorder %s30, %s46
    %p48 = scmp.eq.s32.totalorder %s22, 0
    %p49 = por %p47, %p48
    %s50 = ssub.s32 %s16, %s23
    %p51 = scmp.eq.s32.totalorder %s50, 0
    %s53 = sadd.s32 %s52, 1
    %s54 = scalar_select %p51, %s52, %s53
    %p57 = pneg %p51
    %p58 = scmp.eq.s32.totalorder %s16, 2
    %p59 = por %p57, %p58
    %p60 = scmp.ne.s32.totalorder %s52, %s55
    %p61 = scmp.eq.s32.totalorder %s16, 0
    %p62 = por %p60, %p61
    %p63 = scmp.ne.s32.totalorder %s52, %s55
    %p64 = scmp.eq.s32.totalorder %s21, 2
    %p65 = por %p63, %p64
    %p66 = scmp.ne.s32.totalorder %s55, %s56
    %p67 = scmp.eq.s32.totalorder %s21, 0
    %p68 = por %p66, %p67
    %p69 = scmp.ne.s32.totalorder %s55, %s56
    %p70 = scmp.eq.s32.totalorder %s22, 2
    %p71 = por %p69, %p70
    %p73 = scmp.ne.s32.totalorder %s56, %s72
    %p74 = scmp.eq.s32.totalorder %s22, 0
    %p75 = por %p73, %p74
    %s76 = ssub.s32 %s16, %s23
    %p77 = scmp.eq.s32.totalorder %s76, 0
    %s79 = sadd.s32 %s78, 1
    %s80 = scalar_select %p77, %s78, %s79
    %p83 = pneg %p77
    %p84 = scmp.eq.s32.totalorder %s16, 2
    %p85 = por %p83, %p84
    %p86 = scmp.ne.s32.totalorder %s78, %s81
    %p87 = scmp.eq.s32.totalorder %s16, 0
    %p88 = por %p86, %p87
    %p89 = scmp.ne.s32.totalorder %s78, %s81
    %p90 = scmp.eq.s32.totalorder %s21, 2
    %p91 = por %p89, %p90
    %p92 = scmp.ne.s32.totalorder %s81, %s82
    %p93 = scmp.eq.s32.totalorder %s21, 0
    %p94 = por %p92, %p93
    %p95 = scmp.ne.s32.totalorder %s81, %s82
    %p96 = scmp.eq.s32.totalorder %s22, 2
    %p97 = por %p95, %p96
    %p99 = scmp.ne.s32.totalorder %s82, %s98
    %p100 = scmp.eq.s32.totalorder %s22, 0
    %p101 = por %p99, %p100
    %s102 = ssub.s32 %s16, %s23
    %p103 = scmp.eq.s32.totalorder %s102, 0
    %s105 = sadd.s32 %s104, 1
    %s106 = scalar_select %p103, %s104, %s105
    %p109 = pneg %p103
    %p110 = scmp.eq.s32.totalorder %s16, 2
    %p111 = por %p109, %p110
    %p112 = scmp.ne.s32.totalorder %s104, %s107
    %p113 = scmp.eq.s32.totalorder %s16, 0
    %p114 = por %p112, %p113
    %p115 = scmp.ne.s32.totalorder %s104, %s107
    %p116 = scmp.eq.s32.totalorder %s21, 2
    %p117 = por %p115, %p116
    %p118 = scmp.ne.s32.totalorder %s107, %s108
    %p119 = scmp.eq.s32.totalorder %s21, 0
    %p120 = por %p118, %p119
    %p121 = scmp.ne.s32.totalorder %s107, %s108
    %p122 = scmp.eq.s32.totalorder %s22, 2
    %p123 = por %p121, %p122
    %p125 = scmp.ne.s32.totalorder %s108, %s124
    %p126 = scmp.eq.s32.totalorder %s22, 0
    %p127 = por %p125, %p126
    %s128 = ssub.s32 %s16, %s23
    %p129 = scmp.eq.s32.totalorder %s128, 0
    %s131 = sadd.s32 %s130, 1
    %s132 = scalar_select %p129, %s130, %s131
    %p135 = pneg %p129
    %p136 = scmp.eq.s32.totalorder %s16, 2
    %p137 = por %p135, %p136
    %p138 = scmp.ne.s32.totalorder %s130, %s133
    %p139 = scmp.eq.s32.totalorder %s16, 0
    %p140 = por %p138, %p139
    %p141 = scmp.ne.s32.totalorder %s130, %s133
    %p142 = scmp.eq.s32.totalorder %s21, 2
    %p143 = por %p141, %p142
    %p144 = scmp.ne.s32.totalorder %s133, %s134
    %p145 = scmp.eq.s32.totalorder %s21, 0
    %p146 = por %p144, %p145
    %p147 = scmp.ne.s32.totalorder %s133, %s134
    %p148 = scmp.eq.s32.totalorder %s22, 2
    %p149 = por %p147, %p148
    %p151 = scmp.ne.s32.totalorder %s134, %s150
    %p152 = scmp.eq.s32.totalorder %s22, 0
    %p153 = por %p151, %p152
    %s154 = ssub.s32 %s16, %s23
    %p155 = scmp.eq.s32.totalorder %s154, 0
    %s157 = sadd.s32 %s156, 1
    %s158 = scalar_select %p155, %s156, %s157
    %p161 = pneg %p155
    %p162 = scmp.eq.s32.totalorder %s16, 2
    %p163 = por %p161, %p162
    %p164 = scmp.ne.s32.totalorder %s156, %s159
    %p165 = scmp.eq.s32.totalorder %s16, 0
    %p166 = por %p164, %p165
    %p167 = scmp.ne.s32.totalorder %s156, %s159
    %p168 = scmp.eq.s32.totalorder %s21, 2
    %p169 = por %p167, %p168
    %p170 = scmp.ne.s32.totalorder %s159, %s160
    %p171 = scmp.eq.s32.totalorder %s21, 0
    %p172 = por %p170, %p171
    %p173 = scmp.ne.s32.totalorder %s159, %s160
    %p174 = scmp.eq.s32.totalorder %s22, 2
    %p175 = por %p173, %p174
    %p177 = scmp.ne.s32.totalorder %s160, %s176
    %p178 = scmp.eq.s32.totalorder %s22, 0
    %p179 = por %p177, %p178
    %s181 = sadd.s32 %s180, 1
    %p184 = scmp.eq.s32.totalorder %s16, 2
    %p185 = scmp.ne.s32.totalorder %s180, %s182
    %p186 = scmp.eq.s32.totalorder %s16, 0
    %p187 = por %p185, %p186
    %p188 = scmp.ne.s32.totalorder %s180, %s182
    %p189 = scmp.eq.s32.totalorder %s21, 2
    %p190 = por %p188, %p189
    %p191 = scmp.ne.s32.totalorder %s182, %s183
    %p192 = scmp.eq.s32.totalorder %s21, 0
    %p193 = por %p191, %p192
    %p194 = scmp.ne.s32.totalorder %s182, %s183
    %p195 = scmp.eq.s32.totalorder %s22, 2
    %p196 = por %p194, %p195
    %p198 = scmp.ne.s32.totalorder %s183, %s197
    %p199 = scmp.eq.s32.totalorder %s22, 0
    %p200 = por %p198, %p199
    %s202 = sadd.s32 %s201, 1
    %p205 = scmp.eq.s32.totalorder %s16, 2
    %p206 = scmp.ne.s32.totalorder %s201, %s203
    %p207 = scmp.eq.s32.totalorder %s16, 0
    %p208 = por %p206, %p207
    %p209 = scmp.ne.s32.totalorder %s201, %s203
    %p210 = scmp.eq.s32.totalorder %s21, 2
    %p211 = por %p209, %p210
    %p212 = scmp.ne.s32.totalorder %s203, %s204
    %p213 = scmp.eq.s32.totalorder %s21, 0
    %p214 = por %p212, %p213
    %p215 = scmp.ne.s32.totalorder %s203, %s204
    %p216 = scmp.eq.s32.totalorder %s22, 2
    %p217 = por %p215, %p216
    %p219 = scmp.ne.s32.totalorder %s204, %s218
    %p220 = scmp.eq.s32.totalorder %s22, 0
    %p221 = por %p219, %p220
    %s223 = sadd.s32 %s222, 1
    %p226 = scmp.eq.s32.totalorder %s16, 2
    %p227 = scmp.ne.s32.totalorder %s222, %s224
    %p228 = scmp.eq.s32.totalorder %s16, 0
    %p229 = por %p227, %p228
    %p230 = scmp.ne.s32.totalorder %s222, %s224
    %p231 = scmp.eq.s32.totalorder %s21, 2
    %p232 = por %p230, %p231
    %p233 = scmp.ne.s32.totalorder %s224, %s225
    %p234 = scmp.eq.s32.totalorder %s21, 0
    %p235 = por %p233, %p234
    %p236 = scmp.ne.s32.totalorder %s224, %s225
    %p237 = scmp.eq.s32.totalorder %s22, 2
    %p238 = por %p236, %p237
    %p240 = scmp.ne.s32.totalorder %s225, %s239
    %p241 = scmp.eq.s32.totalorder %s22, 0
    %p242 = por %p240, %p241
    %p243 = scmp.le.s32.totalorder 1, %s16
    %p244 = scmp.lt.s32.totalorder %s16, 4
    %p245 = pnand %p243, %p244
    %p246 = pneg %p245
    // Predicated region
    $region9: #{discriminator_forward.5} parent=5 // pred_check
      _
    $region10: #{discriminator_forward.5} parent=5 // pred_check_branch
      %248 = sbr.rel (%p245) target = $region12
    $region11: #{discriminator_forward.5} parent=5 // pred_region
      %s249 = ssub.s32 %s16, 1
      // Predicated region
      $region13: #{discriminator_forward.5} parent=11 // pred_check
        %p250 = pneg %p193
      $region14: #{discriminator_forward.5} parent=11 // pred_check_branch
        %252 = sbr.rel (%p250) target = $region16
      $region15: #{discriminator_forward.5} parent=11 // pred_region
        _
      $region16: #{discriminator_forward.5} parent=11 // pred_fallthru
        _
      // Predicated region
      $region17: #{discriminator_forward.5} parent=11 // pred_check
        %p253 = pneg %p214
      $region18: #{discriminator_forward.5} parent=11 // pred_check_branch
        %255 = sbr.rel (%p253) target = $region20
      $region19: #{discriminator_forward.5} parent=11 // pred_region
        _
      $region20: #{discriminator_forward.5} parent=11 // pred_fallthru
        _
    $region12: #{discriminator_forward.5} parent=5 // pred_fallthru
      _
    %p256 = scmp.lt.s32.totalorder %s16, 3
    // Predicated region
    $region21: #{discriminator_forward.5} parent=5 // pred_check
      %p257 = pneg %p256
    $region22: #{discriminator_forward.5} parent=5 // pred_check_branch
      %259 = sbr.rel (%p257) target = $region24
    $region23: #{discriminator_forward.5} parent=5 // pred_region
      // Predicated region
      $region25: #{discriminator_forward.5} parent=23 // pred_check
        %p260 = pneg %p36
      $region26: #{discriminator_forward.5} parent=23 // pred_check_branch
        %262 = sbr.rel (%p260) target = $region28
      $region27: #{discriminator_forward.5} parent=23 // pred_region
        %p263 = scmp.lt.s32.totalorder %s16, 2
        %s264 = scalar_select %p263, %s16, 2
        %s265 = smul.addr %s264, 108
        %s266 = smul.addr %s265, 4
        %s267 = scalar_lea.vmem %s0, %s266
      $region28: #{discriminator_forward.5} parent=23 // pred_fallthru
        _
      // Predicated region
      $region29: #{discriminator_forward.5} parent=23 // pred_check
        %p268 = pneg %p62
      $region30: #{discriminator_forward.5} parent=23 // pred_check_branch
        %270 = sbr.rel (%p268) target = $region32
      $region31: #{discriminator_forward.5} parent=23 // pred_region
        %p271 = scmp.lt.s32.totalorder %s16, 2
        %s272 = scalar_select %p271, %s16, 2
        %s273 = smul.addr %s272, 36
        %s274 = smul.addr %s273, 4
        %s275 = scalar_lea.vmem %s1, %s274
      $region32: #{discriminator_forward.5} parent=23 // pred_fallthru
        _
      // Predicated region
      $region33: #{discriminator_forward.5} parent=23 // pred_check
        %p276 = pneg %p88
      $region34: #{discriminator_forward.5} parent=23 // pred_check_branch
        %278 = sbr.rel (%p276) target = $region36
      $region35: #{discriminator_forward.5} parent=23 // pred_region
        %p279 = scmp.lt.s32.totalorder %s16, 2
        %s280 = scalar_select %p279, %s16, 2
        %s281 = scalar_lea.vmem %s2, %s280
      $region36: #{discriminator_forward.5} parent=23 // pred_fallthru
        _
      // Predicated region
      $region37: #{discriminator_forward.5} parent=23 // pred_check
        %p282 = pneg %p114
      $region38: #{discriminator_forward.5} parent=23 // pred_check_branch
        %284 = sbr.rel (%p282) target = $region40
      $region39: #{discriminator_forward.5} parent=23 // pred_region
        %p285 = scmp.lt.s32.totalorder %s16, 2
        %s286 = scalar_select %p285, %s16, 2
        %s287 = scalar_lea.vmem %s3, %s286
      $region40: #{discriminator_forward.5} parent=23 // pred_fallthru
        _
      // Predicated region
      $region41: #{discriminator_forward.5} parent=23 // pred_check
        %p288 = pneg %p140
      $region42: #{discriminator_forward.5} parent=23 // pred_check_branch
        %290 = sbr.rel (%p288) target = $region44
      $region43: #{discriminator_forward.5} parent=23 // pred_region
        %p291 = scmp.lt.s32.totalorder %s16, 2
        %s292 = scalar_select %p291, %s16, 2
        %s293 = scalar_lea.vmem %s4, %s292
      $region44: #{discriminator_forward.5} parent=23 // pred_fallthru
        _
      // Predicated region
      $region45: #{discriminator_forward.5} parent=23 // pred_check
        %p294 = pneg %p166
      $region46: #{discriminator_forward.5} parent=23 // pred_check_branch
        %296 = sbr.rel (%p294) target = $region48
      $region47: #{discriminator_forward.5} parent=23 // pred_region
        %p297 = scmp.lt.s32.totalorder %s16, 2
        %s298 = scalar_select %p297, %s16, 2
        %s299 = smul.addr %s298, 9
        %s300 = smul.addr %s299, 8
        %s301 = scalar_lea.vmem %s5, %s300
      $region48: #{discriminator_forward.5} parent=23 // pred_fallthru
        _
    $region24: #{discriminator_forward.5} parent=5 // pred_fallthru
      _
    %p302 = scmp.le.s32.totalorder 1, %s16
    %p303 = scmp.lt.s32.totalorder %s16, 4
    %p304 = pnand %p302, %p303
    %p305 = pneg %p304
    // Predicated region
    $region49: #{discriminator_forward.5} parent=5 // pred_check
      _
    $region50: #{discriminator_forward.5} parent=5 // pred_check_branch
      %307 = sbr.rel (%p304) target = $region52
    $region51: #{discriminator_forward.5} parent=5 // pred_region
      %s308 = ssub.s32 %s16, 1
      %p309 = scmp.lt.s32.totalorder %s21, 2
      %s310 = scalar_select %p309, %s21, 2
      %s311 = smul.addr %s310, 108
      %s312 = smul.addr %s311, 4
      %s313 = scalar_lea.vmem %s0, %s312
      %p314 = pneg %p42
      %p315 = pneg %p39
      %p316 = scmp.lt.s32.totalorder %s21, 2
      %s317 = scalar_select %p316, %s21, 2
      %s318 = smul.addr %s317, 36
      %s319 = smul.addr %s318, 4
      %s320 = scalar_lea.vmem %s1, %s319
      %p321 = pneg %p68
      %p322 = pneg %p65
      %p323 = scmp.lt.s32.totalorder %s21, 2
      %s324 = scalar_select %p323, %s21, 2
      %s325 = scalar_lea.vmem %s2, %s324
      %p326 = pneg %p94
      %p327 = pneg %p91
      %p328 = scmp.lt.s32.totalorder %s21, 2
      %s329 = scalar_select %p328, %s21, 2
      %s330 = scalar_lea.vmem %s3, %s329
      %p331 = pneg %p120
      %p332 = pneg %p117
      %p333 = scmp.lt.s32.totalorder %s21, 2
      %s334 = scalar_select %p333, %s21, 2
      %s335 = scalar_lea.vmem %s4, %s334
      %p336 = pneg %p146
      %p337 = pneg %p143
      %p338 = scmp.lt.s32.totalorder %s21, 2
      %s339 = scalar_select %p338, %s21, 2
      %s340 = smul.addr %s339, 9
      %s341 = smul.addr %s340, 8
      %s342 = scalar_lea.vmem %s5, %s341
      %p343 = pneg %p172
      %p344 = pneg %p169
      %p345 = pneg %p193
      %p346 = pneg %p190
      %p347 = pneg %p214
      %p348 = pneg %p211
      %p349 = pneg %p235
      %p350 = pneg %p232
      %p351 = scmp.lt.s32.totalorder %s21, 2
      %s352 = scalar_select %p351, %s21, 2
      %s353 = smul.addr %s352, 108
      %s354 = smul.addr %s353, 4
      %s355 = scalar_lea.vmem %s0, %s354
      %p356 = scmp.lt.s32.totalorder %s21, 2
      %s357 = scalar_select %p356, %s21, 2
      %s358 = smul.addr %s357, 36
      %s359 = smul.addr %s358, 4
      %s360 = scalar_lea.vmem %s1, %s359
      %p361 = scmp.lt.s32.totalorder %s21, 2
      %s362 = scalar_select %p361, %s21, 2
      %s363 = scalar_lea.vmem %s2, %s362
      %p364 = scmp.lt.s32.totalorder %s21, 2
      %s365 = scalar_select %p364, %s21, 2
      %s366 = scalar_lea.vmem %s3, %s365
      %p367 = scmp.lt.s32.totalorder %s21, 2
      %s368 = scalar_select %p367, %s21, 2
      %s369 = scalar_lea.vmem %s4, %s368
      %p370 = scmp.lt.s32.totalorder %s21, 2
      %s371 = scalar_select %p370, %s21, 2
      %s372 = smul.addr %s371, 9
      %s373 = smul.addr %s372, 8
      %s374 = scalar_lea.vmem %s5, %s373
      %p376 = scmp.eq.s32.totalorder %s21, 0
      // Predicated region
      $region53: #{discriminator_forward.5} parent=51 // pred_check
        %p377 = pneg %p376
      $region54: #{discriminator_forward.5} parent=51 // pred_check_branch
        %379 = sbr.rel (%p377) target = $region56
      $region55: #{discriminator_forward.5} parent=51 // pred_region
        %vm380 = vcmask 1024
        %381 = vst.msk [vmem:[%s8] sm:$0x3] %vm380, 0.0
      $region56: #{discriminator_forward.5} parent=51 // pred_fallthru
        _
      %v382 = vld [vmem:[%s360] sm:$0xf]
      %v383 = vld [vmem:[%s360 + $0x4] sm:$0xf]
      %v384 = vld [vmem:[%s360 + $0x8] sm:$0xf]
      %v385 = vld [vmem:[%s360 + $0xc] sm:$0xf]
      %v386 = vld [vmem:[%s360 + $0x10] sm:$0xf]
      %v387 = vld [vmem:[%s360 + $0x14] sm:$0xf]
      %v388 = vld [vmem:[%s360 + $0x18] sm:$0xf]
      %v389 = vld [vmem:[%s360 + $0x1c] sm:$0xf]
      %v390 = vld [vmem:[%s360 + $0x20] sm:$0xf]
      %v391 = vld [vmem:[%s360 + $0x24] sm:$0xf]
      %v392 = vld [vmem:[%s360 + $0x28] sm:$0xf]
      %v393 = vld [vmem:[%s360 + $0x2c] sm:$0xf]
      %v394 = vld [vmem:[%s360 + $0x30] sm:$0xf]
      %v395 = vld [vmem:[%s360 + $0x34] sm:$0xf]
      %v396 = vld [vmem:[%s360 + $0x38] sm:$0xf]
      %v397 = vld [vmem:[%s360 + $0x3c] sm:$0xf]
      %v398 = vld [vmem:[%s360 + $0x40] sm:$0xf]
      %v399 = vld [vmem:[%s360 + $0x44] sm:$0xf]
      %v400 = vld [vmem:[%s360 + $0x48] sm:$0xf]
      %v401 = vld [vmem:[%s360 + $0x4c] sm:$0xf]
      %v402 = vld [vmem:[%s360 + $0x50] sm:$0xf]
      %v403 = vld [vmem:[%s360 + $0x54] sm:$0xf]
      %v404 = vld [vmem:[%s360 + $0x58] sm:$0xf]
      %v405 = vld [vmem:[%s360 + $0x5c] sm:$0xf]
      %v406 = vld [vmem:[%s360 + $0x60] sm:$0xf]
      %v407 = vld [vmem:[%s360 + $0x64] sm:$0xf]
      %v408 = vld [vmem:[%s360 + $0x68] sm:$0xf]
      %v409 = vld [vmem:[%s360 + $0x6c] sm:$0xf]
      %v410 = vld [vmem:[%s360 + $0x70] sm:$0xf]
      %v411 = vld [vmem:[%s360 + $0x74] sm:$0xf]
      %v412 = vld [vmem:[%s360 + $0x78] sm:$0xf]
      %v413 = vld [vmem:[%s360 + $0x7c] sm:$0xf]
      %v414 = vld [vmem:[%s360 + $0x80] sm:$0xf]
      %v415 = vld [vmem:[%s360 + $0x84] sm:$0xf]
      %v416 = vld [vmem:[%s360 + $0x88] sm:$0xf]
      %v417 = vld [vmem:[%s360 + $0x8c] sm:$0xf]
      %v418 = vld [vmem:[%s355] sm:$0xff]
      %v419 = vld [vmem:[%s355 + $0x8] sm:$0xf]
      %v420 = vld [vmem:[%s355 + $0xc] sm:$0xff]
      %v421 = vld [vmem:[%s355 + $0x14] sm:$0xf]
      %v422 = vld [vmem:[%s355 + $0x18] sm:$0xff]
      %v423 = vld [vmem:[%s355 + $0x20] sm:$0xf]
      %v424 = vld [vmem:[%s355 + $0x24] sm:$0xff]
      %v425 = vld [vmem:[%s355 + $0x2c] sm:$0xf]
      %v426 = vld [vmem:[%s355 + $0x30] sm:$0xff]
      %v427 = vld [vmem:[%s355 + $0x38] sm:$0xf]
      %v428 = vld [vmem:[%s355 + $0x3c] sm:$0xff]
      %v429 = vld [vmem:[%s355 + $0x44] sm:$0xf]
      %v430 = vld [vmem:[%s355 + $0x48] sm:$0xff]
      %v431 = vld [vmem:[%s355 + $0x50] sm:$0xf]
      %v432 = vld [vmem:[%s355 + $0x54] sm:$0xff]
      %v433 = vld [vmem:[%s355 + $0x5c] sm:$0xf]
      %v434 = vld [vmem:[%s355 + $0x60] sm:$0xff]
      %v435 = vld [vmem:[%s355 + $0x68] sm:$0xf]
      %v454 = vunpack.c.l.b16 %v418
      %v455 = vunpack.c.h.b16 %v418
      %v456 = vunpack.c.l.b16 %v419
      %v457 = vunpack.c.l.b16 %v420
      %v458 = vunpack.c.h.b16 %v420
      %v459 = vunpack.c.l.b16 %v421
      %v460 = vunpack.c.l.b16 %v422
      %v461 = vunpack.c.h.b16 %v422
      %v462 = vunpack.c.l.b16 %v423
      %v463 = vunpack.c.l.b16 %v424
      %v464 = vunpack.c.h.b16 %v424
      %v465 = vunpack.c.l.b16 %v425
      %v466 = vunpack.c.l.b16 %v426
      %v467 = vunpack.c.h.b16 %v426
      %v468 = vunpack.c.l.b16 %v427
      %v469 = vunpack.c.l.b16 %v428
      %v470 = vunpack.c.h.b16 %v428
      %v471 = vunpack.c.l.b16 %v429
      %v472 = vunpack.c.l.b16 %v430
      %v473 = vunpack.c.h.b16 %v430
      %v474 = vunpack.c.l.b16 %v431
      %v475 = vunpack.c.l.b16 %v432
      %v476 = vunpack.c.h.b16 %v432
      %v477 = vunpack.c.l.b16 %v433
      %v478 = vunpack.c.l.b16 %v434
      %v479 = vunpack.c.h.b16 %v434
      %v480 = vunpack.c.l.b16 %v435
      %v481 = vpack.c.b16 %v457, %v454
      %v482 = vpack.c.b16 %v458, %v455
      %v483 = vpack.c.b16 %v459, %v456
      %v484 = vpack.c.b16 %v463, %v460
      %v485 = vpack.c.b16 %v464, %v461
      %v486 = vpack.c.b16 %v465, %v462
      %v487 = vpack.c.b16 %v469, %v466
      %v488 = vpack.c.b16 %v470, %v467
      %v489 = vpack.c.b16 %v471, %v468
      %v490 = vpack.c.b16 %v475, %v472
      %v491 = vpack.c.b16 %v476, %v473
      %v492 = vpack.c.b16 %v477, %v474
      %v493 = vpack.c.b16 %v478, %v478
      %v494 = vpack.c.b16 %v479, %v479
      %v495 = vpack.c.b16 %v480, %v480
      %v542 = vunpack.c.l.b16 %v382
      %v543 = vunpack.c.l.b16 %v383
      %v544 = vunpack.c.l.b16 %v384
      %v545 = vunpack.c.l.b16 %v385
      %v546 = vunpack.c.l.b16 %v386
      %v547 = vunpack.c.l.b16 %v387
      %v548 = vunpack.c.l.b16 %v388
      %v549 = vunpack.c.l.b16 %v389
      %v550 = vunpack.c.l.b16 %v390
      %v551 = vunpack.c.l.b16 %v391
      %v552 = vunpack.c.l.b16 %v392
      %v553 = vunpack.c.l.b16 %v393
      %v554 = vunpack.c.l.b16 %v394
      %v555 = vunpack.c.l.b16 %v395
      %v556 = vunpack.c.l.b16 %v396
      %v557 = vunpack.c.l.b16 %v397
      %v558 = vunpack.c.l.b16 %v398
      %v559 = vunpack.c.l.b16 %v399
      %v560 = vunpack.c.l.b16 %v400
      %v561 = vunpack.c.l.b16 %v401
      %v562 = vunpack.c.l.b16 %v402
      %v563 = vunpack.c.l.b16 %v403
      %v564 = vunpack.c.l.b16 %v404
      %v565 = vunpack.c.l.b16 %v405
      %v566 = vunpack.c.l.b16 %v406
      %v567 = vunpack.c.l.b16 %v407
      %v568 = vunpack.c.l.b16 %v408
      %v569 = vunpack.c.l.b16 %v409
      %v570 = vunpack.c.l.b16 %v410
      %v571 = vunpack.c.l.b16 %v411
      %v572 = vunpack.c.l.b16 %v412
      %v573 = vunpack.c.l.b16 %v413
      %v574 = vunpack.c.l.b16 %v414
      %v575 = vunpack.c.l.b16 %v415
      %v576 = vunpack.c.l.b16 %v416
      %v577 = vunpack.c.l.b16 %v417
      %v578 = vpack.c.b16 %v543, %v542
      %v579 = vpack.c.b16 %v545, %v544
      %v580 = vpack.c.b16 %v547, %v546
      %v581 = vpack.c.b16 %v549, %v548
      %v582 = vpack.c.b16 %v551, %v550
      %v583 = vpack.c.b16 %v553, %v552
      %v584 = vpack.c.b16 %v555, %v554
      %v585 = vpack.c.b16 %v557, %v556
      %v586 = vpack.c.b16 %v559, %v558
      %v587 = vpack.c.b16 %v561, %v560
      %v588 = vpack.c.b16 %v563, %v562
      %v589 = vpack.c.b16 %v565, %v564
      %v590 = vpack.c.b16 %v567, %v566
      %v591 = vpack.c.b16 %v569, %v568
      %v592 = vpack.c.b16 %v571, %v570
      %v593 = vpack.c.b16 %v573, %v572
      %v594 = vpack.c.b16 %v575, %v574
      %v595 = vpack.c.b16 %v577, %v576
      %vm614 = vcmask 261120
      %v616 = vsel %vm614, %v483, 0
      %v619 = vsel %vm614, %v486, 0
      %v622 = vsel %vm614, %v489, 0
      %v625 = vsel %vm614, %v492, 0
      %v628 = vsel %vm614, %v495, 0
      %630 = vmatprep.subr.bf16.mxu0 0
      %631 = vmatpush1.bf16.msra.mxu0 %v578
      %632 = vmatprep.subr.bf16.mxu0 0
      %633 = vmatpush1.bf16.msra.mxu0 %v579
      %634 = vmatprep.subr.bf16.mxu0 0
      %635 = vmatpush1.bf16.msra.mxu0 %v580
      %636 = vmatprep.subr.bf16.mxu0 0
      %637 = vmatpush1.bf16.msra.mxu0 %v581
      %638 = vmatprep.subr.bf16.mxu0 0
      %639 = vmatpush1.bf16.msra.mxu0 %v582
      %640 = vmatprep.subr.bf16.mxu0 0
      %641 = vmatpush1.bf16.msra.mxu0 %v583
      %642 = vmatprep.subr.bf16.mxu0 0
      %643 = vmatpush1.bf16.msra.mxu0 %v584
      %644 = vmatprep.subr.bf16.mxu0 0
      %645 = vmatpush1.bf16.msra.mxu0 %v585
      %646 = vmatprep.subr.bf16.mxu0 0
      %647 = vmatpush1.bf16.msra.mxu0 %v586
      %648 = vmatprep.subr.bf16.mxu0 0
      %649 = vmatpush1.bf16.msra.mxu0 %v587
      %650 = vmatprep.subr.bf16.mxu0 0
      %651 = vmatpush1.bf16.msra.mxu0 %v588
      %652 = vmatprep.subr.bf16.mxu0 0
      %653 = vmatpush1.bf16.msra.mxu0 %v589
      %654 = vmatprep.subr.bf16.mxu0 0
      %655 = vmatpush1.bf16.msra.mxu0 %v590
      %656 = vmatprep.subr.bf16.mxu0 0
      %657 = vmatpush1.bf16.msra.mxu0 %v591
      %658 = vmatprep.subr.bf16.mxu0 0
      %659 = vmatpush1.bf16.msra.mxu0 %v592
      %660 = vmatprep.subr.bf16.mxu0 0
      %661 = vmatpush1.bf16.msra.mxu0 %v593
      %662 = vmatprep.mubr.bf16.mxu0 %v482
      %663 = vmatmul.mubr.bf16.gmra.mrb[0].mxu0 %v481
      %v664 = vpop.f32.mrb[0].mxu0
      %v665 = vadd.f32 0.0, %v664
      %v666 = vpop.f32.mrb[0].mxu0
      %v667 = vpop.f32.mrb[0].mxu0
      %v668 = vadd.f32 0.0, %v667
      %v669 = vpop.f32.mrb[0].mxu0
      %670 = vmatprep.mubr.bf16.mxu0 %v485
      %671 = vmatmul.mubr.bf16.gmra.mrb[0].mxu0 %v484
      %v672 = vpop.f32.mrb[0].mxu0
      %v673 = vadd.f32 0.0, %v672
      %v674 = vpop.f32.mrb[0].mxu0
      %v675 = vpop.f32.mrb[0].mxu0
      %v676 = vadd.f32 0.0, %v675
      %v677 = vpop.f32.mrb[0].mxu0
      %678 = vmatprep.mubr.bf16.mxu0 %v488
      %679 = vmatmul.mubr.bf16.gmra.mrb[0].mxu0 %v487
      %v680 = vpop.f32.mrb[0].mxu0
      %v681 = vadd.f32 0.0, %v680
      %v682 = vpop.f32.mrb[0].mxu0
      %v683 = vpop.f32.mrb[0].mxu0
      %v684 = vadd.f32 0.0, %v683
      %v685 = vpop.f32.mrb[0].mxu0
      %686 = vmatprep.mubr.bf16.mxu0 %v491
      %687 = vmatmul.mubr.bf16.gmra.mrb[0].mxu0 %v490
      %v688 = vpop.f32.mrb[0].mxu0
      %v689 = vadd.f32 0.0, %v688
      %v690 = vpop.f32.mrb[0].mxu0
      %v691 = vpop.f32.mrb[0].mxu0
      %v692 = vadd.f32 0.0, %v691
      %v693 = vpop.f32.mrb[0].mxu0
      %694 = vmatprep.mubr.bf16.mxu0 %v494
      %695 = vmatmul.mubr.bf16.gmra.mrb[0].mxu0 %v493
      %v696 = vpop.f32.mrb[0].mxu0
      %v697 = vadd.f32 0.0, %v696
      %v698 = vpop.f32.mrb[0].mxu0
      %v699 = vpop.f32.mrb[0].mxu0
      %v700 = vpop.f32.mrb[0].mxu0
      %701 = vdwg.mxu0
      %702 = vmatprep.subr.bf16.mxu0 0
      %703 = vmatpush1.bf16.msra.mxu0 %v594
      %704 = vmatprep.subr.bf16.mxu0 0
      %705 = vmatpush1.bf16.msra.mxu0 %v595
      %706 = vmatprep.subr.bf16.mxu0 0
      %707 = vmatpush1.bf16.msra.mxu0 0
      %708 = vmatprep.subr.bf16.mxu0 0
      %709 = vmatpush1.bf16.msra.mxu0 0
      %710 = vmatprep.subr.bf16.mxu0 0
      %711 = vmatpush1.bf16.msra.mxu0 0
      %712 = vmatprep.subr.bf16.mxu0 0
      %713 = vmatpush1.bf16.msra.mxu0 0
      %714 = vmatprep.subr.bf16.mxu0 0
      %715 = vmatpush1.bf16.msra.mxu0 0
      %716 = vmatprep.subr.bf16.mxu0 0
      %717 = vmatpush1.bf16.msra.mxu0 0
      %718 = vmatprep.subr.bf16.mxu0 0
      %719 = vmatpush1.bf16.msra.mxu0 0
      %720 = vmatprep.subr.bf16.mxu0 0
      %721 = vmatpush1.bf16.msra.mxu0 0
      %722 = vmatprep.subr.bf16.mxu0 0
      %723 = vmatpush1.bf16.msra.mxu0 0
      %724 = vmatprep.subr.bf16.mxu0 0
      %725 = vmatpush1.bf16.msra.mxu0 0
      %726 = vmatprep.subr.bf16.mxu0 0
      %727 = vmatpush1.bf16.msra.mxu0 0
      %728 = vmatprep.subr.bf16.mxu0 0
      %729 = vmatpush1.bf16.msra.mxu0 0
      %730 = vmatprep.subr.bf16.mxu0 0
      %731 = vmatpush1.bf16.msra.mxu0 0
      %732 = vmatprep.subr.bf16.mxu0 0
      %733 = vmatpush1.bf16.msra.mxu0 0
      %734 = vmatprep.mubr.bf16.mxu0 0
      %735 = vmatmul.mubr.bf16.gmra.mrb[0].mxu0 %v616
      %v736 = vpop.f32.mrb[0].mxu0
      %v737 = vadd.f32 %v665, %v736
      %v738 = vpop.f32.mrb[0].mxu0
      %v739 = vpop.f32.mrb[0].mxu0
      %v740 = vadd.f32 %v668, %v739
      %v741 = vpop.f32.mrb[0].mxu0
      %742 = vmatprep.mubr.bf16.mxu0 0
      %743 = vmatmul.mubr.bf16.gmra.mrb[0].mxu0 %v619
      %v744 = vpop.f32.mrb[0].mxu0
      %v745 = vadd.f32 %v673, %v744
      %v746 = vpop.f32.mrb[0].mxu0
      %v747 = vpop.f32.mrb[0].mxu0
      %v748 = vadd.f32 %v676, %v747
      %v749 = vpop.f32.mrb[0].mxu0
      %750 = vmatprep.mubr.bf16.mxu0 0
      %751 = vmatmul.mubr.bf16.gmra.mrb[0].mxu0 %v622
      %v752 = vpop.f32.mrb[0].mxu0
      %v753 = vadd.f32 %v681, %v752
      %v754 = vpop.f32.mrb[0].mxu0
      %v755 = vpop.f32.mrb[0].mxu0
      %v756 = vadd.f32 %v684, %v755
      %v757 = vpop.f32.mrb[0].mxu0
      %758 = vmatprep.mubr.bf16.mxu0 0
      %759 = vmatmul.mubr.bf16.gmra.mrb[0].mxu0 %v625
      %v760 = vpop.f32.mrb[0].mxu0
      %v761 = vadd.f32 %v689, %v760
      %v762 = vpop.f32.mrb[0].mxu0
      %v763 = vpop.f32.mrb[0].mxu0
      %v764 = vadd.f32 %v692, %v763
      %v765 = vpop.f32.mrb[0].mxu0
      %766 = vmatprep.mubr.bf16.mxu0 0
      %767 = vmatmul.mubr.bf16.gmra.mrb[0].mxu0 %v628
      %v768 = vpop.f32.mrb[0].mxu0
      %v769 = vadd.f32 %v697, %v768
      %v770 = vpop.f32.mrb[0].mxu0
      %v771 = vpop.f32.mrb[0].mxu0
      %v772 = vpop.f32.mrb[0].mxu0
      %773 = vdwg.mxu0
      %s774 = scalar_lea.vmem %s355, 108
      %v775 = vld [vmem:[%s774] sm:$0xff]
      %v776 = vld [vmem:[%s774 + $0x8] sm:$0xf]
      %v777 = vld [vmem:[%s774 + $0xc] sm:$0xff]
      %v778 = vld [vmem:[%s774 + $0x14] sm:$0xf]
      %v779 = vld [vmem:[%s774 + $0x18] sm:$0xff]
      %v780 = vld [vmem:[%s774 + $0x20] sm:$0xf]
      %v781 = vld [vmem:[%s774 + $0x24] sm:$0xff]
      %v782 = vld [vmem:[%s774 + $0x2c] sm:$0xf]
      %v783 = vld [vmem:[%s774 + $0x30] sm:$0xff]
      %v784 = vld [vmem:[%s774 + $0x38] sm:$0xf]
      %v785 = vld [vmem:[%s774 + $0x3c] sm:$0xff]
      %v786 = vld [vmem:[%s774 + $0x44] sm:$0xf]
      %v787 = vld [vmem:[%s774 + $0x48] sm:$0xff]
      %v788 = vld [vmem:[%s774 + $0x50] sm:$0xf]
      %v789 = vld [vmem:[%s774 + $0x54] sm:$0xff]
      %v790 = vld [vmem:[%s774 + $0x5c] sm:$0xf]
      %v791 = vld [vmem:[%s774 + $0x60] sm:$0xff]
      %v792 = vld [vmem:[%s774 + $0x68] sm:$0xf]
      %v811 = vunpack.c.l.b16 %v775
      %v812 = vunpack.c.h.b16 %v775
      %v813 = vunpack.c.l.b16 %v776
      %v814 = vunpack.c.l.b16 %v777
      %v815 = vunpack.c.h.b16 %v777
      %v816 = vunpack.c.l.b16 %v778
      %v817 = vunpack.c.l.b16 %v779
      %v818 = vunpack.c.h.b16 %v779
      %v819 = vunpack.c.l.b16 %v780
      %v820 = vunpack.c.l.b16 %v781
      %v821 = vunpack.c.h.b16 %v781
      %v822 = vunpack.c.l.b16 %v782
      %v823 = vunpack.c.l.b16 %v783
      %v824 = vunpack.c.h.b16 %v783
      %v825 = vunpack.c.l.b16 %v784
      %v826 = vunpack.c.l.b16 %v785
      %v827 = vunpack.c.h.b16 %v785
      %v828 = vunpack.c.l.b16 %v786
      %v829 = vunpack.c.l.b16 %v787
      %v830 = vunpack.c.h.b16 %v787
      %v831 = vunpack.c.l.b16 %v788
      %v832 = vunpack.c.l.b16 %v789
      %v833 = vunpack.c.h.b16 %v789
      %v834 = vunpack.c.l.b16 %v790
      %v835 = vunpack.c.l.b16 %v791
      %v836 = vunpack.c.h.b16 %v791
      %v837 = vunpack.c.l.b16 %v792
      %v838 = vpack.c.b16 %v814, %v811
      %v839 = vpack.c.b16 %v815, %v812
      %v840 = vpack.c.b16 %v816, %v813
      %v841 = vpack.c.b16 %v820, %v817
      %v842 = vpack.c.b16 %v821, %v818
      %v843 = vpack.c.b16 %v822, %v819
      %v844 = vpack.c.b16 %v826, %v823
      %v845 = vpack.c.b16 %v827, %v824
      %v846 = vpack.c.b16 %v828, %v825
      %v847 = vpack.c.b16 %v832, %v829
      %v848 = vpack.c.b16 %v833, %v830
      %v849 = vpack.c.b16 %v834, %v831
      %v850 = vpack.c.b16 %v835, %v835
      %v851 = vpack.c.b16 %v836, %v836
      %v852 = vpack.c.b16 %v837, %v837
      %v864 = vsel %vm614, %v840, 0
      %v867 = vsel %vm614, %v843, 0
      %v870 = vsel %vm614, %v846, 0
      %v873 = vsel %vm614, %v849, 0
      %v876 = vsel %vm614, %v852, 0
      %878 = vmatprep.subr.bf16.mxu0 0
      %879 = vmatpush1.bf16.msra.mxu0 %v578
      %880 = vmatprep.subr.bf16.mxu0 0
      %881 = vmatpush1.bf16.msra.mxu0 %v579
      %882 = vmatprep.subr.bf16.mxu0 0
      %883 = vmatpush1.bf16.msra.mxu0 %v580
      %884 = vmatprep.subr.bf16.mxu0 0
      %885 = vmatpush1.bf16.msra.mxu0 %v581
      %886 = vmatprep.subr.bf16.mxu0 0
      %887 = vmatpush1.bf16.msra.mxu0 %v582
      %888 = vmatprep.subr.bf16.mxu0 0
      %889 = vmatpush1.bf16.msra.mxu0 %v583
      %890 = vmatprep.subr.bf16.mxu0 0
      %891 = vmatpush1.bf16.msra.mxu0 %v584
      %892 = vmatprep.subr.bf16.mxu0 0
      %893 = vmatpush1.bf16.msra.mxu0 %v585
      %894 = vmatprep.subr.bf16.mxu0 0
      %895 = vmatpush1.bf16.msra.mxu0 %v586
      %896 = vmatprep.subr.bf16.mxu0 0
      %897 = vmatpush1.bf16.msra.mxu0 %v587
      %898 = vmatprep.subr.bf16.mxu0 0
      %899 = vmatpush1.bf16.msra.mxu0 %v588
      %900 = vmatprep.subr.bf16.mxu0 0
      %901 = vmatpush1.bf16.msra.mxu0 %v589
      %902 = vmatprep.subr.bf16.mxu0 0
      %903 = vmatpush1.bf16.msra.mxu0 %v590
      %904 = vmatprep.subr.bf16.mxu0 0
      %905 = vmatpush1.bf16.msra.mxu0 %v591
      %906 = vmatprep.subr.bf16.mxu0 0
      %907 = vmatpush1.bf16.msra.mxu0 %v592
      %908 = vmatprep.subr.bf16.mxu0 0
      %909 = vmatpush1.bf16.msra.mxu0 %v593
      %910 = vmatprep.mubr.bf16.mxu0 %v839
      %911 = vmatmul.mubr.bf16.gmra.mrb[0].mxu0 %v838
      %v912 = vpop.f32.mrb[0].mxu0
      %v913 = vadd.f32 0.0, %v912
      %v914 = vpop.f32.mrb[0].mxu0
      %v915 = vpop.f32.mrb[0].mxu0
      %v916 = vadd.f32 0.0, %v915
      %v917 = vpop.f32.mrb[0].mxu0
      %918 = vmatprep.mubr.bf16.mxu0 %v842
      %919 = vmatmul.mubr.bf16.gmra.mrb[0].mxu0 %v841
      %v920 = vpop.f32.mrb[0].mxu0
      %v921 = vadd.f32 0.0, %v920
      %v922 = vpop.f32.mrb[0].mxu0
      %v923 = vpop.f32.mrb[0].mxu0
      %v924 = vadd.f32 0.0, %v923
      %v925 = vpop.f32.mrb[0].mxu0
      %926 = vmatprep.mubr.bf16.mxu0 %v845
      %927 = vmatmul.mubr.bf16.gmra.mrb[0].mxu0 %v844
      %v928 = vpop.f32.mrb[0].mxu0
      %v929 = vadd.f32 0.0, %v928
      %v930 = vpop.f32.mrb[0].mxu0
      %v931 = vpop.f32.mrb[0].mxu0
      %v932 = vadd.f32 0.0, %v931
      %v933 = vpop.f32.mrb[0].mxu0
      %934 = vmatprep.mubr.bf16.mxu0 %v848
      %935 = vmatmul.mubr.bf16.gmra.mrb[0].mxu0 %v847
      %v936 = vpop.f32.mrb[0].mxu0
      %v937 = vadd.f32 0.0, %v936
      %v938 = vpop.f32.mrb[0].mxu0
      %v939 = vpop.f32.mrb[0].mxu0
      %v940 = vadd.f32 0.0, %v939
      %v941 = vpop.f32.mrb[0].mxu0
      %942 = vmatprep.mubr.bf16.mxu0 %v851
      %943 = vmatmul.mubr.bf16.gmra.mrb[0].mxu0 %v850
      %v944 = vpop.f32.mrb[0].mxu0
      %v945 = vadd.f32 0.0, %v944
      %v946 = vpop.f32.mrb[0].mxu0
      %v947 = vpop.f32.mrb[0].mxu0
      %v948 = vpop.f32.mrb[0].mxu0
      %949 = vdwg.mxu0
      %950 = vmatprep.subr.bf16.mxu0 0
      %951 = vmatpush1.bf16.msra.mxu0 %v594
      %952 = vmatprep.subr.bf16.mxu0 0
      %953 = vmatpush1.bf16.msra.mxu0 %v595
      %954 = vmatprep.subr.bf16.mxu0 0
      %955 = vmatpush1.bf16.msra.mxu0 0
      %956 = vmatprep.subr.bf16.mxu0 0
      %957 = vmatpush1.bf16.msra.mxu0 0
      %958 = vmatprep.subr.bf16.mxu0 0
      %959 = vmatpush1.bf16.msra.mxu0 0
      %960 = vmatprep.subr.bf16.mxu0 0
      %961 = vmatpush1.bf16.msra.mxu0 0
      %962 = vmatprep.subr.bf16.mxu0 0
      %963 = vmatpush1.bf16.msra.mxu0 0
      %964 = vmatprep.subr.bf16.mxu0 0
      %965 = vmatpush1.bf16.msra.mxu0 0
      %966 = vmatprep.subr.bf16.mxu0 0
      %967 = vmatpush1.bf16.msra.mxu0 0
      %968 = vmatprep.subr.bf16.mxu0 0
      %969 = vmatpush1.bf16.msra.mxu0 0
      %970 = vmatprep.subr.bf16.mxu0 0
      %971 = vmatpush1.bf16.msra.mxu0 0
      %972 = vmatprep.subr.bf16.mxu0 0
      %973 = vmatpush1.bf16.msra.mxu0 0
      %974 = vmatprep.subr.bf16.mxu0 0
      %975 = vmatpush1.bf16.msra.mxu0 0
      %976 = vmatprep.subr.bf16.mxu0 0
      %977 = vmatpush1.bf16.msra.mxu0 0
      %978 = vmatprep.subr.bf16.mxu0 0
      %979 = vmatpush1.bf16.msra.mxu0 0
      %980 = vmatprep.subr.bf16.mxu0 0
      %981 = vmatpush1.bf16.msra.mxu0 0
      %982 = vmatprep.mubr.bf16.mxu0 0
      %983 = vmatmul.mubr.bf16.gmra.mrb[0].mxu0 %v864
      %v984 = vpop.f32.mrb[0].mxu0
      %v985 = vadd.f32 %v913, %v984
      %v986 = vpop.f32.mrb[0].mxu0
      %v987 = vpop.f32.mrb[0].mxu0
      %v988 = vadd.f32 %v916, %v987
      %v989 = vpop.f32.mrb[0].mxu0
      %990 = vmatprep.mubr.bf16.mxu0 0
      %991 = vmatmul.mubr.bf16.gmra.mrb[0].mxu0 %v867
      %v992 = vpop.f32.mrb[0].mxu0
      %v993 = vadd.f32 %v921, %v992
      %v994 = vpop.f32.mrb[0].mxu0
      %v995 = vpop.f32.mrb[0].mxu0
      %v996 = vadd.f32 %v924, %v995
      %v997 = vpop.f32.mrb[0].mxu0
      %998 = vmatprep.mubr.bf16.mxu0 0
      %999 = vmatmul.mubr.bf16.gmra.mrb[0].mxu0 %v870
      %v1000 = vpop.f32.mrb[0].mxu0
      %v1001 = vadd.f32 %v929, %v1000
      %v1002 = vpop.f32.mrb[0].mxu0
      %v1003 = vpop.f32.mrb[0].mxu0
      %v1004 = vadd.f32 %v932, %v1003
      %v1005 = vpop.f32.mrb[0].mxu0
      %1006 = vmatprep.mubr.bf16.mxu0 0
      %1007 = vmatmul.mubr.bf16.gmra.mrb[0].mxu0 %v873
      %v1008 = vpop.f32.mrb[0].mxu0
      %v1009 = vadd.f32 %v937, %v1008
      %v1010 = vpop.f32.mrb[0].mxu0
      %v1011 = vpop.f32.mrb[0].mxu0
      %v1012 = vadd.f32 %v940, %v1011
      %v1013 = vpop.f32.mrb[0].mxu0
      %1014 = vmatprep.mubr.bf16.mxu0 0
      %1015 = vmatmul.mubr.bf16.gmra.mrb[0].mxu0 %v876
      %v1016 = vpop.f32.mrb[0].mxu0
      %v1017 = vadd.f32 %v945, %v1016
      %v1018 = vpop.f32.mrb[0].mxu0
      %v1019 = vpop.f32.mrb[0].mxu0
      %v1020 = vpop.f32.mrb[0].mxu0
      %1021 = vdwg.mxu0
      %v1022 = vmax.f32 %v737, %v985
      %v1023 = vmax.f32 %v740, %v988
      %v1024 = vmax.f32 %v745, %v993
      %v1025 = vmax.f32 %v748, %v996
      %v1026 = vmax.f32 %v753, %v1001
      %v1027 = vmax.f32 %v756, %v1004
      %v1028 = vmax.f32 %v761, %v1009
      %v1029 = vmax.f32 %v764, %v1012
      %v1030 = vmax.f32 %v769, %v1017
      %v1031 = vmin.f32 %v737, %v985
      %v1032 = vmin.f32 %v740, %v988
      %v1033 = vmin.f32 %v745, %v993
      %v1034 = vmin.f32 %v748, %v996
      %v1035 = vmin.f32 %v753, %v1001
      %v1036 = vmin.f32 %v756, %v1004
      %v1037 = vmin.f32 %v761, %v1009
      %v1038 = vmin.f32 %v764, %v1012
      %v1039 = vmin.f32 %v769, %v1017
      %s1040 = scalar_lea.vmem %s355, 216
      %v1041 = vld [vmem:[%s1040] sm:$0xff]
      %v1042 = vld [vmem:[%s1040 + $0x8] sm:$0xf]
      %v1043 = vld [vmem:[%s1040 + $0xc] sm:$0xff]
      %v1044 = vld [vmem:[%s1040 + $0x14] sm:$0xf]
      %v1045 = vld [vmem:[%s1040 + $0x18] sm:$0xff]
      %v1046 = vld [vmem:[%s1040 + $0x20] sm:$0xf]
      %v1047 = vld [vmem:[%s1040 + $0x24] sm:$0xff]
      %v1048 = vld [vmem:[%s1040 + $0x2c] sm:$0xf]
      %v1049 = vld [vmem:[%s1040 + $0x30] sm:$0xff]
      %v1050 = vld [vmem:[%s1040 + $0x38] sm:$0xf]
      %v1051 = vld [vmem:[%s1040 + $0x3c] sm:$0xff]
      %v1052 = vld [vmem:[%s1040 + $0x44] sm:$0xf]
      %v1053 = vld [vmem:[%s1040 + $0x48] sm:$0xff]
      %v1054 = vld [vmem:[%s1040 + $0x50] sm:$0xf]
      %v1055 = vld [vmem:[%s1040 + $0x54] sm:$0xff]
      %v1056 = vld [vmem:[%s1040 + $0x5c] sm:$0xf]
      %v1057 = vld [vmem:[%s1040 + $0x60] sm:$0xff]
      %v1058 = vld [vmem:[%s1040 + $0x68] sm:$0xf]
      %v1077 = vunpack.c.l.b16 %v1041
      %v1078 = vunpack.c.h.b16 %v1041
      %v1079 = vunpack.c.l.b16 %v1042
      %v1080 = vunpack.c.l.b16 %v1043
      %v1081 = vunpack.c.h.b16 %v1043
      %v1082 = vunpack.c.l.b16 %v1044
      %v1083 = vunpack.c.l.b16 %v1045
      %v1084 = vunpack.c.h.b16 %v1045
      %v1085 = vunpack.c.l.b16 %v1046
      %v1086 = vunpack.c.l.b16 %v1047
      %v1087 = vunpack.c.h.b16 %v1047
      %v1088 = vunpack.c.l.b16 %v1048
      %v1089 = vunpack.c.l.b16 %v1049
      %v1090 = vunpack.c.h.b16 %v1049
      %v1091 = vunpack.c.l.b16 %v1050
      %v1092 = vunpack.c.l.b16 %v1051
      %v1093 = vunpack.c.h.b16 %v1051
      %v1094 = vunpack.c.l.b16 %v1052
      %v1095 = vunpack.c.l.b16 %v1053
      %v1096 = vunpack.c.h.b16 %v1053
      %v1097 = vunpack.c.l.b16 %v1054
      %v1098 = vunpack.c.l.b16 %v1055
      %v1099 = vunpack.c.h.b16 %v1055
      %v1100 = vunpack.c.l.b16 %v1056
      %v1101 = vunpack.c.l.b16 %v1057
      %v1102 = vunpack.c.h.b16 %v1057
      %v1103 = vunpack.c.l.b16 %v1058
      %v1104 = vpack.c.b16 %v1080, %v1077
      %v1105 = vpack.c.b16 %v1081, %v1078
      %v1106 = vpack.c.b16 %v1082, %v1079
      %v1107 = vpack.c.b16 %v1086, %v1083
      %v1108 = vpack.c.b16 %v1087, %v1084
      %v1109 = vpack.c.b16 %v1088, %v1085
      %v1110 = vpack.c.b16 %v1092, %v1089
      %v1111 = vpack.c.b16 %v1093, %v1090
      %v1112 = vpack.c.b16 %v1094, %v1091
      %v1113 = vpack.c.b16 %v1098, %v1095
      %v1114 = vpack.c.b16 %v1099, %v1096
      %v1115 = vpack.c.b16 %v1100, %v1097
      %v1116 = vpack.c.b16 %v1101, %v1101
      %v1117 = vpack.c.b16 %v1102, %v1102
      %v1118 = vpack.c.b16 %v1103, %v1103
      %v1130 = vsel %vm614, %v1106, 0
      %v1133 = vsel %vm614, %v1109, 0
      %v1136 = vsel %vm614, %v1112, 0
      %v1139 = vsel %vm614, %v1115, 0
      %v1142 = vsel %vm614, %v1118, 0
      %1144 = vmatprep.subr.bf16.mxu0 0
      %1145 = vmatpush1.bf16.msra.mxu0 %v578
      %1146 = vmatprep.subr.bf16.mxu0 0
      %1147 = vmatpush1.bf16.msra.mxu0 %v579
      %1148 = vmatprep.subr.bf16.mxu0 0
      %1149 = vmatpush1.bf16.msra.mxu0 %v580
      %1150 = vmatprep.subr.bf16.mxu0 0
      %1151 = vmatpush1.bf16.msra.mxu0 %v581
      %1152 = vmatprep.subr.bf16.mxu0 0
      %1153 = vmatpush1.bf16.msra.mxu0 %v582
      %1154 = vmatprep.subr.bf16.mxu0 0
      %1155 = vmatpush1.bf16.msra.mxu0 %v583
      %1156 = vmatprep.subr.bf16.mxu0 0
      %1157 = vmatpush1.bf16.msra.mxu0 %v584
      %1158 = vmatprep.subr.bf16.mxu0 0
      %1159 = vmatpush1.bf16.msra.mxu0 %v585
      %1160 = vmatprep.subr.bf16.mxu0 0
      %1161 = vmatpush1.bf16.msra.mxu0 %v586
      %1162 = vmatprep.subr.bf16.mxu0 0
      %1163 = vmatpush1.bf16.msra.mxu0 %v587
      %1164 = vmatprep.subr.bf16.mxu0 0
      %1165 = vmatpush1.bf16.msra.mxu0 %v588
      %1166 = vmatprep.subr.bf16.mxu0 0
      %1167 = vmatpush1.bf16.msra.mxu0 %v589
      %1168 = vmatprep.subr.bf16.mxu0 0
      %1169 = vmatpush1.bf16.msra.mxu0 %v590
      %1170 = vmatprep.subr.bf16.mxu0 0
      %1171 = vmatpush1.bf16.msra.mxu0 %v591
      %1172 = vmatprep.subr.bf16.mxu0 0
      %1173 = vmatpush1.bf16.msra.mxu0 %v592
      %1174 = vmatprep.subr.bf16.mxu0 0
      %1175 = vmatpush1.bf16.msra.mxu0 %v593
      %1176 = vmatprep.mubr.bf16.mxu0 %v1105
      %1177 = vmatmul.mubr.bf16.gmra.mrb[0].mxu0 %v1104
      %v1178 = vpop.f32.mrb[0].mxu0
      %v1179 = vadd.f32 0.0, %v1178
      %v1180 = vpop.f32.mrb[0].mxu0
      %v1181 = vpop.f32.mrb[0].mxu0
      %v1182 = vadd.f32 0.0, %v1181
      %v1183 = vpop.f32.mrb[0].mxu0
      %1184 = vmatprep.mubr.bf16.mxu0 %v1108
      %1185 = vmatmul.mubr.bf16.gmra.mrb[0].mxu0 %v1107
      %v1186 = vpop.f32.mrb[0].mxu0
      %v1187 = vadd.f32 0.0, %v1186
      %v1188 = vpop.f32.mrb[0].mxu0
      %v1189 = vpop.f32.mrb[0].mxu0
      %v1190 = vadd.f32 0.0, %v1189
      %v1191 = vpop.f32.mrb[0].mxu0
      %1192 = vmatprep.mubr.bf16.mxu0 %v1111
      %1193 = vmatmul.mubr.bf16.gmra.mrb[0].mxu0 %v1110
      %v1194 = vpop.f32.mrb[0].mxu0
      %v1195 = vadd.f32 0.0, %v1194
      %v1196 = vpop.f32.mrb[0].mxu0
      %v1197 = vpop.f32.mrb[0].mxu0
      %v1198 = vadd.f32 0.0, %v1197
      %v1199 = vpop.f32.mrb[0].mxu0
      %1200 = vmatprep.mubr.bf16.mxu0 %v1114
      %1201 = vmatmul.mubr.bf16.gmra.mrb[0].mxu0 %v1113
      %v1202 = vpop.f32.mrb[0].mxu0
      %v1203 = vadd.f32 0.0, %v1202
      %v1204 = vpop.f32.mrb[0].mxu0
      %v1205 = vpop.f32.mrb[0].mxu0
      %v1206 = vadd.f32 0.0, %v1205
      %v1207 = vpop.f32.mrb[0].mxu0
      %1208 = vmatprep.mubr.bf16.mxu0 %v1117
      %1209 = vmatmul.mubr.bf16.gmra.mrb[0].mxu0 %v1116
      %v1210 = vpop.f32.mrb[0].mxu0
      %v1211 = vadd.f32 0.0, %v1210
      %v1212 = vpop.f32.mrb[0].mxu0
      %v1213 = vpop.f32.mrb[0].mxu0
      %v1214 = vpop.f32.mrb[0].mxu0
      %1215 = vdwg.mxu0
      %1216 = vmatprep.subr.bf16.mxu0 0
      %1217 = vmatpush1.bf16.msra.mxu0 %v594
      %1218 = vmatprep.subr.bf16.mxu0 0
      %1219 = vmatpush1.bf16.msra.mxu0 %v595
      %1220 = vmatprep.subr.bf16.mxu0 0
      %1221 = vmatpush1.bf16.msra.mxu0 0
      %1222 = vmatprep.subr.bf16.mxu0 0
      %1223 = vmatpush1.bf16.msra.mxu0 0
      %1224 = vmatprep.subr.bf16.mxu0 0
      %1225 = vmatpush1.bf16.msra.mxu0 0
      %1226 = vmatprep.subr.bf16.mxu0 0
      %1227 = vmatpush1.bf16.msra.mxu0 0
      %1228 = vmatprep.subr.bf16.mxu0 0
      %1229 = vmatpush1.bf16.msra.mxu0 0
      %1230 = vmatprep.subr.bf16.mxu0 0
      %1231 = vmatpush1.bf16.msra.mxu0 0
      %1232 = vmatprep.subr.bf16.mxu0 0
      %1233 = vmatpush1.bf16.msra.mxu0 0
      %1234 = vmatprep.subr.bf16.mxu0 0
      %1235 = vmatpush1.bf16.msra.mxu0 0
      %1236 = vmatprep.subr.bf16.mxu0 0
      %1237 = vmatpush1.bf16.msra.mxu0 0
      %1238 = vmatprep.subr.bf16.mxu0 0
      %1239 = vmatpush1.bf16.msra.mxu0 0
      %1240 = vmatprep.subr.bf16.mxu0 0
      %1241 = vmatpush1.bf16.msra.mxu0 0
      %1242 = vmatprep.subr.bf16.mxu0 0
      %1243 = vmatpush1.bf16.msra.mxu0 0
      %1244 = vmatprep.subr.bf16.mxu0 0
      %1245 = vmatpush1.bf16.msra.mxu0 0
      %1246 = vmatprep.subr.bf16.mxu0 0
      %1247 = vmatpush1.bf16.msra.mxu0 0
      %1248 = vmatprep.mubr.bf16.mxu0 0
      %1249 = vmatmul.mubr.bf16.gmra.mrb[0].mxu0 %v1130
      %v1250 = vpop.f32.mrb[0].mxu0
      %v1251 = vadd.f32 %v1179, %v1250
      %v1252 = vpop.f32.mrb[0].mxu0
      %v1253 = vpop.f32.mrb[0].mxu0
      %v1254 = vadd.f32 %v1182, %v1253
      %v1255 = vpop.f32.mrb[0].mxu0
      %1256 = vmatprep.mubr.bf16.mxu0 0
      %1257 = vmatmul.mubr.bf16.gmra.mrb[0].mxu0 %v1133
      %v1258 = vpop.f32.mrb[0].mxu0
      %v1259 = vadd.f32 %v1187, %v1258
      %v1260 = vpop.f32.mrb[0].mxu0
      %v1261 = vpop.f32.mrb[0].mxu0
      %v1262 = vadd.f32 %v1190, %v1261
      %v1263 = vpop.f32.mrb[0].mxu0
      %1264 = vmatprep.mubr.bf16.mxu0 0
      %1265 = vmatmul.mubr.bf16.gmra.mrb[0].mxu0 %v1136
      %v1266 = vpop.f32.mrb[0].mxu0
      %v1267 = vadd.f32 %v1195, %v1266
      %v1268 = vpop.f32.mrb[0].mxu0
      %v1269 = vpop.f32.mrb[0].mxu0
      %v1270 = vadd.f32 %v1198, %v1269
      %v1271 = vpop.f32.mrb[0].mxu0
      %1272 = vmatprep.mubr.bf16.mxu0 0
      %1273 = vmatmul.mubr.bf16.gmra.mrb[0].mxu0 %v1139
      %v1274 = vpop.f32.mrb[0].mxu0
      %v1275 = vadd.f32 %v1203, %v1274
      %v1276 = vpop.f32.mrb[0].mxu0
      %v1277 = vpop.f32.mrb[0].mxu0
      %v1278 = vadd.f32 %v1206, %v1277
      %v1279 = vpop.f32.mrb[0].mxu0
      %1280 = vmatprep.mubr.bf16.mxu0 0
      %1281 = vmatmul.mubr.bf16.gmra.mrb[0].mxu0 %v1142
      %v1282 = vpop.f32.mrb[0].mxu0
      %v1283 = vadd.f32 %v1211, %v1282
      %v1284 = vpop.f32.mrb[0].mxu0
      %v1285 = vpop.f32.mrb[0].mxu0
      %v1286 = vpop.f32.mrb[0].mxu0
      %1287 = vdwg.mxu0
      %v1288 = vmax.f32 %v1022, %v1251
      %v1289 = vmax.f32 %v1023, %v1254
      %v1290 = vmax.f32 %v1024, %v1259
      %v1291 = vmax.f32 %v1025, %v1262
      %v1292 = vmax.f32 %v1026, %v1267
      %v1293 = vmax.f32 %v1027, %v1270
      %v1294 = vmax.f32 %v1028, %v1275
      %v1295 = vmax.f32 %v1029, %v1278
      %v1296 = vmax.f32 %v1030, %v1283
      %v1297 = vmin.f32 %v1031, %v1251
      %v1298 = vmin.f32 %v1032, %v1254
      %v1299 = vmin.f32 %v1033, %v1259
      %v1300 = vmin.f32 %v1034, %v1262
      %v1301 = vmin.f32 %v1035, %v1267
      %v1302 = vmin.f32 %v1036, %v1270
      %v1303 = vmin.f32 %v1037, %v1275
      %v1304 = vmin.f32 %v1038, %v1278
      %v1305 = vmin.f32 %v1039, %v1283
      %s1306 = scalar_lea.vmem %s355, 324
      %v1307 = vld [vmem:[%s1306] sm:$0xff]
      %v1308 = vld [vmem:[%s1306 + $0x8] sm:$0xf]
      %v1309 = vld [vmem:[%s1306 + $0xc] sm:$0xff]
      %v1310 = vld [vmem:[%s1306 + $0x14] sm:$0xf]
      %v1311 = vld [vmem:[%s1306 + $0x18] sm:$0xff]
      %v1312 = vld [vmem:[%s1306 + $0x20] sm:$0xf]
      %v1313 = vld [vmem:[%s1306 + $0x24] sm:$0xff]
      %v1314 = vld [vmem:[%s1306 + $0x2c] sm:$0xf]
      %v1315 = vld [vmem:[%s1306 + $0x30] sm:$0xff]
      %v1316 = vld [vmem:[%s1306 + $0x38] sm:$0xf]
      %v1317 = vld [vmem:[%s1306 + $0x3c] sm:$0xff]
      %v1318 = vld [vmem:[%s1306 + $0x44] sm:$0xf]
      %v1319 = vld [vmem:[%s1306 + $0x48] sm:$0xff]
      %v1320 = vld [vmem:[%s1306 + $0x50] sm:$0xf]
      %v1321 = vld [vmem:[%s1306 + $0x54] sm:$0xff]
      %v1322 = vld [vmem:[%s1306 + $0x5c] sm:$0xf]
      %v1323 = vld [vmem:[%s1306 + $0x60] sm:$0xff]
      %v1324 = vld [vmem:[%s1306 + $0x68] sm:$0xf]
      %v1343 = vunpack.c.l.b16 %v1307
      %v1344 = vunpack.c.h.b16 %v1307
      %v1345 = vunpack.c.l.b16 %v1308
      %v1346 = vunpack.c.l.b16 %v1309
      %v1347 = vunpack.c.h.b16 %v1309
      %v1348 = vunpack.c.l.b16 %v1310
      %v1349 = vunpack.c.l.b16 %v1311
      %v1350 = vunpack.c.h.b16 %v1311
      %v1351 = vunpack.c.l.b16 %v1312
      %v1352 = vunpack.c.l.b16 %v1313
      %v1353 = vunpack.c.h.b16 %v1313
      %v1354 = vunpack.c.l.b16 %v1314
      %v1355 = vunpack.c.l.b16 %v1315
      %v1356 = vunpack.c.h.b16 %v1315
      %v1357 = vunpack.c.l.b16 %v1316
      %v1358 = vunpack.c.l.b16 %v1317
      %v1359 = vunpack.c.h.b16 %v1317
      %v1360 = vunpack.c.l.b16 %v1318
      %v1361 = vunpack.c.l.b16 %v1319
      %v1362 = vunpack.c.h.b16 %v1319
      %v1363 = vunpack.c.l.b16 %v1320
      %v1364 = vunpack.c.l.b16 %v1321
      %v1365 = vunpack.c.h.b16 %v1321
      %v1366 = vunpack.c.l.b16 %v1322
      %v1367 = vunpack.c.l.b16 %v1323
      %v1368 = vunpack.c.h.b16 %v1323
      %v1369 = vunpack.c.l.b16 %v1324
      %v1370 = vpack.c.b16 %v1346, %v1343
      %v1371 = vpack.c.b16 %v1347, %v1344
      %v1372 = vpack.c.b16 %v1348, %v1345
      %v1373 = vpack.c.b16 %v1352, %v1349
      %v1374 = vpack.c.b16 %v1353, %v1350
      %v1375 = vpack.c.b16 %v1354, %v1351
      %v1376 = vpack.c.b16 %v1358, %v1355
      %v1377 = vpack.c.b16 %v1359, %v1356
      %v1378 = vpack.c.b16 %v1360, %v1357
      %v1379 = vpack.c.b16 %v1364, %v1361
      %v1380 = vpack.c.b16 %v1365, %v1362
      %v1381 = vpack.c.b16 %v1366, %v1363
      %v1382 = vpack.c.b16 %v1367, %v1367
      %v1383 = vpack.c.b16 %v1368, %v1368
      %v1384 = vpack.c.b16 %v1369, %v1369
      %v1396 = vsel %vm614, %v1372, 0
      %v1399 = vsel %vm614, %v1375, 0
      %v1402 = vsel %vm614, %v1378, 0
      %v1405 = vsel %vm614, %v1381, 0
      %v1408 = vsel %vm614, %v1384, 0
      %1410 = vmatprep.subr.bf16.mxu0 0
      %1411 = vmatpush1.bf16.msra.mxu0 %v578
      %1412 = vmatprep.subr.bf16.mxu0 0
      %1413 = vmatpush1.bf16.msra.mxu0 %v579
      %1414 = vmatprep.subr.bf16.mxu0 0
      %1415 = vmatpush1.bf16.msra.mxu0 %v580
      %1416 = vmatprep.subr.bf16.mxu0 0
      %1417 = vmatpush1.bf16.msra.mxu0 %v581
      %1418 = vmatprep.subr.bf16.mxu0 0
      %1419 = vmatpush1.bf16.msra.mxu0 %v582
      %1420 = vmatprep.subr.bf16.mxu0 0
      %1421 = vmatpush1.bf16.msra.mxu0 %v583
      %1422 = vmatprep.subr.bf16.mxu0 0
      %1423 = vmatpush1.bf16.msra.mxu0 %v584
      %1424 = vmatprep.subr.bf16.mxu0 0
      %1425 = vmatpush1.bf16.msra.mxu0 %v585
      %1426 = vmatprep.subr.bf16.mxu0 0
      %1427 = vmatpush1.bf16.msra.mxu0 %v586
      %1428 = vmatprep.subr.bf16.mxu0 0
      %1429 = vmatpush1.bf16.msra.mxu0 %v587
      %1430 = vmatprep.subr.bf16.mxu0 0
      %1431 = vmatpush1.bf16.msra.mxu0 %v588
      %1432 = vmatprep.subr.bf16.mxu0 0
      %1433 = vmatpush1.bf16.msra.mxu0 %v589
      %1434 = vmatprep.subr.bf16.mxu0 0
      %1435 = vmatpush1.bf16.msra.mxu0 %v590
      %1436 = vmatprep.subr.bf16.mxu0 0
      %1437 = vmatpush1.bf16.msra.mxu0 %v591
      %1438 = vmatprep.subr.bf16.mxu0 0
      %1439 = vmatpush1.bf16.msra.mxu0 %v592
      %1440 = vmatprep.subr.bf16.mxu0 0
      %1441 = vmatpush1.bf16.msra.mxu0 %v593
      %1442 = vmatprep.mubr.bf16.mxu0 %v1371
      %1443 = vmatmul.mubr.bf16.gmra.mrb[0].mxu0 %v1370
      %v1444 = vpop.f32.mrb[0].mxu0
      %v1445 = vadd.f32 0.0, %v1444
      %v1446 = vpop.f32.mrb[0].mxu0
      %v1447 = vpop.f32.mrb[0].mxu0
      %v1448 = vadd.f32 0.0, %v1447
      %v1449 = vpop.f32.mrb[0].mxu0
      %1450 = vmatprep.mubr.bf16.mxu0 %v1374
      %1451 = vmatmul.mubr.bf16.gmra.mrb[0].mxu0 %v1373
      %v1452 = vpop.f32.mrb[0].mxu0
      %v1453 = vadd.f32 0.0, %v1452
      %v1454 = vpop.f32.mrb[0].mxu0
      %v1455 = vpop.f32.mrb[0].mxu0
      %v1456 = vadd.f32 0.0, %v1455
      %v1457 = vpop.f32.mrb[0].mxu0
      %1458 = vmatprep.mubr.bf16.mxu0 %v1377
      %1459 = vmatmul.mubr.bf16.gmra.mrb[0].mxu0 %v1376
      %v1460 = vpop.f32.mrb[0].mxu0
      %v1461 = vadd.f32 0.0, %v1460
      %v1462 = vpop.f32.mrb[0].mxu0
      %v1463 = vpop.f32.mrb[0].mxu0
      %v1464 = vadd.f32 0.0, %v1463
      %v1465 = vpop.f32.mrb[0].mxu0
      %1466 = vmatprep.mubr.bf16.mxu0 %v1380
      %1467 = vmatmul.mubr.bf16.gmra.mrb[0].mxu0 %v1379
      %v1468 = vpop.f32.mrb[0].mxu0
      %v1469 = vadd.f32 0.0, %v1468
      %v1470 = vpop.f32.mrb[0].mxu0
      %v1471 = vpop.f32.mrb[0].mxu0
      %v1472 = vadd.f32 0.0, %v1471
      %v1473 = vpop.f32.mrb[0].mxu0
      %1474 = vmatprep.mubr.bf16.mxu0 %v1383
      %1475 = vmatmul.mubr.bf16.gmra.mrb[0].mxu0 %v1382
      %v1476 = vpop.f32.mrb[0].mxu0
      %v1477 = vadd.f32 0.0, %v1476
      %v1478 = vpop.f32.mrb[0].mxu0
      %v1479 = vpop.f32.mrb[0].mxu0
      %v1480 = vpop.f32.mrb[0].mxu0
      %1481 = vdwg.mxu0
      %1482 = vmatprep.subr.bf16.mxu0 0
      %1483 = vmatpush1.bf16.msra.mxu0 %v594
      %1484 = vmatprep.subr.bf16.mxu0 0
      %1485 = vmatpush1.bf16.msra.mxu0 %v595
      %1486 = vmatprep.subr.bf16.mxu0 0
      %1487 = vmatpush1.bf16.msra.mxu0 0
      %1488 = vmatprep.subr.bf16.mxu0 0
      %1489 = vmatpush1.bf16.msra.mxu0 0
      %1490 = vmatprep.subr.bf16.mxu0 0
      %1491 = vmatpush1.bf16.msra.mxu0 0
      %1492 = vmatprep.subr.bf16.mxu0 0
      %1493 = vmatpush1.bf16.msra.mxu0 0
      %1494 = vmatprep.subr.bf16.mxu0 0
      %1495 = vmatpush1.bf16.msra.mxu0 0
      %1496 = vmatprep.subr.bf16.mxu0 0
      %1497 = vmatpush1.bf16.msra.mxu0 0
      %1498 = vmatprep.subr.bf16.mxu0 0
      %1499 = vmatpush1.bf16.msra.mxu0 0
      %1500 = vmatprep.subr.bf16.mxu0 0
      %1501 = vmatpush1.bf16.msra.mxu0 0
      %1502 = vmatprep.subr.bf16.mxu0 0
      %1503 = vmatpush1.bf16.msra.mxu0 0
      %1504 = vmatprep.subr.bf16.mxu0 0
      %1505 = vmatpush1.bf16.msra.mxu0 0
      %1506 = vmatprep.subr.bf16.mxu0 0
      %1507 = vmatpush1.bf16.msra.mxu0 0
      %1508 = vmatprep.subr.bf16.mxu0 0
      %1509 = vmatpush1.bf16.msra.mxu0 0
      %1510 = vmatprep.subr.bf16.mxu0 0
      %1511 = vmatpush1.bf16.msra.mxu0 0
      %1512 = vmatprep.subr.bf16.mxu0 0
      %1513 = vmatpush1.bf16.msra.mxu0 0
      %1514 = vmatprep.mubr.bf16.mxu0 0
      %1515 = vmatmul.mubr.bf16.gmra.mrb[0].mxu0 %v1396
      %v1516 = vpop.f32.mrb[0].mxu0
      %v1517 = vadd.f32 %v1445, %v1516
      %v1518 = vpop.f32.mrb[0].mxu0
      %v1519 = vpop.f32.mrb[0].mxu0
      %v1520 = vadd.f32 %v1448, %v1519
      %v1521 = vpop.f32.mrb[0].mxu0
      %1522 = vmatprep.mubr.bf16.mxu0 0
      %1523 = vmatmul.mubr.bf16.gmra.mrb[0].mxu0 %v1399
      %v1524 = vpop.f32.mrb[0].mxu0
      %v1525 = vadd.f32 %v1453, %v1524
      %v1526 = vpop.f32.mrb[0].mxu0
      %v1527 = vpop.f32.mrb[0].mxu0
      %v1528 = vadd.f32 %v1456, %v1527
      %v1529 = vpop.f32.mrb[0].mxu0
      %1530 = vmatprep.mubr.bf16.mxu0 0
      %1531 = vmatmul.mubr.bf16.gmra.mrb[0].mxu0 %v1402
      %v1532 = vpop.f32.mrb[0].mxu0
      %v1533 = vadd.f32 %v1461, %v1532
      %v1534 = vpop.f32.mrb[0].mxu0
      %v1535 = vpop.f32.mrb[0].mxu0
      %v1536 = vadd.f32 %v1464, %v1535
      %v1537 = vpop.f32.mrb[0].mxu0
      %1538 = vmatprep.mubr.bf16.mxu0 0
      %1539 = vmatmul.mubr.bf16.gmra.mrb[0].mxu0 %v1405
      %v1540 = vpop.f32.mrb[0].mxu0
      %v1541 = vadd.f32 %v1469, %v1540
      %v1542 = vpop.f32.mrb[0].mxu0
      %v1543 = vpop.f32.mrb[0].mxu0
      %v1544 = vadd.f32 %v1472, %v1543
      %v1545 = vpop.f32.mrb[0].mxu0
      %1546 = vmatprep.mubr.bf16.mxu0 0
      %1547 = vmatmul.mubr.bf16.gmra.mrb[0].mxu0 %v1408
      %v1548 = vpop.f32.mrb[0].mxu0
      %v1549 = vadd.f32 %v1477, %v1548
      %v1550 = vpop.f32.mrb[0].mxu0
      %v1551 = vpop.f32.mrb[0].mxu0
      %v1552 = vpop.f32.mrb[0].mxu0
      %1553 = vdwg.mxu0
      %v1554 = vmax.f32 %v1288, %v1517
      %v1555 = vmax.f32 %v1289, %v1520
      %v1556 = vmax.f32 %v1290, %v1525
      %v1557 = vmax.f32 %v1291, %v1528
      %v1558 = vmax.f32 %v1292, %v1533
      %v1559 = vmax.f32 %v1293, %v1536
      %v1560 = vmax.f32 %v1294, %v1541
      %v1561 = vmax.f32 %v1295, %v1544
      %v1562 = vmax.f32 %v1296, %v1549
      %v1563 = vmin.f32 %v1297, %v1517
      %v1564 = vmin.f32 %v1298, %v1520
      %v1565 = vmin.f32 %v1299, %v1525
      %v1566 = vmin.f32 %v1300, %v1528
      %v1567 = vmin.f32 %v1301, %v1533
      %v1568 = vmin.f32 %v1302, %v1536
      %v1569 = vmin.f32 %v1303, %v1541
      %v1570 = vmin.f32 %v1304, %v1544
      %v1571 = vmin.f32 %v1305, %v1549
      %v1572 = vld [vmem:[%s366] sm:$0x1]
      %vm1573 = vcmp.ge.f32.partialorder %v1572, 0.0
      %v1574 = vsel %vm1573, 1, 0
      %v1575 = vlaneseq
      %v1576 = vshrl.u32 %v1575, 7
      %v1577 = vsub.s32 0, %v1576
      %v1578 = vrot.slane %v1574, %v1577
      %vm1579 = vcmp.eq.s32.totalorder %v1578, 1
      %v1580 = vsel %vm1579, %v1554, %v1563
      %v1581 = vsel %vm1579, %v1555, %v1564
      %v1582 = vsel %vm1579, %v1556, %v1565
      %v1583 = vsel %vm1579, %v1557, %v1566
      %v1584 = vsel %vm1579, %v1558, %v1567
      %v1585 = vsel %vm1579, %v1559, %v1568
      %v1586 = vsel %vm1579, %v1560, %v1569
      %v1587 = vsel %vm1579, %v1561, %v1570
      %v1588 = vsel %vm1579, %v1562, %v1571
      %v1589 = vld [vmem:[%s363] sm:$0x1]
      %v1591 = vlaneseq
      %v1592 = vshrl.u32 %v1591, 7
      %v1593 = vsub.s32 0, %v1592
      %v1594 = vrot.slane %v1589, %v1593
      %v1596 = vadd.f32 %v1580, %v1594
      %v1597 = vadd.f32 %v1581, %v1594
      %v1598 = vadd.f32 %v1582, %v1594
      %v1599 = vadd.f32 %v1583, %v1594
      %v1600 = vadd.f32 %v1584, %v1594
      %v1601 = vadd.f32 %v1585, %v1594
      %v1602 = vadd.f32 %v1586, %v1594
      %v1603 = vadd.f32 %v1587, %v1594
      %v1604 = vadd.f32 %v1588, %v1594
      %v1605 = vmax.f32 %v1596, 0.0
      %v1606 = vmax.f32 %v1597, 0.0
      %v1607 = vmax.f32 %v1598, 0.0
      %v1608 = vmax.f32 %v1599, 0.0
      %v1609 = vmax.f32 %v1600, 0.0
      %v1610 = vmax.f32 %v1601, 0.0
      %v1611 = vmax.f32 %v1602, 0.0
      %v1612 = vmax.f32 %v1603, 0.0
      %v1613 = vmax.f32 %v1604, 0.0
      %v1615 = vlaneseq
      %v1616 = vshrl.u32 %v1615, 7
      %v1617 = vsub.s32 0, %v1616
      %v1618 = vrot.slane %v1572, %v1617
      %v1620 = vmul.f32 %v1605, %v1618
      %v1621 = vmul.f32 %v1606, %v1618
      %v1622 = vmul.f32 %v1607, %v1618
      %v1623 = vmul.f32 %v1608, %v1618
      %v1624 = vmul.f32 %v1609, %v1618
      %v1625 = vmul.f32 %v1610, %v1618
      %v1626 = vmul.f32 %v1611, %v1618
      %v1627 = vmul.f32 %v1612, %v1618
      %v1628 = vmul.f32 %v1613, %v1618
      %v1629 = vld [vmem:[%s369] sm:$0x1]
      %v1631 = vlaneseq
      %v1632 = vshrl.u32 %v1631, 7
      %v1633 = vsub.s32 0, %v1632
      %v1634 = vrot.slane %v1629, %v1633
      %v1636 = vadd.f32 %v1620, %v1634
      %v1637 = vadd.f32 %v1621, %v1634
      %v1638 = vadd.f32 %v1622, %v1634
      %v1639 = vadd.f32 %v1623, %v1634
      %v1640 = vadd.f32 %v1624, %v1634
      %v1641 = vadd.f32 %v1625, %v1634
      %v1642 = vadd.f32 %v1626, %v1634
      %v1643 = vadd.f32 %v1627, %v1634
      %v1644 = vadd.f32 %v1628, %v1634
      %v1645 = vld [vmem:[%s374] sm:$0xff]
      %v1646 = vld [vmem:[%s374 + $0x8] sm:$0xff]
      %v1647 = vld [vmem:[%s374 + $0x10] sm:$0xff]
      %v1648 = vld [vmem:[%s374 + $0x18] sm:$0xff]
      %v1649 = vld [vmem:[%s374 + $0x20] sm:$0xff]
      %v1650 = vld [vmem:[%s374 + $0x28] sm:$0xff]
      %v1651 = vld [vmem:[%s374 + $0x30] sm:$0xff]
      %v1652 = vld [vmem:[%s374 + $0x38] sm:$0xff]
      %v1653 = vld [vmem:[%s374 + $0x40] sm:$0xff]
      %v1654 = vmul.f32 %v1636, %v1645
      %v1655 = vmul.f32 %v1637, %v1646
      %v1656 = vmul.f32 %v1638, %v1647
      %v1657 = vmul.f32 %v1639, %v1648
      %v1658 = vmul.f32 %v1640, %v1649
      %v1659 = vmul.f32 %v1641, %v1650
      %v1660 = vmul.f32 %v1642, %v1651
      %v1661 = vmul.f32 %v1643, %v1652
      %v1662 = vmul.f32 %v1644, %v1653
      %v1663 = vld [vmem:[%s6] sm:$0x3]
      %vm1664 = vcmask 588800
      %v1666 = vsel %vm1664, %v1663, 0
      %1668 = vmatprep.subr.mxu0 0.0
      %1669 = vmatpush1.msra.mxu0 %v1654
      %1670 = vmatprep.subr.mxu0 0.0
      %1671 = vmatpush1.msra.mxu0 %v1655
      %1672 = vmatprep.subr.mxu0 0.0
      %1673 = vmatpush1.msra.mxu0 %v1656
      %1674 = vmatprep.subr.mxu0 0.0
      %1675 = vmatpush1.msra.mxu0 %v1657
      %1676 = vmatprep.subr.mxu0 0.0
      %1677 = vmatpush1.msra.mxu0 %v1658
      %1678 = vmatprep.subr.mxu0 0.0
      %1679 = vmatpush1.msra.mxu0 %v1659
      %1680 = vmatprep.subr.mxu0 0.0
      %1681 = vmatpush1.msra.mxu0 %v1660
      %1682 = vmatprep.subr.mxu0 0.0
      %1683 = vmatpush1.msra.mxu0 %v1661
      %1684 = vmatprep.subr.mxu0 0.0
      %1685 = vmatpush1.msra.mxu0 %v1662
      %1686 = vmatprep.subr.mxu0 0.0
      %1687 = vmatpush1.msra.mxu0 0.0
      %1688 = vmatprep.subr.mxu0 0.0
      %1689 = vmatpush1.msra.mxu0 0.0
      %1690 = vmatprep.subr.mxu0 0.0
      %1691 = vmatpush1.msra.mxu0 0.0
      %1692 = vmatprep.subr.mxu0 0.0
      %1693 = vmatpush1.msra.mxu0 0.0
      %1694 = vmatprep.subr.mxu0 0.0
      %1695 = vmatpush1.msra.mxu0 0.0
      %1696 = vmatprep.subr.mxu0 0.0
      %1697 = vmatpush1.msra.mxu0 0.0
      %1698 = vmatprep.subr.mxu0 0.0
      %1699 = vmatpush1.msra.mxu0 0.0
      %1700 = vmatprep.subr.mxu0 0.0
      %1701 = vmatpush1.msra.mxu0 0.0
      %1702 = vmatprep.subr.mxu0 0.0
      %1703 = vmatpush1.msra.mxu0 0.0
      %1704 = vmatprep.subr.mxu0 0.0
      %1705 = vmatpush1.msra.mxu0 0.0
      %1706 = vmatprep.subr.mxu0 0.0
      %1707 = vmatpush1.msra.mxu0 0.0
      %1708 = vmatprep.subr.mxu0 0.0
      %1709 = vmatpush1.msra.mxu0 0.0
      %1710 = vmatprep.subr.mxu0 0.0
      %1711 = vmatpush1.msra.mxu0 0.0
      %1712 = vmatprep.subr.mxu0 0.0
      %1713 = vmatpush1.msra.mxu0 0.0
      %1714 = vmatprep.subr.mxu0 0.0
      %1715 = vmatpush1.msra.mxu0 0.0
      %1716 = vmatprep.subr.mxu0 0.0
      %1717 = vmatpush1.msra.mxu0 0.0
      %1718 = vmatprep.subr.mxu0 0.0
      %1719 = vmatpush1.msra.mxu0 0.0
      %1720 = vmatprep.subr.mxu0 0.0
      %1721 = vmatpush1.msra.mxu0 0.0
      %1722 = vmatprep.subr.mxu0 0.0
      %1723 = vmatpush1.msra.mxu0 0.0
      %1724 = vmatprep.subr.mxu0 0.0
      %1725 = vmatpush1.msra.mxu0 0.0
      %1726 = vmatprep.subr.mxu0 0.0
      %1727 = vmatpush1.msra.mxu0 0.0
      %1728 = vmatprep.subr.mxu0 0.0
      %1729 = vmatpush1.msra.mxu0 0.0
      %1730 = vmatprep.subr.mxu0 0.0
      %1731 = vmatpush1.msra.mxu0 0.0
      %1732 = vmatprep.mubr.f32.mxu0 0.0
      %1733 = vmatmul.mubr.f32.gmra.mrb[0].mxu0 %v1666
      %v1734 = vpop.f32.mrb[0].mxu0
      %v1735 = vadd.f32 0.0, %v1734
      %v1736 = vpop.f32.mrb[0].mxu0
      %1737 = vdwg.mxu0
      %v1738 = vld [vmem:[%s8] sm:$0x3]
      %vm1739 = vcmask 386048
      %v1740 = vsel %vm1739, %v1735, 0.0
      %1741 = vadd.xlane.f32.xlu0 %v1740
      %v1742 = vpop.xlane.xlu0 %1741
      %v1743 = vadd.f32 %v1738, %v1742
      %vm1744 = vcmask 1024
      %1745 = vst.msk [vmem:[%s8] sm:$0x3] %vm1744, %v1743
      %p1746 = scmp.eq.s32.totalorder %s21, 2
      // Predicated region
      $region57: #{discriminator_forward.5} parent=51 // pred_check
        %p1747 = pneg %p1746
      $region58: #{discriminator_forward.5} parent=51 // pred_check_branch
        %1749 = sbr.rel (%p1747) target = $region60
      $region59: #{discriminator_forward.5} parent=51 // pred_region
        %v1750 = vld [vmem:[%s8] sm:$0x3]
        %v1751 = vld [vmem:[#allocation2] sm:$0x1]
        %v1753 = vlaneseq
        %v1754 = vshrl.u32 %v1753, 7
        %v1755 = vsub.s32 0, %v1754
        %v1756 = vrot.slane %v1751, %v1755
        %v1758 = vadd.f32 %v1750, %v1756
        %v1759 = vxor.u32 %v1758, 2147483648
        %v1760 = vmul.f32 %v1759, 1.442695
        %v1761 = vpow.pop %v1760
        %v1762 = vadd.f32 %v1761, 1.0
        %v1763 = vrcp.pop %v1762
        %v1764 = vmul.f32 1.0, %v1763
        %1765 = vst.msk [vmem:[%s8] sm:$0x3] %vm1744, %v1764
      $region60: #{discriminator_forward.5} parent=51 // pred_fallthru
        _
      // Predicated region
      $region61: #{discriminator_forward.5} parent=51 // pred_check
        %p1766 = pneg %p232
      $region62: #{discriminator_forward.5} parent=51 // pred_check_branch
        %1768 = sbr.rel (%p1766) target = $region64
      $region63: #{discriminator_forward.5} parent=51 // pred_region
        _
      $region64: #{discriminator_forward.5} parent=51 // pred_fallthru
        _
      // Predicated region
      $region65: #{discriminator_forward.5} parent=51 // pred_check
        %p1769 = pneg %p232
      $region66: #{discriminator_forward.5} parent=51 // pred_check_branch
        %1771 = sbr.rel (%p1769) target = $region68
      $region67: #{discriminator_forward.5} parent=51 // pred_region
        _
      $region68: #{discriminator_forward.5} parent=51 // pred_fallthru
        _
    $region52: #{discriminator_forward.5} parent=5 // pred_fallthru
      _
    %p1772 = scmp.le.s32.totalorder 2, %s16
    // Predicated region
    $region69: #{discriminator_forward.5} parent=5 // pred_check
      %p1773 = pneg %p1772
    $region70: #{discriminator_forward.5} parent=5 // pred_check_branch
      %1775 = sbr.rel (%p1773) target = $region72
    $region71: #{discriminator_forward.5} parent=5 // pred_region
      %s1776 = ssub.s32 %s16, 2
    $region72: #{discriminator_forward.5} parent=5 // pred_fallthru
      _
  $region6: #{discriminator_forward.5} parent=0 // loop_footer
    %s20 = sadd.s32 1, %s16
  $region7: #{discriminator_forward.5} parent=0 // loop_footer_branch
    %15 = sbr.rel target = $region3
  $region8: #{discriminator_forward.5} parent=0 // loop_exit
    _

</llo_original>
